<compile_context>
chip_gen: v7x
topology: tpu7x:2x2x1
jax: 0.10.0
libtpu: 0.0.40
codegen_flags: <defaults>
</compile_context>

<pallas_src>
from math import floor, log2

import numpy as np
import jax
import jax.numpy as jnp
from jax.experimental import pallas as pl
from jax.experimental.pallas import tpu as pltpu

LANE = 128


def _rup(x, m):
    return ((x + m - 1) // m) * m


# ----------------------------------------------------------------------------
# Fused meta-body kernel (all convs + pools + avgpool + tail linear)
# ----------------------------------------------------------------------------
def _make_body_kernel(plan, L):
    """plan: per-layer static metadata (python ints only)."""

    def kernel(*args):
        # args: x, (w,b,sel) * L, tail_w, tail_b, out, *scratch
        x_ref = args[0]
        layer_refs = [(args[1 + 3 * l], args[2 + 3 * l], args[3 + 3 * l])
                      for l in range(L)]
        tw_ref = args[3 * L + 1]
        tb_ref = args[3 * L + 2]
        out_ref = args[3 * L + 3]
        scratch = args[3 * L + 4:]

        avg = None
        cur_ref = x_ref
        for l, spec in enumerate(plan):
            w_ref, b_ref, s_ref = layer_refs[l]
            Wp, R = spec["Wp"], spec["R"]

            # 3x3 conv as 9 accumulated matmuls over shifted row windows.
            acc = None
            for dh in range(3):
                for dw in range(3):
                    o = dh * Wp + dw
                    a = cur_ref[o:o + R, :]                       # (R, Cin_pad)
                    c = jnp.dot(a, w_ref[dh * 3 + dw],
                                preferred_element_type=jnp.float32)
                    acc = c if acc is None else acc + c
            acc = acc + b_ref[...]
            if spec["slope"] is not None:
                acc = jnp.where(acc >= 0.0, acc, spec["slope"] * acc)

            if spec["pool"]:
                # 2x2/stride-2 max pool: elementwise max of 4 shifted windows.
                abuf = scratch[spec["abuf_idx"]]
                abuf[...] = acc
                Rc = spec["Rc"]
                src = jnp.maximum(
                    jnp.maximum(abuf[0:Rc, :], abuf[1:1 + Rc, :]),
                    jnp.maximum(abuf[Wp:Wp + Rc, :],
                                abuf[Wp + 1:Wp + 1 + Rc, :]))
            else:
                src = acc

            sel = s_ref[...]
            if spec["is_last"]:
                # selection vector == masked global average pool -> (1, C_pad)
                avg = jnp.dot(sel, src, preferred_element_type=jnp.float32)
            else:
                # 0/1 scatter matrix: re-pad + (optionally) pool-gather into the
                # next layer's padded grid with a single full aligned store.
                dst = scratch[spec["dst_idx"]]
                dst[...] = jnp.dot(sel, src, preferred_element_type=jnp.float32)
                cur_ref = dst

        theta = jnp.dot(avg, tw_ref[...],
                        preferred_element_type=jnp.float32) + tb_ref[...]
        out_ref[...] = theta

    return kernel


# ----------------------------------------------------------------------------
# Generic stride-1 conv kernel for the fine-tuned target network
# ----------------------------------------------------------------------------
def _make_conv_kernel(Wp, R_total, kh, kw):
    def kernel(x_ref, w_ref, b_ref, o_ref):
        acc = None
        for dh in range(kh):
            for dw in range(kw):
                o = dh * Wp + dw
                a = x_ref[o:o + R_total, :]
                c = jnp.dot(a, w_ref[dh * kw + dw],
                            preferred_element_type=jnp.float32)
                acc = c if acc is None else acc + c
        acc = acc + b_ref[...]
        o_ref[...] = jnp.zeros_like(o_ref)
        o_ref[0:R_total, :] = acc
    return kernel


def conv2d_pallas(x_nchw, w_oihw, b, stride=1, padding=0):
    """Conv2d (stride 1) on the MXU with channel padding to 128 lanes."""
    assert stride == 1  # TODO(synk): strided target-net convs not implemented.
    B, Cin, H, W = x_nchw.shape
    Cout, Cin2, kh, kw = w_oihw.shape
    assert Cin == Cin2
    Hp, Wp = H + 2 * padding, W + 2 * padding
    Ho, Wo = Hp - kh + 1, Wp - kw + 1
    Cin_pad, Cout_pad = _rup(Cin, LANE), _rup(Cout, LANE)

    # pack input: NCHW -> flat padded (B*Hp*Wp, Cin_pad)
    x = jnp.transpose(x_nchw, (0, 2, 3, 1))
    x = jnp.pad(x, ((0, 0), (padding, padding), (padding, padding),
                    (0, Cin_pad - Cin)))
    x = x.reshape(B * Hp * Wp, Cin_pad)

    # pack weight: (Cout,Cin,kh,kw) -> (kh*kw, Cin_pad, Cout_pad)
    wt = jnp.transpose(w_oihw, (2, 3, 1, 0)).reshape(kh * kw, Cin, Cout)
    wp = jnp.zeros((kh * kw, Cin_pad, Cout_pad),
                   jnp.float32).at[:, :Cin, :Cout].set(wt)
    bp = jnp.zeros((1, Cout_pad), jnp.float32).at[0, :Cout].set(b)

    R = (Ho - 1) * Wp + Wo
    R_total = (B - 1) * Hp * Wp + R
    total_rows = B * Hp * Wp

    flops = 2 * kh * kw * R_total * Cin_pad * Cout_pad
    bytes_accessed = 4 * (x.size + wp.size + bp.size + total_rows * Cout_pad)

    out = pl.pallas_call(
        _make_conv_kernel(Wp, R_total, kh, kw),
        out_shape=jax.ShapeDtypeStruct((total_rows, Cout_pad), jnp.float32),
        grid=(1,),
        in_specs=[
            pl.BlockSpec((total_rows, Cin_pad), lambda i: (0, 0)),
            pl.BlockSpec((kh * kw, Cin_pad, Cout_pad), lambda i: (0, 0, 0)),
            pl.BlockSpec((1, Cout_pad), lambda i: (0, 0)),
        ],
        out_specs=pl.BlockSpec((total_rows, Cout_pad), lambda i: (0, 0)),
        compiler_params=pltpu.CompilerParams(dimension_semantics=("arbitrary",)),
        cost_estimate=pl.CostEstimate(flops=flops, transcendentals=0,
                                      bytes_accessed=bytes_accessed),
    )(x, wp, bp)

    y = out.reshape(B, Hp, Wp, Cout_pad)[:, :Ho, :Wo, :Cout]
    return jnp.transpose(y, (0, 3, 1, 2))                    # back to NCHW


# ----------------------------------------------------------------------------
# FineTuner
# ----------------------------------------------------------------------------
class FineTunerPallas:
    LEAKY_SLOPE = 0.01  # nn.LeakyReLU default negative_slope

    def __init__(self, net_config, fine_tuning_depth, key):
        self.config = net_config
        self.depth = fine_tuning_depth
        target_config = self.config[-fine_tuning_depth:]

        # --- mirror the reference's bookkeeping exactly ---
        self.param_nb = 0
        for conf in self.config:
            t = conf[0]
            if t in ("conv2d", "convt2d", "linear"):
                self.param_nb += 2
            elif t == "prelu":
                self.param_nb += 1
            elif t in ("resblock_leakyrelu", "resblock_relu"):
                self.param_nb += 4

        self.parameters_size = 0
        for t, conf in target_config:
            if t == "conv2d":
                self.parameters_size += conf[0] * conf[1] * conf[2] * conf[3] + conf[0]
            elif t == "convt2d":
                self.parameters_size += conf[0] * conf[1] * conf[2] * conf[3] + conf[1]
            elif t == "linear":
                self.parameters_size += conf[0] * conf[1]
            elif t in ("reblock_leakyrelu", "resblock_relu"):
                self.parameters_size += (conf[0] * conf[1] * conf[2] * conf[3] + conf[0]) * 2

        self.block_number = int(floor(log2(self.parameters_size) - 3))

        # --- body: Conv2d(3,8,3,pad=0) then alternating Conv/Pool blocks ---
        keys = jax.random.split(key, self.block_number + 2)

        def he(k, shape):
            fan_in = shape[1] * shape[2] * shape[3]
            return jax.random.normal(k, shape, jnp.float32) * (2.0 / fan_in) ** 0.5

        self.body_meta = [dict(cin=3, cout=8, pad=0, pool=False, slope=None)]
        raw = [(he(keys[0], (8, 3, 3, 3)), jnp.zeros((8,), jnp.float32))]
        for i in range(self.block_number):
            cin, cout = 2 ** (3 + i), 2 ** (3 + i + 1)
            raw.append((he(keys[i + 1], (cout, cin, 3, 3)),
                        jnp.zeros((cout,), jnp.float32)))
            self.body_meta.append(dict(cin=cin, cout=cout, pad=1,
                                       pool=(i % 2 == 1), slope=self.LEAKY_SLOPE))

        # prepack all body weights once (transpose + lane-pad hoisted to init)
        self.packed = []
        for (w, b), meta in zip(raw, self.body_meta):
            cinp, coutp = _rup(meta["cin"], LANE), _rup(meta["cout"], LANE)
            wt = jnp.transpose(w, (2, 3, 1, 0)).reshape(9, meta["cin"], meta["cout"])
            wp = jnp.zeros((9, cinp, coutp),
                           jnp.float32).at[:, :meta["cin"], :meta["cout"]].set(wt)
            bp = jnp.zeros((1, coutp), jnp.float32).at[0, :meta["cout"]].set(b)
            self.packed.append((wp, bp))

        # TODO(synk): reference builds nn.Linear(self.block_number, parameters_size),
        # which is shape-inconsistent with its own .view(-1, 2**(3+block_number));
        # we use the consistent in_features = 2**(3+block_number).
        in_feat = 2 ** (3 + self.block_number)
        in_feat_pad = _rup(in_feat, LANE)
        self.P = self.parameters_size
        self.P_pad = _rup(self.P, LANE)
        tail_w = jax.random.normal(keys[-1], (self.P, in_feat),
                                   jnp.float32) * (1.0 / in_feat) ** 0.5
        self.tail_w_packed = jnp.zeros((in_feat_pad, self.P_pad),
                                       jnp.float32).at[:in_feat, :self.P].set(tail_w.T)
        self.tail_b_packed = jnp.zeros((1, self.P_pad), jnp.float32)

        self._body_cache = {}

    # ------------------------------------------------------------------ body
    def _build_body_call(self, H, W):
        plan, scratch_shapes, extras = [], [], []
        h, w = H, W
        L = len(self.body_meta)
        for l, meta in enumerate(self.body_meta):
            p = meta["pad"]
            Hp, Wp = h + 2 * p, w + 2 * p
            Ho, Wo = Hp - 2, Wp - 2
            assert Ho > 0 and Wo > 0
            R = (Ho - 1) * Wp + Wo
            coutp = _rup(meta["cout"], LANE)
            spec = dict(Wp=Wp, R=R, slope=meta["slope"], pool=meta["pool"],
                        is_last=(l == L - 1), abuf_idx=None, dst_idx=None)

            if meta["pool"]:
                Rc = R - Wp - 1
                H2, W2 = Ho // 2, Wo // 2
                spec["Rc"] = Rc
                spec["abuf_idx"] = len(scratch_shapes)
                scratch_shapes.append(pltpu.VMEM((R, coutp), jnp.float32))
                out_h, out_w, src_len = H2, W2, Rc

                def src_pos(ho, wo, Wp=Wp):
                    return 2 * ho * Wp + 2 * wo
            else:
                out_h, out_w, src_len = Ho, Wo, R

                def src_pos(ho, wo, Wp=Wp):
                    return ho * Wp + wo

            if spec["is_last"]:
                # global-average-pool selection vector
                v = np.zeros((1, src_len), np.float32)
                inv = 1.0 / float(out_h * out_w)
                for ho in range(out_h):
                    for wo in range(out_w):
                        v[0, src_pos(ho, wo)] = inv
                extras.append(jnp.asarray(v))
            else:
                # scatter into the next layer's zero-padded grid (pad=1)
                Hpn, Wpn = out_h + 2, out_w + 2
                S = np.zeros((Hpn * Wpn, src_len), np.float32)
                for ho in range(out_h):
                    for wo in range(out_w):
                        S[(ho + 1) * Wpn + wo + 1, src_pos(ho, wo)] = 1.0
                extras.append(jnp.asarray(S))
                spec["dst_idx"] = len(scratch_shapes)
                scratch_shapes.append(pltpu.VMEM((Hpn * Wpn, coutp), jnp.float32))

            plan.append(spec)
            h, w = out_h, out_w

        kernel = _make_body_kernel(plan, L)

        def full_spec(shape):
            nd = len(shape)
            return pl.BlockSpec(shape, lambda i, nd=nd: (0,) * nd)

        in_shapes = [(H * W, _rup(3, LANE))]
        for l, meta in enumerate(self.body_meta):
            cinp, coutp = _rup(meta["cin"], LANE), _rup(meta["cout"], LANE)
            in_shapes += [(9, cinp, coutp), (1, coutp), tuple(extras[l].shape)]
        in_shapes += [tuple(self.tail_w_packed.shape), tuple(self.tail_b_packed.shape)]

        flops = 0
        for l, spec in enumerate(plan):
            cinp = _rup(self.body_meta[l]["cin"], LANE)
            coutp = _rup(self.body_meta[l]["cout"], LANE)
            flops += 2 * 9 * spec["R"] * cinp * coutp
        bytes_accessed = sum(int(np.prod(s)) for s in in_shapes) * 4 + self.P_pad * 4

        call = pl.pallas_call(
            kernel,
            out_shape=jax.ShapeDtypeStruct((1, self.P_pad), jnp.float32),
            grid=(1,),
            in_specs=[full_spec(s) for s in in_shapes],
            out_specs=pl.BlockSpec((1, self.P_pad), lambda i: (0, 0)),
            scratch_shapes=scratch_shapes,
            compiler_params=pltpu.CompilerParams(dimension_semantics=("arbitrary",)),
            cost_estimate=pl.CostEstimate(flops=flops, transcendentals=0,
                                          bytes_accessed=bytes_accessed),
        )
        return call, extras

    def _body_forward(self, x_spt):
        B, C, H, W = x_spt.shape
        assert B == 1 and C == 3
        key = (H, W)
        if key not in self._body_cache:
            self._body_cache[key] = self._build_body_call(H, W)
        call, extras = self._body_cache[key]

        x = jnp.transpose(x_spt, (0, 2, 3, 1)).reshape(H * W, 3)
        x = jnp.pad(x, ((0, 0), (0, _rup(3, LANE) - 3)))
        inputs = [x]
        for l in range(len(self.packed)):
            wp, bp = self.packed[l]
            inputs += [wp, bp, extras[l]]
        inputs += [self.tail_w_packed, self.tail_b_packed]
        theta_pad = call(*inputs)                 # (1, P_pad)
        return theta_pad[0, :self.P]              # (parameters_size,)

    # --- functional equivalent of the in-place param.data overwrite ---
    def finetune(self, x, net_params):
        assert x.shape[0] == self.parameters_size
        new_params = []
        k = 0
        for i, p in enumerate(net_params):
            if self.param_nb - i < self.depth:
                new_params.append(p)
            else:
                n = p.size
                # TODO(synk): reference assigns the flat slice to param.data; we
                # reshape so the target conv is runnable.
                new_params.append(x[k:k + n].reshape(p.shape))
                k = n  # faithfully replicate the reference's `k = n` (not `k += n`)
        return new_params

    # --- synthetic target network described by self.config ---
    def _network_forward(self, x_nchw, params):
        y = x_nchw
        pi = 0
        for t, conf in self.config:
            if t == "conv2d":
                w, b = params[pi], params[pi + 1]
                pi += 2
                stride = conf[4] if len(conf) > 4 else 1
                pad = conf[5] if len(conf) > 5 else 0
                y = conv2d_pallas(y, w, b, stride=stride, padding=pad)
            # TODO(synk): other target-network layer types not implemented.
        return y

    def forward(self, x_spt, x_qry, net_params):
        theta = self._body_forward(x_spt)               # (parameters_size,)
        new_params = self.finetune(theta, net_params)
        return self._network_forward(x_qry, new_params)  # NCHW


# ----------------------------------------------------------------------------
if __name__ == "__main__":
    key = jax.random.PRNGKey(0)
    kw_, kft, ks, kq = jax.random.split(key, 4)

    # Synthetic target network: a single conv2d layer
    # config entry: ('conv2d', [Cout, Cin, kh, kw, stride, pad])
    net_config = [("conv2d", [4, 3, 3, 3, 1, 1])]
    net_w = 0.1 * jax.random.normal(kw_, (4, 3, 3, 3), jnp.float32)
    net_b = jnp.zeros((4,), jnp.float32)
    net_params = [net_w, net_b]
    # parameters_size = 4*3*3*3 + 4 = 112  ->  block_number = 3

    ft = FineTunerPallas(net_config, fine_tuning_depth=1, key=kft)

    # x_spt batch must be 1 (reference asserts theta size == parameters_size)
    x_spt = jax.random.normal(ks, (1, 3, 16, 16), jnp.float32)   # NCHW
    x_qry = jax.random.normal(kq, (2, 3, 16, 16), jnp.float32)   # NCHW

    out = ft.forward(x_spt, x_qry, net_params)
    jax.block_until_ready(out)
    assert out.shape == (2, 4, 16, 16)
    print("KERNEL_OK")
</pallas_src>

<mosaic_0001>
module attributes {stable_mosaic.version = 11 : i64} {
  func.func @kernel(%arg0: i32, %arg1: memref<256x128xf32, #tpu.memory_space<vmem>>, %arg2: memref<9x128x128xf32, #tpu.memory_space<vmem>>, %arg3: memref<1x128xf32, #tpu.memory_space<vmem>>, %arg4: memref<256x222xf32, #tpu.memory_space<vmem>>, %arg5: memref<9x128x128xf32, #tpu.memory_space<vmem>>, %arg6: memref<1x128xf32, #tpu.memory_space<vmem>>, %arg7: memref<256x222xf32, #tpu.memory_space<vmem>>, %arg8: memref<9x128x128xf32, #tpu.memory_space<vmem>>, %arg9: memref<1x128xf32, #tpu.memory_space<vmem>>, %arg10: memref<81x205xf32, #tpu.memory_space<vmem>>, %arg11: memref<9x128x128xf32, #tpu.memory_space<vmem>>, %arg12: memref<1x128xf32, #tpu.memory_space<vmem>>, %arg13: memref<1x61xf32, #tpu.memory_space<vmem>>, %arg14: memref<128x128xf32, #tpu.memory_space<vmem>>, %arg15: memref<1x128xf32, #tpu.memory_space<vmem>>, %arg16: memref<1x128xf32, #tpu.memory_space<vmem>>, %arg17: memref<256x128xf32, #tpu.memory_space<vmem>>, %arg18: memref<256x128xf32, #tpu.memory_space<vmem>>, %arg19: memref<222x128xf32, #tpu.memory_space<vmem>>, %arg20: memref<81x128xf32, #tpu.memory_space<vmem>>) attributes {dimension_semantics = [#tpu.dimension_semantics<arbitrary>], iteration_bounds = array<i64: 1>, scalar_prefetch = 0 : i64, scratch_operands = 4 : i64, tpu.core_type = #tpu.core_type<tc>, window_params = [{pipeline_mode = #tpu.pipeline_mode<synchronous>, transform_indices = @transform_0, window_bounds = array<i64: 256, 128>}, {pipeline_mode = #tpu.pipeline_mode<synchronous>, transform_indices = @transform_1, window_bounds = array<i64: 9, 128, 128>}, {pipeline_mode = #tpu.pipeline_mode<synchronous>, transform_indices = @transform_2, window_bounds = array<i64: 1, 128>}, {pipeline_mode = #tpu.pipeline_mode<synchronous>, transform_indices = @transform_3, window_bounds = array<i64: 256, 222>}, {pipeline_mode = #tpu.pipeline_mode<synchronous>, transform_indices = @transform_4, window_bounds = array<i64: 9, 128, 128>}, {pipeline_mode = #tpu.pipeline_mode<synchronous>, transform_indices = @transform_5, window_bounds = array<i64: 1, 128>}, {pipeline_mode = #tpu.pipeline_mode<synchronous>, transform_indices = @transform_6, window_bounds = array<i64: 256, 222>}, {pipeline_mode = #tpu.pipeline_mode<synchronous>, transform_indices = @transform_7, window_bounds = array<i64: 9, 128, 128>}, {pipeline_mode = #tpu.pipeline_mode<synchronous>, transform_indices = @transform_8, window_bounds = array<i64: 1, 128>}, {pipeline_mode = #tpu.pipeline_mode<synchronous>, transform_indices = @transform_9, window_bounds = array<i64: 81, 205>}, {pipeline_mode = #tpu.pipeline_mode<synchronous>, transform_indices = @transform_10, window_bounds = array<i64: 9, 128, 128>}, {pipeline_mode = #tpu.pipeline_mode<synchronous>, transform_indices = @transform_11, window_bounds = array<i64: 1, 128>}, {pipeline_mode = #tpu.pipeline_mode<synchronous>, transform_indices = @transform_12, window_bounds = array<i64: 1, 61>}, {pipeline_mode = #tpu.pipeline_mode<synchronous>, transform_indices = @transform_13, window_bounds = array<i64: 128, 128>}, {pipeline_mode = #tpu.pipeline_mode<synchronous>, transform_indices = @transform_14, window_bounds = array<i64: 1, 128>}, {pipeline_mode = #tpu.pipeline_mode<synchronous>, transform_indices = @transform_15, window_bounds = array<i64: 1, 128>}]} {
    %c0 = arith.constant 0 : index
    %c0_0 = arith.constant 0 : index
    %0 = vector.load %arg1[%c0, %c0_0] : memref<256x128xf32, #tpu.memory_space<vmem>>, vector<222x128xf32>
    %c0_1 = arith.constant 0 : index
    %c0_2 = arith.constant 0 : index
    %c0_3 = arith.constant 0 : index
    %1 = vector.load %arg2[%c0_1, %c0_2, %c0_3] : memref<9x128x128xf32, #tpu.memory_space<vmem>>, vector<1x128x128xf32>
    %2 = vector.shape_cast %1 : vector<1x128x128xf32> to vector<128x128xf32>
    %cst = arith.constant dense<0.000000e+00> : vector<222x128xf32>
    %3 = tpu.matmul %0, %2, %cst {dimension_numbers = #tpu.dot_dimension_numbers<[1], [0], [0], [1], [0, 0, 1, 1], [], []>} : vector<222x128xf32>, vector<128x128xf32>, vector<222x128xf32> -> vector<222x128xf32>
    %c1 = arith.constant 1 : index
    %c0_4 = arith.constant 0 : index
    %4 = vector.load %arg1[%c1, %c0_4] : memref<256x128xf32, #tpu.memory_space<vmem>>, vector<222x128xf32>
    %c1_5 = arith.constant 1 : index
    %c0_6 = arith.constant 0 : index
    %c0_7 = arith.constant 0 : index
    %5 = vector.load %arg2[%c1_5, %c0_6, %c0_7] : memref<9x128x128xf32, #tpu.memory_space<vmem>>, vector<1x128x128xf32>
    %6 = vector.shape_cast %5 : vector<1x128x128xf32> to vector<128x128xf32>
    %cst_8 = arith.constant dense<0.000000e+00> : vector<222x128xf32>
    %7 = tpu.matmul %4, %6, %cst_8 {dimension_numbers = #tpu.dot_dimension_numbers<[1], [0], [0], [1], [0, 0, 1, 1], [], []>} : vector<222x128xf32>, vector<128x128xf32>, vector<222x128xf32> -> vector<222x128xf32>
    %8 = arith.addf %3, %7 : vector<222x128xf32>
    %c2 = arith.constant 2 : index
    %c0_9 = arith.constant 0 : index
    %9 = vector.load %arg1[%c2, %c0_9] : memref<256x128xf32, #tpu.memory_space<vmem>>, vector<222x128xf32>
    %c2_10 = arith.constant 2 : index
    %c0_11 = arith.constant 0 : index
    %c0_12 = arith.constant 0 : index
    %10 = vector.load %arg2[%c2_10, %c0_11, %c0_12] : memref<9x128x128xf32, #tpu.memory_space<vmem>>, vector<1x128x128xf32>
    %11 = vector.shape_cast %10 : vector<1x128x128xf32> to vector<128x128xf32>
    %cst_13 = arith.constant dense<0.000000e+00> : vector<222x128xf32>
    %12 = tpu.matmul %9, %11, %cst_13 {dimension_numbers = #tpu.dot_dimension_numbers<[1], [0], [0], [1], [0, 0, 1, 1], [], []>} : vector<222x128xf32>, vector<128x128xf32>, vector<222x128xf32> -> vector<222x128xf32>
    %13 = arith.addf %8, %12 : vector<222x128xf32>
    %c16 = arith.constant 16 : index
    %c0_14 = arith.constant 0 : index
    %14 = vector.load %arg1[%c16, %c0_14] : memref<256x128xf32, #tpu.memory_space<vmem>>, vector<222x128xf32>
    %c3 = arith.constant 3 : index
    %c0_15 = arith.constant 0 : index
    %c0_16 = arith.constant 0 : index
    %15 = vector.load %arg2[%c3, %c0_15, %c0_16] : memref<9x128x128xf32, #tpu.memory_space<vmem>>, vector<1x128x128xf32>
    %16 = vector.shape_cast %15 : vector<1x128x128xf32> to vector<128x128xf32>
    %cst_17 = arith.constant dense<0.000000e+00> : vector<222x128xf32>
    %17 = tpu.matmul %14, %16, %cst_17 {dimension_numbers = #tpu.dot_dimension_numbers<[1], [0], [0], [1], [0, 0, 1, 1], [], []>} : vector<222x128xf32>, vector<128x128xf32>, vector<222x128xf32> -> vector<222x128xf32>
    %18 = arith.addf %13, %17 : vector<222x128xf32>
    %c17 = arith.constant 17 : index
    %c0_18 = arith.constant 0 : index
    %19 = vector.load %arg1[%c17, %c0_18] : memref<256x128xf32, #tpu.memory_space<vmem>>, vector<222x128xf32>
    %c4 = arith.constant 4 : index
    %c0_19 = arith.constant 0 : index
    %c0_20 = arith.constant 0 : index
    %20 = vector.load %arg2[%c4, %c0_19, %c0_20] : memref<9x128x128xf32, #tpu.memory_space<vmem>>, vector<1x128x128xf32>
    %21 = vector.shape_cast %20 : vector<1x128x128xf32> to vector<128x128xf32>
    %cst_21 = arith.constant dense<0.000000e+00> : vector<222x128xf32>
    %22 = tpu.matmul %19, %21, %cst_21 {dimension_numbers = #tpu.dot_dimension_numbers<[1], [0], [0], [1], [0, 0, 1, 1], [], []>} : vector<222x128xf32>, vector<128x128xf32>, vector<222x128xf32> -> vector<222x128xf32>
    %23 = arith.addf %18, %22 : vector<222x128xf32>
    %c18 = arith.constant 18 : index
    %c0_22 = arith.constant 0 : index
    %24 = vector.load %arg1[%c18, %c0_22] : memref<256x128xf32, #tpu.memory_space<vmem>>, vector<222x128xf32>
    %c5 = arith.constant 5 : index
    %c0_23 = arith.constant 0 : index
    %c0_24 = arith.constant 0 : index
    %25 = vector.load %arg2[%c5, %c0_23, %c0_24] : memref<9x128x128xf32, #tpu.memory_space<vmem>>, vector<1x128x128xf32>
    %26 = vector.shape_cast %25 : vector<1x128x128xf32> to vector<128x128xf32>
    %cst_25 = arith.constant dense<0.000000e+00> : vector<222x128xf32>
    %27 = tpu.matmul %24, %26, %cst_25 {dimension_numbers = #tpu.dot_dimension_numbers<[1], [0], [0], [1], [0, 0, 1, 1], [], []>} : vector<222x128xf32>, vector<128x128xf32>, vector<222x128xf32> -> vector<222x128xf32>
    %28 = arith.addf %23, %27 : vector<222x128xf32>
    %c32 = arith.constant 32 : index
    %c0_26 = arith.constant 0 : index
    %29 = vector.load %arg1[%c32, %c0_26] : memref<256x128xf32, #tpu.memory_space<vmem>>, vector<222x128xf32>
    %c6 = arith.constant 6 : index
    %c0_27 = arith.constant 0 : index
    %c0_28 = arith.constant 0 : index
    %30 = vector.load %arg2[%c6, %c0_27, %c0_28] : memref<9x128x128xf32, #tpu.memory_space<vmem>>, vector<1x128x128xf32>
    %31 = vector.shape_cast %30 : vector<1x128x128xf32> to vector<128x128xf32>
    %cst_29 = arith.constant dense<0.000000e+00> : vector<222x128xf32>
    %32 = tpu.matmul %29, %31, %cst_29 {dimension_numbers = #tpu.dot_dimension_numbers<[1], [0], [0], [1], [0, 0, 1, 1], [], []>} : vector<222x128xf32>, vector<128x128xf32>, vector<222x128xf32> -> vector<222x128xf32>
    %33 = arith.addf %28, %32 : vector<222x128xf32>
    %c33 = arith.constant 33 : index
    %c0_30 = arith.constant 0 : index
    %34 = vector.load %arg1[%c33, %c0_30] : memref<256x128xf32, #tpu.memory_space<vmem>>, vector<222x128xf32>
    %c7 = arith.constant 7 : index
    %c0_31 = arith.constant 0 : index
    %c0_32 = arith.constant 0 : index
    %35 = vector.load %arg2[%c7, %c0_31, %c0_32] : memref<9x128x128xf32, #tpu.memory_space<vmem>>, vector<1x128x128xf32>
    %36 = vector.shape_cast %35 : vector<1x128x128xf32> to vector<128x128xf32>
    %cst_33 = arith.constant dense<0.000000e+00> : vector<222x128xf32>
    %37 = tpu.matmul %34, %36, %cst_33 {dimension_numbers = #tpu.dot_dimension_numbers<[1], [0], [0], [1], [0, 0, 1, 1], [], []>} : vector<222x128xf32>, vector<128x128xf32>, vector<222x128xf32> -> vector<222x128xf32>
    %38 = arith.addf %33, %37 : vector<222x128xf32>
    %c34 = arith.constant 34 : index
    %c0_34 = arith.constant 0 : index
    %39 = vector.load %arg1[%c34, %c0_34] : memref<256x128xf32, #tpu.memory_space<vmem>>, vector<222x128xf32>
    %c8 = arith.constant 8 : index
    %c0_35 = arith.constant 0 : index
    %c0_36 = arith.constant 0 : index
    %40 = vector.load %arg2[%c8, %c0_35, %c0_36] : memref<9x128x128xf32, #tpu.memory_space<vmem>>, vector<1x128x128xf32>
    %41 = vector.shape_cast %40 : vector<1x128x128xf32> to vector<128x128xf32>
    %cst_37 = arith.constant dense<0.000000e+00> : vector<222x128xf32>
    %42 = tpu.matmul %39, %41, %cst_37 {dimension_numbers = #tpu.dot_dimension_numbers<[1], [0], [0], [1], [0, 0, 1, 1], [], []>} : vector<222x128xf32>, vector<128x128xf32>, vector<222x128xf32> -> vector<222x128xf32>
    %43 = arith.addf %38, %42 : vector<222x128xf32>
    %c0_38 = arith.constant 0 : index
    %c0_39 = arith.constant 0 : index
    %44 = vector.load %arg3[%c0_38, %c0_39] : memref<1x128xf32, #tpu.memory_space<vmem>>, vector<1x128xf32>
    %45 = vector.broadcast %44 : vector<1x128xf32> to vector<222x128xf32>
    %46 = arith.addf %43, %45 : vector<222x128xf32>
    %c0_40 = arith.constant 0 : index
    %c0_41 = arith.constant 0 : index
    %47 = vector.load %arg4[%c0_40, %c0_41] : memref<256x222xf32, #tpu.memory_space<vmem>>, vector<256x222xf32>
    %cst_42 = arith.constant dense<0.000000e+00> : vector<256x128xf32>
    %48 = tpu.matmul %47, %46, %cst_42 {dimension_numbers = #tpu.dot_dimension_numbers<[1], [0], [0], [1], [0, 0, 1, 1], [], []>} : vector<256x222xf32>, vector<222x128xf32>, vector<256x128xf32> -> vector<256x128xf32>
    %c0_43 = arith.constant 0 : index
    %c0_44 = arith.constant 0 : index
    %49 = vector.load %arg17[%c0_43, %c0_44] : memref<256x128xf32, #tpu.memory_space<vmem>>, vector<256x128xf32>
    tpu.vector_store %arg17[%c0_43, %c0_44], %48 {strides = array<i32>} : memref<256x128xf32, #tpu.memory_space<vmem>>, vector<256x128xf32>,
    %c0_45 = arith.constant 0 : index
    %c0_46 = arith.constant 0 : index
    %50 = vector.load %arg17[%c0_45, %c0_46] : memref<256x128xf32, #tpu.memory_space<vmem>>, vector<222x128xf32>
    %c0_47 = arith.constant 0 : index
    %c0_48 = arith.constant 0 : index
    %c0_49 = arith.constant 0 : index
    %51 = vector.load %arg5[%c0_47, %c0_48, %c0_49] : memref<9x128x128xf32, #tpu.memory_space<vmem>>, vector<1x128x128xf32>
    %52 = vector.shape_cast %51 : vector<1x128x128xf32> to vector<128x128xf32>
    %cst_50 = arith.constant dense<0.000000e+00> : vector<222x128xf32>
    %53 = tpu.matmul %50, %52, %cst_50 {dimension_numbers = #tpu.dot_dimension_numbers<[1], [0], [0], [1], [0, 0, 1, 1], [], []>} : vector<222x128xf32>, vector<128x128xf32>, vector<222x128xf32> -> vector<222x128xf32>
    %c1_51 = arith.constant 1 : index
    %c0_52 = arith.constant 0 : index
    %54 = vector.load %arg17[%c1_51, %c0_52] : memref<256x128xf32, #tpu.memory_space<vmem>>, vector<222x128xf32>
    %c1_53 = arith.constant 1 : index
    %c0_54 = arith.constant 0 : index
    %c0_55 = arith.constant 0 : index
    %55 = vector.load %arg5[%c1_53, %c0_54, %c0_55] : memref<9x128x128xf32, #tpu.memory_space<vmem>>, vector<1x128x128xf32>
    %56 = vector.shape_cast %55 : vector<1x128x128xf32> to vector<128x128xf32>
    %cst_56 = arith.constant dense<0.000000e+00> : vector<222x128xf32>
    %57 = tpu.matmul %54, %56, %cst_56 {dimension_numbers = #tpu.dot_dimension_numbers<[1], [0], [0], [1], [0, 0, 1, 1], [], []>} : vector<222x128xf32>, vector<128x128xf32>, vector<222x128xf32> -> vector<222x128xf32>
    %58 = arith.addf %53, %57 : vector<222x128xf32>
    %c2_57 = arith.constant 2 : index
    %c0_58 = arith.constant 0 : index
    %59 = vector.load %arg17[%c2_57, %c0_58] : memref<256x128xf32, #tpu.memory_space<vmem>>, vector<222x128xf32>
    %c2_59 = arith.constant 2 : index
    %c0_60 = arith.constant 0 : index
    %c0_61 = arith.constant 0 : index
    %60 = vector.load %arg5[%c2_59, %c0_60, %c0_61] : memref<9x128x128xf32, #tpu.memory_space<vmem>>, vector<1x128x128xf32>
    %61 = vector.shape_cast %60 : vector<1x128x128xf32> to vector<128x128xf32>
    %cst_62 = arith.constant dense<0.000000e+00> : vector<222x128xf32>
    %62 = tpu.matmul %59, %61, %cst_62 {dimension_numbers = #tpu.dot_dimension_numbers<[1], [0], [0], [1], [0, 0, 1, 1], [], []>} : vector<222x128xf32>, vector<128x128xf32>, vector<222x128xf32> -> vector<222x128xf32>
    %63 = arith.addf %58, %62 : vector<222x128xf32>
    %c16_63 = arith.constant 16 : index
    %c0_64 = arith.constant 0 : index
    %64 = vector.load %arg17[%c16_63, %c0_64] : memref<256x128xf32, #tpu.memory_space<vmem>>, vector<222x128xf32>
    %c3_65 = arith.constant 3 : index
    %c0_66 = arith.constant 0 : index
    %c0_67 = arith.constant 0 : index
    %65 = vector.load %arg5[%c3_65, %c0_66, %c0_67] : memref<9x128x128xf32, #tpu.memory_space<vmem>>, vector<1x128x128xf32>
    %66 = vector.shape_cast %65 : vector<1x128x128xf32> to vector<128x128xf32>
    %cst_68 = arith.constant dense<0.000000e+00> : vector<222x128xf32>
    %67 = tpu.matmul %64, %66, %cst_68 {dimension_numbers = #tpu.dot_dimension_numbers<[1], [0], [0], [1], [0, 0, 1, 1], [], []>} : vector<222x128xf32>, vector<128x128xf32>, vector<222x128xf32> -> vector<222x128xf32>
    %68 = arith.addf %63, %67 : vector<222x128xf32>
    %c17_69 = arith.constant 17 : index
    %c0_70 = arith.constant 0 : index
    %69 = vector.load %arg17[%c17_69, %c0_70] : memref<256x128xf32, #tpu.memory_space<vmem>>, vector<222x128xf32>
    %c4_71 = arith.constant 4 : index
    %c0_72 = arith.constant 0 : index
    %c0_73 = arith.constant 0 : index
    %70 = vector.load %arg5[%c4_71, %c0_72, %c0_73] : memref<9x128x128xf32, #tpu.memory_space<vmem>>, vector<1x128x128xf32>
    %71 = vector.shape_cast %70 : vector<1x128x128xf32> to vector<128x128xf32>
    %cst_74 = arith.constant dense<0.000000e+00> : vector<222x128xf32>
    %72 = tpu.matmul %69, %71, %cst_74 {dimension_numbers = #tpu.dot_dimension_numbers<[1], [0], [0], [1], [0, 0, 1, 1], [], []>} : vector<222x128xf32>, vector<128x128xf32>, vector<222x128xf32> -> vector<222x128xf32>
    %73 = arith.addf %68, %72 : vector<222x128xf32>
    %c18_75 = arith.constant 18 : index
    %c0_76 = arith.constant 0 : index
    %74 = vector.load %arg17[%c18_75, %c0_76] : memref<256x128xf32, #tpu.memory_space<vmem>>, vector<222x128xf32>
    %c5_77 = arith.constant 5 : index
    %c0_78 = arith.constant 0 : index
    %c0_79 = arith.constant 0 : index
    %75 = vector.load %arg5[%c5_77, %c0_78, %c0_79] : memref<9x128x128xf32, #tpu.memory_space<vmem>>, vector<1x128x128xf32>
    %76 = vector.shape_cast %75 : vector<1x128x128xf32> to vector<128x128xf32>
    %cst_80 = arith.constant dense<0.000000e+00> : vector<222x128xf32>
    %77 = tpu.matmul %74, %76, %cst_80 {dimension_numbers = #tpu.dot_dimension_numbers<[1], [0], [0], [1], [0, 0, 1, 1], [], []>} : vector<222x128xf32>, vector<128x128xf32>, vector<222x128xf32> -> vector<222x128xf32>
    %78 = arith.addf %73, %77 : vector<222x128xf32>
    %c32_81 = arith.constant 32 : index
    %c0_82 = arith.constant 0 : index
    %79 = vector.load %arg17[%c32_81, %c0_82] : memref<256x128xf32, #tpu.memory_space<vmem>>, vector<222x128xf32>
    %c6_83 = arith.constant 6 : index
    %c0_84 = arith.constant 0 : index
    %c0_85 = arith.constant 0 : index
    %80 = vector.load %arg5[%c6_83, %c0_84, %c0_85] : memref<9x128x128xf32, #tpu.memory_space<vmem>>, vector<1x128x128xf32>
    %81 = vector.shape_cast %80 : vector<1x128x128xf32> to vector<128x128xf32>
    %cst_86 = arith.constant dense<0.000000e+00> : vector<222x128xf32>
    %82 = tpu.matmul %79, %81, %cst_86 {dimension_numbers = #tpu.dot_dimension_numbers<[1], [0], [0], [1], [0, 0, 1, 1], [], []>} : vector<222x128xf32>, vector<128x128xf32>, vector<222x128xf32> -> vector<222x128xf32>
    %83 = arith.addf %78, %82 : vector<222x128xf32>
    %c33_87 = arith.constant 33 : index
    %c0_88 = arith.constant 0 : index
    %84 = vector.load %arg17[%c33_87, %c0_88] : memref<256x128xf32, #tpu.memory_space<vmem>>, vector<222x128xf32>
    %c7_89 = arith.constant 7 : index
    %c0_90 = arith.constant 0 : index
    %c0_91 = arith.constant 0 : index
    %85 = vector.load %arg5[%c7_89, %c0_90, %c0_91] : memref<9x128x128xf32, #tpu.memory_space<vmem>>, vector<1x128x128xf32>
    %86 = vector.shape_cast %85 : vector<1x128x128xf32> to vector<128x128xf32>
    %cst_92 = arith.constant dense<0.000000e+00> : vector<222x128xf32>
    %87 = tpu.matmul %84, %86, %cst_92 {dimension_numbers = #tpu.dot_dimension_numbers<[1], [0], [0], [1], [0, 0, 1, 1], [], []>} : vector<222x128xf32>, vector<128x128xf32>, vector<222x128xf32> -> vector<222x128xf32>
    %88 = arith.addf %83, %87 : vector<222x128xf32>
    %c34_93 = arith.constant 34 : index
    %c0_94 = arith.constant 0 : index
    %89 = vector.load %arg17[%c34_93, %c0_94] : memref<256x128xf32, #tpu.memory_space<vmem>>, vector<222x128xf32>
    %c8_95 = arith.constant 8 : index
    %c0_96 = arith.constant 0 : index
    %c0_97 = arith.constant 0 : index
    %90 = vector.load %arg5[%c8_95, %c0_96, %c0_97] : memref<9x128x128xf32, #tpu.memory_space<vmem>>, vector<1x128x128xf32>
    %91 = vector.shape_cast %90 : vector<1x128x128xf32> to vector<128x128xf32>
    %cst_98 = arith.constant dense<0.000000e+00> : vector<222x128xf32>
    %92 = tpu.matmul %89, %91, %cst_98 {dimension_numbers = #tpu.dot_dimension_numbers<[1], [0], [0], [1], [0, 0, 1, 1], [], []>} : vector<222x128xf32>, vector<128x128xf32>, vector<222x128xf32> -> vector<222x128xf32>
    %93 = arith.addf %88, %92 : vector<222x128xf32>
    %c0_99 = arith.constant 0 : index
    %c0_100 = arith.constant 0 : index
    %94 = vector.load %arg6[%c0_99, %c0_100] : memref<1x128xf32, #tpu.memory_space<vmem>>, vector<1x128xf32>
    %95 = vector.broadcast %94 : vector<1x128xf32> to vector<222x128xf32>
    %96 = arith.addf %93, %95 : vector<222x128xf32>
    %cst_101 = arith.constant 0.000000e+00 : f32
    %97 = vector.broadcast %cst_101 : f32 to vector<222x128xf32>
    %98 = arith.cmpf oge, %96, %97 : vector<222x128xf32>
    %cst_102 = arith.constant 0.00999999977 : f32
    %99 = vector.broadcast %cst_102 : f32 to vector<222x128xf32>
    %100 = arith.mulf %99, %96 : vector<222x128xf32>
    %101 = arith.select %98, %96, %100 : vector<222x128xi1>, vector<222x128xf32>
    %c0_103 = arith.constant 0 : index
    %c0_104 = arith.constant 0 : index
    %102 = vector.load %arg7[%c0_103, %c0_104] : memref<256x222xf32, #tpu.memory_space<vmem>>, vector<256x222xf32>
    %cst_105 = arith.constant dense<0.000000e+00> : vector<256x128xf32>
    %103 = tpu.matmul %102, %101, %cst_105 {dimension_numbers = #tpu.dot_dimension_numbers<[1], [0], [0], [1], [0, 0, 1, 1], [], []>} : vector<256x222xf32>, vector<222x128xf32>, vector<256x128xf32> -> vector<256x128xf32>
    %c0_106 = arith.constant 0 : index
    %c0_107 = arith.constant 0 : index
    %104 = vector.load %arg18[%c0_106, %c0_107] : memref<256x128xf32, #tpu.memory_space<vmem>>, vector<256x128xf32>
    tpu.vector_store %arg18[%c0_106, %c0_107], %103 {strides = array<i32>} : memref<256x128xf32, #tpu.memory_space<vmem>>, vector<256x128xf32>,
    %c0_108 = arith.constant 0 : index
    %c0_109 = arith.constant 0 : index
    %105 = vector.load %arg18[%c0_108, %c0_109] : memref<256x128xf32, #tpu.memory_space<vmem>>, vector<222x128xf32>
    %c0_110 = arith.constant 0 : index
    %c0_111 = arith.constant 0 : index
    %c0_112 = arith.constant 0 : index
    %106 = vector.load %arg8[%c0_110, %c0_111, %c0_112] : memref<9x128x128xf32, #tpu.memory_space<vmem>>, vector<1x128x128xf32>
    %107 = vector.shape_cast %106 : vector<1x128x128xf32> to vector<128x128xf32>
    %cst_113 = arith.constant dense<0.000000e+00> : vector<222x128xf32>
    %108 = tpu.matmul %105, %107, %cst_113 {dimension_numbers = #tpu.dot_dimension_numbers<[1], [0], [0], [1], [0, 0, 1, 1], [], []>} : vector<222x128xf32>, vector<128x128xf32>, vector<222x128xf32> -> vector<222x128xf32>
    %c1_114 = arith.constant 1 : index
    %c0_115 = arith.constant 0 : index
    %109 = vector.load %arg18[%c1_114, %c0_115] : memref<256x128xf32, #tpu.memory_space<vmem>>, vector<222x128xf32>
    %c1_116 = arith.constant 1 : index
    %c0_117 = arith.constant 0 : index
    %c0_118 = arith.constant 0 : index
    %110 = vector.load %arg8[%c1_116, %c0_117, %c0_118] : memref<9x128x128xf32, #tpu.memory_space<vmem>>, vector<1x128x128xf32>
    %111 = vector.shape_cast %110 : vector<1x128x128xf32> to vector<128x128xf32>
    %cst_119 = arith.constant dense<0.000000e+00> : vector<222x128xf32>
    %112 = tpu.matmul %109, %111, %cst_119 {dimension_numbers = #tpu.dot_dimension_numbers<[1], [0], [0], [1], [0, 0, 1, 1], [], []>} : vector<222x128xf32>, vector<128x128xf32>, vector<222x128xf32> -> vector<222x128xf32>
    %113 = arith.addf %108, %112 : vector<222x128xf32>
    %c2_120 = arith.constant 2 : index
    %c0_121 = arith.constant 0 : index
    %114 = vector.load %arg18[%c2_120, %c0_121] : memref<256x128xf32, #tpu.memory_space<vmem>>, vector<222x128xf32>
    %c2_122 = arith.constant 2 : index
    %c0_123 = arith.constant 0 : index
    %c0_124 = arith.constant 0 : index
    %115 = vector.load %arg8[%c2_122, %c0_123, %c0_124] : memref<9x128x128xf32, #tpu.memory_space<vmem>>, vector<1x128x128xf32>
    %116 = vector.shape_cast %115 : vector<1x128x128xf32> to vector<128x128xf32>
    %cst_125 = arith.constant dense<0.000000e+00> : vector<222x128xf32>
    %117 = tpu.matmul %114, %116, %cst_125 {dimension_numbers = #tpu.dot_dimension_numbers<[1], [0], [0], [1], [0, 0, 1, 1], [], []>} : vector<222x128xf32>, vector<128x128xf32>, vector<222x128xf32> -> vector<222x128xf32>
    %118 = arith.addf %113, %117 : vector<222x128xf32>
    %c16_126 = arith.constant 16 : index
    %c0_127 = arith.constant 0 : index
    %119 = vector.load %arg18[%c16_126, %c0_127] : memref<256x128xf32, #tpu.memory_space<vmem>>, vector<222x128xf32>
    %c3_128 = arith.constant 3 : index
    %c0_129 = arith.constant 0 : index
    %c0_130 = arith.constant 0 : index
    %120 = vector.load %arg8[%c3_128, %c0_129, %c0_130] : memref<9x128x128xf32, #tpu.memory_space<vmem>>, vector<1x128x128xf32>
    %121 = vector.shape_cast %120 : vector<1x128x128xf32> to vector<128x128xf32>
    %cst_131 = arith.constant dense<0.000000e+00> : vector<222x128xf32>
    %122 = tpu.matmul %119, %121, %cst_131 {dimension_numbers = #tpu.dot_dimension_numbers<[1], [0], [0], [1], [0, 0, 1, 1], [], []>} : vector<222x128xf32>, vector<128x128xf32>, vector<222x128xf32> -> vector<222x128xf32>
    %123 = arith.addf %118, %122 : vector<222x128xf32>
    %c17_132 = arith.constant 17 : index
    %c0_133 = arith.constant 0 : index
    %124 = vector.load %arg18[%c17_132, %c0_133] : memref<256x128xf32, #tpu.memory_space<vmem>>, vector<222x128xf32>
    %c4_134 = arith.constant 4 : index
    %c0_135 = arith.constant 0 : index
    %c0_136 = arith.constant 0 : index
    %125 = vector.load %arg8[%c4_134, %c0_135, %c0_136] : memref<9x128x128xf32, #tpu.memory_space<vmem>>, vector<1x128x128xf32>
    %126 = vector.shape_cast %125 : vector<1x128x128xf32> to vector<128x128xf32>
    %cst_137 = arith.constant dense<0.000000e+00> : vector<222x128xf32>
    %127 = tpu.matmul %124, %126, %cst_137 {dimension_numbers = #tpu.dot_dimension_numbers<[1], [0], [0], [1], [0, 0, 1, 1], [], []>} : vector<222x128xf32>, vector<128x128xf32>, vector<222x128xf32> -> vector<222x128xf32>
    %128 = arith.addf %123, %127 : vector<222x128xf32>
    %c18_138 = arith.constant 18 : index
    %c0_139 = arith.constant 0 : index
    %129 = vector.load %arg18[%c18_138, %c0_139] : memref<256x128xf32, #tpu.memory_space<vmem>>, vector<222x128xf32>
    %c5_140 = arith.constant 5 : index
    %c0_141 = arith.constant 0 : index
    %c0_142 = arith.constant 0 : index
    %130 = vector.load %arg8[%c5_140, %c0_141, %c0_142] : memref<9x128x128xf32, #tpu.memory_space<vmem>>, vector<1x128x128xf32>
    %131 = vector.shape_cast %130 : vector<1x128x128xf32> to vector<128x128xf32>
    %cst_143 = arith.constant dense<0.000000e+00> : vector<222x128xf32>
    %132 = tpu.matmul %129, %131, %cst_143 {dimension_numbers = #tpu.dot_dimension_numbers<[1], [0], [0], [1], [0, 0, 1, 1], [], []>} : vector<222x128xf32>, vector<128x128xf32>, vector<222x128xf32> -> vector<222x128xf32>
    %133 = arith.addf %128, %132 : vector<222x128xf32>
    %c32_144 = arith.constant 32 : index
    %c0_145 = arith.constant 0 : index
    %134 = vector.load %arg18[%c32_144, %c0_145] : memref<256x128xf32, #tpu.memory_space<vmem>>, vector<222x128xf32>
    %c6_146 = arith.constant 6 : index
    %c0_147 = arith.constant 0 : index
    %c0_148 = arith.constant 0 : index
    %135 = vector.load %arg8[%c6_146, %c0_147, %c0_148] : memref<9x128x128xf32, #tpu.memory_space<vmem>>, vector<1x128x128xf32>
    %136 = vector.shape_cast %135 : vector<1x128x128xf32> to vector<128x128xf32>
    %cst_149 = arith.constant dense<0.000000e+00> : vector<222x128xf32>
    %137 = tpu.matmul %134, %136, %cst_149 {dimension_numbers = #tpu.dot_dimension_numbers<[1], [0], [0], [1], [0, 0, 1, 1], [], []>} : vector<222x128xf32>, vector<128x128xf32>, vector<222x128xf32> -> vector<222x128xf32>
    %138 = arith.addf %133, %137 : vector<222x128xf32>
    %c33_150 = arith.constant 33 : index
    %c0_151 = arith.constant 0 : index
    %139 = vector.load %arg18[%c33_150, %c0_151] : memref<256x128xf32, #tpu.memory_space<vmem>>, vector<222x128xf32>
    %c7_152 = arith.constant 7 : index
    %c0_153 = arith.constant 0 : index
    %c0_154 = arith.constant 0 : index
    %140 = vector.load %arg8[%c7_152, %c0_153, %c0_154] : memref<9x128x128xf32, #tpu.memory_space<vmem>>, vector<1x128x128xf32>
    %141 = vector.shape_cast %140 : vector<1x128x128xf32> to vector<128x128xf32>
    %cst_155 = arith.constant dense<0.000000e+00> : vector<222x128xf32>
    %142 = tpu.matmul %139, %141, %cst_155 {dimension_numbers = #tpu.dot_dimension_numbers<[1], [0], [0], [1], [0, 0, 1, 1], [], []>} : vector<222x128xf32>, vector<128x128xf32>, vector<222x128xf32> -> vector<222x128xf32>
    %143 = arith.addf %138, %142 : vector<222x128xf32>
    %c34_156 = arith.constant 34 : index
    %c0_157 = arith.constant 0 : index
    %144 = vector.load %arg18[%c34_156, %c0_157] : memref<256x128xf32, #tpu.memory_space<vmem>>, vector<222x128xf32>
    %c8_158 = arith.constant 8 : index
    %c0_159 = arith.constant 0 : index
    %c0_160 = arith.constant 0 : index
    %145 = vector.load %arg8[%c8_158, %c0_159, %c0_160] : memref<9x128x128xf32, #tpu.memory_space<vmem>>, vector<1x128x128xf32>
    %146 = vector.shape_cast %145 : vector<1x128x128xf32> to vector<128x128xf32>
    %cst_161 = arith.constant dense<0.000000e+00> : vector<222x128xf32>
    %147 = tpu.matmul %144, %146, %cst_161 {dimension_numbers = #tpu.dot_dimension_numbers<[1], [0], [0], [1], [0, 0, 1, 1], [], []>} : vector<222x128xf32>, vector<128x128xf32>, vector<222x128xf32> -> vector<222x128xf32>
    %148 = arith.addf %143, %147 : vector<222x128xf32>
    %c0_162 = arith.constant 0 : index
    %c0_163 = arith.constant 0 : index
    %149 = vector.load %arg9[%c0_162, %c0_163] : memref<1x128xf32, #tpu.memory_space<vmem>>, vector<1x128xf32>
    %150 = vector.broadcast %149 : vector<1x128xf32> to vector<222x128xf32>
    %151 = arith.addf %148, %150 : vector<222x128xf32>
    %cst_164 = arith.constant 0.000000e+00 : f32
    %152 = vector.broadcast %cst_164 : f32 to vector<222x128xf32>
    %153 = arith.cmpf oge, %151, %152 : vector<222x128xf32>
    %cst_165 = arith.constant 0.00999999977 : f32
    %154 = vector.broadcast %cst_165 : f32 to vector<222x128xf32>
    %155 = arith.mulf %154, %151 : vector<222x128xf32>
    %156 = arith.select %153, %151, %155 : vector<222x128xi1>, vector<222x128xf32>
    %c0_166 = arith.constant 0 : index
    %c0_167 = arith.constant 0 : index
    %157 = vector.load %arg19[%c0_166, %c0_167] : memref<222x128xf32, #tpu.memory_space<vmem>>, vector<222x128xf32>
    tpu.vector_store %arg19[%c0_166, %c0_167], %156 {strides = array<i32>} : memref<222x128xf32, #tpu.memory_space<vmem>>, vector<222x128xf32>,
    %c0_168 = arith.constant 0 : index
    %c0_169 = arith.constant 0 : index
    %158 = vector.load %arg19[%c0_168, %c0_169] : memref<222x128xf32, #tpu.memory_space<vmem>>, vector<205x128xf32>
    %c1_170 = arith.constant 1 : index
    %c0_171 = arith.constant 0 : index
    %159 = vector.load %arg19[%c1_170, %c0_171] : memref<222x128xf32, #tpu.memory_space<vmem>>, vector<205x128xf32>
    %160 = arith.maximumf %158, %159 : vector<205x128xf32>
    %c16_172 = arith.constant 16 : index
    %c0_173 = arith.constant 0 : index
    %161 = vector.load %arg19[%c16_172, %c0_173] : memref<222x128xf32, #tpu.memory_space<vmem>>, vector<205x128xf32>
    %c17_174 = arith.constant 17 : index
    %c0_175 = arith.constant 0 : index
    %162 = vector.load %arg19[%c17_174, %c0_175] : memref<222x128xf32, #tpu.memory_space<vmem>>, vector<205x128xf32>
    %163 = arith.maximumf %161, %162 : vector<205x128xf32>
    %164 = arith.maximumf %160, %163 : vector<205x128xf32>
    %c0_176 = arith.constant 0 : index
    %c0_177 = arith.constant 0 : index
    %165 = vector.load %arg10[%c0_176, %c0_177] : memref<81x205xf32, #tpu.memory_space<vmem>>, vector<81x205xf32>
    %cst_178 = arith.constant dense<0.000000e+00> : vector<81x128xf32>
    %166 = tpu.matmul %165, %164, %cst_178 {dimension_numbers = #tpu.dot_dimension_numbers<[1], [0], [0], [1], [0, 0, 1, 1], [], []>} : vector<81x205xf32>, vector<205x128xf32>, vector<81x128xf32> -> vector<81x128xf32>
    %c0_179 = arith.constant 0 : index
    %c0_180 = arith.constant 0 : index
    %167 = vector.load %arg20[%c0_179, %c0_180] : memref<81x128xf32, #tpu.memory_space<vmem>>, vector<81x128xf32>
    tpu.vector_store %arg20[%c0_179, %c0_180], %166 {strides = array<i32>} : memref<81x128xf32, #tpu.memory_space<vmem>>, vector<81x128xf32>,
    %c0_181 = arith.constant 0 : index
    %c0_182 = arith.constant 0 : index
    %168 = vector.load %arg20[%c0_181, %c0_182] : memref<81x128xf32, #tpu.memory_space<vmem>>, vector<61x128xf32>
    %c0_183 = arith.constant 0 : index
    %c0_184 = arith.constant 0 : index
    %c0_185 = arith.constant 0 : index
    %169 = vector.load %arg11[%c0_183, %c0_184, %c0_185] : memref<9x128x128xf32, #tpu.memory_space<vmem>>, vector<1x128x128xf32>
    %170 = vector.shape_cast %169 : vector<1x128x128xf32> to vector<128x128xf32>
    %cst_186 = arith.constant dense<0.000000e+00> : vector<61x128xf32>
    %171 = tpu.matmul %168, %170, %cst_186 {dimension_numbers = #tpu.dot_dimension_numbers<[1], [0], [0], [1], [0, 0, 1, 1], [], []>} : vector<61x128xf32>, vector<128x128xf32>, vector<61x128xf32> -> vector<61x128xf32>
    %c1_187 = arith.constant 1 : index
    %c0_188 = arith.constant 0 : index
    %172 = vector.load %arg20[%c1_187, %c0_188] : memref<81x128xf32, #tpu.memory_space<vmem>>, vector<61x128xf32>
    %c1_189 = arith.constant 1 : index
    %c0_190 = arith.constant 0 : index
    %c0_191 = arith.constant 0 : index
    %173 = vector.load %arg11[%c1_189, %c0_190, %c0_191] : memref<9x128x128xf32, #tpu.memory_space<vmem>>, vector<1x128x128xf32>
    %174 = vector.shape_cast %173 : vector<1x128x128xf32> to vector<128x128xf32>
    %cst_192 = arith.constant dense<0.000000e+00> : vector<61x128xf32>
    %175 = tpu.matmul %172, %174, %cst_192 {dimension_numbers = #tpu.dot_dimension_numbers<[1], [0], [0], [1], [0, 0, 1, 1], [], []>} : vector<61x128xf32>, vector<128x128xf32>, vector<61x128xf32> -> vector<61x128xf32>
    %176 = arith.addf %171, %175 : vector<61x128xf32>
    %c2_193 = arith.constant 2 : index
    %c0_194 = arith.constant 0 : index
    %177 = vector.load %arg20[%c2_193, %c0_194] : memref<81x128xf32, #tpu.memory_space<vmem>>, vector<61x128xf32>
    %c2_195 = arith.constant 2 : index
    %c0_196 = arith.constant 0 : index
    %c0_197 = arith.constant 0 : index
    %178 = vector.load %arg11[%c2_195, %c0_196, %c0_197] : memref<9x128x128xf32, #tpu.memory_space<vmem>>, vector<1x128x128xf32>
    %179 = vector.shape_cast %178 : vector<1x128x128xf32> to vector<128x128xf32>
    %cst_198 = arith.constant dense<0.000000e+00> : vector<61x128xf32>
    %180 = tpu.matmul %177, %179, %cst_198 {dimension_numbers = #tpu.dot_dimension_numbers<[1], [0], [0], [1], [0, 0, 1, 1], [], []>} : vector<61x128xf32>, vector<128x128xf32>, vector<61x128xf32> -> vector<61x128xf32>
    %181 = arith.addf %176, %180 : vector<61x128xf32>
    %c9 = arith.constant 9 : index
    %c0_199 = arith.constant 0 : index
    %182 = vector.load %arg20[%c9, %c0_199] : memref<81x128xf32, #tpu.memory_space<vmem>>, vector<61x128xf32>
    %c3_200 = arith.constant 3 : index
    %c0_201 = arith.constant 0 : index
    %c0_202 = arith.constant 0 : index
    %183 = vector.load %arg11[%c3_200, %c0_201, %c0_202] : memref<9x128x128xf32, #tpu.memory_space<vmem>>, vector<1x128x128xf32>
    %184 = vector.shape_cast %183 : vector<1x128x128xf32> to vector<128x128xf32>
    %cst_203 = arith.constant dense<0.000000e+00> : vector<61x128xf32>
    %185 = tpu.matmul %182, %184, %cst_203 {dimension_numbers = #tpu.dot_dimension_numbers<[1], [0], [0], [1], [0, 0, 1, 1], [], []>} : vector<61x128xf32>, vector<128x128xf32>, vector<61x128xf32> -> vector<61x128xf32>
    %186 = arith.addf %181, %185 : vector<61x128xf32>
    %c10 = arith.constant 10 : index
    %c0_204 = arith.constant 0 : index
    %187 = vector.load %arg20[%c10, %c0_204] : memref<81x128xf32, #tpu.memory_space<vmem>>, vector<61x128xf32>
    %c4_205 = arith.constant 4 : index
    %c0_206 = arith.constant 0 : index
    %c0_207 = arith.constant 0 : index
    %188 = vector.load %arg11[%c4_205, %c0_206, %c0_207] : memref<9x128x128xf32, #tpu.memory_space<vmem>>, vector<1x128x128xf32>
    %189 = vector.shape_cast %188 : vector<1x128x128xf32> to vector<128x128xf32>
    %cst_208 = arith.constant dense<0.000000e+00> : vector<61x128xf32>
    %190 = tpu.matmul %187, %189, %cst_208 {dimension_numbers = #tpu.dot_dimension_numbers<[1], [0], [0], [1], [0, 0, 1, 1], [], []>} : vector<61x128xf32>, vector<128x128xf32>, vector<61x128xf32> -> vector<61x128xf32>
    %191 = arith.addf %186, %190 : vector<61x128xf32>
    %c11 = arith.constant 11 : index
    %c0_209 = arith.constant 0 : index
    %192 = vector.load %arg20[%c11, %c0_209] : memref<81x128xf32, #tpu.memory_space<vmem>>, vector<61x128xf32>
    %c5_210 = arith.constant 5 : index
    %c0_211 = arith.constant 0 : index
    %c0_212 = arith.constant 0 : index
    %193 = vector.load %arg11[%c5_210, %c0_211, %c0_212] : memref<9x128x128xf32, #tpu.memory_space<vmem>>, vector<1x128x128xf32>
    %194 = vector.shape_cast %193 : vector<1x128x128xf32> to vector<128x128xf32>
    %cst_213 = arith.constant dense<0.000000e+00> : vector<61x128xf32>
    %195 = tpu.matmul %192, %194, %cst_213 {dimension_numbers = #tpu.dot_dimension_numbers<[1], [0], [0], [1], [0, 0, 1, 1], [], []>} : vector<61x128xf32>, vector<128x128xf32>, vector<61x128xf32> -> vector<61x128xf32>
    %196 = arith.addf %191, %195 : vector<61x128xf32>
    %c18_214 = arith.constant 18 : index
    %c0_215 = arith.constant 0 : index
    %197 = vector.load %arg20[%c18_214, %c0_215] : memref<81x128xf32, #tpu.memory_space<vmem>>, vector<61x128xf32>
    %c6_216 = arith.constant 6 : index
    %c0_217 = arith.constant 0 : index
    %c0_218 = arith.constant 0 : index
    %198 = vector.load %arg11[%c6_216, %c0_217, %c0_218] : memref<9x128x128xf32, #tpu.memory_space<vmem>>, vector<1x128x128xf32>
    %199 = vector.shape_cast %198 : vector<1x128x128xf32> to vector<128x128xf32>
    %cst_219 = arith.constant dense<0.000000e+00> : vector<61x128xf32>
    %200 = tpu.matmul %197, %199, %cst_219 {dimension_numbers = #tpu.dot_dimension_numbers<[1], [0], [0], [1], [0, 0, 1, 1], [], []>} : vector<61x128xf32>, vector<128x128xf32>, vector<61x128xf32> -> vector<61x128xf32>
    %201 = arith.addf %196, %200 : vector<61x128xf32>
    %c19 = arith.constant 19 : index
    %c0_220 = arith.constant 0 : index
    %202 = vector.load %arg20[%c19, %c0_220] : memref<81x128xf32, #tpu.memory_space<vmem>>, vector<61x128xf32>
    %c7_221 = arith.constant 7 : index
    %c0_222 = arith.constant 0 : index
    %c0_223 = arith.constant 0 : index
    %203 = vector.load %arg11[%c7_221, %c0_222, %c0_223] : memref<9x128x128xf32, #tpu.memory_space<vmem>>, vector<1x128x128xf32>
    %204 = vector.shape_cast %203 : vector<1x128x128xf32> to vector<128x128xf32>
    %cst_224 = arith.constant dense<0.000000e+00> : vector<61x128xf32>
    %205 = tpu.matmul %202, %204, %cst_224 {dimension_numbers = #tpu.dot_dimension_numbers<[1], [0], [0], [1], [0, 0, 1, 1], [], []>} : vector<61x128xf32>, vector<128x128xf32>, vector<61x128xf32> -> vector<61x128xf32>
    %206 = arith.addf %201, %205 : vector<61x128xf32>
    %c20 = arith.constant 20 : index
    %c0_225 = arith.constant 0 : index
    %207 = vector.load %arg20[%c20, %c0_225] : memref<81x128xf32, #tpu.memory_space<vmem>>, vector<61x128xf32>
    %c8_226 = arith.constant 8 : index
    %c0_227 = arith.constant 0 : index
    %c0_228 = arith.constant 0 : index
    %208 = vector.load %arg11[%c8_226, %c0_227, %c0_228] : memref<9x128x128xf32, #tpu.memory_space<vmem>>, vector<1x128x128xf32>
    %209 = vector.shape_cast %208 : vector<1x128x128xf32> to vector<128x128xf32>
    %cst_229 = arith.constant dense<0.000000e+00> : vector<61x128xf32>
    %210 = tpu.matmul %207, %209, %cst_229 {dimension_numbers = #tpu.dot_dimension_numbers<[1], [0], [0], [1], [0, 0, 1, 1], [], []>} : vector<61x128xf32>, vector<128x128xf32>, vector<61x128xf32> -> vector<61x128xf32>
    %211 = arith.addf %206, %210 : vector<61x128xf32>
    %c0_230 = arith.constant 0 : index
    %c0_231 = arith.constant 0 : index
    %212 = vector.load %arg12[%c0_230, %c0_231] : memref<1x128xf32, #tpu.memory_space<vmem>>, vector<1x128xf32>
    %213 = vector.broadcast %212 : vector<1x128xf32> to vector<61x128xf32>
    %214 = arith.addf %211, %213 : vector<61x128xf32>
    %cst_232 = arith.constant 0.000000e+00 : f32
    %215 = vector.broadcast %cst_232 : f32 to vector<61x128xf32>
    %216 = arith.cmpf oge, %214, %215 : vector<61x128xf32>
    %cst_233 = arith.constant 0.00999999977 : f32
    %217 = vector.broadcast %cst_233 : f32 to vector<61x128xf32>
    %218 = arith.mulf %217, %214 : vector<61x128xf32>
    %219 = arith.select %216, %214, %218 : vector<61x128xi1>, vector<61x128xf32>
    %c0_234 = arith.constant 0 : index
    %c0_235 = arith.constant 0 : index
    %220 = vector.load %arg13[%c0_234, %c0_235] : memref<1x61xf32, #tpu.memory_space<vmem>>, vector<1x61xf32>
    %cst_236 = arith.constant dense<0.000000e+00> : vector<1x128xf32>
    %221 = tpu.matmul %220, %219, %cst_236 {dimension_numbers = #tpu.dot_dimension_numbers<[1], [0], [0], [1], [0, 0, 1, 1], [], []>} : vector<1x61xf32>, vector<61x128xf32>, vector<1x128xf32> -> vector<1x128xf32>
    %c0_237 = arith.constant 0 : index
    %c0_238 = arith.constant 0 : index
    %222 = vector.load %arg14[%c0_237, %c0_238] : memref<128x128xf32, #tpu.memory_space<vmem>>, vector<128x128xf32>
    %cst_239 = arith.constant dense<0.000000e+00> : vector<1x128xf32>
    %223 = tpu.matmul %221, %222, %cst_239 {dimension_numbers = #tpu.dot_dimension_numbers<[1], [0], [0], [1], [0, 0, 1, 1], [], []>} : vector<1x128xf32>, vector<128x128xf32>, vector<1x128xf32> -> vector<1x128xf32>
    %c0_240 = arith.constant 0 : index
    %c0_241 = arith.constant 0 : index
    %224 = vector.load %arg15[%c0_240, %c0_241] : memref<1x128xf32, #tpu.memory_space<vmem>>, vector<1x128xf32>
    %225 = arith.addf %223, %224 : vector<1x128xf32>
    %c0_242 = arith.constant 0 : index
    %c0_243 = arith.constant 0 : index
    %226 = vector.load %arg16[%c0_242, %c0_243] : memref<1x128xf32, #tpu.memory_space<vmem>>, vector<1x128xf32>
    tpu.vector_store %arg16[%c0_242, %c0_243], %225 {strides = array<i32>} : memref<1x128xf32, #tpu.memory_space<vmem>>, vector<1x128xf32>,
    return
  }
  func.func @transform_0(%arg0: i32) -> (i32, i32) {
    %c0_i32 = arith.constant 0 : i32
    %c0_i32_0 = arith.constant 0 : i32
    %c0_i32_1 = arith.constant 0 : i32
    return %c0_i32, %c0_i32_0 : i32, i32
  }
  func.func @transform_1(%arg0: i32) -> (i32, i32, i32) {
    %c0_i32 = arith.constant 0 : i32
    %c0_i32_0 = arith.constant 0 : i32
    %c0_i32_1 = arith.constant 0 : i32
    %c0_i32_2 = arith.constant 0 : i32
    return %c0_i32, %c0_i32_0, %c0_i32_1 : i32, i32, i32
  }
  func.func @transform_2(%arg0: i32) -> (i32, i32) {
    %c0_i32 = arith.constant 0 : i32
    %c0_i32_0 = arith.constant 0 : i32
    %c0_i32_1 = arith.constant 0 : i32
    return %c0_i32, %c0_i32_0 : i32, i32
  }
  func.func @transform_3(%arg0: i32) -> (i32, i32) {
    %c0_i32 = arith.constant 0 : i32
    %c0_i32_0 = arith.constant 0 : i32
    %c0_i32_1 = arith.constant 0 : i32
    return %c0_i32, %c0_i32_0 : i32, i32
  }
  func.func @transform_4(%arg0: i32) -> (i32, i32, i32) {
    %c0_i32 = arith.constant 0 : i32
    %c0_i32_0 = arith.constant 0 : i32
    %c0_i32_1 = arith.constant 0 : i32
    %c0_i32_2 = arith.constant 0 : i32
    return %c0_i32, %c0_i32_0, %c0_i32_1 : i32, i32, i32
  }
  func.func @transform_5(%arg0: i32) -> (i32, i32) {
    %c0_i32 = arith.constant 0 : i32
    %c0_i32_0 = arith.constant 0 : i32
    %c0_i32_1 = arith.constant 0 : i32
    return %c0_i32, %c0_i32_0 : i32, i32
  }
  func.func @transform_6(%arg0: i32) -> (i32, i32) {
    %c0_i32 = arith.constant 0 : i32
    %c0_i32_0 = arith.constant 0 : i32
    %c0_i32_1 = arith.constant 0 : i32
    return %c0_i32, %c0_i32_0 : i32, i32
  }
  func.func @transform_7(%arg0: i32) -> (i32, i32, i32) {
    %c0_i32 = arith.constant 0 : i32
    %c0_i32_0 = arith.constant 0 : i32
    %c0_i32_1 = arith.constant 0 : i32
    %c0_i32_2 = arith.constant 0 : i32
    return %c0_i32, %c0_i32_0, %c0_i32_1 : i32, i32, i32
  }
  func.func @transform_8(%arg0: i32) -> (i32, i32) {
    %c0_i32 = arith.constant 0 : i32
    %c0_i32_0 = arith.constant 0 : i32
    %c0_i32_1 = arith.constant 0 : i32
    return %c0_i32, %c0_i32_0 : i32, i32
  }
  func.func @transform_9(%arg0: i32) -> (i32, i32) {
    %c0_i32 = arith.constant 0 : i32
    %c0_i32_0 = arith.constant 0 : i32
    %c0_i32_1 = arith.constant 0 : i32
    return %c0_i32, %c0_i32_0 : i32, i32
  }
  func.func @transform_10(%arg0: i32) -> (i32, i32, i32) {
    %c0_i32 = arith.constant 0 : i32
    %c0_i32_0 = arith.constant 0 : i32
    %c0_i32_1 = arith.constant 0 : i32
    %c0_i32_2 = arith.constant 0 : i32
    return %c0_i32, %c0_i32_0, %c0_i32_1 : i32, i32, i32
  }
  func.func @transform_11(%arg0: i32) -> (i32, i32) {
    %c0_i32 = arith.constant 0 : i32
    %c0_i32_0 = arith.constant 0 : i32
    %c0_i32_1 = arith.constant 0 : i32
    return %c0_i32, %c0_i32_0 : i32, i32
  }
  func.func @transform_12(%arg0: i32) -> (i32, i32) {
    %c0_i32 = arith.constant 0 : i32
    %c0_i32_0 = arith.constant 0 : i32
    %c0_i32_1 = arith.constant 0 : i32
    return %c0_i32, %c0_i32_0 : i32, i32
  }
  func.func @transform_13(%arg0: i32) -> (i32, i32) {
    %c0_i32 = arith.constant 0 : i32
    %c0_i32_0 = arith.constant 0 : i32
    %c0_i32_1 = arith.constant 0 : i32
    return %c0_i32, %c0_i32_0 : i32, i32
  }
  func.func @transform_14(%arg0: i32) -> (i32, i32) {
    %c0_i32 = arith.constant 0 : i32
    %c0_i32_0 = arith.constant 0 : i32
    %c0_i32_1 = arith.constant 0 : i32
    return %c0_i32, %c0_i32_0 : i32, i32
  }
  func.func @transform_15(%arg0: i32) -> (i32, i32) {
    %c0_i32 = arith.constant 0 : i32
    %c0_i32_0 = arith.constant 0 : i32
    %c0_i32_1 = arith.constant 0 : i32
    return %c0_i32, %c0_i32_0 : i32, i32
  }
}

</mosaic_0001>

<llo_original>
// kernel: tpu_custom_call.1
$region0: #{tpu_custom_call.1}
  #allocation0 [shape = 'u32[]', space=smem, size = 0x4, offset = 0x4, fixed_abs, tag = 'smem constant byte address 0x4 - core index']
  #allocation1 [shape = 'u32[144,128]{1,0:T(1,128)}', space=vmem, size = 0x12000, scoped, tag = 'internal scratch']
  #allocation2 [shape = 'f32[256,128]{1,0:T(8,128)}', space=vmem, size = 0x20000, scoped, tag = 'scratch operand']
  #allocation3 [shape = 'f32[256,128]{1,0:T(8,128)}', space=vmem, size = 0x20000, scoped, tag = 'scratch operand']
  #allocation4 [shape = 'f32[222,128]{1,0:T(8,128)}', space=vmem, size = 0x1c000, scoped, tag = 'scratch operand']
  #allocation5 [shape = 'f32[81,128]{1,0:T(8,128)}', space=vmem, size = 0xb000, scoped, tag = 'scratch operand']
  %s0 = inlined_call_operand.vmem [shape: f32[256,128], index: 0, kind: input, shape index: {}]
  %s1 = inlined_call_operand.vmem [shape: f32[9,128,128], index: 1, kind: input, shape index: {}]
  %s2 = inlined_call_operand.vmem [shape: f32[1,128], index: 2, kind: input, shape index: {}]
  %s3 = inlined_call_operand.vmem [shape: f32[256,222], index: 3, kind: input, shape index: {}]
  %s4 = inlined_call_operand.hbm [shape: f32[9,128,128], index: 4, kind: input, shape index: {}]
  %s5 = inlined_call_operand.vmem [shape: f32[1,128], index: 5, kind: input, shape index: {}]
  %s6 = inlined_call_operand.vmem [shape: f32[256,222], index: 6, kind: input, shape index: {}]
  %s7 = inlined_call_operand.hbm [shape: f32[9,128,128], index: 7, kind: input, shape index: {}]
  %s8 = inlined_call_operand.vmem [shape: f32[1,128], index: 8, kind: input, shape index: {}]
  %s9 = inlined_call_operand.hbm [shape: f32[81,205], index: 9, kind: input, shape index: {}]
  %s10 = inlined_call_operand.hbm [shape: f32[9,128,128], index: 10, kind: input, shape index: {}]
  %s11 = inlined_call_operand.vmem [shape: f32[1,128], index: 11, kind: input, shape index: {}]
  %s12 = inlined_call_operand.vmem [shape: f32[1,61], index: 12, kind: input, shape index: {}]
  %s13 = inlined_call_operand.hbm [shape: f32[128,128], index: 13, kind: input, shape index: {}]
  %s14 = inlined_call_operand.vmem [shape: f32[1,128], index: 14, kind: input, shape index: {}]
  %s15 = inlined_call_operand.hbm [shape: f32[1,128], index: 15, kind: output, shape index: {}]
  %s16 = sld [smem:[#allocation0]]
  $region90: #{tpu_custom_call.1} parent=0
    _
  %s18 = ssub.s32 1, %s16
  %s19 = scalar_select 0, %s18, %s16
  $region1: #{tpu_custom_call.1} parent=0
    #allocation6 [shape = 'u8[589824]{0}', space=vmem, size = 0x90000, scoped, tag = 'input window, operand 4, single buffered']
    #allocation7 [shape = 's32[1]{0}', space=sflag, size = 0x4, scoped, tag = 'scoped memory for tpu_custom_call.1']
    #allocation8 [shape = 's32[1]{0}', space=sflag, size = 0x4, scoped, tag = 'scoped memory for tpu_custom_call.1']
    #allocation9 [shape = 'u8[589824]{0}', space=vmem, size = 0x90000, scoped, tag = 'input window, operand 7, single buffered']
    #allocation10 [shape = 's32[1]{0}', space=sflag, size = 0x4, scoped, tag = 'scoped memory for tpu_custom_call.1']
    #allocation11 [shape = 'u8[90112]{0}', space=vmem, size = 0x16000, scoped, tag = 'input window, operand 9, single buffered']
    #allocation12 [shape = 'u8[589824]{0}', space=vmem, size = 0x90000, scoped, tag = 'input window, operand 10, single buffered']
    #allocation13 [shape = 's32[1]{0}', space=sflag, size = 0x4, scoped, tag = 'scoped memory for tpu_custom_call.1']
    #allocation14 [shape = 'u8[65536]{0}', space=vmem, size = 0x10000, scoped, tag = 'input window, operand 13, single buffered']
    #allocation15 [shape = 'u8[512]{0}', space=vmem, size = 0x400, scoped, tag = 'output window, operand 0, single buffered']
    %20 = vsyncpa [#allocation7], 0
    %21 = vsyncpa [#allocation10], 0
    %22 = vsyncpa [#allocation13], 0
    %23 = vsyncpa [#allocation8], 0
    // Predicated region
    $region2: #{tpu_custom_call.1} parent=1 // pred_check
      _
    $region3: #{tpu_custom_call.1} parent=1 // pred_check_branch
      %25 = sbr.rel (0) target = $region5
    $region4: #{tpu_custom_call.1} parent=1 // pred_region
      _
    $region5: #{tpu_custom_call.1} parent=1 // pred_fallthru
      _
    // Predicated region
    $region6: #{tpu_custom_call.1} parent=1 // pred_check
      _
    $region7: #{tpu_custom_call.1} parent=1 // pred_check_branch
      %27 = sbr.rel (0) target = $region9
    $region8: #{tpu_custom_call.1} parent=1 // pred_region
      _
    $region9: #{tpu_custom_call.1} parent=1 // pred_fallthru
      _
    // Predicated region
    $region10: #{tpu_custom_call.1} parent=1 // pred_check
      _
    $region11: #{tpu_custom_call.1} parent=1 // pred_check_branch
      %29 = sbr.rel (0) target = $region13
    $region12: #{tpu_custom_call.1} parent=1 // pred_region
      _
    $region13: #{tpu_custom_call.1} parent=1 // pred_fallthru
      _
    // Predicated region
    $region14: #{tpu_custom_call.1} parent=1 // pred_check
      _
    $region15: #{tpu_custom_call.1} parent=1 // pred_check_branch
      %31 = sbr.rel (0) target = $region17
    $region16: #{tpu_custom_call.1} parent=1 // pred_region
      _
    $region17: #{tpu_custom_call.1} parent=1 // pred_fallthru
      _
    // Predicated region
    $region18: #{tpu_custom_call.1} parent=1 // pred_check
      _
    $region19: #{tpu_custom_call.1} parent=1 // pred_check_branch
      %33 = sbr.rel (0) target = $region21
    $region20: #{tpu_custom_call.1} parent=1 // pred_region
      %s35 = ssub.s32 18432, 18432
      %36 = vsyncadd [#allocation7], %s35
      %s37 = sshll.u32 [#allocation6], 4
      %s38 = int_to_ptr.vmem [resolvable:$true] %s37
      %43 = dma.hbm_to_vmem [thread:$0]  %s4, 18432, %s38, [#allocation7], 128, 128, 8
    $region21: #{tpu_custom_call.1} parent=1 // pred_fallthru
      _
    // Predicated region
    $region22: #{tpu_custom_call.1} parent=1 // pred_check
      _
    $region23: #{tpu_custom_call.1} parent=1 // pred_check_branch
      %45 = sbr.rel (0) target = $region25
    $region24: #{tpu_custom_call.1} parent=1 // pred_region
      _
    $region25: #{tpu_custom_call.1} parent=1 // pred_fallthru
      _
    // Predicated region
    $region26: #{tpu_custom_call.1} parent=1 // pred_check
      _
    $region27: #{tpu_custom_call.1} parent=1 // pred_check_branch
      %47 = sbr.rel (0) target = $region29
    $region28: #{tpu_custom_call.1} parent=1 // pred_region
      _
    $region29: #{tpu_custom_call.1} parent=1 // pred_fallthru
      _
    // Predicated region
    $region30: #{tpu_custom_call.1} parent=1 // pred_check
      _
    $region31: #{tpu_custom_call.1} parent=1 // pred_check_branch
      %49 = sbr.rel (0) target = $region33
    $region32: #{tpu_custom_call.1} parent=1 // pred_region
      %s51 = ssub.s32 18432, 18432
      %52 = vsyncadd [#allocation10], %s51
      %s53 = sshll.u32 [#allocation9], 4
      %s54 = int_to_ptr.vmem [resolvable:$true] %s53
      %59 = dma.hbm_to_vmem [thread:$0]  %s7, 18432, %s54, [#allocation10], 128, 128, 8
    $region33: #{tpu_custom_call.1} parent=1 // pred_fallthru
      _
    // Predicated region
    $region34: #{tpu_custom_call.1} parent=1 // pred_check
      _
    $region35: #{tpu_custom_call.1} parent=1 // pred_check_branch
      %61 = sbr.rel (0) target = $region37
    $region36: #{tpu_custom_call.1} parent=1 // pred_region
      _
    $region37: #{tpu_custom_call.1} parent=1 // pred_fallthru
      _
    // Predicated region
    $region38: #{tpu_custom_call.1} parent=1 // pred_check
      _
    $region39: #{tpu_custom_call.1} parent=1 // pred_check_branch
      %63 = sbr.rel (0) target = $region41
    $region40: #{tpu_custom_call.1} parent=1 // pred_region
      %s65 = ssub.s32 2816, 2816
      %66 = vsyncadd [#allocation10], %s65
      %s67 = sshll.u32 [#allocation11], 4
      %s68 = int_to_ptr.vmem [resolvable:$true] %s67
      %73 = dma.hbm_to_vmem [thread:$0]  %s9, 2816, %s68, [#allocation10], 256, 256, 16
    $region41: #{tpu_custom_call.1} parent=1 // pred_fallthru
      _
    // Predicated region
    $region42: #{tpu_custom_call.1} parent=1 // pred_check
      _
    $region43: #{tpu_custom_call.1} parent=1 // pred_check_branch
      %75 = sbr.rel (0) target = $region45
    $region44: #{tpu_custom_call.1} parent=1 // pred_region
      %s77 = ssub.s32 18432, 18432
      %78 = vsyncadd [#allocation13], %s77
      %s79 = sshll.u32 [#allocation12], 4
      %s80 = int_to_ptr.vmem [resolvable:$true] %s79
      %85 = dma.hbm_to_vmem [thread:$0]  %s10, 18432, %s80, [#allocation13], 128, 128, 8
    $region45: #{tpu_custom_call.1} parent=1 // pred_fallthru
      _
    // Predicated region
    $region46: #{tpu_custom_call.1} parent=1 // pred_check
      _
    $region47: #{tpu_custom_call.1} parent=1 // pred_check_branch
      %87 = sbr.rel (0) target = $region49
    $region48: #{tpu_custom_call.1} parent=1 // pred_region
      _
    $region49: #{tpu_custom_call.1} parent=1 // pred_fallthru
      _
    // Predicated region
    $region50: #{tpu_custom_call.1} parent=1 // pred_check
      _
    $region51: #{tpu_custom_call.1} parent=1 // pred_check_branch
      %89 = sbr.rel (0) target = $region53
    $region52: #{tpu_custom_call.1} parent=1 // pred_region
      _
    $region53: #{tpu_custom_call.1} parent=1 // pred_fallthru
      _
    // Predicated region
    $region54: #{tpu_custom_call.1} parent=1 // pred_check
      _
    $region55: #{tpu_custom_call.1} parent=1 // pred_check_branch
      %91 = sbr.rel (0) target = $region57
    $region56: #{tpu_custom_call.1} parent=1 // pred_region
      %s93 = ssub.s32 2048, 2048
      %94 = vsyncadd [#allocation13], %s93
      %s95 = sshll.u32 [#allocation14], 4
      %s96 = int_to_ptr.vmem [resolvable:$true] %s95
      %101 = dma.hbm_to_vmem [thread:$0]  %s13, 2048, %s96, [#allocation13], 128, 128, 8
    $region57: #{tpu_custom_call.1} parent=1 // pred_fallthru
      _
    // Predicated region
    $region58: #{tpu_custom_call.1} parent=1 // pred_check
      _
    $region59: #{tpu_custom_call.1} parent=1 // pred_check_branch
      %103 = sbr.rel (0) target = $region61
    $region60: #{tpu_custom_call.1} parent=1 // pred_region
      _
    $region61: #{tpu_custom_call.1} parent=1 // pred_fallthru
      _
    // Predicated region
    $region62: #{tpu_custom_call.1} parent=1 // pred_check
      _
    $region63: #{tpu_custom_call.1} parent=1 // pred_check_branch
      %105 = sbr.rel (0) target = $region65
    $region64: #{tpu_custom_call.1} parent=1 // pred_region
      %106 = dma.done [#allocation7], 18432
    $region65: #{tpu_custom_call.1} parent=1 // pred_fallthru
      _
    // Predicated region
    $region66: #{tpu_custom_call.1} parent=1 // pred_check
      _
    $region67: #{tpu_custom_call.1} parent=1 // pred_check_branch
      %108 = sbr.rel (0) target = $region69
    $region68: #{tpu_custom_call.1} parent=1 // pred_region
      %109 = dma.done [#allocation10], 18432
    $region69: #{tpu_custom_call.1} parent=1 // pred_fallthru
      _
    // Predicated region
    $region70: #{tpu_custom_call.1} parent=1 // pred_check
      _
    $region71: #{tpu_custom_call.1} parent=1 // pred_check_branch
      %111 = sbr.rel (0) target = $region73
    $region72: #{tpu_custom_call.1} parent=1 // pred_region
      %112 = dma.done [#allocation10], 2816
    $region73: #{tpu_custom_call.1} parent=1 // pred_fallthru
      _
    // Predicated region
    $region74: #{tpu_custom_call.1} parent=1 // pred_check
      _
    $region75: #{tpu_custom_call.1} parent=1 // pred_check_branch
      %114 = sbr.rel (0) target = $region77
    $region76: #{tpu_custom_call.1} parent=1 // pred_region
      %115 = dma.done [#allocation13], 18432
    $region77: #{tpu_custom_call.1} parent=1 // pred_fallthru
      _
    // Predicated region
    $region78: #{tpu_custom_call.1} parent=1 // pred_check
      _
    $region79: #{tpu_custom_call.1} parent=1 // pred_check_branch
      %117 = sbr.rel (0) target = $region81
    $region80: #{tpu_custom_call.1} parent=1 // pred_region
      %118 = dma.done [#allocation13], 2048
    $region81: #{tpu_custom_call.1} parent=1 // pred_fallthru
      _
    %v119 = vld [vmem:[%s0] sm:$0xff]
    %v120 = vld [vmem:[%s0 + $0x8] sm:$0xff]
    %v121 = vld [vmem:[%s0 + $0x10] sm:$0xff]
    %v122 = vld [vmem:[%s0 + $0x18] sm:$0xff]
    %v123 = vld [vmem:[%s0 + $0x20] sm:$0xff]
    %v124 = vld [vmem:[%s0 + $0x28] sm:$0xff]
    %v125 = vld [vmem:[%s0 + $0x30] sm:$0xff]
    %v126 = vld [vmem:[%s0 + $0x38] sm:$0xff]
    %v127 = vld [vmem:[%s0 + $0x40] sm:$0xff]
    %v128 = vld [vmem:[%s0 + $0x48] sm:$0xff]
    %v129 = vld [vmem:[%s0 + $0x50] sm:$0xff]
    %v130 = vld [vmem:[%s0 + $0x58] sm:$0xff]
    %v131 = vld [vmem:[%s0 + $0x60] sm:$0xff]
    %v132 = vld [vmem:[%s0 + $0x68] sm:$0xff]
    %v133 = vld [vmem:[%s0 + $0x70] sm:$0xff]
    %v134 = vld [vmem:[%s0 + $0x78] sm:$0xff]
    %v135 = vld [vmem:[%s0 + $0x80] sm:$0xff]
    %v136 = vld [vmem:[%s0 + $0x88] sm:$0xff]
    %v137 = vld [vmem:[%s0 + $0x90] sm:$0xff]
    %v138 = vld [vmem:[%s0 + $0x98] sm:$0xff]
    %v139 = vld [vmem:[%s0 + $0xa0] sm:$0xff]
    %v140 = vld [vmem:[%s0 + $0xa8] sm:$0xff]
    %v141 = vld [vmem:[%s0 + $0xb0] sm:$0xff]
    %v142 = vld [vmem:[%s0 + $0xb8] sm:$0xff]
    %v143 = vld [vmem:[%s0 + $0xc0] sm:$0xff]
    %v144 = vld [vmem:[%s0 + $0xc8] sm:$0xff]
    %v145 = vld [vmem:[%s0 + $0xd0] sm:$0xff]
    %v146 = vld [vmem:[%s0 + $0xd8] sm:$0x3f]
    %v147 = vld [vmem:[%s1] sm:$0xff]
    %v148 = vld [vmem:[%s1 + $0x8] sm:$0xff]
    %v149 = vld [vmem:[%s1 + $0x10] sm:$0xff]
    %v150 = vld [vmem:[%s1 + $0x18] sm:$0xff]
    %v151 = vld [vmem:[%s1 + $0x20] sm:$0xff]
    %v152 = vld [vmem:[%s1 + $0x28] sm:$0xff]
    %v153 = vld [vmem:[%s1 + $0x30] sm:$0xff]
    %v154 = vld [vmem:[%s1 + $0x38] sm:$0xff]
    %v155 = vld [vmem:[%s1 + $0x40] sm:$0xff]
    %v156 = vld [vmem:[%s1 + $0x48] sm:$0xff]
    %v157 = vld [vmem:[%s1 + $0x50] sm:$0xff]
    %v158 = vld [vmem:[%s1 + $0x58] sm:$0xff]
    %v159 = vld [vmem:[%s1 + $0x60] sm:$0xff]
    %v160 = vld [vmem:[%s1 + $0x68] sm:$0xff]
    %v161 = vld [vmem:[%s1 + $0x70] sm:$0xff]
    %v162 = vld [vmem:[%s1 + $0x78] sm:$0xff]
    %v163 = vld [vmem:[%s0 + $0x1] sm:$0xff]
    %v164 = vld [vmem:[%s0 + $0x9] sm:$0xff]
    %v165 = vld [vmem:[%s0 + $0x11] sm:$0xff]
    %v166 = vld [vmem:[%s0 + $0x19] sm:$0xff]
    %v167 = vld [vmem:[%s0 + $0x21] sm:$0xff]
    %v168 = vld [vmem:[%s0 + $0x29] sm:$0xff]
    %v169 = vld [vmem:[%s0 + $0x31] sm:$0xff]
    %v170 = vld [vmem:[%s0 + $0x39] sm:$0xff]
    %v171 = vld [vmem:[%s0 + $0x41] sm:$0xff]
    %v172 = vld [vmem:[%s0 + $0x49] sm:$0xff]
    %v173 = vld [vmem:[%s0 + $0x51] sm:$0xff]
    %v174 = vld [vmem:[%s0 + $0x59] sm:$0xff]
    %v175 = vld [vmem:[%s0 + $0x61] sm:$0xff]
    %v176 = vld [vmem:[%s0 + $0x69] sm:$0xff]
    %v177 = vld [vmem:[%s0 + $0x71] sm:$0xff]
    %v178 = vld [vmem:[%s0 + $0x79] sm:$0xff]
    %v179 = vld [vmem:[%s0 + $0x81] sm:$0xff]
    %v180 = vld [vmem:[%s0 + $0x89] sm:$0xff]
    %v181 = vld [vmem:[%s0 + $0x91] sm:$0xff]
    %v182 = vld [vmem:[%s0 + $0x99] sm:$0xff]
    %v183 = vld [vmem:[%s0 + $0xa1] sm:$0xff]
    %v184 = vld [vmem:[%s0 + $0xa9] sm:$0xff]
    %v185 = vld [vmem:[%s0 + $0xb1] sm:$0xff]
    %v186 = vld [vmem:[%s0 + $0xb9] sm:$0xff]
    %v187 = vld [vmem:[%s0 + $0xc1] sm:$0xff]
    %v188 = vld [vmem:[%s0 + $0xc9] sm:$0xff]
    %v189 = vld [vmem:[%s0 + $0xd1] sm:$0xff]
    %v190 = vld [vmem:[%s0 + $0xd9] sm:$0x3f]
    %s191 = scalar_lea.vmem %s1, 128
    %v192 = vld [vmem:[%s191] sm:$0xff]
    %v193 = vld [vmem:[%s191 + $0x8] sm:$0xff]
    %v194 = vld [vmem:[%s191 + $0x10] sm:$0xff]
    %v195 = vld [vmem:[%s191 + $0x18] sm:$0xff]
    %v196 = vld [vmem:[%s191 + $0x20] sm:$0xff]
    %v197 = vld [vmem:[%s191 + $0x28] sm:$0xff]
    %v198 = vld [vmem:[%s191 + $0x30] sm:$0xff]
    %v199 = vld [vmem:[%s191 + $0x38] sm:$0xff]
    %v200 = vld [vmem:[%s191 + $0x40] sm:$0xff]
    %v201 = vld [vmem:[%s191 + $0x48] sm:$0xff]
    %v202 = vld [vmem:[%s191 + $0x50] sm:$0xff]
    %v203 = vld [vmem:[%s191 + $0x58] sm:$0xff]
    %v204 = vld [vmem:[%s191 + $0x60] sm:$0xff]
    %v205 = vld [vmem:[%s191 + $0x68] sm:$0xff]
    %v206 = vld [vmem:[%s191 + $0x70] sm:$0xff]
    %v207 = vld [vmem:[%s191 + $0x78] sm:$0xff]
    %208 = vmatprep.subr.mxu0 0.0
    %209 = vmatpush1.msra.mxu0 %v192
    %210 = vmatprep.subr.mxu0 0.0
    %211 = vmatpush1.msra.mxu0 %v193
    %212 = vmatprep.subr.mxu0 0.0
    %213 = vmatpush1.msra.mxu0 %v194
    %214 = vmatprep.subr.mxu0 0.0
    %215 = vmatpush1.msra.mxu0 %v195
    %216 = vmatprep.subr.mxu0 0.0
    %217 = vmatpush1.msra.mxu0 %v196
    %218 = vmatprep.subr.mxu0 0.0
    %219 = vmatpush1.msra.mxu0 %v197
    %220 = vmatprep.subr.mxu0 0.0
    %221 = vmatpush1.msra.mxu0 %v198
    %222 = vmatprep.subr.mxu0 0.0
    %223 = vmatpush1.msra.mxu0 %v199
    %224 = vmatprep.subr.mxu0 0.0
    %225 = vmatpush1.msra.mxu0 %v200
    %226 = vmatprep.subr.mxu0 0.0
    %227 = vmatpush1.msra.mxu0 %v201
    %228 = vmatprep.subr.mxu0 0.0
    %229 = vmatpush1.msra.mxu0 %v202
    %230 = vmatprep.subr.mxu0 0.0
    %231 = vmatpush1.msra.mxu0 %v203
    %232 = vmatprep.subr.mxu0 0.0
    %233 = vmatpush1.msra.mxu0 %v204
    %234 = vmatprep.subr.mxu0 0.0
    %235 = vmatpush1.msra.mxu0 %v205
    %236 = vmatprep.subr.mxu0 0.0
    %237 = vmatpush1.msra.mxu0 %v206
    %238 = vmatprep.subr.mxu0 0.0
    %239 = vmatpush1.msra.mxu0 %v207
    %240 = vmatprep.subr.mxu0 0.0
    %241 = vmatpush1.msra.mxu0 0.0
    %242 = vmatprep.subr.mxu0 0.0
    %243 = vmatpush1.msra.mxu0 0.0
    %244 = vmatprep.subr.mxu0 0.0
    %245 = vmatpush1.msra.mxu0 0.0
    %246 = vmatprep.subr.mxu0 0.0
    %247 = vmatpush1.msra.mxu0 0.0
    %248 = vmatprep.subr.mxu0 0.0
    %249 = vmatpush1.msra.mxu0 0.0
    %250 = vmatprep.subr.mxu0 0.0
    %251 = vmatpush1.msra.mxu0 0.0
    %252 = vmatprep.subr.mxu0 0.0
    %253 = vmatpush1.msra.mxu0 0.0
    %254 = vmatprep.subr.mxu0 0.0
    %255 = vmatpush1.msra.mxu0 0.0
    %256 = vmatprep.subr.mxu0 0.0
    %257 = vmatpush1.msra.mxu0 0.0
    %258 = vmatprep.subr.mxu0 0.0
    %259 = vmatpush1.msra.mxu0 0.0
    %260 = vmatprep.subr.mxu0 0.0
    %261 = vmatpush1.msra.mxu0 0.0
    %262 = vmatprep.subr.mxu0 0.0
    %263 = vmatpush1.msra.mxu0 0.0
    %264 = vmatprep.subr.mxu0 0.0
    %265 = vmatpush1.msra.mxu0 0.0
    %266 = vmatprep.subr.mxu0 0.0
    %267 = vmatpush1.msra.mxu0 0.0
    %268 = vmatprep.subr.mxu0 0.0
    %269 = vmatpush1.msra.mxu0 0.0
    %270 = vmatprep.subr.mxu0 0.0
    %271 = vmatpush1.msra.mxu0 0.0
    %272 = vmatprep.mubr.f32.mxu0 0.0
    %273 = vmatmul.mubr.f32.gmra.mrb[0].mxu0 %v163
    %v274 = vpop.f32.mrb[0].mxu0
    %v275 = vadd.f32 0.0, %v274
    %v276 = vpop.f32.mrb[0].mxu0
    %277 = vmatprep.mubr.f32.mxu0 0.0
    %278 = vmatmul.mubr.f32.gmra.mrb[0].mxu0 %v164
    %v279 = vpop.f32.mrb[0].mxu0
    %v280 = vadd.f32 0.0, %v279
    %v281 = vpop.f32.mrb[0].mxu0
    %282 = vmatprep.mubr.f32.mxu0 0.0
    %283 = vmatmul.mubr.f32.gmra.mrb[0].mxu0 %v165
    %v284 = vpop.f32.mrb[0].mxu0
    %v285 = vadd.f32 0.0, %v284
    %v286 = vpop.f32.mrb[0].mxu0
    %287 = vmatprep.mubr.f32.mxu0 0.0
    %288 = vmatmul.mubr.f32.gmra.mrb[0].mxu0 %v166
    %v289 = vpop.f32.mrb[0].mxu0
    %v290 = vadd.f32 0.0, %v289
    %v291 = vpop.f32.mrb[0].mxu0
    %292 = vmatprep.mubr.f32.mxu0 0.0
    %293 = vmatmul.mubr.f32.gmra.mrb[0].mxu0 %v167
    %v294 = vpop.f32.mrb[0].mxu0
    %v295 = vadd.f32 0.0, %v294
    %v296 = vpop.f32.mrb[0].mxu0
    %297 = vmatprep.mubr.f32.mxu0 0.0
    %298 = vmatmul.mubr.f32.gmra.mrb[0].mxu0 %v168
    %v299 = vpop.f32.mrb[0].mxu0
    %v300 = vadd.f32 0.0, %v299
    %v301 = vpop.f32.mrb[0].mxu0
    %302 = vmatprep.mubr.f32.mxu0 0.0
    %303 = vmatmul.mubr.f32.gmra.mrb[0].mxu0 %v169
    %v304 = vpop.f32.mrb[0].mxu0
    %v305 = vadd.f32 0.0, %v304
    %v306 = vpop.f32.mrb[0].mxu0
    %307 = vmatprep.mubr.f32.mxu0 0.0
    %308 = vmatmul.mubr.f32.gmra.mrb[0].mxu0 %v170
    %v309 = vpop.f32.mrb[0].mxu0
    %v310 = vadd.f32 0.0, %v309
    %v311 = vpop.f32.mrb[0].mxu0
    %312 = vmatprep.mubr.f32.mxu0 0.0
    %313 = vmatmul.mubr.f32.gmra.mrb[0].mxu0 %v171
    %v314 = vpop.f32.mrb[0].mxu0
    %v315 = vadd.f32 0.0, %v314
    %v316 = vpop.f32.mrb[0].mxu0
    %317 = vmatprep.mubr.f32.mxu0 0.0
    %318 = vmatmul.mubr.f32.gmra.mrb[0].mxu0 %v172
    %v319 = vpop.f32.mrb[0].mxu0
    %v320 = vadd.f32 0.0, %v319
    %v321 = vpop.f32.mrb[0].mxu0
    %322 = vmatprep.mubr.f32.mxu0 0.0
    %323 = vmatmul.mubr.f32.gmra.mrb[0].mxu0 %v173
    %v324 = vpop.f32.mrb[0].mxu0
    %v325 = vadd.f32 0.0, %v324
    %v326 = vpop.f32.mrb[0].mxu0
    %327 = vmatprep.mubr.f32.mxu0 0.0
    %328 = vmatmul.mubr.f32.gmra.mrb[0].mxu0 %v174
    %v329 = vpop.f32.mrb[0].mxu0
    %v330 = vadd.f32 0.0, %v329
    %v331 = vpop.f32.mrb[0].mxu0
    %332 = vmatprep.mubr.f32.mxu0 0.0
    %333 = vmatmul.mubr.f32.gmra.mrb[0].mxu0 %v175
    %v334 = vpop.f32.mrb[0].mxu0
    %v335 = vadd.f32 0.0, %v334
    %v336 = vpop.f32.mrb[0].mxu0
    %337 = vmatprep.mubr.f32.mxu0 0.0
    %338 = vmatmul.mubr.f32.gmra.mrb[0].mxu0 %v176
    %v339 = vpop.f32.mrb[0].mxu0
    %v340 = vadd.f32 0.0, %v339
    %v341 = vpop.f32.mrb[0].mxu0
    %342 = vmatprep.mubr.f32.mxu0 0.0
    %343 = vmatmul.mubr.f32.gmra.mrb[0].mxu0 %v177
    %v344 = vpop.f32.mrb[0].mxu0
    %v345 = vadd.f32 0.0, %v344
    %v346 = vpop.f32.mrb[0].mxu0
    %347 = vmatprep.mubr.f32.mxu0 0.0
    %348 = vmatmul.mubr.f32.gmra.mrb[0].mxu0 %v178
    %v349 = vpop.f32.mrb[0].mxu0
    %v350 = vadd.f32 0.0, %v349
    %v351 = vpop.f32.mrb[0].mxu0
    %352 = vmatprep.mubr.f32.mxu0 0.0
    %353 = vmatmul.mubr.f32.gmra.mrb[0].mxu0 %v179
    %v354 = vpop.f32.mrb[0].mxu0
    %v355 = vadd.f32 0.0, %v354
    %v356 = vpop.f32.mrb[0].mxu0
    %357 = vmatprep.mubr.f32.mxu0 0.0
    %358 = vmatmul.mubr.f32.gmra.mrb[0].mxu0 %v180
    %v359 = vpop.f32.mrb[0].mxu0
    %v360 = vadd.f32 0.0, %v359
    %v361 = vpop.f32.mrb[0].mxu0
    %362 = vmatprep.mubr.f32.mxu0 0.0
    %363 = vmatmul.mubr.f32.gmra.mrb[0].mxu0 %v181
    %v364 = vpop.f32.mrb[0].mxu0
    %v365 = vadd.f32 0.0, %v364
    %v366 = vpop.f32.mrb[0].mxu0
    %367 = vmatprep.mubr.f32.mxu0 0.0
    %368 = vmatmul.mubr.f32.gmra.mrb[0].mxu0 %v182
    %v369 = vpop.f32.mrb[0].mxu0
    %v370 = vadd.f32 0.0, %v369
    %v371 = vpop.f32.mrb[0].mxu0
    %372 = vmatprep.mubr.f32.mxu0 0.0
    %373 = vmatmul.mubr.f32.gmra.mrb[0].mxu0 %v183
    %v374 = vpop.f32.mrb[0].mxu0
    %v375 = vadd.f32 0.0, %v374
    %v376 = vpop.f32.mrb[0].mxu0
    %377 = vmatprep.mubr.f32.mxu0 0.0
    %378 = vmatmul.mubr.f32.gmra.mrb[0].mxu0 %v184
    %v379 = vpop.f32.mrb[0].mxu0
    %v380 = vadd.f32 0.0, %v379
    %v381 = vpop.f32.mrb[0].mxu0
    %382 = vmatprep.mubr.f32.mxu0 0.0
    %383 = vmatmul.mubr.f32.gmra.mrb[0].mxu0 %v185
    %v384 = vpop.f32.mrb[0].mxu0
    %v385 = vadd.f32 0.0, %v384
    %v386 = vpop.f32.mrb[0].mxu0
    %387 = vmatprep.mubr.f32.mxu0 0.0
    %388 = vmatmul.mubr.f32.gmra.mrb[0].mxu0 %v186
    %v389 = vpop.f32.mrb[0].mxu0
    %v390 = vadd.f32 0.0, %v389
    %v391 = vpop.f32.mrb[0].mxu0
    %392 = vmatprep.mubr.f32.mxu0 0.0
    %393 = vmatmul.mubr.f32.gmra.mrb[0].mxu0 %v187
    %v394 = vpop.f32.mrb[0].mxu0
    %v395 = vadd.f32 0.0, %v394
    %v396 = vpop.f32.mrb[0].mxu0
    %397 = vmatprep.mubr.f32.mxu0 0.0
    %398 = vmatmul.mubr.f32.gmra.mrb[0].mxu0 %v188
    %v399 = vpop.f32.mrb[0].mxu0
    %v400 = vadd.f32 0.0, %v399
    %v401 = vpop.f32.mrb[0].mxu0
    %402 = vmatprep.mubr.f32.mxu0 0.0
    %403 = vmatmul.mubr.f32.gmra.mrb[0].mxu0 %v189
    %v404 = vpop.f32.mrb[0].mxu0
    %v405 = vadd.f32 0.0, %v404
    %v406 = vpop.f32.mrb[0].mxu0
    %407 = vmatprep.mubr.f32.mxu0 0.0
    %408 = vmatmul.mubr.f32.gmra.mrb[0].mxu0 %v190
    %v409 = vpop.f32.mrb[0].mxu0
    %v410 = vadd.f32 0.0, %v409
    %v411 = vpop.f32.mrb[0].mxu0
    %412 = vdwg.mxu0
    %413 = vmatprep.subr.mxu0 0.0
    %414 = vmatpush1.msra.mxu0 %v147
    %415 = vmatprep.subr.mxu0 0.0
    %416 = vmatpush1.msra.mxu0 %v148
    %417 = vmatprep.subr.mxu0 0.0
    %418 = vmatpush1.msra.mxu0 %v149
    %419 = vmatprep.subr.mxu0 0.0
    %420 = vmatpush1.msra.mxu0 %v150
    %421 = vmatprep.subr.mxu0 0.0
    %422 = vmatpush1.msra.mxu0 %v151
    %423 = vmatprep.subr.mxu0 0.0
    %424 = vmatpush1.msra.mxu0 %v152
    %425 = vmatprep.subr.mxu0 0.0
    %426 = vmatpush1.msra.mxu0 %v153
    %427 = vmatprep.subr.mxu0 0.0
    %428 = vmatpush1.msra.mxu0 %v154
    %429 = vmatprep.subr.mxu0 0.0
    %430 = vmatpush1.msra.mxu0 %v155
    %431 = vmatprep.subr.mxu0 0.0
    %432 = vmatpush1.msra.mxu0 %v156
    %433 = vmatprep.subr.mxu0 0.0
    %434 = vmatpush1.msra.mxu0 %v157
    %435 = vmatprep.subr.mxu0 0.0
    %436 = vmatpush1.msra.mxu0 %v158
    %437 = vmatprep.subr.mxu0 0.0
    %438 = vmatpush1.msra.mxu0 %v159
    %439 = vmatprep.subr.mxu0 0.0
    %440 = vmatpush1.msra.mxu0 %v160
    %441 = vmatprep.subr.mxu0 0.0
    %442 = vmatpush1.msra.mxu0 %v161
    %443 = vmatprep.subr.mxu0 0.0
    %444 = vmatpush1.msra.mxu0 %v162
    %445 = vmatprep.subr.mxu0 0.0
    %446 = vmatpush1.msra.mxu0 0.0
    %447 = vmatprep.subr.mxu0 0.0
    %448 = vmatpush1.msra.mxu0 0.0
    %449 = vmatprep.subr.mxu0 0.0
    %450 = vmatpush1.msra.mxu0 0.0
    %451 = vmatprep.subr.mxu0 0.0
    %452 = vmatpush1.msra.mxu0 0.0
    %453 = vmatprep.subr.mxu0 0.0
    %454 = vmatpush1.msra.mxu0 0.0
    %455 = vmatprep.subr.mxu0 0.0
    %456 = vmatpush1.msra.mxu0 0.0
    %457 = vmatprep.subr.mxu0 0.0
    %458 = vmatpush1.msra.mxu0 0.0
    %459 = vmatprep.subr.mxu0 0.0
    %460 = vmatpush1.msra.mxu0 0.0
    %461 = vmatprep.subr.mxu0 0.0
    %462 = vmatpush1.msra.mxu0 0.0
    %463 = vmatprep.subr.mxu0 0.0
    %464 = vmatpush1.msra.mxu0 0.0
    %465 = vmatprep.subr.mxu0 0.0
    %466 = vmatpush1.msra.mxu0 0.0
    %467 = vmatprep.subr.mxu0 0.0
    %468 = vmatpush1.msra.mxu0 0.0
    %469 = vmatprep.subr.mxu0 0.0
    %470 = vmatpush1.msra.mxu0 0.0
    %471 = vmatprep.subr.mxu0 0.0
    %472 = vmatpush1.msra.mxu0 0.0
    %473 = vmatprep.subr.mxu0 0.0
    %474 = vmatpush1.msra.mxu0 0.0
    %475 = vmatprep.subr.mxu0 0.0
    %476 = vmatpush1.msra.mxu0 0.0
    %477 = vmatprep.mubr.f32.mxu0 0.0
    %478 = vmatmul.mubr.f32.gmra.mrb[0].mxu0 %v119
    %v479 = vpop.f32.mrb[0].mxu0
    %v480 = vadd.f32 %v275, %v479
    %v481 = vpop.f32.mrb[0].mxu0
    %482 = vmatprep.mubr.f32.mxu0 0.0
    %483 = vmatmul.mubr.f32.gmra.mrb[0].mxu0 %v120
    %v484 = vpop.f32.mrb[0].mxu0
    %v485 = vadd.f32 %v280, %v484
    %v486 = vpop.f32.mrb[0].mxu0
    %487 = vmatprep.mubr.f32.mxu0 0.0
    %488 = vmatmul.mubr.f32.gmra.mrb[0].mxu0 %v121
    %v489 = vpop.f32.mrb[0].mxu0
    %v490 = vadd.f32 %v285, %v489
    %v491 = vpop.f32.mrb[0].mxu0
    %492 = vmatprep.mubr.f32.mxu0 0.0
    %493 = vmatmul.mubr.f32.gmra.mrb[0].mxu0 %v122
    %v494 = vpop.f32.mrb[0].mxu0
    %v495 = vadd.f32 %v290, %v494
    %v496 = vpop.f32.mrb[0].mxu0
    %497 = vmatprep.mubr.f32.mxu0 0.0
    %498 = vmatmul.mubr.f32.gmra.mrb[0].mxu0 %v123
    %v499 = vpop.f32.mrb[0].mxu0
    %v500 = vadd.f32 %v295, %v499
    %v501 = vpop.f32.mrb[0].mxu0
    %502 = vmatprep.mubr.f32.mxu0 0.0
    %503 = vmatmul.mubr.f32.gmra.mrb[0].mxu0 %v124
    %v504 = vpop.f32.mrb[0].mxu0
    %v505 = vadd.f32 %v300, %v504
    %v506 = vpop.f32.mrb[0].mxu0
    %507 = vmatprep.mubr.f32.mxu0 0.0
    %508 = vmatmul.mubr.f32.gmra.mrb[0].mxu0 %v125
    %v509 = vpop.f32.mrb[0].mxu0
    %v510 = vadd.f32 %v305, %v509
    %v511 = vpop.f32.mrb[0].mxu0
    %512 = vmatprep.mubr.f32.mxu0 0.0
    %513 = vmatmul.mubr.f32.gmra.mrb[0].mxu0 %v126
    %v514 = vpop.f32.mrb[0].mxu0
    %v515 = vadd.f32 %v310, %v514
    %v516 = vpop.f32.mrb[0].mxu0
    %517 = vmatprep.mubr.f32.mxu0 0.0
    %518 = vmatmul.mubr.f32.gmra.mrb[0].mxu0 %v127
    %v519 = vpop.f32.mrb[0].mxu0
    %v520 = vadd.f32 %v315, %v519
    %v521 = vpop.f32.mrb[0].mxu0
    %522 = vmatprep.mubr.f32.mxu0 0.0
    %523 = vmatmul.mubr.f32.gmra.mrb[0].mxu0 %v128
    %v524 = vpop.f32.mrb[0].mxu0
    %v525 = vadd.f32 %v320, %v524
    %v526 = vpop.f32.mrb[0].mxu0
    %527 = vmatprep.mubr.f32.mxu0 0.0
    %528 = vmatmul.mubr.f32.gmra.mrb[0].mxu0 %v129
    %v529 = vpop.f32.mrb[0].mxu0
    %v530 = vadd.f32 %v325, %v529
    %v531 = vpop.f32.mrb[0].mxu0
    %532 = vmatprep.mubr.f32.mxu0 0.0
    %533 = vmatmul.mubr.f32.gmra.mrb[0].mxu0 %v130
    %v534 = vpop.f32.mrb[0].mxu0
    %v535 = vadd.f32 %v330, %v534
    %v536 = vpop.f32.mrb[0].mxu0
    %537 = vmatprep.mubr.f32.mxu0 0.0
    %538 = vmatmul.mubr.f32.gmra.mrb[0].mxu0 %v131
    %v539 = vpop.f32.mrb[0].mxu0
    %v540 = vadd.f32 %v335, %v539
    %v541 = vpop.f32.mrb[0].mxu0
    %542 = vmatprep.mubr.f32.mxu0 0.0
    %543 = vmatmul.mubr.f32.gmra.mrb[0].mxu0 %v132
    %v544 = vpop.f32.mrb[0].mxu0
    %v545 = vadd.f32 %v340, %v544
    %v546 = vpop.f32.mrb[0].mxu0
    %547 = vmatprep.mubr.f32.mxu0 0.0
    %548 = vmatmul.mubr.f32.gmra.mrb[0].mxu0 %v133
    %v549 = vpop.f32.mrb[0].mxu0
    %v550 = vadd.f32 %v345, %v549
    %v551 = vpop.f32.mrb[0].mxu0
    %552 = vmatprep.mubr.f32.mxu0 0.0
    %553 = vmatmul.mubr.f32.gmra.mrb[0].mxu0 %v134
    %v554 = vpop.f32.mrb[0].mxu0
    %v555 = vadd.f32 %v350, %v554
    %v556 = vpop.f32.mrb[0].mxu0
    %557 = vmatprep.mubr.f32.mxu0 0.0
    %558 = vmatmul.mubr.f32.gmra.mrb[0].mxu0 %v135
    %v559 = vpop.f32.mrb[0].mxu0
    %v560 = vadd.f32 %v355, %v559
    %v561 = vpop.f32.mrb[0].mxu0
    %562 = vmatprep.mubr.f32.mxu0 0.0
    %563 = vmatmul.mubr.f32.gmra.mrb[0].mxu0 %v136
    %v564 = vpop.f32.mrb[0].mxu0
    %v565 = vadd.f32 %v360, %v564
    %v566 = vpop.f32.mrb[0].mxu0
    %567 = vmatprep.mubr.f32.mxu0 0.0
    %568 = vmatmul.mubr.f32.gmra.mrb[0].mxu0 %v137
    %v569 = vpop.f32.mrb[0].mxu0
    %v570 = vadd.f32 %v365, %v569
    %v571 = vpop.f32.mrb[0].mxu0
    %572 = vmatprep.mubr.f32.mxu0 0.0
    %573 = vmatmul.mubr.f32.gmra.mrb[0].mxu0 %v138
    %v574 = vpop.f32.mrb[0].mxu0
    %v575 = vadd.f32 %v370, %v574
    %v576 = vpop.f32.mrb[0].mxu0
    %577 = vmatprep.mubr.f32.mxu0 0.0
    %578 = vmatmul.mubr.f32.gmra.mrb[0].mxu0 %v139
    %v579 = vpop.f32.mrb[0].mxu0
    %v580 = vadd.f32 %v375, %v579
    %v581 = vpop.f32.mrb[0].mxu0
    %582 = vmatprep.mubr.f32.mxu0 0.0
    %583 = vmatmul.mubr.f32.gmra.mrb[0].mxu0 %v140
    %v584 = vpop.f32.mrb[0].mxu0
    %v585 = vadd.f32 %v380, %v584
    %v586 = vpop.f32.mrb[0].mxu0
    %587 = vmatprep.mubr.f32.mxu0 0.0
    %588 = vmatmul.mubr.f32.gmra.mrb[0].mxu0 %v141
    %v589 = vpop.f32.mrb[0].mxu0
    %v590 = vadd.f32 %v385, %v589
    %v591 = vpop.f32.mrb[0].mxu0
    %592 = vmatprep.mubr.f32.mxu0 0.0
    %593 = vmatmul.mubr.f32.gmra.mrb[0].mxu0 %v142
    %v594 = vpop.f32.mrb[0].mxu0
    %v595 = vadd.f32 %v390, %v594
    %v596 = vpop.f32.mrb[0].mxu0
    %597 = vmatprep.mubr.f32.mxu0 0.0
    %598 = vmatmul.mubr.f32.gmra.mrb[0].mxu0 %v143
    %v599 = vpop.f32.mrb[0].mxu0
    %v600 = vadd.f32 %v395, %v599
    %v601 = vpop.f32.mrb[0].mxu0
    %602 = vmatprep.mubr.f32.mxu0 0.0
    %603 = vmatmul.mubr.f32.gmra.mrb[0].mxu0 %v144
    %v604 = vpop.f32.mrb[0].mxu0
    %v605 = vadd.f32 %v400, %v604
    %v606 = vpop.f32.mrb[0].mxu0
    %607 = vmatprep.mubr.f32.mxu0 0.0
    %608 = vmatmul.mubr.f32.gmra.mrb[0].mxu0 %v145
    %v609 = vpop.f32.mrb[0].mxu0
    %v610 = vadd.f32 %v405, %v609
    %v611 = vpop.f32.mrb[0].mxu0
    %612 = vmatprep.mubr.f32.mxu0 0.0
    %613 = vmatmul.mubr.f32.gmra.mrb[0].mxu0 %v146
    %v614 = vpop.f32.mrb[0].mxu0
    %v615 = vadd.f32 %v410, %v614
    %v616 = vpop.f32.mrb[0].mxu0
    %617 = vdwg.mxu0
    %v618 = vld [vmem:[%s0 + $0x2] sm:$0xff]
    %v619 = vld [vmem:[%s0 + $0xa] sm:$0xff]
    %v620 = vld [vmem:[%s0 + $0x12] sm:$0xff]
    %v621 = vld [vmem:[%s0 + $0x1a] sm:$0xff]
    %v622 = vld [vmem:[%s0 + $0x22] sm:$0xff]
    %v623 = vld [vmem:[%s0 + $0x2a] sm:$0xff]
    %v624 = vld [vmem:[%s0 + $0x32] sm:$0xff]
    %v625 = vld [vmem:[%s0 + $0x3a] sm:$0xff]
    %v626 = vld [vmem:[%s0 + $0x42] sm:$0xff]
    %v627 = vld [vmem:[%s0 + $0x4a] sm:$0xff]
    %v628 = vld [vmem:[%s0 + $0x52] sm:$0xff]
    %v629 = vld [vmem:[%s0 + $0x5a] sm:$0xff]
    %v630 = vld [vmem:[%s0 + $0x62] sm:$0xff]
    %v631 = vld [vmem:[%s0 + $0x6a] sm:$0xff]
    %v632 = vld [vmem:[%s0 + $0x72] sm:$0xff]
    %v633 = vld [vmem:[%s0 + $0x7a] sm:$0xff]
    %v634 = vld [vmem:[%s0 + $0x82] sm:$0xff]
    %v635 = vld [vmem:[%s0 + $0x8a] sm:$0xff]
    %v636 = vld [vmem:[%s0 + $0x92] sm:$0xff]
    %v637 = vld [vmem:[%s0 + $0x9a] sm:$0xff]
    %v638 = vld [vmem:[%s0 + $0xa2] sm:$0xff]
    %v639 = vld [vmem:[%s0 + $0xaa] sm:$0xff]
    %v640 = vld [vmem:[%s0 + $0xb2] sm:$0xff]
    %v641 = vld [vmem:[%s0 + $0xba] sm:$0xff]
    %v642 = vld [vmem:[%s0 + $0xc2] sm:$0xff]
    %v643 = vld [vmem:[%s0 + $0xca] sm:$0xff]
    %v644 = vld [vmem:[%s0 + $0xd2] sm:$0xff]
    %v645 = vld [vmem:[%s0 + $0xda] sm:$0x3f]
    %s646 = scalar_lea.vmem %s1, 256
    %v647 = vld [vmem:[%s646] sm:$0xff]
    %v648 = vld [vmem:[%s646 + $0x8] sm:$0xff]
    %v649 = vld [vmem:[%s646 + $0x10] sm:$0xff]
    %v650 = vld [vmem:[%s646 + $0x18] sm:$0xff]
    %v651 = vld [vmem:[%s646 + $0x20] sm:$0xff]
    %v652 = vld [vmem:[%s646 + $0x28] sm:$0xff]
    %v653 = vld [vmem:[%s646 + $0x30] sm:$0xff]
    %v654 = vld [vmem:[%s646 + $0x38] sm:$0xff]
    %v655 = vld [vmem:[%s646 + $0x40] sm:$0xff]
    %v656 = vld [vmem:[%s646 + $0x48] sm:$0xff]
    %v657 = vld [vmem:[%s646 + $0x50] sm:$0xff]
    %v658 = vld [vmem:[%s646 + $0x58] sm:$0xff]
    %v659 = vld [vmem:[%s646 + $0x60] sm:$0xff]
    %v660 = vld [vmem:[%s646 + $0x68] sm:$0xff]
    %v661 = vld [vmem:[%s646 + $0x70] sm:$0xff]
    %v662 = vld [vmem:[%s646 + $0x78] sm:$0xff]
    %663 = vmatprep.subr.mxu0 0.0
    %664 = vmatpush1.msra.mxu0 %v647
    %665 = vmatprep.subr.mxu0 0.0
    %666 = vmatpush1.msra.mxu0 %v648
    %667 = vmatprep.subr.mxu0 0.0
    %668 = vmatpush1.msra.mxu0 %v649
    %669 = vmatprep.subr.mxu0 0.0
    %670 = vmatpush1.msra.mxu0 %v650
    %671 = vmatprep.subr.mxu0 0.0
    %672 = vmatpush1.msra.mxu0 %v651
    %673 = vmatprep.subr.mxu0 0.0
    %674 = vmatpush1.msra.mxu0 %v652
    %675 = vmatprep.subr.mxu0 0.0
    %676 = vmatpush1.msra.mxu0 %v653
    %677 = vmatprep.subr.mxu0 0.0
    %678 = vmatpush1.msra.mxu0 %v654
    %679 = vmatprep.subr.mxu0 0.0
    %680 = vmatpush1.msra.mxu0 %v655
    %681 = vmatprep.subr.mxu0 0.0
    %682 = vmatpush1.msra.mxu0 %v656
    %683 = vmatprep.subr.mxu0 0.0
    %684 = vmatpush1.msra.mxu0 %v657
    %685 = vmatprep.subr.mxu0 0.0
    %686 = vmatpush1.msra.mxu0 %v658
    %687 = vmatprep.subr.mxu0 0.0
    %688 = vmatpush1.msra.mxu0 %v659
    %689 = vmatprep.subr.mxu0 0.0
    %690 = vmatpush1.msra.mxu0 %v660
    %691 = vmatprep.subr.mxu0 0.0
    %692 = vmatpush1.msra.mxu0 %v661
    %693 = vmatprep.subr.mxu0 0.0
    %694 = vmatpush1.msra.mxu0 %v662
    %695 = vmatprep.subr.mxu0 0.0
    %696 = vmatpush1.msra.mxu0 0.0
    %697 = vmatprep.subr.mxu0 0.0
    %698 = vmatpush1.msra.mxu0 0.0
    %699 = vmatprep.subr.mxu0 0.0
    %700 = vmatpush1.msra.mxu0 0.0
    %701 = vmatprep.subr.mxu0 0.0
    %702 = vmatpush1.msra.mxu0 0.0
    %703 = vmatprep.subr.mxu0 0.0
    %704 = vmatpush1.msra.mxu0 0.0
    %705 = vmatprep.subr.mxu0 0.0
    %706 = vmatpush1.msra.mxu0 0.0
    %707 = vmatprep.subr.mxu0 0.0
    %708 = vmatpush1.msra.mxu0 0.0
    %709 = vmatprep.subr.mxu0 0.0
    %710 = vmatpush1.msra.mxu0 0.0
    %711 = vmatprep.subr.mxu0 0.0
    %712 = vmatpush1.msra.mxu0 0.0
    %713 = vmatprep.subr.mxu0 0.0
    %714 = vmatpush1.msra.mxu0 0.0
    %715 = vmatprep.subr.mxu0 0.0
    %716 = vmatpush1.msra.mxu0 0.0
    %717 = vmatprep.subr.mxu0 0.0
    %718 = vmatpush1.msra.mxu0 0.0
    %719 = vmatprep.subr.mxu0 0.0
    %720 = vmatpush1.msra.mxu0 0.0
    %721 = vmatprep.subr.mxu0 0.0
    %722 = vmatpush1.msra.mxu0 0.0
    %723 = vmatprep.subr.mxu0 0.0
    %724 = vmatpush1.msra.mxu0 0.0
    %725 = vmatprep.subr.mxu0 0.0
    %726 = vmatpush1.msra.mxu0 0.0
    %727 = vmatprep.mubr.f32.mxu0 0.0
    %728 = vmatmul.mubr.f32.gmra.mrb[0].mxu0 %v618
    %v729 = vpop.f32.mrb[0].mxu0
    %v730 = vadd.f32 0.0, %v729
    %v731 = vpop.f32.mrb[0].mxu0
    %732 = vmatprep.mubr.f32.mxu0 0.0
    %733 = vmatmul.mubr.f32.gmra.mrb[0].mxu0 %v619
    %v734 = vpop.f32.mrb[0].mxu0
    %v735 = vadd.f32 0.0, %v734
    %v736 = vpop.f32.mrb[0].mxu0
    %737 = vmatprep.mubr.f32.mxu0 0.0
    %738 = vmatmul.mubr.f32.gmra.mrb[0].mxu0 %v620
    %v739 = vpop.f32.mrb[0].mxu0
    %v740 = vadd.f32 0.0, %v739
    %v741 = vpop.f32.mrb[0].mxu0
    %742 = vmatprep.mubr.f32.mxu0 0.0
    %743 = vmatmul.mubr.f32.gmra.mrb[0].mxu0 %v621
    %v744 = vpop.f32.mrb[0].mxu0
    %v745 = vadd.f32 0.0, %v744
    %v746 = vpop.f32.mrb[0].mxu0
    %747 = vmatprep.mubr.f32.mxu0 0.0
    %748 = vmatmul.mubr.f32.gmra.mrb[0].mxu0 %v622
    %v749 = vpop.f32.mrb[0].mxu0
    %v750 = vadd.f32 0.0, %v749
    %v751 = vpop.f32.mrb[0].mxu0
    %752 = vmatprep.mubr.f32.mxu0 0.0
    %753 = vmatmul.mubr.f32.gmra.mrb[0].mxu0 %v623
    %v754 = vpop.f32.mrb[0].mxu0
    %v755 = vadd.f32 0.0, %v754
    %v756 = vpop.f32.mrb[0].mxu0
    %757 = vmatprep.mubr.f32.mxu0 0.0
    %758 = vmatmul.mubr.f32.gmra.mrb[0].mxu0 %v624
    %v759 = vpop.f32.mrb[0].mxu0
    %v760 = vadd.f32 0.0, %v759
    %v761 = vpop.f32.mrb[0].mxu0
    %762 = vmatprep.mubr.f32.mxu0 0.0
    %763 = vmatmul.mubr.f32.gmra.mrb[0].mxu0 %v625
    %v764 = vpop.f32.mrb[0].mxu0
    %v765 = vadd.f32 0.0, %v764
    %v766 = vpop.f32.mrb[0].mxu0
    %767 = vmatprep.mubr.f32.mxu0 0.0
    %768 = vmatmul.mubr.f32.gmra.mrb[0].mxu0 %v626
    %v769 = vpop.f32.mrb[0].mxu0
    %v770 = vadd.f32 0.0, %v769
    %v771 = vpop.f32.mrb[0].mxu0
    %772 = vmatprep.mubr.f32.mxu0 0.0
    %773 = vmatmul.mubr.f32.gmra.mrb[0].mxu0 %v627
    %v774 = vpop.f32.mrb[0].mxu0
    %v775 = vadd.f32 0.0, %v774
    %v776 = vpop.f32.mrb[0].mxu0
    %777 = vmatprep.mubr.f32.mxu0 0.0
    %778 = vmatmul.mubr.f32.gmra.mrb[0].mxu0 %v628
    %v779 = vpop.f32.mrb[0].mxu0
    %v780 = vadd.f32 0.0, %v779
    %v781 = vpop.f32.mrb[0].mxu0
    %782 = vmatprep.mubr.f32.mxu0 0.0
    %783 = vmatmul.mubr.f32.gmra.mrb[0].mxu0 %v629
    %v784 = vpop.f32.mrb[0].mxu0
    %v785 = vadd.f32 0.0, %v784
    %v786 = vpop.f32.mrb[0].mxu0
    %787 = vmatprep.mubr.f32.mxu0 0.0
    %788 = vmatmul.mubr.f32.gmra.mrb[0].mxu0 %v630
    %v789 = vpop.f32.mrb[0].mxu0
    %v790 = vadd.f32 0.0, %v789
    %v791 = vpop.f32.mrb[0].mxu0
    %792 = vmatprep.mubr.f32.mxu0 0.0
    %793 = vmatmul.mubr.f32.gmra.mrb[0].mxu0 %v631
    %v794 = vpop.f32.mrb[0].mxu0
    %v795 = vadd.f32 0.0, %v794
    %v796 = vpop.f32.mrb[0].mxu0
    %797 = vmatprep.mubr.f32.mxu0 0.0
    %798 = vmatmul.mubr.f32.gmra.mrb[0].mxu0 %v632
    %v799 = vpop.f32.mrb[0].mxu0
    %v800 = vadd.f32 0.0, %v799
    %v801 = vpop.f32.mrb[0].mxu0
    %802 = vmatprep.mubr.f32.mxu0 0.0
    %803 = vmatmul.mubr.f32.gmra.mrb[0].mxu0 %v633
    %v804 = vpop.f32.mrb[0].mxu0
    %v805 = vadd.f32 0.0, %v804
    %v806 = vpop.f32.mrb[0].mxu0
    %807 = vmatprep.mubr.f32.mxu0 0.0
    %808 = vmatmul.mubr.f32.gmra.mrb[0].mxu0 %v634
    %v809 = vpop.f32.mrb[0].mxu0
    %v810 = vadd.f32 0.0, %v809
    %v811 = vpop.f32.mrb[0].mxu0
    %812 = vmatprep.mubr.f32.mxu0 0.0
    %813 = vmatmul.mubr.f32.gmra.mrb[0].mxu0 %v635
    %v814 = vpop.f32.mrb[0].mxu0
    %v815 = vadd.f32 0.0, %v814
    %v816 = vpop.f32.mrb[0].mxu0
    %817 = vmatprep.mubr.f32.mxu0 0.0
    %818 = vmatmul.mubr.f32.gmra.mrb[0].mxu0 %v636
    %v819 = vpop.f32.mrb[0].mxu0
    %v820 = vadd.f32 0.0, %v819
    %v821 = vpop.f32.mrb[0].mxu0
    %822 = vmatprep.mubr.f32.mxu0 0.0
    %823 = vmatmul.mubr.f32.gmra.mrb[0].mxu0 %v637
    %v824 = vpop.f32.mrb[0].mxu0
    %v825 = vadd.f32 0.0, %v824
    %v826 = vpop.f32.mrb[0].mxu0
    %827 = vmatprep.mubr.f32.mxu0 0.0
    %828 = vmatmul.mubr.f32.gmra.mrb[0].mxu0 %v638
    %v829 = vpop.f32.mrb[0].mxu0
    %v830 = vadd.f32 0.0, %v829
    %v831 = vpop.f32.mrb[0].mxu0
    %832 = vmatprep.mubr.f32.mxu0 0.0
    %833 = vmatmul.mubr.f32.gmra.mrb[0].mxu0 %v639
    %v834 = vpop.f32.mrb[0].mxu0
    %v835 = vadd.f32 0.0, %v834
    %v836 = vpop.f32.mrb[0].mxu0
    %837 = vmatprep.mubr.f32.mxu0 0.0
    %838 = vmatmul.mubr.f32.gmra.mrb[0].mxu0 %v640
    %v839 = vpop.f32.mrb[0].mxu0
    %v840 = vadd.f32 0.0, %v839
    %v841 = vpop.f32.mrb[0].mxu0
    %842 = vmatprep.mubr.f32.mxu0 0.0
    %843 = vmatmul.mubr.f32.gmra.mrb[0].mxu0 %v641
    %v844 = vpop.f32.mrb[0].mxu0
    %v845 = vadd.f32 0.0, %v844
    %v846 = vpop.f32.mrb[0].mxu0
    %847 = vmatprep.mubr.f32.mxu0 0.0
    %848 = vmatmul.mubr.f32.gmra.mrb[0].mxu0 %v642
    %v849 = vpop.f32.mrb[0].mxu0
    %v850 = vadd.f32 0.0, %v849
    %v851 = vpop.f32.mrb[0].mxu0
    %852 = vmatprep.mubr.f32.mxu0 0.0
    %853 = vmatmul.mubr.f32.gmra.mrb[0].mxu0 %v643
    %v854 = vpop.f32.mrb[0].mxu0
    %v855 = vadd.f32 0.0, %v854
    %v856 = vpop.f32.mrb[0].mxu0
    %857 = vmatprep.mubr.f32.mxu0 0.0
    %858 = vmatmul.mubr.f32.gmra.mrb[0].mxu0 %v644
    %v859 = vpop.f32.mrb[0].mxu0
    %v860 = vadd.f32 0.0, %v859
    %v861 = vpop.f32.mrb[0].mxu0
    %862 = vmatprep.mubr.f32.mxu0 0.0
    %863 = vmatmul.mubr.f32.gmra.mrb[0].mxu0 %v645
    %v864 = vpop.f32.mrb[0].mxu0
    %v865 = vadd.f32 0.0, %v864
    %v866 = vpop.f32.mrb[0].mxu0
    %867 = vdwg.mxu0
    %v868 = vadd.f32 %v480, %v730
    %v869 = vadd.f32 %v485, %v735
    %v870 = vadd.f32 %v490, %v740
    %v871 = vadd.f32 %v495, %v745
    %v872 = vadd.f32 %v500, %v750
    %v873 = vadd.f32 %v505, %v755
    %v874 = vadd.f32 %v510, %v760
    %v875 = vadd.f32 %v515, %v765
    %v876 = vadd.f32 %v520, %v770
    %v877 = vadd.f32 %v525, %v775
    %v878 = vadd.f32 %v530, %v780
    %v879 = vadd.f32 %v535, %v785
    %v880 = vadd.f32 %v540, %v790
    %v881 = vadd.f32 %v545, %v795
    %v882 = vadd.f32 %v550, %v800
    %v883 = vadd.f32 %v555, %v805
    %v884 = vadd.f32 %v560, %v810
    %v885 = vadd.f32 %v565, %v815
    %v886 = vadd.f32 %v570, %v820
    %v887 = vadd.f32 %v575, %v825
    %v888 = vadd.f32 %v580, %v830
    %v889 = vadd.f32 %v585, %v835
    %v890 = vadd.f32 %v590, %v840
    %v891 = vadd.f32 %v595, %v845
    %v892 = vadd.f32 %v600, %v850
    %v893 = vadd.f32 %v605, %v855
    %v894 = vadd.f32 %v610, %v860
    %v895 = vadd.f32 %v615, %v865
    %v896 = vld [vmem:[%s0 + $0x10] sm:$0xff]
    %v897 = vld [vmem:[%s0 + $0x18] sm:$0xff]
    %v898 = vld [vmem:[%s0 + $0x20] sm:$0xff]
    %v899 = vld [vmem:[%s0 + $0x28] sm:$0xff]
    %v900 = vld [vmem:[%s0 + $0x30] sm:$0xff]
    %v901 = vld [vmem:[%s0 + $0x38] sm:$0xff]
    %v902 = vld [vmem:[%s0 + $0x40] sm:$0xff]
    %v903 = vld [vmem:[%s0 + $0x48] sm:$0xff]
    %v904 = vld [vmem:[%s0 + $0x50] sm:$0xff]
    %v905 = vld [vmem:[%s0 + $0x58] sm:$0xff]
    %v906 = vld [vmem:[%s0 + $0x60] sm:$0xff]
    %v907 = vld [vmem:[%s0 + $0x68] sm:$0xff]
    %v908 = vld [vmem:[%s0 + $0x70] sm:$0xff]
    %v909 = vld [vmem:[%s0 + $0x78] sm:$0xff]
    %v910 = vld [vmem:[%s0 + $0x80] sm:$0xff]
    %v911 = vld [vmem:[%s0 + $0x88] sm:$0xff]
    %v912 = vld [vmem:[%s0 + $0x90] sm:$0xff]
    %v913 = vld [vmem:[%s0 + $0x98] sm:$0xff]
    %v914 = vld [vmem:[%s0 + $0xa0] sm:$0xff]
    %v915 = vld [vmem:[%s0 + $0xa8] sm:$0xff]
    %v916 = vld [vmem:[%s0 + $0xb0] sm:$0xff]
    %v917 = vld [vmem:[%s0 + $0xb8] sm:$0xff]
    %v918 = vld [vmem:[%s0 + $0xc0] sm:$0xff]
    %v919 = vld [vmem:[%s0 + $0xc8] sm:$0xff]
    %v920 = vld [vmem:[%s0 + $0xd0] sm:$0xff]
    %v921 = vld [vmem:[%s0 + $0xd8] sm:$0xff]
    %v922 = vld [vmem:[%s0 + $0xe0] sm:$0xff]
    %v923 = vld [vmem:[%s0 + $0xe8] sm:$0x3f]
    %s924 = scalar_lea.vmem %s1, 384
    %v925 = vld [vmem:[%s924] sm:$0xff]
    %v926 = vld [vmem:[%s924 + $0x8] sm:$0xff]
    %v927 = vld [vmem:[%s924 + $0x10] sm:$0xff]
    %v928 = vld [vmem:[%s924 + $0x18] sm:$0xff]
    %v929 = vld [vmem:[%s924 + $0x20] sm:$0xff]
    %v930 = vld [vmem:[%s924 + $0x28] sm:$0xff]
    %v931 = vld [vmem:[%s924 + $0x30] sm:$0xff]
    %v932 = vld [vmem:[%s924 + $0x38] sm:$0xff]
    %v933 = vld [vmem:[%s924 + $0x40] sm:$0xff]
    %v934 = vld [vmem:[%s924 + $0x48] sm:$0xff]
    %v935 = vld [vmem:[%s924 + $0x50] sm:$0xff]
    %v936 = vld [vmem:[%s924 + $0x58] sm:$0xff]
    %v937 = vld [vmem:[%s924 + $0x60] sm:$0xff]
    %v938 = vld [vmem:[%s924 + $0x68] sm:$0xff]
    %v939 = vld [vmem:[%s924 + $0x70] sm:$0xff]
    %v940 = vld [vmem:[%s924 + $0x78] sm:$0xff]
    %941 = vmatprep.subr.mxu0 0.0
    %942 = vmatpush1.msra.mxu0 %v925
    %943 = vmatprep.subr.mxu0 0.0
    %944 = vmatpush1.msra.mxu0 %v926
    %945 = vmatprep.subr.mxu0 0.0
    %946 = vmatpush1.msra.mxu0 %v927
    %947 = vmatprep.subr.mxu0 0.0
    %948 = vmatpush1.msra.mxu0 %v928
    %949 = vmatprep.subr.mxu0 0.0
    %950 = vmatpush1.msra.mxu0 %v929
    %951 = vmatprep.subr.mxu0 0.0
    %952 = vmatpush1.msra.mxu0 %v930
    %953 = vmatprep.subr.mxu0 0.0
    %954 = vmatpush1.msra.mxu0 %v931
    %955 = vmatprep.subr.mxu0 0.0
    %956 = vmatpush1.msra.mxu0 %v932
    %957 = vmatprep.subr.mxu0 0.0
    %958 = vmatpush1.msra.mxu0 %v933
    %959 = vmatprep.subr.mxu0 0.0
    %960 = vmatpush1.msra.mxu0 %v934
    %961 = vmatprep.subr.mxu0 0.0
    %962 = vmatpush1.msra.mxu0 %v935
    %963 = vmatprep.subr.mxu0 0.0
    %964 = vmatpush1.msra.mxu0 %v936
    %965 = vmatprep.subr.mxu0 0.0
    %966 = vmatpush1.msra.mxu0 %v937
    %967 = vmatprep.subr.mxu0 0.0
    %968 = vmatpush1.msra.mxu0 %v938
    %969 = vmatprep.subr.mxu0 0.0
    %970 = vmatpush1.msra.mxu0 %v939
    %971 = vmatprep.subr.mxu0 0.0
    %972 = vmatpush1.msra.mxu0 %v940
    %973 = vmatprep.subr.mxu0 0.0
    %974 = vmatpush1.msra.mxu0 0.0
    %975 = vmatprep.subr.mxu0 0.0
    %976 = vmatpush1.msra.mxu0 0.0
    %977 = vmatprep.subr.mxu0 0.0
    %978 = vmatpush1.msra.mxu0 0.0
    %979 = vmatprep.subr.mxu0 0.0
    %980 = vmatpush1.msra.mxu0 0.0
    %981 = vmatprep.subr.mxu0 0.0
    %982 = vmatpush1.msra.mxu0 0.0
    %983 = vmatprep.subr.mxu0 0.0
    %984 = vmatpush1.msra.mxu0 0.0
    %985 = vmatprep.subr.mxu0 0.0
    %986 = vmatpush1.msra.mxu0 0.0
    %987 = vmatprep.subr.mxu0 0.0
    %988 = vmatpush1.msra.mxu0 0.0
    %989 = vmatprep.subr.mxu0 0.0
    %990 = vmatpush1.msra.mxu0 0.0
    %991 = vmatprep.subr.mxu0 0.0
    %992 = vmatpush1.msra.mxu0 0.0
    %993 = vmatprep.subr.mxu0 0.0
    %994 = vmatpush1.msra.mxu0 0.0
    %995 = vmatprep.subr.mxu0 0.0
    %996 = vmatpush1.msra.mxu0 0.0
    %997 = vmatprep.subr.mxu0 0.0
    %998 = vmatpush1.msra.mxu0 0.0
    %999 = vmatprep.subr.mxu0 0.0
    %1000 = vmatpush1.msra.mxu0 0.0
    %1001 = vmatprep.subr.mxu0 0.0
    %1002 = vmatpush1.msra.mxu0 0.0
    %1003 = vmatprep.subr.mxu0 0.0
    %1004 = vmatpush1.msra.mxu0 0.0
    %1005 = vmatprep.mubr.f32.mxu0 0.0
    %1006 = vmatmul.mubr.f32.gmra.mrb[0].mxu0 %v896
    %v1007 = vpop.f32.mrb[0].mxu0
    %v1008 = vadd.f32 0.0, %v1007
    %v1009 = vpop.f32.mrb[0].mxu0
    %1010 = vmatprep.mubr.f32.mxu0 0.0
    %1011 = vmatmul.mubr.f32.gmra.mrb[0].mxu0 %v897
    %v1012 = vpop.f32.mrb[0].mxu0
    %v1013 = vadd.f32 0.0, %v1012
    %v1014 = vpop.f32.mrb[0].mxu0
    %1015 = vmatprep.mubr.f32.mxu0 0.0
    %1016 = vmatmul.mubr.f32.gmra.mrb[0].mxu0 %v898
    %v1017 = vpop.f32.mrb[0].mxu0
    %v1018 = vadd.f32 0.0, %v1017
    %v1019 = vpop.f32.mrb[0].mxu0
    %1020 = vmatprep.mubr.f32.mxu0 0.0
    %1021 = vmatmul.mubr.f32.gmra.mrb[0].mxu0 %v899
    %v1022 = vpop.f32.mrb[0].mxu0
    %v1023 = vadd.f32 0.0, %v1022
    %v1024 = vpop.f32.mrb[0].mxu0
    %1025 = vmatprep.mubr.f32.mxu0 0.0
    %1026 = vmatmul.mubr.f32.gmra.mrb[0].mxu0 %v900
    %v1027 = vpop.f32.mrb[0].mxu0
    %v1028 = vadd.f32 0.0, %v1027
    %v1029 = vpop.f32.mrb[0].mxu0
    %1030 = vmatprep.mubr.f32.mxu0 0.0
    %1031 = vmatmul.mubr.f32.gmra.mrb[0].mxu0 %v901
    %v1032 = vpop.f32.mrb[0].mxu0
    %v1033 = vadd.f32 0.0, %v1032
    %v1034 = vpop.f32.mrb[0].mxu0
    %1035 = vmatprep.mubr.f32.mxu0 0.0
    %1036 = vmatmul.mubr.f32.gmra.mrb[0].mxu0 %v902
    %v1037 = vpop.f32.mrb[0].mxu0
    %v1038 = vadd.f32 0.0, %v1037
    %v1039 = vpop.f32.mrb[0].mxu0
    %1040 = vmatprep.mubr.f32.mxu0 0.0
    %1041 = vmatmul.mubr.f32.gmra.mrb[0].mxu0 %v903
    %v1042 = vpop.f32.mrb[0].mxu0
    %v1043 = vadd.f32 0.0, %v1042
    %v1044 = vpop.f32.mrb[0].mxu0
    %1045 = vmatprep.mubr.f32.mxu0 0.0
    %1046 = vmatmul.mubr.f32.gmra.mrb[0].mxu0 %v904
    %v1047 = vpop.f32.mrb[0].mxu0
    %v1048 = vadd.f32 0.0, %v1047
    %v1049 = vpop.f32.mrb[0].mxu0
    %1050 = vmatprep.mubr.f32.mxu0 0.0
    %1051 = vmatmul.mubr.f32.gmra.mrb[0].mxu0 %v905
    %v1052 = vpop.f32.mrb[0].mxu0
    %v1053 = vadd.f32 0.0, %v1052
    %v1054 = vpop.f32.mrb[0].mxu0
    %1055 = vmatprep.mubr.f32.mxu0 0.0
    %1056 = vmatmul.mubr.f32.gmra.mrb[0].mxu0 %v906
    %v1057 = vpop.f32.mrb[0].mxu0
    %v1058 = vadd.f32 0.0, %v1057
    %v1059 = vpop.f32.mrb[0].mxu0
    %1060 = vmatprep.mubr.f32.mxu0 0.0
    %1061 = vmatmul.mubr.f32.gmra.mrb[0].mxu0 %v907
    %v1062 = vpop.f32.mrb[0].mxu0
    %v1063 = vadd.f32 0.0, %v1062
    %v1064 = vpop.f32.mrb[0].mxu0
    %1065 = vmatprep.mubr.f32.mxu0 0.0
    %1066 = vmatmul.mubr.f32.gmra.mrb[0].mxu0 %v908
    %v1067 = vpop.f32.mrb[0].mxu0
    %v1068 = vadd.f32 0.0, %v1067
    %v1069 = vpop.f32.mrb[0].mxu0
    %1070 = vmatprep.mubr.f32.mxu0 0.0
    %1071 = vmatmul.mubr.f32.gmra.mrb[0].mxu0 %v909
    %v1072 = vpop.f32.mrb[0].mxu0
    %v1073 = vadd.f32 0.0, %v1072
    %v1074 = vpop.f32.mrb[0].mxu0
    %1075 = vmatprep.mubr.f32.mxu0 0.0
    %1076 = vmatmul.mubr.f32.gmra.mrb[0].mxu0 %v910
    %v1077 = vpop.f32.mrb[0].mxu0
    %v1078 = vadd.f32 0.0, %v1077
    %v1079 = vpop.f32.mrb[0].mxu0
    %1080 = vmatprep.mubr.f32.mxu0 0.0
    %1081 = vmatmul.mubr.f32.gmra.mrb[0].mxu0 %v911
    %v1082 = vpop.f32.mrb[0].mxu0
    %v1083 = vadd.f32 0.0, %v1082
    %v1084 = vpop.f32.mrb[0].mxu0
    %1085 = vmatprep.mubr.f32.mxu0 0.0
    %1086 = vmatmul.mubr.f32.gmra.mrb[0].mxu0 %v912
    %v1087 = vpop.f32.mrb[0].mxu0
    %v1088 = vadd.f32 0.0, %v1087
    %v1089 = vpop.f32.mrb[0].mxu0
    %1090 = vmatprep.mubr.f32.mxu0 0.0
    %1091 = vmatmul.mubr.f32.gmra.mrb[0].mxu0 %v913
    %v1092 = vpop.f32.mrb[0].mxu0
    %v1093 = vadd.f32 0.0, %v1092
    %v1094 = vpop.f32.mrb[0].mxu0
    %1095 = vmatprep.mubr.f32.mxu0 0.0
    %1096 = vmatmul.mubr.f32.gmra.mrb[0].mxu0 %v914
    %v1097 = vpop.f32.mrb[0].mxu0
    %v1098 = vadd.f32 0.0, %v1097
    %v1099 = vpop.f32.mrb[0].mxu0
    %1100 = vmatprep.mubr.f32.mxu0 0.0
    %1101 = vmatmul.mubr.f32.gmra.mrb[0].mxu0 %v915
    %v1102 = vpop.f32.mrb[0].mxu0
    %v1103 = vadd.f32 0.0, %v1102
    %v1104 = vpop.f32.mrb[0].mxu0
    %1105 = vmatprep.mubr.f32.mxu0 0.0
    %1106 = vmatmul.mubr.f32.gmra.mrb[0].mxu0 %v916
    %v1107 = vpop.f32.mrb[0].mxu0
    %v1108 = vadd.f32 0.0, %v1107
    %v1109 = vpop.f32.mrb[0].mxu0
    %1110 = vmatprep.mubr.f32.mxu0 0.0
    %1111 = vmatmul.mubr.f32.gmra.mrb[0].mxu0 %v917
    %v1112 = vpop.f32.mrb[0].mxu0
    %v1113 = vadd.f32 0.0, %v1112
    %v1114 = vpop.f32.mrb[0].mxu0
    %1115 = vmatprep.mubr.f32.mxu0 0.0
    %1116 = vmatmul.mubr.f32.gmra.mrb[0].mxu0 %v918
    %v1117 = vpop.f32.mrb[0].mxu0
    %v1118 = vadd.f32 0.0, %v1117
    %v1119 = vpop.f32.mrb[0].mxu0
    %1120 = vmatprep.mubr.f32.mxu0 0.0
    %1121 = vmatmul.mubr.f32.gmra.mrb[0].mxu0 %v919
    %v1122 = vpop.f32.mrb[0].mxu0
    %v1123 = vadd.f32 0.0, %v1122
    %v1124 = vpop.f32.mrb[0].mxu0
    %1125 = vmatprep.mubr.f32.mxu0 0.0
    %1126 = vmatmul.mubr.f32.gmra.mrb[0].mxu0 %v920
    %v1127 = vpop.f32.mrb[0].mxu0
    %v1128 = vadd.f32 0.0, %v1127
    %v1129 = vpop.f32.mrb[0].mxu0
    %1130 = vmatprep.mubr.f32.mxu0 0.0
    %1131 = vmatmul.mubr.f32.gmra.mrb[0].mxu0 %v921
    %v1132 = vpop.f32.mrb[0].mxu0
    %v1133 = vadd.f32 0.0, %v1132
    %v1134 = vpop.f32.mrb[0].mxu0
    %1135 = vmatprep.mubr.f32.mxu0 0.0
    %1136 = vmatmul.mubr.f32.gmra.mrb[0].mxu0 %v922
    %v1137 = vpop.f32.mrb[0].mxu0
    %v1138 = vadd.f32 0.0, %v1137
    %v1139 = vpop.f32.mrb[0].mxu0
    %1140 = vmatprep.mubr.f32.mxu0 0.0
    %1141 = vmatmul.mubr.f32.gmra.mrb[0].mxu0 %v923
    %v1142 = vpop.f32.mrb[0].mxu0
    %v1143 = vadd.f32 0.0, %v1142
    %v1144 = vpop.f32.mrb[0].mxu0
    %1145 = vdwg.mxu0
    %v1146 = vadd.f32 %v868, %v1008
    %v1147 = vadd.f32 %v869, %v1013
    %v1148 = vadd.f32 %v870, %v1018
    %v1149 = vadd.f32 %v871, %v1023
    %v1150 = vadd.f32 %v872, %v1028
    %v1151 = vadd.f32 %v873, %v1033
    %v1152 = vadd.f32 %v874, %v1038
    %v1153 = vadd.f32 %v875, %v1043
    %v1154 = vadd.f32 %v876, %v1048
    %v1155 = vadd.f32 %v877, %v1053
    %v1156 = vadd.f32 %v878, %v1058
    %v1157 = vadd.f32 %v879, %v1063
    %v1158 = vadd.f32 %v880, %v1068
    %v1159 = vadd.f32 %v881, %v1073
    %v1160 = vadd.f32 %v882, %v1078
    %v1161 = vadd.f32 %v883, %v1083
    %v1162 = vadd.f32 %v884, %v1088
    %v1163 = vadd.f32 %v885, %v1093
    %v1164 = vadd.f32 %v886, %v1098
    %v1165 = vadd.f32 %v887, %v1103
    %v1166 = vadd.f32 %v888, %v1108
    %v1167 = vadd.f32 %v889, %v1113
    %v1168 = vadd.f32 %v890, %v1118
    %v1169 = vadd.f32 %v891, %v1123
    %v1170 = vadd.f32 %v892, %v1128
    %v1171 = vadd.f32 %v893, %v1133
    %v1172 = vadd.f32 %v894, %v1138
    %v1173 = vadd.f32 %v895, %v1143
    %v1174 = vld [vmem:[%s0 + $0x11] sm:$0xff]
    %v1175 = vld [vmem:[%s0 + $0x19] sm:$0xff]
    %v1176 = vld [vmem:[%s0 + $0x21] sm:$0xff]
    %v1177 = vld [vmem:[%s0 + $0x29] sm:$0xff]
    %v1178 = vld [vmem:[%s0 + $0x31] sm:$0xff]
    %v1179 = vld [vmem:[%s0 + $0x39] sm:$0xff]
    %v1180 = vld [vmem:[%s0 + $0x41] sm:$0xff]
    %v1181 = vld [vmem:[%s0 + $0x49] sm:$0xff]
    %v1182 = vld [vmem:[%s0 + $0x51] sm:$0xff]
    %v1183 = vld [vmem:[%s0 + $0x59] sm:$0xff]
    %v1184 = vld [vmem:[%s0 + $0x61] sm:$0xff]
    %v1185 = vld [vmem:[%s0 + $0x69] sm:$0xff]
    %v1186 = vld [vmem:[%s0 + $0x71] sm:$0xff]
    %v1187 = vld [vmem:[%s0 + $0x79] sm:$0xff]
    %v1188 = vld [vmem:[%s0 + $0x81] sm:$0xff]
    %v1189 = vld [vmem:[%s0 + $0x89] sm:$0xff]
    %v1190 = vld [vmem:[%s0 + $0x91] sm:$0xff]
    %v1191 = vld [vmem:[%s0 + $0x99] sm:$0xff]
    %v1192 = vld [vmem:[%s0 + $0xa1] sm:$0xff]
    %v1193 = vld [vmem:[%s0 + $0xa9] sm:$0xff]
    %v1194 = vld [vmem:[%s0 + $0xb1] sm:$0xff]
    %v1195 = vld [vmem:[%s0 + $0xb9] sm:$0xff]
    %v1196 = vld [vmem:[%s0 + $0xc1] sm:$0xff]
    %v1197 = vld [vmem:[%s0 + $0xc9] sm:$0xff]
    %v1198 = vld [vmem:[%s0 + $0xd1] sm:$0xff]
    %v1199 = vld [vmem:[%s0 + $0xd9] sm:$0xff]
    %v1200 = vld [vmem:[%s0 + $0xe1] sm:$0xff]
    %v1201 = vld [vmem:[%s0 + $0xe9] sm:$0x3f]
    %s1202 = scalar_lea.vmem %s1, 512
    %v1203 = vld [vmem:[%s1202] sm:$0xff]
    %v1204 = vld [vmem:[%s1202 + $0x8] sm:$0xff]
    %v1205 = vld [vmem:[%s1202 + $0x10] sm:$0xff]
    %v1206 = vld [vmem:[%s1202 + $0x18] sm:$0xff]
    %v1207 = vld [vmem:[%s1202 + $0x20] sm:$0xff]
    %v1208 = vld [vmem:[%s1202 + $0x28] sm:$0xff]
    %v1209 = vld [vmem:[%s1202 + $0x30] sm:$0xff]
    %v1210 = vld [vmem:[%s1202 + $0x38] sm:$0xff]
    %v1211 = vld [vmem:[%s1202 + $0x40] sm:$0xff]
    %v1212 = vld [vmem:[%s1202 + $0x48] sm:$0xff]
    %v1213 = vld [vmem:[%s1202 + $0x50] sm:$0xff]
    %v1214 = vld [vmem:[%s1202 + $0x58] sm:$0xff]
    %v1215 = vld [vmem:[%s1202 + $0x60] sm:$0xff]
    %v1216 = vld [vmem:[%s1202 + $0x68] sm:$0xff]
    %v1217 = vld [vmem:[%s1202 + $0x70] sm:$0xff]
    %v1218 = vld [vmem:[%s1202 + $0x78] sm:$0xff]
    %1219 = vmatprep.subr.mxu0 0.0
    %1220 = vmatpush1.msra.mxu0 %v1203
    %1221 = vmatprep.subr.mxu0 0.0
    %1222 = vmatpush1.msra.mxu0 %v1204
    %1223 = vmatprep.subr.mxu0 0.0
    %1224 = vmatpush1.msra.mxu0 %v1205
    %1225 = vmatprep.subr.mxu0 0.0
    %1226 = vmatpush1.msra.mxu0 %v1206
    %1227 = vmatprep.subr.mxu0 0.0
    %1228 = vmatpush1.msra.mxu0 %v1207
    %1229 = vmatprep.subr.mxu0 0.0
    %1230 = vmatpush1.msra.mxu0 %v1208
    %1231 = vmatprep.subr.mxu0 0.0
    %1232 = vmatpush1.msra.mxu0 %v1209
    %1233 = vmatprep.subr.mxu0 0.0
    %1234 = vmatpush1.msra.mxu0 %v1210
    %1235 = vmatprep.subr.mxu0 0.0
    %1236 = vmatpush1.msra.mxu0 %v1211
    %1237 = vmatprep.subr.mxu0 0.0
    %1238 = vmatpush1.msra.mxu0 %v1212
    %1239 = vmatprep.subr.mxu0 0.0
    %1240 = vmatpush1.msra.mxu0 %v1213
    %1241 = vmatprep.subr.mxu0 0.0
    %1242 = vmatpush1.msra.mxu0 %v1214
    %1243 = vmatprep.subr.mxu0 0.0
    %1244 = vmatpush1.msra.mxu0 %v1215
    %1245 = vmatprep.subr.mxu0 0.0
    %1246 = vmatpush1.msra.mxu0 %v1216
    %1247 = vmatprep.subr.mxu0 0.0
    %1248 = vmatpush1.msra.mxu0 %v1217
    %1249 = vmatprep.subr.mxu0 0.0
    %1250 = vmatpush1.msra.mxu0 %v1218
    %1251 = vmatprep.subr.mxu0 0.0
    %1252 = vmatpush1.msra.mxu0 0.0
    %1253 = vmatprep.subr.mxu0 0.0
    %1254 = vmatpush1.msra.mxu0 0.0
    %1255 = vmatprep.subr.mxu0 0.0
    %1256 = vmatpush1.msra.mxu0 0.0
    %1257 = vmatprep.subr.mxu0 0.0
    %1258 = vmatpush1.msra.mxu0 0.0
    %1259 = vmatprep.subr.mxu0 0.0
    %1260 = vmatpush1.msra.mxu0 0.0
    %1261 = vmatprep.subr.mxu0 0.0
    %1262 = vmatpush1.msra.mxu0 0.0
    %1263 = vmatprep.subr.mxu0 0.0
    %1264 = vmatpush1.msra.mxu0 0.0
    %1265 = vmatprep.subr.mxu0 0.0
    %1266 = vmatpush1.msra.mxu0 0.0
    %1267 = vmatprep.subr.mxu0 0.0
    %1268 = vmatpush1.msra.mxu0 0.0
    %1269 = vmatprep.subr.mxu0 0.0
    %1270 = vmatpush1.msra.mxu0 0.0
    %1271 = vmatprep.subr.mxu0 0.0
    %1272 = vmatpush1.msra.mxu0 0.0
    %1273 = vmatprep.subr.mxu0 0.0
    %1274 = vmatpush1.msra.mxu0 0.0
    %1275 = vmatprep.subr.mxu0 0.0
    %1276 = vmatpush1.msra.mxu0 0.0
    %1277 = vmatprep.subr.mxu0 0.0
    %1278 = vmatpush1.msra.mxu0 0.0
    %1279 = vmatprep.subr.mxu0 0.0
    %1280 = vmatpush1.msra.mxu0 0.0
    %1281 = vmatprep.subr.mxu0 0.0
    %1282 = vmatpush1.msra.mxu0 0.0
    %1283 = vmatprep.mubr.f32.mxu0 0.0
    %1284 = vmatmul.mubr.f32.gmra.mrb[0].mxu0 %v1174
    %v1285 = vpop.f32.mrb[0].mxu0
    %v1286 = vadd.f32 0.0, %v1285
    %v1287 = vpop.f32.mrb[0].mxu0
    %1288 = vmatprep.mubr.f32.mxu0 0.0
    %1289 = vmatmul.mubr.f32.gmra.mrb[0].mxu0 %v1175
    %v1290 = vpop.f32.mrb[0].mxu0
    %v1291 = vadd.f32 0.0, %v1290
    %v1292 = vpop.f32.mrb[0].mxu0
    %1293 = vmatprep.mubr.f32.mxu0 0.0
    %1294 = vmatmul.mubr.f32.gmra.mrb[0].mxu0 %v1176
    %v1295 = vpop.f32.mrb[0].mxu0
    %v1296 = vadd.f32 0.0, %v1295
    %v1297 = vpop.f32.mrb[0].mxu0
    %1298 = vmatprep.mubr.f32.mxu0 0.0
    %1299 = vmatmul.mubr.f32.gmra.mrb[0].mxu0 %v1177
    %v1300 = vpop.f32.mrb[0].mxu0
    %v1301 = vadd.f32 0.0, %v1300
    %v1302 = vpop.f32.mrb[0].mxu0
    %1303 = vmatprep.mubr.f32.mxu0 0.0
    %1304 = vmatmul.mubr.f32.gmra.mrb[0].mxu0 %v1178
    %v1305 = vpop.f32.mrb[0].mxu0
    %v1306 = vadd.f32 0.0, %v1305
    %v1307 = vpop.f32.mrb[0].mxu0
    %1308 = vmatprep.mubr.f32.mxu0 0.0
    %1309 = vmatmul.mubr.f32.gmra.mrb[0].mxu0 %v1179
    %v1310 = vpop.f32.mrb[0].mxu0
    %v1311 = vadd.f32 0.0, %v1310
    %v1312 = vpop.f32.mrb[0].mxu0
    %1313 = vmatprep.mubr.f32.mxu0 0.0
    %1314 = vmatmul.mubr.f32.gmra.mrb[0].mxu0 %v1180
    %v1315 = vpop.f32.mrb[0].mxu0
    %v1316 = vadd.f32 0.0, %v1315
    %v1317 = vpop.f32.mrb[0].mxu0
    %1318 = vmatprep.mubr.f32.mxu0 0.0
    %1319 = vmatmul.mubr.f32.gmra.mrb[0].mxu0 %v1181
    %v1320 = vpop.f32.mrb[0].mxu0
    %v1321 = vadd.f32 0.0, %v1320
    %v1322 = vpop.f32.mrb[0].mxu0
    %1323 = vmatprep.mubr.f32.mxu0 0.0
    %1324 = vmatmul.mubr.f32.gmra.mrb[0].mxu0 %v1182
    %v1325 = vpop.f32.mrb[0].mxu0
    %v1326 = vadd.f32 0.0, %v1325
    %v1327 = vpop.f32.mrb[0].mxu0
    %1328 = vmatprep.mubr.f32.mxu0 0.0
    %1329 = vmatmul.mubr.f32.gmra.mrb[0].mxu0 %v1183
    %v1330 = vpop.f32.mrb[0].mxu0
    %v1331 = vadd.f32 0.0, %v1330
    %v1332 = vpop.f32.mrb[0].mxu0
    %1333 = vmatprep.mubr.f32.mxu0 0.0
    %1334 = vmatmul.mubr.f32.gmra.mrb[0].mxu0 %v1184
    %v1335 = vpop.f32.mrb[0].mxu0
    %v1336 = vadd.f32 0.0, %v1335
    %v1337 = vpop.f32.mrb[0].mxu0
    %1338 = vmatprep.mubr.f32.mxu0 0.0
    %1339 = vmatmul.mubr.f32.gmra.mrb[0].mxu0 %v1185
    %v1340 = vpop.f32.mrb[0].mxu0
    %v1341 = vadd.f32 0.0, %v1340
    %v1342 = vpop.f32.mrb[0].mxu0
    %1343 = vmatprep.mubr.f32.mxu0 0.0
    %1344 = vmatmul.mubr.f32.gmra.mrb[0].mxu0 %v1186
    %v1345 = vpop.f32.mrb[0].mxu0
    %v1346 = vadd.f32 0.0, %v1345
    %v1347 = vpop.f32.mrb[0].mxu0
    %1348 = vmatprep.mubr.f32.mxu0 0.0
    %1349 = vmatmul.mubr.f32.gmra.mrb[0].mxu0 %v1187
    %v1350 = vpop.f32.mrb[0].mxu0
    %v1351 = vadd.f32 0.0, %v1350
    %v1352 = vpop.f32.mrb[0].mxu0
    %1353 = vmatprep.mubr.f32.mxu0 0.0
    %1354 = vmatmul.mubr.f32.gmra.mrb[0].mxu0 %v1188
    %v1355 = vpop.f32.mrb[0].mxu0
    %v1356 = vadd.f32 0.0, %v1355
    %v1357 = vpop.f32.mrb[0].mxu0
    %1358 = vmatprep.mubr.f32.mxu0 0.0
    %1359 = vmatmul.mubr.f32.gmra.mrb[0].mxu0 %v1189
    %v1360 = vpop.f32.mrb[0].mxu0
    %v1361 = vadd.f32 0.0, %v1360
    %v1362 = vpop.f32.mrb[0].mxu0
    %1363 = vmatprep.mubr.f32.mxu0 0.0
    %1364 = vmatmul.mubr.f32.gmra.mrb[0].mxu0 %v1190
    %v1365 = vpop.f32.mrb[0].mxu0
    %v1366 = vadd.f32 0.0, %v1365
    %v1367 = vpop.f32.mrb[0].mxu0
    %1368 = vmatprep.mubr.f32.mxu0 0.0
    %1369 = vmatmul.mubr.f32.gmra.mrb[0].mxu0 %v1191
    %v1370 = vpop.f32.mrb[0].mxu0
    %v1371 = vadd.f32 0.0, %v1370
    %v1372 = vpop.f32.mrb[0].mxu0
    %1373 = vmatprep.mubr.f32.mxu0 0.0
    %1374 = vmatmul.mubr.f32.gmra.mrb[0].mxu0 %v1192
    %v1375 = vpop.f32.mrb[0].mxu0
    %v1376 = vadd.f32 0.0, %v1375
    %v1377 = vpop.f32.mrb[0].mxu0
    %1378 = vmatprep.mubr.f32.mxu0 0.0
    %1379 = vmatmul.mubr.f32.gmra.mrb[0].mxu0 %v1193
    %v1380 = vpop.f32.mrb[0].mxu0
    %v1381 = vadd.f32 0.0, %v1380
    %v1382 = vpop.f32.mrb[0].mxu0
    %1383 = vmatprep.mubr.f32.mxu0 0.0
    %1384 = vmatmul.mubr.f32.gmra.mrb[0].mxu0 %v1194
    %v1385 = vpop.f32.mrb[0].mxu0
    %v1386 = vadd.f32 0.0, %v1385
    %v1387 = vpop.f32.mrb[0].mxu0
    %1388 = vmatprep.mubr.f32.mxu0 0.0
    %1389 = vmatmul.mubr.f32.gmra.mrb[0].mxu0 %v1195
    %v1390 = vpop.f32.mrb[0].mxu0
    %v1391 = vadd.f32 0.0, %v1390
    %v1392 = vpop.f32.mrb[0].mxu0
    %1393 = vmatprep.mubr.f32.mxu0 0.0
    %1394 = vmatmul.mubr.f32.gmra.mrb[0].mxu0 %v1196
    %v1395 = vpop.f32.mrb[0].mxu0
    %v1396 = vadd.f32 0.0, %v1395
    %v1397 = vpop.f32.mrb[0].mxu0
    %1398 = vmatprep.mubr.f32.mxu0 0.0
    %1399 = vmatmul.mubr.f32.gmra.mrb[0].mxu0 %v1197
    %v1400 = vpop.f32.mrb[0].mxu0
    %v1401 = vadd.f32 0.0, %v1400
    %v1402 = vpop.f32.mrb[0].mxu0
    %1403 = vmatprep.mubr.f32.mxu0 0.0
    %1404 = vmatmul.mubr.f32.gmra.mrb[0].mxu0 %v1198
    %v1405 = vpop.f32.mrb[0].mxu0
    %v1406 = vadd.f32 0.0, %v1405
    %v1407 = vpop.f32.mrb[0].mxu0
    %1408 = vmatprep.mubr.f32.mxu0 0.0
    %1409 = vmatmul.mubr.f32.gmra.mrb[0].mxu0 %v1199
    %v1410 = vpop.f32.mrb[0].mxu0
    %v1411 = vadd.f32 0.0, %v1410
    %v1412 = vpop.f32.mrb[0].mxu0
    %1413 = vmatprep.mubr.f32.mxu0 0.0
    %1414 = vmatmul.mubr.f32.gmra.mrb[0].mxu0 %v1200
    %v1415 = vpop.f32.mrb[0].mxu0
    %v1416 = vadd.f32 0.0, %v1415
    %v1417 = vpop.f32.mrb[0].mxu0
    %1418 = vmatprep.mubr.f32.mxu0 0.0
    %1419 = vmatmul.mubr.f32.gmra.mrb[0].mxu0 %v1201
    %v1420 = vpop.f32.mrb[0].mxu0
    %v1421 = vadd.f32 0.0, %v1420
    %v1422 = vpop.f32.mrb[0].mxu0
    %1423 = vdwg.mxu0
    %v1424 = vadd.f32 %v1146, %v1286
    %v1425 = vadd.f32 %v1147, %v1291
    %v1426 = vadd.f32 %v1148, %v1296
    %v1427 = vadd.f32 %v1149, %v1301
    %v1428 = vadd.f32 %v1150, %v1306
    %v1429 = vadd.f32 %v1151, %v1311
    %v1430 = vadd.f32 %v1152, %v1316
    %v1431 = vadd.f32 %v1153, %v1321
    %v1432 = vadd.f32 %v1154, %v1326
    %v1433 = vadd.f32 %v1155, %v1331
    %v1434 = vadd.f32 %v1156, %v1336
    %v1435 = vadd.f32 %v1157, %v1341
    %v1436 = vadd.f32 %v1158, %v1346
    %v1437 = vadd.f32 %v1159, %v1351
    %v1438 = vadd.f32 %v1160, %v1356
    %v1439 = vadd.f32 %v1161, %v1361
    %v1440 = vadd.f32 %v1162, %v1366
    %v1441 = vadd.f32 %v1163, %v1371
    %v1442 = vadd.f32 %v1164, %v1376
    %v1443 = vadd.f32 %v1165, %v1381
    %v1444 = vadd.f32 %v1166, %v1386
    %v1445 = vadd.f32 %v1167, %v1391
    %v1446 = vadd.f32 %v1168, %v1396
    %v1447 = vadd.f32 %v1169, %v1401
    %v1448 = vadd.f32 %v1170, %v1406
    %v1449 = vadd.f32 %v1171, %v1411
    %v1450 = vadd.f32 %v1172, %v1416
    %v1451 = vadd.f32 %v1173, %v1421
    %v1452 = vld [vmem:[%s0 + $0x12] sm:$0xff]
    %v1453 = vld [vmem:[%s0 + $0x1a] sm:$0xff]
    %v1454 = vld [vmem:[%s0 + $0x22] sm:$0xff]
    %v1455 = vld [vmem:[%s0 + $0x2a] sm:$0xff]
    %v1456 = vld [vmem:[%s0 + $0x32] sm:$0xff]
    %v1457 = vld [vmem:[%s0 + $0x3a] sm:$0xff]
    %v1458 = vld [vmem:[%s0 + $0x42] sm:$0xff]
    %v1459 = vld [vmem:[%s0 + $0x4a] sm:$0xff]
    %v1460 = vld [vmem:[%s0 + $0x52] sm:$0xff]
    %v1461 = vld [vmem:[%s0 + $0x5a] sm:$0xff]
    %v1462 = vld [vmem:[%s0 + $0x62] sm:$0xff]
    %v1463 = vld [vmem:[%s0 + $0x6a] sm:$0xff]
    %v1464 = vld [vmem:[%s0 + $0x72] sm:$0xff]
    %v1465 = vld [vmem:[%s0 + $0x7a] sm:$0xff]
    %v1466 = vld [vmem:[%s0 + $0x82] sm:$0xff]
    %v1467 = vld [vmem:[%s0 + $0x8a] sm:$0xff]
    %v1468 = vld [vmem:[%s0 + $0x92] sm:$0xff]
    %v1469 = vld [vmem:[%s0 + $0x9a] sm:$0xff]
    %v1470 = vld [vmem:[%s0 + $0xa2] sm:$0xff]
    %v1471 = vld [vmem:[%s0 + $0xaa] sm:$0xff]
    %v1472 = vld [vmem:[%s0 + $0xb2] sm:$0xff]
    %v1473 = vld [vmem:[%s0 + $0xba] sm:$0xff]
    %v1474 = vld [vmem:[%s0 + $0xc2] sm:$0xff]
    %v1475 = vld [vmem:[%s0 + $0xca] sm:$0xff]
    %v1476 = vld [vmem:[%s0 + $0xd2] sm:$0xff]
    %v1477 = vld [vmem:[%s0 + $0xda] sm:$0xff]
    %v1478 = vld [vmem:[%s0 + $0xe2] sm:$0xff]
    %v1479 = vld [vmem:[%s0 + $0xea] sm:$0x3f]
    %s1480 = scalar_lea.vmem %s1, 640
    %v1481 = vld [vmem:[%s1480] sm:$0xff]
    %v1482 = vld [vmem:[%s1480 + $0x8] sm:$0xff]
    %v1483 = vld [vmem:[%s1480 + $0x10] sm:$0xff]
    %v1484 = vld [vmem:[%s1480 + $0x18] sm:$0xff]
    %v1485 = vld [vmem:[%s1480 + $0x20] sm:$0xff]
    %v1486 = vld [vmem:[%s1480 + $0x28] sm:$0xff]
    %v1487 = vld [vmem:[%s1480 + $0x30] sm:$0xff]
    %v1488 = vld [vmem:[%s1480 + $0x38] sm:$0xff]
    %v1489 = vld [vmem:[%s1480 + $0x40] sm:$0xff]
    %v1490 = vld [vmem:[%s1480 + $0x48] sm:$0xff]
    %v1491 = vld [vmem:[%s1480 + $0x50] sm:$0xff]
    %v1492 = vld [vmem:[%s1480 + $0x58] sm:$0xff]
    %v1493 = vld [vmem:[%s1480 + $0x60] sm:$0xff]
    %v1494 = vld [vmem:[%s1480 + $0x68] sm:$0xff]
    %v1495 = vld [vmem:[%s1480 + $0x70] sm:$0xff]
    %v1496 = vld [vmem:[%s1480 + $0x78] sm:$0xff]
    %1497 = vmatprep.subr.mxu0 0.0
    %1498 = vmatpush1.msra.mxu0 %v1481
    %1499 = vmatprep.subr.mxu0 0.0
    %1500 = vmatpush1.msra.mxu0 %v1482
    %1501 = vmatprep.subr.mxu0 0.0
    %1502 = vmatpush1.msra.mxu0 %v1483
    %1503 = vmatprep.subr.mxu0 0.0
    %1504 = vmatpush1.msra.mxu0 %v1484
    %1505 = vmatprep.subr.mxu0 0.0
    %1506 = vmatpush1.msra.mxu0 %v1485
    %1507 = vmatprep.subr.mxu0 0.0
    %1508 = vmatpush1.msra.mxu0 %v1486
    %1509 = vmatprep.subr.mxu0 0.0
    %1510 = vmatpush1.msra.mxu0 %v1487
    %1511 = vmatprep.subr.mxu0 0.0
    %1512 = vmatpush1.msra.mxu0 %v1488
    %1513 = vmatprep.subr.mxu0 0.0
    %1514 = vmatpush1.msra.mxu0 %v1489
    %1515 = vmatprep.subr.mxu0 0.0
    %1516 = vmatpush1.msra.mxu0 %v1490
    %1517 = vmatprep.subr.mxu0 0.0
    %1518 = vmatpush1.msra.mxu0 %v1491
    %1519 = vmatprep.subr.mxu0 0.0
    %1520 = vmatpush1.msra.mxu0 %v1492
    %1521 = vmatprep.subr.mxu0 0.0
    %1522 = vmatpush1.msra.mxu0 %v1493
    %1523 = vmatprep.subr.mxu0 0.0
    %1524 = vmatpush1.msra.mxu0 %v1494
    %1525 = vmatprep.subr.mxu0 0.0
    %1526 = vmatpush1.msra.mxu0 %v1495
    %1527 = vmatprep.subr.mxu0 0.0
    %1528 = vmatpush1.msra.mxu0 %v1496
    %1529 = vmatprep.subr.mxu0 0.0
    %1530 = vmatpush1.msra.mxu0 0.0
    %1531 = vmatprep.subr.mxu0 0.0
    %1532 = vmatpush1.msra.mxu0 0.0
    %1533 = vmatprep.subr.mxu0 0.0
    %1534 = vmatpush1.msra.mxu0 0.0
    %1535 = vmatprep.subr.mxu0 0.0
    %1536 = vmatpush1.msra.mxu0 0.0
    %1537 = vmatprep.subr.mxu0 0.0
    %1538 = vmatpush1.msra.mxu0 0.0
    %1539 = vmatprep.subr.mxu0 0.0
    %1540 = vmatpush1.msra.mxu0 0.0
    %1541 = vmatprep.subr.mxu0 0.0
    %1542 = vmatpush1.msra.mxu0 0.0
    %1543 = vmatprep.subr.mxu0 0.0
    %1544 = vmatpush1.msra.mxu0 0.0
    %1545 = vmatprep.subr.mxu0 0.0
    %1546 = vmatpush1.msra.mxu0 0.0
    %1547 = vmatprep.subr.mxu0 0.0
    %1548 = vmatpush1.msra.mxu0 0.0
    %1549 = vmatprep.subr.mxu0 0.0
    %1550 = vmatpush1.msra.mxu0 0.0
    %1551 = vmatprep.subr.mxu0 0.0
    %1552 = vmatpush1.msra.mxu0 0.0
    %1553 = vmatprep.subr.mxu0 0.0
    %1554 = vmatpush1.msra.mxu0 0.0
    %1555 = vmatprep.subr.mxu0 0.0
    %1556 = vmatpush1.msra.mxu0 0.0
    %1557 = vmatprep.subr.mxu0 0.0
    %1558 = vmatpush1.msra.mxu0 0.0
    %1559 = vmatprep.subr.mxu0 0.0
    %1560 = vmatpush1.msra.mxu0 0.0
    %1561 = vmatprep.mubr.f32.mxu0 0.0
    %1562 = vmatmul.mubr.f32.gmra.mrb[0].mxu0 %v1452
    %v1563 = vpop.f32.mrb[0].mxu0
    %v1564 = vadd.f32 0.0, %v1563
    %v1565 = vpop.f32.mrb[0].mxu0
    %1566 = vmatprep.mubr.f32.mxu0 0.0
    %1567 = vmatmul.mubr.f32.gmra.mrb[0].mxu0 %v1453
    %v1568 = vpop.f32.mrb[0].mxu0
    %v1569 = vadd.f32 0.0, %v1568
    %v1570 = vpop.f32.mrb[0].mxu0
    %1571 = vmatprep.mubr.f32.mxu0 0.0
    %1572 = vmatmul.mubr.f32.gmra.mrb[0].mxu0 %v1454
    %v1573 = vpop.f32.mrb[0].mxu0
    %v1574 = vadd.f32 0.0, %v1573
    %v1575 = vpop.f32.mrb[0].mxu0
    %1576 = vmatprep.mubr.f32.mxu0 0.0
    %1577 = vmatmul.mubr.f32.gmra.mrb[0].mxu0 %v1455
    %v1578 = vpop.f32.mrb[0].mxu0
    %v1579 = vadd.f32 0.0, %v1578
    %v1580 = vpop.f32.mrb[0].mxu0
    %1581 = vmatprep.mubr.f32.mxu0 0.0
    %1582 = vmatmul.mubr.f32.gmra.mrb[0].mxu0 %v1456
    %v1583 = vpop.f32.mrb[0].mxu0
    %v1584 = vadd.f32 0.0, %v1583
    %v1585 = vpop.f32.mrb[0].mxu0
    %1586 = vmatprep.mubr.f32.mxu0 0.0
    %1587 = vmatmul.mubr.f32.gmra.mrb[0].mxu0 %v1457
    %v1588 = vpop.f32.mrb[0].mxu0
    %v1589 = vadd.f32 0.0, %v1588
    %v1590 = vpop.f32.mrb[0].mxu0
    %1591 = vmatprep.mubr.f32.mxu0 0.0
    %1592 = vmatmul.mubr.f32.gmra.mrb[0].mxu0 %v1458
    %v1593 = vpop.f32.mrb[0].mxu0
    %v1594 = vadd.f32 0.0, %v1593
    %v1595 = vpop.f32.mrb[0].mxu0
    %1596 = vmatprep.mubr.f32.mxu0 0.0
    %1597 = vmatmul.mubr.f32.gmra.mrb[0].mxu0 %v1459
    %v1598 = vpop.f32.mrb[0].mxu0
    %v1599 = vadd.f32 0.0, %v1598
    %v1600 = vpop.f32.mrb[0].mxu0
    %1601 = vmatprep.mubr.f32.mxu0 0.0
    %1602 = vmatmul.mubr.f32.gmra.mrb[0].mxu0 %v1460
    %v1603 = vpop.f32.mrb[0].mxu0
    %v1604 = vadd.f32 0.0, %v1603
    %v1605 = vpop.f32.mrb[0].mxu0
    %1606 = vmatprep.mubr.f32.mxu0 0.0
    %1607 = vmatmul.mubr.f32.gmra.mrb[0].mxu0 %v1461
    %v1608 = vpop.f32.mrb[0].mxu0
    %v1609 = vadd.f32 0.0, %v1608
    %v1610 = vpop.f32.mrb[0].mxu0
    %1611 = vmatprep.mubr.f32.mxu0 0.0
    %1612 = vmatmul.mubr.f32.gmra.mrb[0].mxu0 %v1462
    %v1613 = vpop.f32.mrb[0].mxu0
    %v1614 = vadd.f32 0.0, %v1613
    %v1615 = vpop.f32.mrb[0].mxu0
    %1616 = vmatprep.mubr.f32.mxu0 0.0
    %1617 = vmatmul.mubr.f32.gmra.mrb[0].mxu0 %v1463
    %v1618 = vpop.f32.mrb[0].mxu0
    %v1619 = vadd.f32 0.0, %v1618
    %v1620 = vpop.f32.mrb[0].mxu0
    %1621 = vmatprep.mubr.f32.mxu0 0.0
    %1622 = vmatmul.mubr.f32.gmra.mrb[0].mxu0 %v1464
    %v1623 = vpop.f32.mrb[0].mxu0
    %v1624 = vadd.f32 0.0, %v1623
    %v1625 = vpop.f32.mrb[0].mxu0
    %1626 = vmatprep.mubr.f32.mxu0 0.0
    %1627 = vmatmul.mubr.f32.gmra.mrb[0].mxu0 %v1465
    %v1628 = vpop.f32.mrb[0].mxu0
    %v1629 = vadd.f32 0.0, %v1628
    %v1630 = vpop.f32.mrb[0].mxu0
    %1631 = vmatprep.mubr.f32.mxu0 0.0
    %1632 = vmatmul.mubr.f32.gmra.mrb[0].mxu0 %v1466
    %v1633 = vpop.f32.mrb[0].mxu0
    %v1634 = vadd.f32 0.0, %v1633
    %v1635 = vpop.f32.mrb[0].mxu0
    %1636 = vmatprep.mubr.f32.mxu0 0.0
    %1637 = vmatmul.mubr.f32.gmra.mrb[0].mxu0 %v1467
    %v1638 = vpop.f32.mrb[0].mxu0
    %v1639 = vadd.f32 0.0, %v1638
    %v1640 = vpop.f32.mrb[0].mxu0
    %1641 = vmatprep.mubr.f32.mxu0 0.0
    %1642 = vmatmul.mubr.f32.gmra.mrb[0].mxu0 %v1468
    %v1643 = vpop.f32.mrb[0].mxu0
    %v1644 = vadd.f32 0.0, %v1643
    %v1645 = vpop.f32.mrb[0].mxu0
    %1646 = vmatprep.mubr.f32.mxu0 0.0
    %1647 = vmatmul.mubr.f32.gmra.mrb[0].mxu0 %v1469
    %v1648 = vpop.f32.mrb[0].mxu0
    %v1649 = vadd.f32 0.0, %v1648
    %v1650 = vpop.f32.mrb[0].mxu0
    %1651 = vmatprep.mubr.f32.mxu0 0.0
    %1652 = vmatmul.mubr.f32.gmra.mrb[0].mxu0 %v1470
    %v1653 = vpop.f32.mrb[0].mxu0
    %v1654 = vadd.f32 0.0, %v1653
    %v1655 = vpop.f32.mrb[0].mxu0
    %1656 = vmatprep.mubr.f32.mxu0 0.0
    %1657 = vmatmul.mubr.f32.gmra.mrb[0].mxu0 %v1471
    %v1658 = vpop.f32.mrb[0].mxu0
    %v1659 = vadd.f32 0.0, %v1658
    %v1660 = vpop.f32.mrb[0].mxu0
    %1661 = vmatprep.mubr.f32.mxu0 0.0
    %1662 = vmatmul.mubr.f32.gmra.mrb[0].mxu0 %v1472
    %v1663 = vpop.f32.mrb[0].mxu0
    %v1664 = vadd.f32 0.0, %v1663
    %v1665 = vpop.f32.mrb[0].mxu0
    %1666 = vmatprep.mubr.f32.mxu0 0.0
    %1667 = vmatmul.mubr.f32.gmra.mrb[0].mxu0 %v1473
    %v1668 = vpop.f32.mrb[0].mxu0
    %v1669 = vadd.f32 0.0, %v1668
    %v1670 = vpop.f32.mrb[0].mxu0
    %1671 = vmatprep.mubr.f32.mxu0 0.0
    %1672 = vmatmul.mubr.f32.gmra.mrb[0].mxu0 %v1474
    %v1673 = vpop.f32.mrb[0].mxu0
    %v1674 = vadd.f32 0.0, %v1673
    %v1675 = vpop.f32.mrb[0].mxu0
    %1676 = vmatprep.mubr.f32.mxu0 0.0
    %1677 = vmatmul.mubr.f32.gmra.mrb[0].mxu0 %v1475
    %v1678 = vpop.f32.mrb[0].mxu0
    %v1679 = vadd.f32 0.0, %v1678
    %v1680 = vpop.f32.mrb[0].mxu0
    %1681 = vmatprep.mubr.f32.mxu0 0.0
    %1682 = vmatmul.mubr.f32.gmra.mrb[0].mxu0 %v1476
    %v1683 = vpop.f32.mrb[0].mxu0
    %v1684 = vadd.f32 0.0, %v1683
    %v1685 = vpop.f32.mrb[0].mxu0
    %1686 = vmatprep.mubr.f32.mxu0 0.0
    %1687 = vmatmul.mubr.f32.gmra.mrb[0].mxu0 %v1477
    %v1688 = vpop.f32.mrb[0].mxu0
    %v1689 = vadd.f32 0.0, %v1688
    %v1690 = vpop.f32.mrb[0].mxu0
    %1691 = vmatprep.mubr.f32.mxu0 0.0
    %1692 = vmatmul.mubr.f32.gmra.mrb[0].mxu0 %v1478
    %v1693 = vpop.f32.mrb[0].mxu0
    %v1694 = vadd.f32 0.0, %v1693
    %v1695 = vpop.f32.mrb[0].mxu0
    %1696 = vmatprep.mubr.f32.mxu0 0.0
    %1697 = vmatmul.mubr.f32.gmra.mrb[0].mxu0 %v1479
    %v1698 = vpop.f32.mrb[0].mxu0
    %v1699 = vadd.f32 0.0, %v1698
    %v1700 = vpop.f32.mrb[0].mxu0
    %1701 = vdwg.mxu0
    %v1702 = vadd.f32 %v1424, %v1564
    %v1703 = vadd.f32 %v1425, %v1569
    %v1704 = vadd.f32 %v1426, %v1574
    %v1705 = vadd.f32 %v1427, %v1579
    %v1706 = vadd.f32 %v1428, %v1584
    %v1707 = vadd.f32 %v1429, %v1589
    %v1708 = vadd.f32 %v1430, %v1594
    %v1709 = vadd.f32 %v1431, %v1599
    %v1710 = vadd.f32 %v1432, %v1604
    %v1711 = vadd.f32 %v1433, %v1609
    %v1712 = vadd.f32 %v1434, %v1614
    %v1713 = vadd.f32 %v1435, %v1619
    %v1714 = vadd.f32 %v1436, %v1624
    %v1715 = vadd.f32 %v1437, %v1629
    %v1716 = vadd.f32 %v1438, %v1634
    %v1717 = vadd.f32 %v1439, %v1639
    %v1718 = vadd.f32 %v1440, %v1644
    %v1719 = vadd.f32 %v1441, %v1649
    %v1720 = vadd.f32 %v1442, %v1654
    %v1721 = vadd.f32 %v1443, %v1659
    %v1722 = vadd.f32 %v1444, %v1664
    %v1723 = vadd.f32 %v1445, %v1669
    %v1724 = vadd.f32 %v1446, %v1674
    %v1725 = vadd.f32 %v1447, %v1679
    %v1726 = vadd.f32 %v1448, %v1684
    %v1727 = vadd.f32 %v1449, %v1689
    %v1728 = vadd.f32 %v1450, %v1694
    %v1729 = vadd.f32 %v1451, %v1699
    %v1730 = vld [vmem:[%s0 + $0x20] sm:$0xff]
    %v1731 = vld [vmem:[%s0 + $0x28] sm:$0xff]
    %v1732 = vld [vmem:[%s0 + $0x30] sm:$0xff]
    %v1733 = vld [vmem:[%s0 + $0x38] sm:$0xff]
    %v1734 = vld [vmem:[%s0 + $0x40] sm:$0xff]
    %v1735 = vld [vmem:[%s0 + $0x48] sm:$0xff]
    %v1736 = vld [vmem:[%s0 + $0x50] sm:$0xff]
    %v1737 = vld [vmem:[%s0 + $0x58] sm:$0xff]
    %v1738 = vld [vmem:[%s0 + $0x60] sm:$0xff]
    %v1739 = vld [vmem:[%s0 + $0x68] sm:$0xff]
    %v1740 = vld [vmem:[%s0 + $0x70] sm:$0xff]
    %v1741 = vld [vmem:[%s0 + $0x78] sm:$0xff]
    %v1742 = vld [vmem:[%s0 + $0x80] sm:$0xff]
    %v1743 = vld [vmem:[%s0 + $0x88] sm:$0xff]
    %v1744 = vld [vmem:[%s0 + $0x90] sm:$0xff]
    %v1745 = vld [vmem:[%s0 + $0x98] sm:$0xff]
    %v1746 = vld [vmem:[%s0 + $0xa0] sm:$0xff]
    %v1747 = vld [vmem:[%s0 + $0xa8] sm:$0xff]
    %v1748 = vld [vmem:[%s0 + $0xb0] sm:$0xff]
    %v1749 = vld [vmem:[%s0 + $0xb8] sm:$0xff]
    %v1750 = vld [vmem:[%s0 + $0xc0] sm:$0xff]
    %v1751 = vld [vmem:[%s0 + $0xc8] sm:$0xff]
    %v1752 = vld [vmem:[%s0 + $0xd0] sm:$0xff]
    %v1753 = vld [vmem:[%s0 + $0xd8] sm:$0xff]
    %v1754 = vld [vmem:[%s0 + $0xe0] sm:$0xff]
    %v1755 = vld [vmem:[%s0 + $0xe8] sm:$0xff]
    %v1756 = vld [vmem:[%s0 + $0xf0] sm:$0xff]
    %v1757 = vld [vmem:[%s0 + $0xf8] sm:$0x3f]
    %s1758 = scalar_lea.vmem %s1, 768
    %v1759 = vld [vmem:[%s1758] sm:$0xff]
    %v1760 = vld [vmem:[%s1758 + $0x8] sm:$0xff]
    %v1761 = vld [vmem:[%s1758 + $0x10] sm:$0xff]
    %v1762 = vld [vmem:[%s1758 + $0x18] sm:$0xff]
    %v1763 = vld [vmem:[%s1758 + $0x20] sm:$0xff]
    %v1764 = vld [vmem:[%s1758 + $0x28] sm:$0xff]
    %v1765 = vld [vmem:[%s1758 + $0x30] sm:$0xff]
    %v1766 = vld [vmem:[%s1758 + $0x38] sm:$0xff]
    %v1767 = vld [vmem:[%s1758 + $0x40] sm:$0xff]
    %v1768 = vld [vmem:[%s1758 + $0x48] sm:$0xff]
    %v1769 = vld [vmem:[%s1758 + $0x50] sm:$0xff]
    %v1770 = vld [vmem:[%s1758 + $0x58] sm:$0xff]
    %v1771 = vld [vmem:[%s1758 + $0x60] sm:$0xff]
    %v1772 = vld [vmem:[%s1758 + $0x68] sm:$0xff]
    %v1773 = vld [vmem:[%s1758 + $0x70] sm:$0xff]
    %v1774 = vld [vmem:[%s1758 + $0x78] sm:$0xff]
    %1775 = vmatprep.subr.mxu0 0.0
    %1776 = vmatpush1.msra.mxu0 %v1759
    %1777 = vmatprep.subr.mxu0 0.0
    %1778 = vmatpush1.msra.mxu0 %v1760
    %1779 = vmatprep.subr.mxu0 0.0
    %1780 = vmatpush1.msra.mxu0 %v1761
    %1781 = vmatprep.subr.mxu0 0.0
    %1782 = vmatpush1.msra.mxu0 %v1762
    %1783 = vmatprep.subr.mxu0 0.0
    %1784 = vmatpush1.msra.mxu0 %v1763
    %1785 = vmatprep.subr.mxu0 0.0
    %1786 = vmatpush1.msra.mxu0 %v1764
    %1787 = vmatprep.subr.mxu0 0.0
    %1788 = vmatpush1.msra.mxu0 %v1765
    %1789 = vmatprep.subr.mxu0 0.0
    %1790 = vmatpush1.msra.mxu0 %v1766
    %1791 = vmatprep.subr.mxu0 0.0
    %1792 = vmatpush1.msra.mxu0 %v1767
    %1793 = vmatprep.subr.mxu0 0.0
    %1794 = vmatpush1.msra.mxu0 %v1768
    %1795 = vmatprep.subr.mxu0 0.0
    %1796 = vmatpush1.msra.mxu0 %v1769
    %1797 = vmatprep.subr.mxu0 0.0
    %1798 = vmatpush1.msra.mxu0 %v1770
    %1799 = vmatprep.subr.mxu0 0.0
    %1800 = vmatpush1.msra.mxu0 %v1771
    %1801 = vmatprep.subr.mxu0 0.0
    %1802 = vmatpush1.msra.mxu0 %v1772
    %1803 = vmatprep.subr.mxu0 0.0
    %1804 = vmatpush1.msra.mxu0 %v1773
    %1805 = vmatprep.subr.mxu0 0.0
    %1806 = vmatpush1.msra.mxu0 %v1774
    %1807 = vmatprep.subr.mxu0 0.0
    %1808 = vmatpush1.msra.mxu0 0.0
    %1809 = vmatprep.subr.mxu0 0.0
    %1810 = vmatpush1.msra.mxu0 0.0
    %1811 = vmatprep.subr.mxu0 0.0
    %1812 = vmatpush1.msra.mxu0 0.0
    %1813 = vmatprep.subr.mxu0 0.0
    %1814 = vmatpush1.msra.mxu0 0.0
    %1815 = vmatprep.subr.mxu0 0.0
    %1816 = vmatpush1.msra.mxu0 0.0
    %1817 = vmatprep.subr.mxu0 0.0
    %1818 = vmatpush1.msra.mxu0 0.0
    %1819 = vmatprep.subr.mxu0 0.0
    %1820 = vmatpush1.msra.mxu0 0.0
    %1821 = vmatprep.subr.mxu0 0.0
    %1822 = vmatpush1.msra.mxu0 0.0
    %1823 = vmatprep.subr.mxu0 0.0
    %1824 = vmatpush1.msra.mxu0 0.0
    %1825 = vmatprep.subr.mxu0 0.0
    %1826 = vmatpush1.msra.mxu0 0.0
    %1827 = vmatprep.subr.mxu0 0.0
    %1828 = vmatpush1.msra.mxu0 0.0
    %1829 = vmatprep.subr.mxu0 0.0
    %1830 = vmatpush1.msra.mxu0 0.0
    %1831 = vmatprep.subr.mxu0 0.0
    %1832 = vmatpush1.msra.mxu0 0.0
    %1833 = vmatprep.subr.mxu0 0.0
    %1834 = vmatpush1.msra.mxu0 0.0
    %1835 = vmatprep.subr.mxu0 0.0
    %1836 = vmatpush1.msra.mxu0 0.0
    %1837 = vmatprep.subr.mxu0 0.0
    %1838 = vmatpush1.msra.mxu0 0.0
    %1839 = vmatprep.mubr.f32.mxu0 0.0
    %1840 = vmatmul.mubr.f32.gmra.mrb[0].mxu0 %v1730
    %v1841 = vpop.f32.mrb[0].mxu0
    %v1842 = vadd.f32 0.0, %v1841
    %v1843 = vpop.f32.mrb[0].mxu0
    %1844 = vmatprep.mubr.f32.mxu0 0.0
    %1845 = vmatmul.mubr.f32.gmra.mrb[0].mxu0 %v1731
    %v1846 = vpop.f32.mrb[0].mxu0
    %v1847 = vadd.f32 0.0, %v1846
    %v1848 = vpop.f32.mrb[0].mxu0
    %1849 = vmatprep.mubr.f32.mxu0 0.0
    %1850 = vmatmul.mubr.f32.gmra.mrb[0].mxu0 %v1732
    %v1851 = vpop.f32.mrb[0].mxu0
    %v1852 = vadd.f32 0.0, %v1851
    %v1853 = vpop.f32.mrb[0].mxu0
    %1854 = vmatprep.mubr.f32.mxu0 0.0
    %1855 = vmatmul.mubr.f32.gmra.mrb[0].mxu0 %v1733
    %v1856 = vpop.f32.mrb[0].mxu0
    %v1857 = vadd.f32 0.0, %v1856
    %v1858 = vpop.f32.mrb[0].mxu0
    %1859 = vmatprep.mubr.f32.mxu0 0.0
    %1860 = vmatmul.mubr.f32.gmra.mrb[0].mxu0 %v1734
    %v1861 = vpop.f32.mrb[0].mxu0
    %v1862 = vadd.f32 0.0, %v1861
    %v1863 = vpop.f32.mrb[0].mxu0
    %1864 = vmatprep.mubr.f32.mxu0 0.0
    %1865 = vmatmul.mubr.f32.gmra.mrb[0].mxu0 %v1735
    %v1866 = vpop.f32.mrb[0].mxu0
    %v1867 = vadd.f32 0.0, %v1866
    %v1868 = vpop.f32.mrb[0].mxu0
    %1869 = vmatprep.mubr.f32.mxu0 0.0
    %1870 = vmatmul.mubr.f32.gmra.mrb[0].mxu0 %v1736
    %v1871 = vpop.f32.mrb[0].mxu0
    %v1872 = vadd.f32 0.0, %v1871
    %v1873 = vpop.f32.mrb[0].mxu0
    %1874 = vmatprep.mubr.f32.mxu0 0.0
    %1875 = vmatmul.mubr.f32.gmra.mrb[0].mxu0 %v1737
    %v1876 = vpop.f32.mrb[0].mxu0
    %v1877 = vadd.f32 0.0, %v1876
    %v1878 = vpop.f32.mrb[0].mxu0
    %1879 = vmatprep.mubr.f32.mxu0 0.0
    %1880 = vmatmul.mubr.f32.gmra.mrb[0].mxu0 %v1738
    %v1881 = vpop.f32.mrb[0].mxu0
    %v1882 = vadd.f32 0.0, %v1881
    %v1883 = vpop.f32.mrb[0].mxu0
    %1884 = vmatprep.mubr.f32.mxu0 0.0
    %1885 = vmatmul.mubr.f32.gmra.mrb[0].mxu0 %v1739
    %v1886 = vpop.f32.mrb[0].mxu0
    %v1887 = vadd.f32 0.0, %v1886
    %v1888 = vpop.f32.mrb[0].mxu0
    %1889 = vmatprep.mubr.f32.mxu0 0.0
    %1890 = vmatmul.mubr.f32.gmra.mrb[0].mxu0 %v1740
    %v1891 = vpop.f32.mrb[0].mxu0
    %v1892 = vadd.f32 0.0, %v1891
    %v1893 = vpop.f32.mrb[0].mxu0
    %1894 = vmatprep.mubr.f32.mxu0 0.0
    %1895 = vmatmul.mubr.f32.gmra.mrb[0].mxu0 %v1741
    %v1896 = vpop.f32.mrb[0].mxu0
    %v1897 = vadd.f32 0.0, %v1896
    %v1898 = vpop.f32.mrb[0].mxu0
    %1899 = vmatprep.mubr.f32.mxu0 0.0
    %1900 = vmatmul.mubr.f32.gmra.mrb[0].mxu0 %v1742
    %v1901 = vpop.f32.mrb[0].mxu0
    %v1902 = vadd.f32 0.0, %v1901
    %v1903 = vpop.f32.mrb[0].mxu0
    %1904 = vmatprep.mubr.f32.mxu0 0.0
    %1905 = vmatmul.mubr.f32.gmra.mrb[0].mxu0 %v1743
    %v1906 = vpop.f32.mrb[0].mxu0
    %v1907 = vadd.f32 0.0, %v1906
    %v1908 = vpop.f32.mrb[0].mxu0
    %1909 = vmatprep.mubr.f32.mxu0 0.0
    %1910 = vmatmul.mubr.f32.gmra.mrb[0].mxu0 %v1744
    %v1911 = vpop.f32.mrb[0].mxu0
    %v1912 = vadd.f32 0.0, %v1911
    %v1913 = vpop.f32.mrb[0].mxu0
    %1914 = vmatprep.mubr.f32.mxu0 0.0
    %1915 = vmatmul.mubr.f32.gmra.mrb[0].mxu0 %v1745
    %v1916 = vpop.f32.mrb[0].mxu0
    %v1917 = vadd.f32 0.0, %v1916
    %v1918 = vpop.f32.mrb[0].mxu0
    %1919 = vmatprep.mubr.f32.mxu0 0.0
    %1920 = vmatmul.mubr.f32.gmra.mrb[0].mxu0 %v1746
    %v1921 = vpop.f32.mrb[0].mxu0
    %v1922 = vadd.f32 0.0, %v1921
    %v1923 = vpop.f32.mrb[0].mxu0
    %1924 = vmatprep.mubr.f32.mxu0 0.0
    %1925 = vmatmul.mubr.f32.gmra.mrb[0].mxu0 %v1747
    %v1926 = vpop.f32.mrb[0].mxu0
    %v1927 = vadd.f32 0.0, %v1926
    %v1928 = vpop.f32.mrb[0].mxu0
    %1929 = vmatprep.mubr.f32.mxu0 0.0
    %1930 = vmatmul.mubr.f32.gmra.mrb[0].mxu0 %v1748
    %v1931 = vpop.f32.mrb[0].mxu0
    %v1932 = vadd.f32 0.0, %v1931
    %v1933 = vpop.f32.mrb[0].mxu0
    %1934 = vmatprep.mubr.f32.mxu0 0.0
    %1935 = vmatmul.mubr.f32.gmra.mrb[0].mxu0 %v1749
    %v1936 = vpop.f32.mrb[0].mxu0
    %v1937 = vadd.f32 0.0, %v1936
    %v1938 = vpop.f32.mrb[0].mxu0
    %1939 = vmatprep.mubr.f32.mxu0 0.0
    %1940 = vmatmul.mubr.f32.gmra.mrb[0].mxu0 %v1750
    %v1941 = vpop.f32.mrb[0].mxu0
    %v1942 = vadd.f32 0.0, %v1941
    %v1943 = vpop.f32.mrb[0].mxu0
    %1944 = vmatprep.mubr.f32.mxu0 0.0
    %1945 = vmatmul.mubr.f32.gmra.mrb[0].mxu0 %v1751
    %v1946 = vpop.f32.mrb[0].mxu0
    %v1947 = vadd.f32 0.0, %v1946
    %v1948 = vpop.f32.mrb[0].mxu0
    %1949 = vmatprep.mubr.f32.mxu0 0.0
    %1950 = vmatmul.mubr.f32.gmra.mrb[0].mxu0 %v1752
    %v1951 = vpop.f32.mrb[0].mxu0
    %v1952 = vadd.f32 0.0, %v1951
    %v1953 = vpop.f32.mrb[0].mxu0
    %1954 = vmatprep.mubr.f32.mxu0 0.0
    %1955 = vmatmul.mubr.f32.gmra.mrb[0].mxu0 %v1753
    %v1956 = vpop.f32.mrb[0].mxu0
    %v1957 = vadd.f32 0.0, %v1956
    %v1958 = vpop.f32.mrb[0].mxu0
    %1959 = vmatprep.mubr.f32.mxu0 0.0
    %1960 = vmatmul.mubr.f32.gmra.mrb[0].mxu0 %v1754
    %v1961 = vpop.f32.mrb[0].mxu0
    %v1962 = vadd.f32 0.0, %v1961
    %v1963 = vpop.f32.mrb[0].mxu0
    %1964 = vmatprep.mubr.f32.mxu0 0.0
    %1965 = vmatmul.mubr.f32.gmra.mrb[0].mxu0 %v1755
    %v1966 = vpop.f32.mrb[0].mxu0
    %v1967 = vadd.f32 0.0, %v1966
    %v1968 = vpop.f32.mrb[0].mxu0
    %1969 = vmatprep.mubr.f32.mxu0 0.0
    %1970 = vmatmul.mubr.f32.gmra.mrb[0].mxu0 %v1756
    %v1971 = vpop.f32.mrb[0].mxu0
    %v1972 = vadd.f32 0.0, %v1971
    %v1973 = vpop.f32.mrb[0].mxu0
    %1974 = vmatprep.mubr.f32.mxu0 0.0
    %1975 = vmatmul.mubr.f32.gmra.mrb[0].mxu0 %v1757
    %v1976 = vpop.f32.mrb[0].mxu0
    %v1977 = vadd.f32 0.0, %v1976
    %v1978 = vpop.f32.mrb[0].mxu0
    %1979 = vdwg.mxu0
    %v1980 = vadd.f32 %v1702, %v1842
    %v1981 = vadd.f32 %v1703, %v1847
    %v1982 = vadd.f32 %v1704, %v1852
    %v1983 = vadd.f32 %v1705, %v1857
    %v1984 = vadd.f32 %v1706, %v1862
    %v1985 = vadd.f32 %v1707, %v1867
    %v1986 = vadd.f32 %v1708, %v1872
    %v1987 = vadd.f32 %v1709, %v1877
    %v1988 = vadd.f32 %v1710, %v1882
    %v1989 = vadd.f32 %v1711, %v1887
    %v1990 = vadd.f32 %v1712, %v1892
    %v1991 = vadd.f32 %v1713, %v1897
    %v1992 = vadd.f32 %v1714, %v1902
    %v1993 = vadd.f32 %v1715, %v1907
    %v1994 = vadd.f32 %v1716, %v1912
    %v1995 = vadd.f32 %v1717, %v1917
    %v1996 = vadd.f32 %v1718, %v1922
    %v1997 = vadd.f32 %v1719, %v1927
    %v1998 = vadd.f32 %v1720, %v1932
    %v1999 = vadd.f32 %v1721, %v1937
    %v2000 = vadd.f32 %v1722, %v1942
    %v2001 = vadd.f32 %v1723, %v1947
    %v2002 = vadd.f32 %v1724, %v1952
    %v2003 = vadd.f32 %v1725, %v1957
    %v2004 = vadd.f32 %v1726, %v1962
    %v2005 = vadd.f32 %v1727, %v1967
    %v2006 = vadd.f32 %v1728, %v1972
    %v2007 = vadd.f32 %v1729, %v1977
    %v2008 = vld [vmem:[%s0 + $0x21] sm:$0xff]
    %v2009 = vld [vmem:[%s0 + $0x29] sm:$0xff]
    %v2010 = vld [vmem:[%s0 + $0x31] sm:$0xff]
    %v2011 = vld [vmem:[%s0 + $0x39] sm:$0xff]
    %v2012 = vld [vmem:[%s0 + $0x41] sm:$0xff]
    %v2013 = vld [vmem:[%s0 + $0x49] sm:$0xff]
    %v2014 = vld [vmem:[%s0 + $0x51] sm:$0xff]
    %v2015 = vld [vmem:[%s0 + $0x59] sm:$0xff]
    %v2016 = vld [vmem:[%s0 + $0x61] sm:$0xff]
    %v2017 = vld [vmem:[%s0 + $0x69] sm:$0xff]
    %v2018 = vld [vmem:[%s0 + $0x71] sm:$0xff]
    %v2019 = vld [vmem:[%s0 + $0x79] sm:$0xff]
    %v2020 = vld [vmem:[%s0 + $0x81] sm:$0xff]
    %v2021 = vld [vmem:[%s0 + $0x89] sm:$0xff]
    %v2022 = vld [vmem:[%s0 + $0x91] sm:$0xff]
    %v2023 = vld [vmem:[%s0 + $0x99] sm:$0xff]
    %v2024 = vld [vmem:[%s0 + $0xa1] sm:$0xff]
    %v2025 = vld [vmem:[%s0 + $0xa9] sm:$0xff]
    %v2026 = vld [vmem:[%s0 + $0xb1] sm:$0xff]
    %v2027 = vld [vmem:[%s0 + $0xb9] sm:$0xff]
    %v2028 = vld [vmem:[%s0 + $0xc1] sm:$0xff]
    %v2029 = vld [vmem:[%s0 + $0xc9] sm:$0xff]
    %v2030 = vld [vmem:[%s0 + $0xd1] sm:$0xff]
    %v2031 = vld [vmem:[%s0 + $0xd9] sm:$0xff]
    %v2032 = vld [vmem:[%s0 + $0xe1] sm:$0xff]
    %v2033 = vld [vmem:[%s0 + $0xe9] sm:$0xff]
    %v2034 = vld [vmem:[%s0 + $0xf1] sm:$0xff]
    %v2035 = vld [vmem:[%s0 + $0xf9] sm:$0x3f]
    %s2036 = scalar_lea.vmem %s1, 896
    %v2037 = vld [vmem:[%s2036] sm:$0xff]
    %v2038 = vld [vmem:[%s2036 + $0x8] sm:$0xff]
    %v2039 = vld [vmem:[%s2036 + $0x10] sm:$0xff]
    %v2040 = vld [vmem:[%s2036 + $0x18] sm:$0xff]
    %v2041 = vld [vmem:[%s2036 + $0x20] sm:$0xff]
    %v2042 = vld [vmem:[%s2036 + $0x28] sm:$0xff]
    %v2043 = vld [vmem:[%s2036 + $0x30] sm:$0xff]
    %v2044 = vld [vmem:[%s2036 + $0x38] sm:$0xff]
    %v2045 = vld [vmem:[%s2036 + $0x40] sm:$0xff]
    %v2046 = vld [vmem:[%s2036 + $0x48] sm:$0xff]
    %v2047 = vld [vmem:[%s2036 + $0x50] sm:$0xff]
    %v2048 = vld [vmem:[%s2036 + $0x58] sm:$0xff]
    %v2049 = vld [vmem:[%s2036 + $0x60] sm:$0xff]
    %v2050 = vld [vmem:[%s2036 + $0x68] sm:$0xff]
    %v2051 = vld [vmem:[%s2036 + $0x70] sm:$0xff]
    %v2052 = vld [vmem:[%s2036 + $0x78] sm:$0xff]
    %2053 = vmatprep.subr.mxu0 0.0
    %2054 = vmatpush1.msra.mxu0 %v2037
    %2055 = vmatprep.subr.mxu0 0.0
    %2056 = vmatpush1.msra.mxu0 %v2038
    %2057 = vmatprep.subr.mxu0 0.0
    %2058 = vmatpush1.msra.mxu0 %v2039
    %2059 = vmatprep.subr.mxu0 0.0
    %2060 = vmatpush1.msra.mxu0 %v2040
    %2061 = vmatprep.subr.mxu0 0.0
    %2062 = vmatpush1.msra.mxu0 %v2041
    %2063 = vmatprep.subr.mxu0 0.0
    %2064 = vmatpush1.msra.mxu0 %v2042
    %2065 = vmatprep.subr.mxu0 0.0
    %2066 = vmatpush1.msra.mxu0 %v2043
    %2067 = vmatprep.subr.mxu0 0.0
    %2068 = vmatpush1.msra.mxu0 %v2044
    %2069 = vmatprep.subr.mxu0 0.0
    %2070 = vmatpush1.msra.mxu0 %v2045
    %2071 = vmatprep.subr.mxu0 0.0
    %2072 = vmatpush1.msra.mxu0 %v2046
    %2073 = vmatprep.subr.mxu0 0.0
    %2074 = vmatpush1.msra.mxu0 %v2047
    %2075 = vmatprep.subr.mxu0 0.0
    %2076 = vmatpush1.msra.mxu0 %v2048
    %2077 = vmatprep.subr.mxu0 0.0
    %2078 = vmatpush1.msra.mxu0 %v2049
    %2079 = vmatprep.subr.mxu0 0.0
    %2080 = vmatpush1.msra.mxu0 %v2050
    %2081 = vmatprep.subr.mxu0 0.0
    %2082 = vmatpush1.msra.mxu0 %v2051
    %2083 = vmatprep.subr.mxu0 0.0
    %2084 = vmatpush1.msra.mxu0 %v2052
    %2085 = vmatprep.subr.mxu0 0.0
    %2086 = vmatpush1.msra.mxu0 0.0
    %2087 = vmatprep.subr.mxu0 0.0
    %2088 = vmatpush1.msra.mxu0 0.0
    %2089 = vmatprep.subr.mxu0 0.0
    %2090 = vmatpush1.msra.mxu0 0.0
    %2091 = vmatprep.subr.mxu0 0.0
    %2092 = vmatpush1.msra.mxu0 0.0
    %2093 = vmatprep.subr.mxu0 0.0
    %2094 = vmatpush1.msra.mxu0 0.0
    %2095 = vmatprep.subr.mxu0 0.0
    %2096 = vmatpush1.msra.mxu0 0.0
    %2097 = vmatprep.subr.mxu0 0.0
    %2098 = vmatpush1.msra.mxu0 0.0
    %2099 = vmatprep.subr.mxu0 0.0
    %2100 = vmatpush1.msra.mxu0 0.0
    %2101 = vmatprep.subr.mxu0 0.0
    %2102 = vmatpush1.msra.mxu0 0.0
    %2103 = vmatprep.subr.mxu0 0.0
    %2104 = vmatpush1.msra.mxu0 0.0
    %2105 = vmatprep.subr.mxu0 0.0
    %2106 = vmatpush1.msra.mxu0 0.0
    %2107 = vmatprep.subr.mxu0 0.0
    %2108 = vmatpush1.msra.mxu0 0.0
    %2109 = vmatprep.subr.mxu0 0.0
    %2110 = vmatpush1.msra.mxu0 0.0
    %2111 = vmatprep.subr.mxu0 0.0
    %2112 = vmatpush1.msra.mxu0 0.0
    %2113 = vmatprep.subr.mxu0 0.0
    %2114 = vmatpush1.msra.mxu0 0.0
    %2115 = vmatprep.subr.mxu0 0.0
    %2116 = vmatpush1.msra.mxu0 0.0
    %2117 = vmatprep.mubr.f32.mxu0 0.0
    %2118 = vmatmul.mubr.f32.gmra.mrb[0].mxu0 %v2008
    %v2119 = vpop.f32.mrb[0].mxu0
    %v2120 = vadd.f32 0.0, %v2119
    %v2121 = vpop.f32.mrb[0].mxu0
    %2122 = vmatprep.mubr.f32.mxu0 0.0
    %2123 = vmatmul.mubr.f32.gmra.mrb[0].mxu0 %v2009
    %v2124 = vpop.f32.mrb[0].mxu0
    %v2125 = vadd.f32 0.0, %v2124
    %v2126 = vpop.f32.mrb[0].mxu0
    %2127 = vmatprep.mubr.f32.mxu0 0.0
    %2128 = vmatmul.mubr.f32.gmra.mrb[0].mxu0 %v2010
    %v2129 = vpop.f32.mrb[0].mxu0
    %v2130 = vadd.f32 0.0, %v2129
    %v2131 = vpop.f32.mrb[0].mxu0
    %2132 = vmatprep.mubr.f32.mxu0 0.0
    %2133 = vmatmul.mubr.f32.gmra.mrb[0].mxu0 %v2011
    %v2134 = vpop.f32.mrb[0].mxu0
    %v2135 = vadd.f32 0.0, %v2134
    %v2136 = vpop.f32.mrb[0].mxu0
    %2137 = vmatprep.mubr.f32.mxu0 0.0
    %2138 = vmatmul.mubr.f32.gmra.mrb[0].mxu0 %v2012
    %v2139 = vpop.f32.mrb[0].mxu0
    %v2140 = vadd.f32 0.0, %v2139
    %v2141 = vpop.f32.mrb[0].mxu0
    %2142 = vmatprep.mubr.f32.mxu0 0.0
    %2143 = vmatmul.mubr.f32.gmra.mrb[0].mxu0 %v2013
    %v2144 = vpop.f32.mrb[0].mxu0
    %v2145 = vadd.f32 0.0, %v2144
    %v2146 = vpop.f32.mrb[0].mxu0
    %2147 = vmatprep.mubr.f32.mxu0 0.0
    %2148 = vmatmul.mubr.f32.gmra.mrb[0].mxu0 %v2014
    %v2149 = vpop.f32.mrb[0].mxu0
    %v2150 = vadd.f32 0.0, %v2149
    %v2151 = vpop.f32.mrb[0].mxu0
    %2152 = vmatprep.mubr.f32.mxu0 0.0
    %2153 = vmatmul.mubr.f32.gmra.mrb[0].mxu0 %v2015
    %v2154 = vpop.f32.mrb[0].mxu0
    %v2155 = vadd.f32 0.0, %v2154
    %v2156 = vpop.f32.mrb[0].mxu0
    %2157 = vmatprep.mubr.f32.mxu0 0.0
    %2158 = vmatmul.mubr.f32.gmra.mrb[0].mxu0 %v2016
    %v2159 = vpop.f32.mrb[0].mxu0
    %v2160 = vadd.f32 0.0, %v2159
    %v2161 = vpop.f32.mrb[0].mxu0
    %2162 = vmatprep.mubr.f32.mxu0 0.0
    %2163 = vmatmul.mubr.f32.gmra.mrb[0].mxu0 %v2017
    %v2164 = vpop.f32.mrb[0].mxu0
    %v2165 = vadd.f32 0.0, %v2164
    %v2166 = vpop.f32.mrb[0].mxu0
    %2167 = vmatprep.mubr.f32.mxu0 0.0
    %2168 = vmatmul.mubr.f32.gmra.mrb[0].mxu0 %v2018
    %v2169 = vpop.f32.mrb[0].mxu0
    %v2170 = vadd.f32 0.0, %v2169
    %v2171 = vpop.f32.mrb[0].mxu0
    %2172 = vmatprep.mubr.f32.mxu0 0.0
    %2173 = vmatmul.mubr.f32.gmra.mrb[0].mxu0 %v2019
    %v2174 = vpop.f32.mrb[0].mxu0
    %v2175 = vadd.f32 0.0, %v2174
    %v2176 = vpop.f32.mrb[0].mxu0
    %2177 = vmatprep.mubr.f32.mxu0 0.0
    %2178 = vmatmul.mubr.f32.gmra.mrb[0].mxu0 %v2020
    %v2179 = vpop.f32.mrb[0].mxu0
    %v2180 = vadd.f32 0.0, %v2179
    %v2181 = vpop.f32.mrb[0].mxu0
    %2182 = vmatprep.mubr.f32.mxu0 0.0
    %2183 = vmatmul.mubr.f32.gmra.mrb[0].mxu0 %v2021
    %v2184 = vpop.f32.mrb[0].mxu0
    %v2185 = vadd.f32 0.0, %v2184
    %v2186 = vpop.f32.mrb[0].mxu0
    %2187 = vmatprep.mubr.f32.mxu0 0.0
    %2188 = vmatmul.mubr.f32.gmra.mrb[0].mxu0 %v2022
    %v2189 = vpop.f32.mrb[0].mxu0
    %v2190 = vadd.f32 0.0, %v2189
    %v2191 = vpop.f32.mrb[0].mxu0
    %2192 = vmatprep.mubr.f32.mxu0 0.0
    %2193 = vmatmul.mubr.f32.gmra.mrb[0].mxu0 %v2023
    %v2194 = vpop.f32.mrb[0].mxu0
    %v2195 = vadd.f32 0.0, %v2194
    %v2196 = vpop.f32.mrb[0].mxu0
    %2197 = vmatprep.mubr.f32.mxu0 0.0
    %2198 = vmatmul.mubr.f32.gmra.mrb[0].mxu0 %v2024
    %v2199 = vpop.f32.mrb[0].mxu0
    %v2200 = vadd.f32 0.0, %v2199
    %v2201 = vpop.f32.mrb[0].mxu0
    %2202 = vmatprep.mubr.f32.mxu0 0.0
    %2203 = vmatmul.mubr.f32.gmra.mrb[0].mxu0 %v2025
    %v2204 = vpop.f32.mrb[0].mxu0
    %v2205 = vadd.f32 0.0, %v2204
    %v2206 = vpop.f32.mrb[0].mxu0
    %2207 = vmatprep.mubr.f32.mxu0 0.0
    %2208 = vmatmul.mubr.f32.gmra.mrb[0].mxu0 %v2026
    %v2209 = vpop.f32.mrb[0].mxu0
    %v2210 = vadd.f32 0.0, %v2209
    %v2211 = vpop.f32.mrb[0].mxu0
    %2212 = vmatprep.mubr.f32.mxu0 0.0
    %2213 = vmatmul.mubr.f32.gmra.mrb[0].mxu0 %v2027
    %v2214 = vpop.f32.mrb[0].mxu0
    %v2215 = vadd.f32 0.0, %v2214
    %v2216 = vpop.f32.mrb[0].mxu0
    %2217 = vmatprep.mubr.f32.mxu0 0.0
    %2218 = vmatmul.mubr.f32.gmra.mrb[0].mxu0 %v2028
    %v2219 = vpop.f32.mrb[0].mxu0
    %v2220 = vadd.f32 0.0, %v2219
    %v2221 = vpop.f32.mrb[0].mxu0
    %2222 = vmatprep.mubr.f32.mxu0 0.0
    %2223 = vmatmul.mubr.f32.gmra.mrb[0].mxu0 %v2029
    %v2224 = vpop.f32.mrb[0].mxu0
    %v2225 = vadd.f32 0.0, %v2224
    %v2226 = vpop.f32.mrb[0].mxu0
    %2227 = vmatprep.mubr.f32.mxu0 0.0
    %2228 = vmatmul.mubr.f32.gmra.mrb[0].mxu0 %v2030
    %v2229 = vpop.f32.mrb[0].mxu0
    %v2230 = vadd.f32 0.0, %v2229
    %v2231 = vpop.f32.mrb[0].mxu0
    %2232 = vmatprep.mubr.f32.mxu0 0.0
    %2233 = vmatmul.mubr.f32.gmra.mrb[0].mxu0 %v2031
    %v2234 = vpop.f32.mrb[0].mxu0
    %v2235 = vadd.f32 0.0, %v2234
    %v2236 = vpop.f32.mrb[0].mxu0
    %2237 = vmatprep.mubr.f32.mxu0 0.0
    %2238 = vmatmul.mubr.f32.gmra.mrb[0].mxu0 %v2032
    %v2239 = vpop.f32.mrb[0].mxu0
    %v2240 = vadd.f32 0.0, %v2239
    %v2241 = vpop.f32.mrb[0].mxu0
    %2242 = vmatprep.mubr.f32.mxu0 0.0
    %2243 = vmatmul.mubr.f32.gmra.mrb[0].mxu0 %v2033
    %v2244 = vpop.f32.mrb[0].mxu0
    %v2245 = vadd.f32 0.0, %v2244
    %v2246 = vpop.f32.mrb[0].mxu0
    %2247 = vmatprep.mubr.f32.mxu0 0.0
    %2248 = vmatmul.mubr.f32.gmra.mrb[0].mxu0 %v2034
    %v2249 = vpop.f32.mrb[0].mxu0
    %v2250 = vadd.f32 0.0, %v2249
    %v2251 = vpop.f32.mrb[0].mxu0
    %2252 = vmatprep.mubr.f32.mxu0 0.0
    %2253 = vmatmul.mubr.f32.gmra.mrb[0].mxu0 %v2035
    %v2254 = vpop.f32.mrb[0].mxu0
    %v2255 = vadd.f32 0.0, %v2254
    %v2256 = vpop.f32.mrb[0].mxu0
    %2257 = vdwg.mxu0
    %v2258 = vadd.f32 %v1980, %v2120
    %v2259 = vadd.f32 %v1981, %v2125
    %v2260 = vadd.f32 %v1982, %v2130
    %v2261 = vadd.f32 %v1983, %v2135
    %v2262 = vadd.f32 %v1984, %v2140
    %v2263 = vadd.f32 %v1985, %v2145
    %v2264 = vadd.f32 %v1986, %v2150
    %v2265 = vadd.f32 %v1987, %v2155
    %v2266 = vadd.f32 %v1988, %v2160
    %v2267 = vadd.f32 %v1989, %v2165
    %v2268 = vadd.f32 %v1990, %v2170
    %v2269 = vadd.f32 %v1991, %v2175
    %v2270 = vadd.f32 %v1992, %v2180
    %v2271 = vadd.f32 %v1993, %v2185
    %v2272 = vadd.f32 %v1994, %v2190
    %v2273 = vadd.f32 %v1995, %v2195
    %v2274 = vadd.f32 %v1996, %v2200
    %v2275 = vadd.f32 %v1997, %v2205
    %v2276 = vadd.f32 %v1998, %v2210
    %v2277 = vadd.f32 %v1999, %v2215
    %v2278 = vadd.f32 %v2000, %v2220
    %v2279 = vadd.f32 %v2001, %v2225
    %v2280 = vadd.f32 %v2002, %v2230
    %v2281 = vadd.f32 %v2003, %v2235
    %v2282 = vadd.f32 %v2004, %v2240
    %v2283 = vadd.f32 %v2005, %v2245
    %v2284 = vadd.f32 %v2006, %v2250
    %v2285 = vadd.f32 %v2007, %v2255
    %v2286 = vld [vmem:[%s0 + $0x22] sm:$0xff]
    %v2287 = vld [vmem:[%s0 + $0x2a] sm:$0xff]
    %v2288 = vld [vmem:[%s0 + $0x32] sm:$0xff]
    %v2289 = vld [vmem:[%s0 + $0x3a] sm:$0xff]
    %v2290 = vld [vmem:[%s0 + $0x42] sm:$0xff]
    %v2291 = vld [vmem:[%s0 + $0x4a] sm:$0xff]
    %v2292 = vld [vmem:[%s0 + $0x52] sm:$0xff]
    %v2293 = vld [vmem:[%s0 + $0x5a] sm:$0xff]
    %v2294 = vld [vmem:[%s0 + $0x62] sm:$0xff]
    %v2295 = vld [vmem:[%s0 + $0x6a] sm:$0xff]
    %v2296 = vld [vmem:[%s0 + $0x72] sm:$0xff]
    %v2297 = vld [vmem:[%s0 + $0x7a] sm:$0xff]
    %v2298 = vld [vmem:[%s0 + $0x82] sm:$0xff]
    %v2299 = vld [vmem:[%s0 + $0x8a] sm:$0xff]
    %v2300 = vld [vmem:[%s0 + $0x92] sm:$0xff]
    %v2301 = vld [vmem:[%s0 + $0x9a] sm:$0xff]
    %v2302 = vld [vmem:[%s0 + $0xa2] sm:$0xff]
    %v2303 = vld [vmem:[%s0 + $0xaa] sm:$0xff]
    %v2304 = vld [vmem:[%s0 + $0xb2] sm:$0xff]
    %v2305 = vld [vmem:[%s0 + $0xba] sm:$0xff]
    %v2306 = vld [vmem:[%s0 + $0xc2] sm:$0xff]
    %v2307 = vld [vmem:[%s0 + $0xca] sm:$0xff]
    %v2308 = vld [vmem:[%s0 + $0xd2] sm:$0xff]
    %v2309 = vld [vmem:[%s0 + $0xda] sm:$0xff]
    %v2310 = vld [vmem:[%s0 + $0xe2] sm:$0xff]
    %v2311 = vld [vmem:[%s0 + $0xea] sm:$0xff]
    %v2312 = vld [vmem:[%s0 + $0xf2] sm:$0xff]
    %v2313 = vld [vmem:[%s0 + $0xfa] sm:$0x3f]
    %s2314 = scalar_lea.vmem %s1, 1024
    %v2315 = vld [vmem:[%s2314] sm:$0xff]
    %v2316 = vld [vmem:[%s2314 + $0x8] sm:$0xff]
    %v2317 = vld [vmem:[%s2314 + $0x10] sm:$0xff]
    %v2318 = vld [vmem:[%s2314 + $0x18] sm:$0xff]
    %v2319 = vld [vmem:[%s2314 + $0x20] sm:$0xff]
    %v2320 = vld [vmem:[%s2314 + $0x28] sm:$0xff]
    %v2321 = vld [vmem:[%s2314 + $0x30] sm:$0xff]
    %v2322 = vld [vmem:[%s2314 + $0x38] sm:$0xff]
    %v2323 = vld [vmem:[%s2314 + $0x40] sm:$0xff]
    %v2324 = vld [vmem:[%s2314 + $0x48] sm:$0xff]
    %v2325 = vld [vmem:[%s2314 + $0x50] sm:$0xff]
    %v2326 = vld [vmem:[%s2314 + $0x58] sm:$0xff]
    %v2327 = vld [vmem:[%s2314 + $0x60] sm:$0xff]
    %v2328 = vld [vmem:[%s2314 + $0x68] sm:$0xff]
    %v2329 = vld [vmem:[%s2314 + $0x70] sm:$0xff]
    %v2330 = vld [vmem:[%s2314 + $0x78] sm:$0xff]
    %2331 = vmatprep.subr.mxu0 0.0
    %2332 = vmatpush1.msra.mxu0 %v2315
    %2333 = vmatprep.subr.mxu0 0.0
    %2334 = vmatpush1.msra.mxu0 %v2316
    %2335 = vmatprep.subr.mxu0 0.0
    %2336 = vmatpush1.msra.mxu0 %v2317
    %2337 = vmatprep.subr.mxu0 0.0
    %2338 = vmatpush1.msra.mxu0 %v2318
    %2339 = vmatprep.subr.mxu0 0.0
    %2340 = vmatpush1.msra.mxu0 %v2319
    %2341 = vmatprep.subr.mxu0 0.0
    %2342 = vmatpush1.msra.mxu0 %v2320
    %2343 = vmatprep.subr.mxu0 0.0
    %2344 = vmatpush1.msra.mxu0 %v2321
    %2345 = vmatprep.subr.mxu0 0.0
    %2346 = vmatpush1.msra.mxu0 %v2322
    %2347 = vmatprep.subr.mxu0 0.0
    %2348 = vmatpush1.msra.mxu0 %v2323
    %2349 = vmatprep.subr.mxu0 0.0
    %2350 = vmatpush1.msra.mxu0 %v2324
    %2351 = vmatprep.subr.mxu0 0.0
    %2352 = vmatpush1.msra.mxu0 %v2325
    %2353 = vmatprep.subr.mxu0 0.0
    %2354 = vmatpush1.msra.mxu0 %v2326
    %2355 = vmatprep.subr.mxu0 0.0
    %2356 = vmatpush1.msra.mxu0 %v2327
    %2357 = vmatprep.subr.mxu0 0.0
    %2358 = vmatpush1.msra.mxu0 %v2328
    %2359 = vmatprep.subr.mxu0 0.0
    %2360 = vmatpush1.msra.mxu0 %v2329
    %2361 = vmatprep.subr.mxu0 0.0
    %2362 = vmatpush1.msra.mxu0 %v2330
    %2363 = vmatprep.subr.mxu0 0.0
    %2364 = vmatpush1.msra.mxu0 0.0
    %2365 = vmatprep.subr.mxu0 0.0
    %2366 = vmatpush1.msra.mxu0 0.0
    %2367 = vmatprep.subr.mxu0 0.0
    %2368 = vmatpush1.msra.mxu0 0.0
    %2369 = vmatprep.subr.mxu0 0.0
    %2370 = vmatpush1.msra.mxu0 0.0
    %2371 = vmatprep.subr.mxu0 0.0
    %2372 = vmatpush1.msra.mxu0 0.0
    %2373 = vmatprep.subr.mxu0 0.0
    %2374 = vmatpush1.msra.mxu0 0.0
    %2375 = vmatprep.subr.mxu0 0.0
    %2376 = vmatpush1.msra.mxu0 0.0
    %2377 = vmatprep.subr.mxu0 0.0
    %2378 = vmatpush1.msra.mxu0 0.0
    %2379 = vmatprep.subr.mxu0 0.0
    %2380 = vmatpush1.msra.mxu0 0.0
    %2381 = vmatprep.subr.mxu0 0.0
    %2382 = vmatpush1.msra.mxu0 0.0
    %2383 = vmatprep.subr.mxu0 0.0
    %2384 = vmatpush1.msra.mxu0 0.0
    %2385 = vmatprep.subr.mxu0 0.0
    %2386 = vmatpush1.msra.mxu0 0.0
    %2387 = vmatprep.subr.mxu0 0.0
    %2388 = vmatpush1.msra.mxu0 0.0
    %2389 = vmatprep.subr.mxu0 0.0
    %2390 = vmatpush1.msra.mxu0 0.0
    %2391 = vmatprep.subr.mxu0 0.0
    %2392 = vmatpush1.msra.mxu0 0.0
    %2393 = vmatprep.subr.mxu0 0.0
    %2394 = vmatpush1.msra.mxu0 0.0
    %2395 = vmatprep.mubr.f32.mxu0 0.0
    %2396 = vmatmul.mubr.f32.gmra.mrb[0].mxu0 %v2286
    %v2397 = vpop.f32.mrb[0].mxu0
    %v2398 = vadd.f32 0.0, %v2397
    %v2399 = vpop.f32.mrb[0].mxu0
    %2400 = vmatprep.mubr.f32.mxu0 0.0
    %2401 = vmatmul.mubr.f32.gmra.mrb[0].mxu0 %v2287
    %v2402 = vpop.f32.mrb[0].mxu0
    %v2403 = vadd.f32 0.0, %v2402
    %v2404 = vpop.f32.mrb[0].mxu0
    %2405 = vmatprep.mubr.f32.mxu0 0.0
    %2406 = vmatmul.mubr.f32.gmra.mrb[0].mxu0 %v2288
    %v2407 = vpop.f32.mrb[0].mxu0
    %v2408 = vadd.f32 0.0, %v2407
    %v2409 = vpop.f32.mrb[0].mxu0
    %2410 = vmatprep.mubr.f32.mxu0 0.0
    %2411 = vmatmul.mubr.f32.gmra.mrb[0].mxu0 %v2289
    %v2412 = vpop.f32.mrb[0].mxu0
    %v2413 = vadd.f32 0.0, %v2412
    %v2414 = vpop.f32.mrb[0].mxu0
    %2415 = vmatprep.mubr.f32.mxu0 0.0
    %2416 = vmatmul.mubr.f32.gmra.mrb[0].mxu0 %v2290
    %v2417 = vpop.f32.mrb[0].mxu0
    %v2418 = vadd.f32 0.0, %v2417
    %v2419 = vpop.f32.mrb[0].mxu0
    %2420 = vmatprep.mubr.f32.mxu0 0.0
    %2421 = vmatmul.mubr.f32.gmra.mrb[0].mxu0 %v2291
    %v2422 = vpop.f32.mrb[0].mxu0
    %v2423 = vadd.f32 0.0, %v2422
    %v2424 = vpop.f32.mrb[0].mxu0
    %2425 = vmatprep.mubr.f32.mxu0 0.0
    %2426 = vmatmul.mubr.f32.gmra.mrb[0].mxu0 %v2292
    %v2427 = vpop.f32.mrb[0].mxu0
    %v2428 = vadd.f32 0.0, %v2427
    %v2429 = vpop.f32.mrb[0].mxu0
    %2430 = vmatprep.mubr.f32.mxu0 0.0
    %2431 = vmatmul.mubr.f32.gmra.mrb[0].mxu0 %v2293
    %v2432 = vpop.f32.mrb[0].mxu0
    %v2433 = vadd.f32 0.0, %v2432
    %v2434 = vpop.f32.mrb[0].mxu0
    %2435 = vmatprep.mubr.f32.mxu0 0.0
    %2436 = vmatmul.mubr.f32.gmra.mrb[0].mxu0 %v2294
    %v2437 = vpop.f32.mrb[0].mxu0
    %v2438 = vadd.f32 0.0, %v2437
    %v2439 = vpop.f32.mrb[0].mxu0
    %2440 = vmatprep.mubr.f32.mxu0 0.0
    %2441 = vmatmul.mubr.f32.gmra.mrb[0].mxu0 %v2295
    %v2442 = vpop.f32.mrb[0].mxu0
    %v2443 = vadd.f32 0.0, %v2442
    %v2444 = vpop.f32.mrb[0].mxu0
    %2445 = vmatprep.mubr.f32.mxu0 0.0
    %2446 = vmatmul.mubr.f32.gmra.mrb[0].mxu0 %v2296
    %v2447 = vpop.f32.mrb[0].mxu0
    %v2448 = vadd.f32 0.0, %v2447
    %v2449 = vpop.f32.mrb[0].mxu0
    %2450 = vmatprep.mubr.f32.mxu0 0.0
    %2451 = vmatmul.mubr.f32.gmra.mrb[0].mxu0 %v2297
    %v2452 = vpop.f32.mrb[0].mxu0
    %v2453 = vadd.f32 0.0, %v2452
    %v2454 = vpop.f32.mrb[0].mxu0
    %2455 = vmatprep.mubr.f32.mxu0 0.0
    %2456 = vmatmul.mubr.f32.gmra.mrb[0].mxu0 %v2298
    %v2457 = vpop.f32.mrb[0].mxu0
    %v2458 = vadd.f32 0.0, %v2457
    %v2459 = vpop.f32.mrb[0].mxu0
    %2460 = vmatprep.mubr.f32.mxu0 0.0
    %2461 = vmatmul.mubr.f32.gmra.mrb[0].mxu0 %v2299
    %v2462 = vpop.f32.mrb[0].mxu0
    %v2463 = vadd.f32 0.0, %v2462
    %v2464 = vpop.f32.mrb[0].mxu0
    %2465 = vmatprep.mubr.f32.mxu0 0.0
    %2466 = vmatmul.mubr.f32.gmra.mrb[0].mxu0 %v2300
    %v2467 = vpop.f32.mrb[0].mxu0
    %v2468 = vadd.f32 0.0, %v2467
    %v2469 = vpop.f32.mrb[0].mxu0
    %2470 = vmatprep.mubr.f32.mxu0 0.0
    %2471 = vmatmul.mubr.f32.gmra.mrb[0].mxu0 %v2301
    %v2472 = vpop.f32.mrb[0].mxu0
    %v2473 = vadd.f32 0.0, %v2472
    %v2474 = vpop.f32.mrb[0].mxu0
    %2475 = vmatprep.mubr.f32.mxu0 0.0
    %2476 = vmatmul.mubr.f32.gmra.mrb[0].mxu0 %v2302
    %v2477 = vpop.f32.mrb[0].mxu0
    %v2478 = vadd.f32 0.0, %v2477
    %v2479 = vpop.f32.mrb[0].mxu0
    %2480 = vmatprep.mubr.f32.mxu0 0.0
    %2481 = vmatmul.mubr.f32.gmra.mrb[0].mxu0 %v2303
    %v2482 = vpop.f32.mrb[0].mxu0
    %v2483 = vadd.f32 0.0, %v2482
    %v2484 = vpop.f32.mrb[0].mxu0
    %2485 = vmatprep.mubr.f32.mxu0 0.0
    %2486 = vmatmul.mubr.f32.gmra.mrb[0].mxu0 %v2304
    %v2487 = vpop.f32.mrb[0].mxu0
    %v2488 = vadd.f32 0.0, %v2487
    %v2489 = vpop.f32.mrb[0].mxu0
    %2490 = vmatprep.mubr.f32.mxu0 0.0
    %2491 = vmatmul.mubr.f32.gmra.mrb[0].mxu0 %v2305
    %v2492 = vpop.f32.mrb[0].mxu0
    %v2493 = vadd.f32 0.0, %v2492
    %v2494 = vpop.f32.mrb[0].mxu0
    %2495 = vmatprep.mubr.f32.mxu0 0.0
    %2496 = vmatmul.mubr.f32.gmra.mrb[0].mxu0 %v2306
    %v2497 = vpop.f32.mrb[0].mxu0
    %v2498 = vadd.f32 0.0, %v2497
    %v2499 = vpop.f32.mrb[0].mxu0
    %2500 = vmatprep.mubr.f32.mxu0 0.0
    %2501 = vmatmul.mubr.f32.gmra.mrb[0].mxu0 %v2307
    %v2502 = vpop.f32.mrb[0].mxu0
    %v2503 = vadd.f32 0.0, %v2502
    %v2504 = vpop.f32.mrb[0].mxu0
    %2505 = vmatprep.mubr.f32.mxu0 0.0
    %2506 = vmatmul.mubr.f32.gmra.mrb[0].mxu0 %v2308
    %v2507 = vpop.f32.mrb[0].mxu0
    %v2508 = vadd.f32 0.0, %v2507
    %v2509 = vpop.f32.mrb[0].mxu0
    %2510 = vmatprep.mubr.f32.mxu0 0.0
    %2511 = vmatmul.mubr.f32.gmra.mrb[0].mxu0 %v2309
    %v2512 = vpop.f32.mrb[0].mxu0
    %v2513 = vadd.f32 0.0, %v2512
    %v2514 = vpop.f32.mrb[0].mxu0
    %2515 = vmatprep.mubr.f32.mxu0 0.0
    %2516 = vmatmul.mubr.f32.gmra.mrb[0].mxu0 %v2310
    %v2517 = vpop.f32.mrb[0].mxu0
    %v2518 = vadd.f32 0.0, %v2517
    %v2519 = vpop.f32.mrb[0].mxu0
    %2520 = vmatprep.mubr.f32.mxu0 0.0
    %2521 = vmatmul.mubr.f32.gmra.mrb[0].mxu0 %v2311
    %v2522 = vpop.f32.mrb[0].mxu0
    %v2523 = vadd.f32 0.0, %v2522
    %v2524 = vpop.f32.mrb[0].mxu0
    %2525 = vmatprep.mubr.f32.mxu0 0.0
    %2526 = vmatmul.mubr.f32.gmra.mrb[0].mxu0 %v2312
    %v2527 = vpop.f32.mrb[0].mxu0
    %v2528 = vadd.f32 0.0, %v2527
    %v2529 = vpop.f32.mrb[0].mxu0
    %2530 = vmatprep.mubr.f32.mxu0 0.0
    %2531 = vmatmul.mubr.f32.gmra.mrb[0].mxu0 %v2313
    %v2532 = vpop.f32.mrb[0].mxu0
    %v2533 = vadd.f32 0.0, %v2532
    %v2534 = vpop.f32.mrb[0].mxu0
    %2535 = vdwg.mxu0
    %v2536 = vadd.f32 %v2258, %v2398
    %v2537 = vadd.f32 %v2259, %v2403
    %v2538 = vadd.f32 %v2260, %v2408
    %v2539 = vadd.f32 %v2261, %v2413
    %v2540 = vadd.f32 %v2262, %v2418
    %v2541 = vadd.f32 %v2263, %v2423
    %v2542 = vadd.f32 %v2264, %v2428
    %v2543 = vadd.f32 %v2265, %v2433
    %v2544 = vadd.f32 %v2266, %v2438
    %v2545 = vadd.f32 %v2267, %v2443
    %v2546 = vadd.f32 %v2268, %v2448
    %v2547 = vadd.f32 %v2269, %v2453
    %v2548 = vadd.f32 %v2270, %v2458
    %v2549 = vadd.f32 %v2271, %v2463
    %v2550 = vadd.f32 %v2272, %v2468
    %v2551 = vadd.f32 %v2273, %v2473
    %v2552 = vadd.f32 %v2274, %v2478
    %v2553 = vadd.f32 %v2275, %v2483
    %v2554 = vadd.f32 %v2276, %v2488
    %v2555 = vadd.f32 %v2277, %v2493
    %v2556 = vadd.f32 %v2278, %v2498
    %v2557 = vadd.f32 %v2279, %v2503
    %v2558 = vadd.f32 %v2280, %v2508
    %v2559 = vadd.f32 %v2281, %v2513
    %v2560 = vadd.f32 %v2282, %v2518
    %v2561 = vadd.f32 %v2283, %v2523
    %v2562 = vadd.f32 %v2284, %v2528
    %v2563 = vadd.f32 %v2285, %v2533
    %v2564 = vld [vmem:[%s2] sm:$0x1]
    %v2566 = vlaneseq
    %v2567 = vshrl.u32 %v2566, 7
    %v2568 = vsub.s32 0, %v2567
    %v2569 = vrot.slane %v2564, %v2568
    %v2571 = vadd.f32 %v2536, %v2569
    %v2572 = vadd.f32 %v2537, %v2569
    %v2573 = vadd.f32 %v2538, %v2569
    %v2574 = vadd.f32 %v2539, %v2569
    %v2575 = vadd.f32 %v2540, %v2569
    %v2576 = vadd.f32 %v2541, %v2569
    %v2577 = vadd.f32 %v2542, %v2569
    %v2578 = vadd.f32 %v2543, %v2569
    %v2579 = vadd.f32 %v2544, %v2569
    %v2580 = vadd.f32 %v2545, %v2569
    %v2581 = vadd.f32 %v2546, %v2569
    %v2582 = vadd.f32 %v2547, %v2569
    %v2583 = vadd.f32 %v2548, %v2569
    %v2584 = vadd.f32 %v2549, %v2569
    %v2585 = vadd.f32 %v2550, %v2569
    %v2586 = vadd.f32 %v2551, %v2569
    %v2587 = vadd.f32 %v2552, %v2569
    %v2588 = vadd.f32 %v2553, %v2569
    %v2589 = vadd.f32 %v2554, %v2569
    %v2590 = vadd.f32 %v2555, %v2569
    %v2591 = vadd.f32 %v2556, %v2569
    %v2592 = vadd.f32 %v2557, %v2569
    %v2593 = vadd.f32 %v2558, %v2569
    %v2594 = vadd.f32 %v2559, %v2569
    %v2595 = vadd.f32 %v2560, %v2569
    %v2596 = vadd.f32 %v2561, %v2569
    %v2597 = vadd.f32 %v2562, %v2569
    %v2598 = vadd.f32 %v2563, %v2569
    %v2599 = vld [vmem:[%s3] sm:$0xff]
    %v2600 = vld [vmem:[%s3 + $0x8] sm:$0xff]
    %v2601 = vld [vmem:[%s3 + $0x10] sm:$0xff]
    %v2602 = vld [vmem:[%s3 + $0x18] sm:$0xff]
    %v2603 = vld [vmem:[%s3 + $0x20] sm:$0xff]
    %v2604 = vld [vmem:[%s3 + $0x28] sm:$0xff]
    %v2605 = vld [vmem:[%s3 + $0x30] sm:$0xff]
    %v2606 = vld [vmem:[%s3 + $0x38] sm:$0xff]
    %v2607 = vld [vmem:[%s3 + $0x40] sm:$0xff]
    %v2608 = vld [vmem:[%s3 + $0x48] sm:$0xff]
    %v2609 = vld [vmem:[%s3 + $0x50] sm:$0xff]
    %v2610 = vld [vmem:[%s3 + $0x58] sm:$0xff]
    %v2611 = vld [vmem:[%s3 + $0x60] sm:$0xff]
    %v2612 = vld [vmem:[%s3 + $0x68] sm:$0xff]
    %v2613 = vld [vmem:[%s3 + $0x70] sm:$0xff]
    %v2614 = vld [vmem:[%s3 + $0x78] sm:$0xff]
    %v2615 = vld [vmem:[%s3 + $0x80] sm:$0xff]
    %v2616 = vld [vmem:[%s3 + $0x88] sm:$0xff]
    %v2617 = vld [vmem:[%s3 + $0x90] sm:$0xff]
    %v2618 = vld [vmem:[%s3 + $0x98] sm:$0xff]
    %v2619 = vld [vmem:[%s3 + $0xa0] sm:$0xff]
    %v2620 = vld [vmem:[%s3 + $0xa8] sm:$0xff]
    %v2621 = vld [vmem:[%s3 + $0xb0] sm:$0xff]
    %v2622 = vld [vmem:[%s3 + $0xb8] sm:$0xff]
    %v2623 = vld [vmem:[%s3 + $0xc0] sm:$0xff]
    %v2624 = vld [vmem:[%s3 + $0xc8] sm:$0xff]
    %v2625 = vld [vmem:[%s3 + $0xd0] sm:$0xff]
    %v2626 = vld [vmem:[%s3 + $0xd8] sm:$0xff]
    %v2627 = vld [vmem:[%s3 + $0xe0] sm:$0xff]
    %v2628 = vld [vmem:[%s3 + $0xe8] sm:$0xff]
    %v2629 = vld [vmem:[%s3 + $0xf0] sm:$0xff]
    %v2630 = vld [vmem:[%s3 + $0xf8] sm:$0xff]
    %v2631 = vld [vmem:[%s3 + $0x100] sm:$0xff]
    %v2632 = vld [vmem:[%s3 + $0x108] sm:$0xff]
    %v2633 = vld [vmem:[%s3 + $0x110] sm:$0xff]
    %v2634 = vld [vmem:[%s3 + $0x118] sm:$0xff]
    %v2635 = vld [vmem:[%s3 + $0x120] sm:$0xff]
    %v2636 = vld [vmem:[%s3 + $0x128] sm:$0xff]
    %v2637 = vld [vmem:[%s3 + $0x130] sm:$0xff]
    %v2638 = vld [vmem:[%s3 + $0x138] sm:$0xff]
    %v2639 = vld [vmem:[%s3 + $0x140] sm:$0xff]
    %v2640 = vld [vmem:[%s3 + $0x148] sm:$0xff]
    %v2641 = vld [vmem:[%s3 + $0x150] sm:$0xff]
    %v2642 = vld [vmem:[%s3 + $0x158] sm:$0xff]
    %v2643 = vld [vmem:[%s3 + $0x160] sm:$0xff]
    %v2644 = vld [vmem:[%s3 + $0x168] sm:$0xff]
    %v2645 = vld [vmem:[%s3 + $0x170] sm:$0xff]
    %v2646 = vld [vmem:[%s3 + $0x178] sm:$0xff]
    %v2647 = vld [vmem:[%s3 + $0x180] sm:$0xff]
    %v2648 = vld [vmem:[%s3 + $0x188] sm:$0xff]
    %v2649 = vld [vmem:[%s3 + $0x190] sm:$0xff]
    %v2650 = vld [vmem:[%s3 + $0x198] sm:$0xff]
    %v2651 = vld [vmem:[%s3 + $0x1a0] sm:$0xff]
    %v2652 = vld [vmem:[%s3 + $0x1a8] sm:$0xff]
    %v2653 = vld [vmem:[%s3 + $0x1b0] sm:$0xff]
    %v2654 = vld [vmem:[%s3 + $0x1b8] sm:$0xff]
    %v2655 = vld [vmem:[%s3 + $0x1c0] sm:$0xff]
    %v2656 = vld [vmem:[%s3 + $0x1c8] sm:$0xff]
    %v2657 = vld [vmem:[%s3 + $0x1d0] sm:$0xff]
    %v2658 = vld [vmem:[%s3 + $0x1d8] sm:$0xff]
    %v2659 = vld [vmem:[%s3 + $0x1e0] sm:$0xff]
    %v2660 = vld [vmem:[%s3 + $0x1e8] sm:$0xff]
    %v2661 = vld [vmem:[%s3 + $0x1f0] sm:$0xff]
    %v2662 = vld [vmem:[%s3 + $0x1f8] sm:$0xff]
    %vm2663 = vcmask 769024
    %v2665 = vsel %vm2663, %v2600, 0
    %v2668 = vsel %vm2663, %v2602, 0
    %v2671 = vsel %vm2663, %v2604, 0
    %v2674 = vsel %vm2663, %v2606, 0
    %v2677 = vsel %vm2663, %v2608, 0
    %v2680 = vsel %vm2663, %v2610, 0
    %v2683 = vsel %vm2663, %v2612, 0
    %v2686 = vsel %vm2663, %v2614, 0
    %v2689 = vsel %vm2663, %v2616, 0
    %v2692 = vsel %vm2663, %v2618, 0
    %v2695 = vsel %vm2663, %v2620, 0
    %v2698 = vsel %vm2663, %v2622, 0
    %v2701 = vsel %vm2663, %v2624, 0
    %v2704 = vsel %vm2663, %v2626, 0
    %v2707 = vsel %vm2663, %v2628, 0
    %v2710 = vsel %vm2663, %v2630, 0
    %v2713 = vsel %vm2663, %v2632, 0
    %v2716 = vsel %vm2663, %v2634, 0
    %v2719 = vsel %vm2663, %v2636, 0
    %v2722 = vsel %vm2663, %v2638, 0
    %v2725 = vsel %vm2663, %v2640, 0
    %v2728 = vsel %vm2663, %v2642, 0
    %v2731 = vsel %vm2663, %v2644, 0
    %v2734 = vsel %vm2663, %v2646, 0
    %v2737 = vsel %vm2663, %v2648, 0
    %v2740 = vsel %vm2663, %v2650, 0
    %v2743 = vsel %vm2663, %v2652, 0
    %v2746 = vsel %vm2663, %v2654, 0
    %v2749 = vsel %vm2663, %v2656, 0
    %v2752 = vsel %vm2663, %v2658, 0
    %v2755 = vsel %vm2663, %v2660, 0
    %v2758 = vsel %vm2663, %v2662, 0
    %vm2760 = vcmask 1045504
    %v2762 = vsel %vm2760, %v2598, 0
    %2764 = vmatprep.subr.mxu0 0.0
    %2765 = vmatpush1.msra.mxu0 %v2571
    %2766 = vmatprep.subr.mxu0 0.0
    %2767 = vmatpush1.msra.mxu0 %v2572
    %2768 = vmatprep.subr.mxu0 0.0
    %2769 = vmatpush1.msra.mxu0 %v2573
    %2770 = vmatprep.subr.mxu0 0.0
    %2771 = vmatpush1.msra.mxu0 %v2574
    %2772 = vmatprep.subr.mxu0 0.0
    %2773 = vmatpush1.msra.mxu0 %v2575
    %2774 = vmatprep.subr.mxu0 0.0
    %2775 = vmatpush1.msra.mxu0 %v2576
    %2776 = vmatprep.subr.mxu0 0.0
    %2777 = vmatpush1.msra.mxu0 %v2577
    %2778 = vmatprep.subr.mxu0 0.0
    %2779 = vmatpush1.msra.mxu0 %v2578
    %2780 = vmatprep.subr.mxu0 0.0
    %2781 = vmatpush1.msra.mxu0 %v2579
    %2782 = vmatprep.subr.mxu0 0.0
    %2783 = vmatpush1.msra.mxu0 %v2580
    %2784 = vmatprep.subr.mxu0 0.0
    %2785 = vmatpush1.msra.mxu0 %v2581
    %2786 = vmatprep.subr.mxu0 0.0
    %2787 = vmatpush1.msra.mxu0 %v2582
    %2788 = vmatprep.subr.mxu0 0.0
    %2789 = vmatpush1.msra.mxu0 %v2583
    %2790 = vmatprep.subr.mxu0 0.0
    %2791 = vmatpush1.msra.mxu0 %v2584
    %2792 = vmatprep.subr.mxu0 0.0
    %2793 = vmatpush1.msra.mxu0 %v2585
    %2794 = vmatprep.subr.mxu0 0.0
    %2795 = vmatpush1.msra.mxu0 %v2586
    %2796 = vmatprep.subr.mxu0 0.0
    %2797 = vmatpush1.msra.mxu0 %v2587
    %2798 = vmatprep.subr.mxu0 0.0
    %2799 = vmatpush1.msra.mxu0 %v2588
    %2800 = vmatprep.subr.mxu0 0.0
    %2801 = vmatpush1.msra.mxu0 %v2589
    %2802 = vmatprep.subr.mxu0 0.0
    %2803 = vmatpush1.msra.mxu0 %v2590
    %2804 = vmatprep.subr.mxu0 0.0
    %2805 = vmatpush1.msra.mxu0 %v2591
    %2806 = vmatprep.subr.mxu0 0.0
    %2807 = vmatpush1.msra.mxu0 %v2592
    %2808 = vmatprep.subr.mxu0 0.0
    %2809 = vmatpush1.msra.mxu0 %v2593
    %2810 = vmatprep.subr.mxu0 0.0
    %2811 = vmatpush1.msra.mxu0 %v2594
    %2812 = vmatprep.subr.mxu0 0.0
    %2813 = vmatpush1.msra.mxu0 %v2595
    %2814 = vmatprep.subr.mxu0 0.0
    %2815 = vmatpush1.msra.mxu0 %v2596
    %2816 = vmatprep.subr.mxu0 0.0
    %2817 = vmatpush1.msra.mxu0 %v2597
    %2818 = vmatprep.subr.mxu0 0.0
    %2819 = vmatpush1.msra.mxu0 %v2762
    %2820 = vmatprep.subr.mxu0 0.0
    %2821 = vmatpush1.msra.mxu0 0.0
    %2822 = vmatprep.subr.mxu0 0.0
    %2823 = vmatpush1.msra.mxu0 0.0
    %2824 = vmatprep.subr.mxu0 0.0
    %2825 = vmatpush1.msra.mxu0 0.0
    %2826 = vmatprep.subr.mxu0 0.0
    %2827 = vmatpush1.msra.mxu0 0.0
    %2828 = vmatprep.mubr.f32.mxu0 %v2665
    %2829 = vmatmul.mubr.f32.gmra.mrb[0].mxu0 %v2599
    %v2830 = vpop.f32.mrb[0].mxu0
    %v2831 = vadd.f32 0.0, %v2830
    %v2832 = vpop.f32.mrb[0].mxu0
    %2833 = vmatprep.mubr.f32.mxu0 %v2668
    %2834 = vmatmul.mubr.f32.gmra.mrb[0].mxu0 %v2601
    %v2835 = vpop.f32.mrb[0].mxu0
    %v2836 = vadd.f32 0.0, %v2835
    %v2837 = vpop.f32.mrb[0].mxu0
    %2838 = vmatprep.mubr.f32.mxu0 %v2671
    %2839 = vmatmul.mubr.f32.gmra.mrb[0].mxu0 %v2603
    %v2840 = vpop.f32.mrb[0].mxu0
    %v2841 = vadd.f32 0.0, %v2840
    %v2842 = vpop.f32.mrb[0].mxu0
    %2843 = vmatprep.mubr.f32.mxu0 %v2674
    %2844 = vmatmul.mubr.f32.gmra.mrb[0].mxu0 %v2605
    %v2845 = vpop.f32.mrb[0].mxu0
    %v2846 = vadd.f32 0.0, %v2845
    %v2847 = vpop.f32.mrb[0].mxu0
    %2848 = vmatprep.mubr.f32.mxu0 %v2677
    %2849 = vmatmul.mubr.f32.gmra.mrb[0].mxu0 %v2607
    %v2850 = vpop.f32.mrb[0].mxu0
    %v2851 = vadd.f32 0.0, %v2850
    %v2852 = vpop.f32.mrb[0].mxu0
    %2853 = vmatprep.mubr.f32.mxu0 %v2680
    %2854 = vmatmul.mubr.f32.gmra.mrb[0].mxu0 %v2609
    %v2855 = vpop.f32.mrb[0].mxu0
    %v2856 = vadd.f32 0.0, %v2855
    %v2857 = vpop.f32.mrb[0].mxu0
    %2858 = vmatprep.mubr.f32.mxu0 %v2683
    %2859 = vmatmul.mubr.f32.gmra.mrb[0].mxu0 %v2611
    %v2860 = vpop.f32.mrb[0].mxu0
    %v2861 = vadd.f32 0.0, %v2860
    %v2862 = vpop.f32.mrb[0].mxu0
    %2863 = vmatprep.mubr.f32.mxu0 %v2686
    %2864 = vmatmul.mubr.f32.gmra.mrb[0].mxu0 %v2613
    %v2865 = vpop.f32.mrb[0].mxu0
    %v2866 = vadd.f32 0.0, %v2865
    %v2867 = vpop.f32.mrb[0].mxu0
    %2868 = vmatprep.mubr.f32.mxu0 %v2689
    %2869 = vmatmul.mubr.f32.gmra.mrb[0].mxu0 %v2615
    %v2870 = vpop.f32.mrb[0].mxu0
    %v2871 = vadd.f32 0.0, %v2870
    %v2872 = vpop.f32.mrb[0].mxu0
    %2873 = vmatprep.mubr.f32.mxu0 %v2692
    %2874 = vmatmul.mubr.f32.gmra.mrb[0].mxu0 %v2617
    %v2875 = vpop.f32.mrb[0].mxu0
    %v2876 = vadd.f32 0.0, %v2875
    %v2877 = vpop.f32.mrb[0].mxu0
    %2878 = vmatprep.mubr.f32.mxu0 %v2695
    %2879 = vmatmul.mubr.f32.gmra.mrb[0].mxu0 %v2619
    %v2880 = vpop.f32.mrb[0].mxu0
    %v2881 = vadd.f32 0.0, %v2880
    %v2882 = vpop.f32.mrb[0].mxu0
    %2883 = vmatprep.mubr.f32.mxu0 %v2698
    %2884 = vmatmul.mubr.f32.gmra.mrb[0].mxu0 %v2621
    %v2885 = vpop.f32.mrb[0].mxu0
    %v2886 = vadd.f32 0.0, %v2885
    %v2887 = vpop.f32.mrb[0].mxu0
    %2888 = vmatprep.mubr.f32.mxu0 %v2701
    %2889 = vmatmul.mubr.f32.gmra.mrb[0].mxu0 %v2623
    %v2890 = vpop.f32.mrb[0].mxu0
    %v2891 = vadd.f32 0.0, %v2890
    %v2892 = vpop.f32.mrb[0].mxu0
    %2893 = vmatprep.mubr.f32.mxu0 %v2704
    %2894 = vmatmul.mubr.f32.gmra.mrb[0].mxu0 %v2625
    %v2895 = vpop.f32.mrb[0].mxu0
    %v2896 = vadd.f32 0.0, %v2895
    %v2897 = vpop.f32.mrb[0].mxu0
    %2898 = vmatprep.mubr.f32.mxu0 %v2707
    %2899 = vmatmul.mubr.f32.gmra.mrb[0].mxu0 %v2627
    %v2900 = vpop.f32.mrb[0].mxu0
    %v2901 = vadd.f32 0.0, %v2900
    %v2902 = vpop.f32.mrb[0].mxu0
    %2903 = vmatprep.mubr.f32.mxu0 %v2710
    %2904 = vmatmul.mubr.f32.gmra.mrb[0].mxu0 %v2629
    %v2905 = vpop.f32.mrb[0].mxu0
    %v2906 = vadd.f32 0.0, %v2905
    %v2907 = vpop.f32.mrb[0].mxu0
    %2908 = vmatprep.mubr.f32.mxu0 %v2713
    %2909 = vmatmul.mubr.f32.gmra.mrb[0].mxu0 %v2631
    %v2910 = vpop.f32.mrb[0].mxu0
    %v2911 = vadd.f32 0.0, %v2910
    %v2912 = vpop.f32.mrb[0].mxu0
    %2913 = vmatprep.mubr.f32.mxu0 %v2716
    %2914 = vmatmul.mubr.f32.gmra.mrb[0].mxu0 %v2633
    %v2915 = vpop.f32.mrb[0].mxu0
    %v2916 = vadd.f32 0.0, %v2915
    %v2917 = vpop.f32.mrb[0].mxu0
    %2918 = vmatprep.mubr.f32.mxu0 %v2719
    %2919 = vmatmul.mubr.f32.gmra.mrb[0].mxu0 %v2635
    %v2920 = vpop.f32.mrb[0].mxu0
    %v2921 = vadd.f32 0.0, %v2920
    %v2922 = vpop.f32.mrb[0].mxu0
    %2923 = vmatprep.mubr.f32.mxu0 %v2722
    %2924 = vmatmul.mubr.f32.gmra.mrb[0].mxu0 %v2637
    %v2925 = vpop.f32.mrb[0].mxu0
    %v2926 = vadd.f32 0.0, %v2925
    %v2927 = vpop.f32.mrb[0].mxu0
    %2928 = vmatprep.mubr.f32.mxu0 %v2725
    %2929 = vmatmul.mubr.f32.gmra.mrb[0].mxu0 %v2639
    %v2930 = vpop.f32.mrb[0].mxu0
    %v2931 = vadd.f32 0.0, %v2930
    %v2932 = vpop.f32.mrb[0].mxu0
    %2933 = vmatprep.mubr.f32.mxu0 %v2728
    %2934 = vmatmul.mubr.f32.gmra.mrb[0].mxu0 %v2641
    %v2935 = vpop.f32.mrb[0].mxu0
    %v2936 = vadd.f32 0.0, %v2935
    %v2937 = vpop.f32.mrb[0].mxu0
    %2938 = vmatprep.mubr.f32.mxu0 %v2731
    %2939 = vmatmul.mubr.f32.gmra.mrb[0].mxu0 %v2643
    %v2940 = vpop.f32.mrb[0].mxu0
    %v2941 = vadd.f32 0.0, %v2940
    %v2942 = vpop.f32.mrb[0].mxu0
    %2943 = vmatprep.mubr.f32.mxu0 %v2734
    %2944 = vmatmul.mubr.f32.gmra.mrb[0].mxu0 %v2645
    %v2945 = vpop.f32.mrb[0].mxu0
    %v2946 = vadd.f32 0.0, %v2945
    %v2947 = vpop.f32.mrb[0].mxu0
    %2948 = vmatprep.mubr.f32.mxu0 %v2737
    %2949 = vmatmul.mubr.f32.gmra.mrb[0].mxu0 %v2647
    %v2950 = vpop.f32.mrb[0].mxu0
    %v2951 = vadd.f32 0.0, %v2950
    %v2952 = vpop.f32.mrb[0].mxu0
    %2953 = vmatprep.mubr.f32.mxu0 %v2740
    %2954 = vmatmul.mubr.f32.gmra.mrb[0].mxu0 %v2649
    %v2955 = vpop.f32.mrb[0].mxu0
    %v2956 = vadd.f32 0.0, %v2955
    %v2957 = vpop.f32.mrb[0].mxu0
    %2958 = vmatprep.mubr.f32.mxu0 %v2743
    %2959 = vmatmul.mubr.f32.gmra.mrb[0].mxu0 %v2651
    %v2960 = vpop.f32.mrb[0].mxu0
    %v2961 = vadd.f32 0.0, %v2960
    %v2962 = vpop.f32.mrb[0].mxu0
    %2963 = vmatprep.mubr.f32.mxu0 %v2746
    %2964 = vmatmul.mubr.f32.gmra.mrb[0].mxu0 %v2653
    %v2965 = vpop.f32.mrb[0].mxu0
    %v2966 = vadd.f32 0.0, %v2965
    %v2967 = vpop.f32.mrb[0].mxu0
    %2968 = vmatprep.mubr.f32.mxu0 %v2749
    %2969 = vmatmul.mubr.f32.gmra.mrb[0].mxu0 %v2655
    %v2970 = vpop.f32.mrb[0].mxu0
    %v2971 = vadd.f32 0.0, %v2970
    %v2972 = vpop.f32.mrb[0].mxu0
    %2973 = vmatprep.mubr.f32.mxu0 %v2752
    %2974 = vmatmul.mubr.f32.gmra.mrb[0].mxu0 %v2657
    %v2975 = vpop.f32.mrb[0].mxu0
    %v2976 = vadd.f32 0.0, %v2975
    %v2977 = vpop.f32.mrb[0].mxu0
    %2978 = vmatprep.mubr.f32.mxu0 %v2755
    %2979 = vmatmul.mubr.f32.gmra.mrb[0].mxu0 %v2659
    %v2980 = vpop.f32.mrb[0].mxu0
    %v2981 = vadd.f32 0.0, %v2980
    %v2982 = vpop.f32.mrb[0].mxu0
    %2983 = vmatprep.mubr.f32.mxu0 %v2758
    %2984 = vmatmul.mubr.f32.gmra.mrb[0].mxu0 %v2661
    %v2985 = vpop.f32.mrb[0].mxu0
    %v2986 = vadd.f32 0.0, %v2985
    %v2987 = vpop.f32.mrb[0].mxu0
    %2988 = vdwg.mxu0
    %2989 = vst [vmem:[#allocation2] sm:$0xff] %v2831
    %2990 = vst [vmem:[#allocation2 + $0x8] sm:$0xff] %v2836
    %2991 = vst [vmem:[#allocation2 + $0x10] sm:$0xff] %v2841
    %2992 = vst [vmem:[#allocation2 + $0x18] sm:$0xff] %v2846
    %2993 = vst [vmem:[#allocation2 + $0x20] sm:$0xff] %v2851
    %2994 = vst [vmem:[#allocation2 + $0x28] sm:$0xff] %v2856
    %2995 = vst [vmem:[#allocation2 + $0x30] sm:$0xff] %v2861
    %2996 = vst [vmem:[#allocation2 + $0x38] sm:$0xff] %v2866
    %2997 = vst [vmem:[#allocation2 + $0x40] sm:$0xff] %v2871
    %2998 = vst [vmem:[#allocation2 + $0x48] sm:$0xff] %v2876
    %2999 = vst [vmem:[#allocation2 + $0x50] sm:$0xff] %v2881
    %3000 = vst [vmem:[#allocation2 + $0x58] sm:$0xff] %v2886
    %3001 = vst [vmem:[#allocation2 + $0x60] sm:$0xff] %v2891
    %3002 = vst [vmem:[#allocation2 + $0x68] sm:$0xff] %v2896
    %3003 = vst [vmem:[#allocation2 + $0x70] sm:$0xff] %v2901
    %3004 = vst [vmem:[#allocation2 + $0x78] sm:$0xff] %v2906
    %3005 = vst [vmem:[#allocation2 + $0x80] sm:$0xff] %v2911
    %3006 = vst [vmem:[#allocation2 + $0x88] sm:$0xff] %v2916
    %3007 = vst [vmem:[#allocation2 + $0x90] sm:$0xff] %v2921
    %3008 = vst [vmem:[#allocation2 + $0x98] sm:$0xff] %v2926
    %3009 = vst [vmem:[#allocation2 + $0xa0] sm:$0xff] %v2931
    %3010 = vst [vmem:[#allocation2 + $0xa8] sm:$0xff] %v2936
    %3011 = vst [vmem:[#allocation2 + $0xb0] sm:$0xff] %v2941
    %3012 = vst [vmem:[#allocation2 + $0xb8] sm:$0xff] %v2946
    %3013 = vst [vmem:[#allocation2 + $0xc0] sm:$0xff] %v2951
    %3014 = vst [vmem:[#allocation2 + $0xc8] sm:$0xff] %v2956
    %3015 = vst [vmem:[#allocation2 + $0xd0] sm:$0xff] %v2961
    %3016 = vst [vmem:[#allocation2 + $0xd8] sm:$0xff] %v2966
    %3017 = vst [vmem:[#allocation2 + $0xe0] sm:$0xff] %v2971
    %3018 = vst [vmem:[#allocation2 + $0xe8] sm:$0xff] %v2976
    %3019 = vst [vmem:[#allocation2 + $0xf0] sm:$0xff] %v2981
    %3020 = vst [vmem:[#allocation2 + $0xf8] sm:$0xff] %v2986
    %v3021 = vld [vmem:[#allocation2] sm:$0xff]
    %v3022 = vld [vmem:[#allocation2 + $0x8] sm:$0xff]
    %v3023 = vld [vmem:[#allocation2 + $0x10] sm:$0xff]
    %v3024 = vld [vmem:[#allocation2 + $0x18] sm:$0xff]
    %v3025 = vld [vmem:[#allocation2 + $0x20] sm:$0xff]
    %v3026 = vld [vmem:[#allocation2 + $0x28] sm:$0xff]
    %v3027 = vld [vmem:[#allocation2 + $0x30] sm:$0xff]
    %v3028 = vld [vmem:[#allocation2 + $0x38] sm:$0xff]
    %v3029 = vld [vmem:[#allocation2 + $0x40] sm:$0xff]
    %v3030 = vld [vmem:[#allocation2 + $0x48] sm:$0xff]
    %v3031 = vld [vmem:[#allocation2 + $0x50] sm:$0xff]
    %v3032 = vld [vmem:[#allocation2 + $0x58] sm:$0xff]
    %v3033 = vld [vmem:[#allocation2 + $0x60] sm:$0xff]
    %v3034 = vld [vmem:[#allocation2 + $0x68] sm:$0xff]
    %v3035 = vld [vmem:[#allocation2 + $0x70] sm:$0xff]
    %v3036 = vld [vmem:[#allocation2 + $0x78] sm:$0xff]
    %v3037 = vld [vmem:[#allocation2 + $0x80] sm:$0xff]
    %v3038 = vld [vmem:[#allocation2 + $0x88] sm:$0xff]
    %v3039 = vld [vmem:[#allocation2 + $0x90] sm:$0xff]
    %v3040 = vld [vmem:[#allocation2 + $0x98] sm:$0xff]
    %v3041 = vld [vmem:[#allocation2 + $0xa0] sm:$0xff]
    %v3042 = vld [vmem:[#allocation2 + $0xa8] sm:$0xff]
    %v3043 = vld [vmem:[#allocation2 + $0xb0] sm:$0xff]
    %v3044 = vld [vmem:[#allocation2 + $0xb8] sm:$0xff]
    %v3045 = vld [vmem:[#allocation2 + $0xc0] sm:$0xff]
    %v3046 = vld [vmem:[#allocation2 + $0xc8] sm:$0xff]
    %v3047 = vld [vmem:[#allocation2 + $0xd0] sm:$0xff]
    %v3048 = vld [vmem:[#allocation2 + $0xd8] sm:$0x3f]
    %v3049 = vld [vmem:[#allocation6] sm:$0xff]
    %v3050 = vld [vmem:[#allocation6 + $0x8] sm:$0xff]
    %v3051 = vld [vmem:[#allocation6 + $0x10] sm:$0xff]
    %v3052 = vld [vmem:[#allocation6 + $0x18] sm:$0xff]
    %v3053 = vld [vmem:[#allocation6 + $0x20] sm:$0xff]
    %v3054 = vld [vmem:[#allocation6 + $0x28] sm:$0xff]
    %v3055 = vld [vmem:[#allocation6 + $0x30] sm:$0xff]
    %v3056 = vld [vmem:[#allocation6 + $0x38] sm:$0xff]
    %v3057 = vld [vmem:[#allocation6 + $0x40] sm:$0xff]
    %v3058 = vld [vmem:[#allocation6 + $0x48] sm:$0xff]
    %v3059 = vld [vmem:[#allocation6 + $0x50] sm:$0xff]
    %v3060 = vld [vmem:[#allocation6 + $0x58] sm:$0xff]
    %v3061 = vld [vmem:[#allocation6 + $0x60] sm:$0xff]
    %v3062 = vld [vmem:[#allocation6 + $0x68] sm:$0xff]
    %v3063 = vld [vmem:[#allocation6 + $0x70] sm:$0xff]
    %v3064 = vld [vmem:[#allocation6 + $0x78] sm:$0xff]
    %v3065 = vld [vmem:[#allocation2 + $0x1] sm:$0xff]
    %v3066 = vld [vmem:[#allocation2 + $0x9] sm:$0xff]
    %v3067 = vld [vmem:[#allocation2 + $0x11] sm:$0xff]
    %v3068 = vld [vmem:[#allocation2 + $0x19] sm:$0xff]
    %v3069 = vld [vmem:[#allocation2 + $0x21] sm:$0xff]
    %v3070 = vld [vmem:[#allocation2 + $0x29] sm:$0xff]
    %v3071 = vld [vmem:[#allocation2 + $0x31] sm:$0xff]
    %v3072 = vld [vmem:[#allocation2 + $0x39] sm:$0xff]
    %v3073 = vld [vmem:[#allocation2 + $0x41] sm:$0xff]
    %v3074 = vld [vmem:[#allocation2 + $0x49] sm:$0xff]
    %v3075 = vld [vmem:[#allocation2 + $0x51] sm:$0xff]
    %v3076 = vld [vmem:[#allocation2 + $0x59] sm:$0xff]
    %v3077 = vld [vmem:[#allocation2 + $0x61] sm:$0xff]
    %v3078 = vld [vmem:[#allocation2 + $0x69] sm:$0xff]
    %v3079 = vld [vmem:[#allocation2 + $0x71] sm:$0xff]
    %v3080 = vld [vmem:[#allocation2 + $0x79] sm:$0xff]
    %v3081 = vld [vmem:[#allocation2 + $0x81] sm:$0xff]
    %v3082 = vld [vmem:[#allocation2 + $0x89] sm:$0xff]
    %v3083 = vld [vmem:[#allocation2 + $0x91] sm:$0xff]
    %v3084 = vld [vmem:[#allocation2 + $0x99] sm:$0xff]
    %v3085 = vld [vmem:[#allocation2 + $0xa1] sm:$0xff]
    %v3086 = vld [vmem:[#allocation2 + $0xa9] sm:$0xff]
    %v3087 = vld [vmem:[#allocation2 + $0xb1] sm:$0xff]
    %v3088 = vld [vmem:[#allocation2 + $0xb9] sm:$0xff]
    %v3089 = vld [vmem:[#allocation2 + $0xc1] sm:$0xff]
    %v3090 = vld [vmem:[#allocation2 + $0xc9] sm:$0xff]
    %v3091 = vld [vmem:[#allocation2 + $0xd1] sm:$0xff]
    %v3092 = vld [vmem:[#allocation2 + $0xd9] sm:$0x3f]
    %s3093 = scalar_lea.vmem [#allocation6], 128
    %v3094 = vld [vmem:[%s3093] sm:$0xff]
    %v3095 = vld [vmem:[%s3093 + $0x8] sm:$0xff]
    %v3096 = vld [vmem:[%s3093 + $0x10] sm:$0xff]
    %v3097 = vld [vmem:[%s3093 + $0x18] sm:$0xff]
    %v3098 = vld [vmem:[%s3093 + $0x20] sm:$0xff]
    %v3099 = vld [vmem:[%s3093 + $0x28] sm:$0xff]
    %v3100 = vld [vmem:[%s3093 + $0x30] sm:$0xff]
    %v3101 = vld [vmem:[%s3093 + $0x38] sm:$0xff]
    %v3102 = vld [vmem:[%s3093 + $0x40] sm:$0xff]
    %v3103 = vld [vmem:[%s3093 + $0x48] sm:$0xff]
    %v3104 = vld [vmem:[%s3093 + $0x50] sm:$0xff]
    %v3105 = vld [vmem:[%s3093 + $0x58] sm:$0xff]
    %v3106 = vld [vmem:[%s3093 + $0x60] sm:$0xff]
    %v3107 = vld [vmem:[%s3093 + $0x68] sm:$0xff]
    %v3108 = vld [vmem:[%s3093 + $0x70] sm:$0xff]
    %v3109 = vld [vmem:[%s3093 + $0x78] sm:$0xff]
    %3110 = vmatprep.subr.mxu0 0.0
    %3111 = vmatpush1.msra.mxu0 %v3094
    %3112 = vmatprep.subr.mxu0 0.0
    %3113 = vmatpush1.msra.mxu0 %v3095
    %3114 = vmatprep.subr.mxu0 0.0
    %3115 = vmatpush1.msra.mxu0 %v3096
    %3116 = vmatprep.subr.mxu0 0.0
    %3117 = vmatpush1.msra.mxu0 %v3097
    %3118 = vmatprep.subr.mxu0 0.0
    %3119 = vmatpush1.msra.mxu0 %v3098
    %3120 = vmatprep.subr.mxu0 0.0
    %3121 = vmatpush1.msra.mxu0 %v3099
    %3122 = vmatprep.subr.mxu0 0.0
    %3123 = vmatpush1.msra.mxu0 %v3100
    %3124 = vmatprep.subr.mxu0 0.0
    %3125 = vmatpush1.msra.mxu0 %v3101
    %3126 = vmatprep.subr.mxu0 0.0
    %3127 = vmatpush1.msra.mxu0 %v3102
    %3128 = vmatprep.subr.mxu0 0.0
    %3129 = vmatpush1.msra.mxu0 %v3103
    %3130 = vmatprep.subr.mxu0 0.0
    %3131 = vmatpush1.msra.mxu0 %v3104
    %3132 = vmatprep.subr.mxu0 0.0
    %3133 = vmatpush1.msra.mxu0 %v3105
    %3134 = vmatprep.subr.mxu0 0.0
    %3135 = vmatpush1.msra.mxu0 %v3106
    %3136 = vmatprep.subr.mxu0 0.0
    %3137 = vmatpush1.msra.mxu0 %v3107
    %3138 = vmatprep.subr.mxu0 0.0
    %3139 = vmatpush1.msra.mxu0 %v3108
    %3140 = vmatprep.subr.mxu0 0.0
    %3141 = vmatpush1.msra.mxu0 %v3109
    %3142 = vmatprep.subr.mxu0 0.0
    %3143 = vmatpush1.msra.mxu0 0.0
    %3144 = vmatprep.subr.mxu0 0.0
    %3145 = vmatpush1.msra.mxu0 0.0
    %3146 = vmatprep.subr.mxu0 0.0
    %3147 = vmatpush1.msra.mxu0 0.0
    %3148 = vmatprep.subr.mxu0 0.0
    %3149 = vmatpush1.msra.mxu0 0.0
    %3150 = vmatprep.subr.mxu0 0.0
    %3151 = vmatpush1.msra.mxu0 0.0
    %3152 = vmatprep.subr.mxu0 0.0
    %3153 = vmatpush1.msra.mxu0 0.0
    %3154 = vmatprep.subr.mxu0 0.0
    %3155 = vmatpush1.msra.mxu0 0.0
    %3156 = vmatprep.subr.mxu0 0.0
    %3157 = vmatpush1.msra.mxu0 0.0
    %3158 = vmatprep.subr.mxu0 0.0
    %3159 = vmatpush1.msra.mxu0 0.0
    %3160 = vmatprep.subr.mxu0 0.0
    %3161 = vmatpush1.msra.mxu0 0.0
    %3162 = vmatprep.subr.mxu0 0.0
    %3163 = vmatpush1.msra.mxu0 0.0
    %3164 = vmatprep.subr.mxu0 0.0
    %3165 = vmatpush1.msra.mxu0 0.0
    %3166 = vmatprep.subr.mxu0 0.0
    %3167 = vmatpush1.msra.mxu0 0.0
    %3168 = vmatprep.subr.mxu0 0.0
    %3169 = vmatpush1.msra.mxu0 0.0
    %3170 = vmatprep.subr.mxu0 0.0
    %3171 = vmatpush1.msra.mxu0 0.0
    %3172 = vmatprep.subr.mxu0 0.0
    %3173 = vmatpush1.msra.mxu0 0.0
    %3174 = vmatprep.mubr.f32.mxu0 0.0
    %3175 = vmatmul.mubr.f32.gmra.mrb[0].mxu0 %v3065
    %v3176 = vpop.f32.mrb[0].mxu0
    %v3177 = vadd.f32 0.0, %v3176
    %v3178 = vpop.f32.mrb[0].mxu0
    %3179 = vmatprep.mubr.f32.mxu0 0.0
    %3180 = vmatmul.mubr.f32.gmra.mrb[0].mxu0 %v3066
    %v3181 = vpop.f32.mrb[0].mxu0
    %v3182 = vadd.f32 0.0, %v3181
    %v3183 = vpop.f32.mrb[0].mxu0
    %3184 = vmatprep.mubr.f32.mxu0 0.0
    %3185 = vmatmul.mubr.f32.gmra.mrb[0].mxu0 %v3067
    %v3186 = vpop.f32.mrb[0].mxu0
    %v3187 = vadd.f32 0.0, %v3186
    %v3188 = vpop.f32.mrb[0].mxu0
    %3189 = vmatprep.mubr.f32.mxu0 0.0
    %3190 = vmatmul.mubr.f32.gmra.mrb[0].mxu0 %v3068
    %v3191 = vpop.f32.mrb[0].mxu0
    %v3192 = vadd.f32 0.0, %v3191
    %v3193 = vpop.f32.mrb[0].mxu0
    %3194 = vmatprep.mubr.f32.mxu0 0.0
    %3195 = vmatmul.mubr.f32.gmra.mrb[0].mxu0 %v3069
    %v3196 = vpop.f32.mrb[0].mxu0
    %v3197 = vadd.f32 0.0, %v3196
    %v3198 = vpop.f32.mrb[0].mxu0
    %3199 = vmatprep.mubr.f32.mxu0 0.0
    %3200 = vmatmul.mubr.f32.gmra.mrb[0].mxu0 %v3070
    %v3201 = vpop.f32.mrb[0].mxu0
    %v3202 = vadd.f32 0.0, %v3201
    %v3203 = vpop.f32.mrb[0].mxu0
    %3204 = vmatprep.mubr.f32.mxu0 0.0
    %3205 = vmatmul.mubr.f32.gmra.mrb[0].mxu0 %v3071
    %v3206 = vpop.f32.mrb[0].mxu0
    %v3207 = vadd.f32 0.0, %v3206
    %v3208 = vpop.f32.mrb[0].mxu0
    %3209 = vmatprep.mubr.f32.mxu0 0.0
    %3210 = vmatmul.mubr.f32.gmra.mrb[0].mxu0 %v3072
    %v3211 = vpop.f32.mrb[0].mxu0
    %v3212 = vadd.f32 0.0, %v3211
    %v3213 = vpop.f32.mrb[0].mxu0
    %3214 = vmatprep.mubr.f32.mxu0 0.0
    %3215 = vmatmul.mubr.f32.gmra.mrb[0].mxu0 %v3073
    %v3216 = vpop.f32.mrb[0].mxu0
    %v3217 = vadd.f32 0.0, %v3216
    %v3218 = vpop.f32.mrb[0].mxu0
    %3219 = vmatprep.mubr.f32.mxu0 0.0
    %3220 = vmatmul.mubr.f32.gmra.mrb[0].mxu0 %v3074
    %v3221 = vpop.f32.mrb[0].mxu0
    %v3222 = vadd.f32 0.0, %v3221
    %v3223 = vpop.f32.mrb[0].mxu0
    %3224 = vmatprep.mubr.f32.mxu0 0.0
    %3225 = vmatmul.mubr.f32.gmra.mrb[0].mxu0 %v3075
    %v3226 = vpop.f32.mrb[0].mxu0
    %v3227 = vadd.f32 0.0, %v3226
    %v3228 = vpop.f32.mrb[0].mxu0
    %3229 = vmatprep.mubr.f32.mxu0 0.0
    %3230 = vmatmul.mubr.f32.gmra.mrb[0].mxu0 %v3076
    %v3231 = vpop.f32.mrb[0].mxu0
    %v3232 = vadd.f32 0.0, %v3231
    %v3233 = vpop.f32.mrb[0].mxu0
    %3234 = vmatprep.mubr.f32.mxu0 0.0
    %3235 = vmatmul.mubr.f32.gmra.mrb[0].mxu0 %v3077
    %v3236 = vpop.f32.mrb[0].mxu0
    %v3237 = vadd.f32 0.0, %v3236
    %v3238 = vpop.f32.mrb[0].mxu0
    %3239 = vmatprep.mubr.f32.mxu0 0.0
    %3240 = vmatmul.mubr.f32.gmra.mrb[0].mxu0 %v3078
    %v3241 = vpop.f32.mrb[0].mxu0
    %v3242 = vadd.f32 0.0, %v3241
    %v3243 = vpop.f32.mrb[0].mxu0
    %3244 = vmatprep.mubr.f32.mxu0 0.0
    %3245 = vmatmul.mubr.f32.gmra.mrb[0].mxu0 %v3079
    %v3246 = vpop.f32.mrb[0].mxu0
    %v3247 = vadd.f32 0.0, %v3246
    %v3248 = vpop.f32.mrb[0].mxu0
    %3249 = vmatprep.mubr.f32.mxu0 0.0
    %3250 = vmatmul.mubr.f32.gmra.mrb[0].mxu0 %v3080
    %v3251 = vpop.f32.mrb[0].mxu0
    %v3252 = vadd.f32 0.0, %v3251
    %v3253 = vpop.f32.mrb[0].mxu0
    %3254 = vmatprep.mubr.f32.mxu0 0.0
    %3255 = vmatmul.mubr.f32.gmra.mrb[0].mxu0 %v3081
    %v3256 = vpop.f32.mrb[0].mxu0
    %v3257 = vadd.f32 0.0, %v3256
    %v3258 = vpop.f32.mrb[0].mxu0
    %3259 = vmatprep.mubr.f32.mxu0 0.0
    %3260 = vmatmul.mubr.f32.gmra.mrb[0].mxu0 %v3082
    %v3261 = vpop.f32.mrb[0].mxu0
    %v3262 = vadd.f32 0.0, %v3261
    %v3263 = vpop.f32.mrb[0].mxu0
    %3264 = vmatprep.mubr.f32.mxu0 0.0
    %3265 = vmatmul.mubr.f32.gmra.mrb[0].mxu0 %v3083
    %v3266 = vpop.f32.mrb[0].mxu0
    %v3267 = vadd.f32 0.0, %v3266
    %v3268 = vpop.f32.mrb[0].mxu0
    %3269 = vmatprep.mubr.f32.mxu0 0.0
    %3270 = vmatmul.mubr.f32.gmra.mrb[0].mxu0 %v3084
    %v3271 = vpop.f32.mrb[0].mxu0
    %v3272 = vadd.f32 0.0, %v3271
    %v3273 = vpop.f32.mrb[0].mxu0
    %3274 = vmatprep.mubr.f32.mxu0 0.0
    %3275 = vmatmul.mubr.f32.gmra.mrb[0].mxu0 %v3085
    %v3276 = vpop.f32.mrb[0].mxu0
    %v3277 = vadd.f32 0.0, %v3276
    %v3278 = vpop.f32.mrb[0].mxu0
    %3279 = vmatprep.mubr.f32.mxu0 0.0
    %3280 = vmatmul.mubr.f32.gmra.mrb[0].mxu0 %v3086
    %v3281 = vpop.f32.mrb[0].mxu0
    %v3282 = vadd.f32 0.0, %v3281
    %v3283 = vpop.f32.mrb[0].mxu0
    %3284 = vmatprep.mubr.f32.mxu0 0.0
    %3285 = vmatmul.mubr.f32.gmra.mrb[0].mxu0 %v3087
    %v3286 = vpop.f32.mrb[0].mxu0
    %v3287 = vadd.f32 0.0, %v3286
    %v3288 = vpop.f32.mrb[0].mxu0
    %3289 = vmatprep.mubr.f32.mxu0 0.0
    %3290 = vmatmul.mubr.f32.gmra.mrb[0].mxu0 %v3088
    %v3291 = vpop.f32.mrb[0].mxu0
    %v3292 = vadd.f32 0.0, %v3291
    %v3293 = vpop.f32.mrb[0].mxu0
    %3294 = vmatprep.mubr.f32.mxu0 0.0
    %3295 = vmatmul.mubr.f32.gmra.mrb[0].mxu0 %v3089
    %v3296 = vpop.f32.mrb[0].mxu0
    %v3297 = vadd.f32 0.0, %v3296
    %v3298 = vpop.f32.mrb[0].mxu0
    %3299 = vmatprep.mubr.f32.mxu0 0.0
    %3300 = vmatmul.mubr.f32.gmra.mrb[0].mxu0 %v3090
    %v3301 = vpop.f32.mrb[0].mxu0
    %v3302 = vadd.f32 0.0, %v3301
    %v3303 = vpop.f32.mrb[0].mxu0
    %3304 = vmatprep.mubr.f32.mxu0 0.0
    %3305 = vmatmul.mubr.f32.gmra.mrb[0].mxu0 %v3091
    %v3306 = vpop.f32.mrb[0].mxu0
    %v3307 = vadd.f32 0.0, %v3306
    %v3308 = vpop.f32.mrb[0].mxu0
    %3309 = vmatprep.mubr.f32.mxu0 0.0
    %3310 = vmatmul.mubr.f32.gmra.mrb[0].mxu0 %v3092
    %v3311 = vpop.f32.mrb[0].mxu0
    %v3312 = vadd.f32 0.0, %v3311
    %v3313 = vpop.f32.mrb[0].mxu0
    %3314 = vdwg.mxu0
    %3315 = vmatprep.subr.mxu0 0.0
    %3316 = vmatpush1.msra.mxu0 %v3049
    %3317 = vmatprep.subr.mxu0 0.0
    %3318 = vmatpush1.msra.mxu0 %v3050
    %3319 = vmatprep.subr.mxu0 0.0
    %3320 = vmatpush1.msra.mxu0 %v3051
    %3321 = vmatprep.subr.mxu0 0.0
    %3322 = vmatpush1.msra.mxu0 %v3052
    %3323 = vmatprep.subr.mxu0 0.0
    %3324 = vmatpush1.msra.mxu0 %v3053
    %3325 = vmatprep.subr.mxu0 0.0
    %3326 = vmatpush1.msra.mxu0 %v3054
    %3327 = vmatprep.subr.mxu0 0.0
    %3328 = vmatpush1.msra.mxu0 %v3055
    %3329 = vmatprep.subr.mxu0 0.0
    %3330 = vmatpush1.msra.mxu0 %v3056
    %3331 = vmatprep.subr.mxu0 0.0
    %3332 = vmatpush1.msra.mxu0 %v3057
    %3333 = vmatprep.subr.mxu0 0.0
    %3334 = vmatpush1.msra.mxu0 %v3058
    %3335 = vmatprep.subr.mxu0 0.0
    %3336 = vmatpush1.msra.mxu0 %v3059
    %3337 = vmatprep.subr.mxu0 0.0
    %3338 = vmatpush1.msra.mxu0 %v3060
    %3339 = vmatprep.subr.mxu0 0.0
    %3340 = vmatpush1.msra.mxu0 %v3061
    %3341 = vmatprep.subr.mxu0 0.0
    %3342 = vmatpush1.msra.mxu0 %v3062
    %3343 = vmatprep.subr.mxu0 0.0
    %3344 = vmatpush1.msra.mxu0 %v3063
    %3345 = vmatprep.subr.mxu0 0.0
    %3346 = vmatpush1.msra.mxu0 %v3064
    %3347 = vmatprep.subr.mxu0 0.0
    %3348 = vmatpush1.msra.mxu0 0.0
    %3349 = vmatprep.subr.mxu0 0.0
    %3350 = vmatpush1.msra.mxu0 0.0
    %3351 = vmatprep.subr.mxu0 0.0
    %3352 = vmatpush1.msra.mxu0 0.0
    %3353 = vmatprep.subr.mxu0 0.0
    %3354 = vmatpush1.msra.mxu0 0.0
    %3355 = vmatprep.subr.mxu0 0.0
    %3356 = vmatpush1.msra.mxu0 0.0
    %3357 = vmatprep.subr.mxu0 0.0
    %3358 = vmatpush1.msra.mxu0 0.0
    %3359 = vmatprep.subr.mxu0 0.0
    %3360 = vmatpush1.msra.mxu0 0.0
    %3361 = vmatprep.subr.mxu0 0.0
    %3362 = vmatpush1.msra.mxu0 0.0
    %3363 = vmatprep.subr.mxu0 0.0
    %3364 = vmatpush1.msra.mxu0 0.0
    %3365 = vmatprep.subr.mxu0 0.0
    %3366 = vmatpush1.msra.mxu0 0.0
    %3367 = vmatprep.subr.mxu0 0.0
    %3368 = vmatpush1.msra.mxu0 0.0
    %3369 = vmatprep.subr.mxu0 0.0
    %3370 = vmatpush1.msra.mxu0 0.0
    %3371 = vmatprep.subr.mxu0 0.0
    %3372 = vmatpush1.msra.mxu0 0.0
    %3373 = vmatprep.subr.mxu0 0.0
    %3374 = vmatpush1.msra.mxu0 0.0
    %3375 = vmatprep.subr.mxu0 0.0
    %3376 = vmatpush1.msra.mxu0 0.0
    %3377 = vmatprep.subr.mxu0 0.0
    %3378 = vmatpush1.msra.mxu0 0.0
    %3379 = vmatprep.mubr.f32.mxu0 0.0
    %3380 = vmatmul.mubr.f32.gmra.mrb[0].mxu0 %v3021
    %v3381 = vpop.f32.mrb[0].mxu0
    %v3382 = vadd.f32 %v3177, %v3381
    %v3383 = vpop.f32.mrb[0].mxu0
    %3384 = vmatprep.mubr.f32.mxu0 0.0
    %3385 = vmatmul.mubr.f32.gmra.mrb[0].mxu0 %v3022
    %v3386 = vpop.f32.mrb[0].mxu0
    %v3387 = vadd.f32 %v3182, %v3386
    %v3388 = vpop.f32.mrb[0].mxu0
    %3389 = vmatprep.mubr.f32.mxu0 0.0
    %3390 = vmatmul.mubr.f32.gmra.mrb[0].mxu0 %v3023
    %v3391 = vpop.f32.mrb[0].mxu0
    %v3392 = vadd.f32 %v3187, %v3391
    %v3393 = vpop.f32.mrb[0].mxu0
    %3394 = vmatprep.mubr.f32.mxu0 0.0
    %3395 = vmatmul.mubr.f32.gmra.mrb[0].mxu0 %v3024
    %v3396 = vpop.f32.mrb[0].mxu0
    %v3397 = vadd.f32 %v3192, %v3396
    %v3398 = vpop.f32.mrb[0].mxu0
    %3399 = vmatprep.mubr.f32.mxu0 0.0
    %3400 = vmatmul.mubr.f32.gmra.mrb[0].mxu0 %v3025
    %v3401 = vpop.f32.mrb[0].mxu0
    %v3402 = vadd.f32 %v3197, %v3401
    %v3403 = vpop.f32.mrb[0].mxu0
    %3404 = vmatprep.mubr.f32.mxu0 0.0
    %3405 = vmatmul.mubr.f32.gmra.mrb[0].mxu0 %v3026
    %v3406 = vpop.f32.mrb[0].mxu0
    %v3407 = vadd.f32 %v3202, %v3406
    %v3408 = vpop.f32.mrb[0].mxu0
    %3409 = vmatprep.mubr.f32.mxu0 0.0
    %3410 = vmatmul.mubr.f32.gmra.mrb[0].mxu0 %v3027
    %v3411 = vpop.f32.mrb[0].mxu0
    %v3412 = vadd.f32 %v3207, %v3411
    %v3413 = vpop.f32.mrb[0].mxu0
    %3414 = vmatprep.mubr.f32.mxu0 0.0
    %3415 = vmatmul.mubr.f32.gmra.mrb[0].mxu0 %v3028
    %v3416 = vpop.f32.mrb[0].mxu0
    %v3417 = vadd.f32 %v3212, %v3416
    %v3418 = vpop.f32.mrb[0].mxu0
    %3419 = vmatprep.mubr.f32.mxu0 0.0
    %3420 = vmatmul.mubr.f32.gmra.mrb[0].mxu0 %v3029
    %v3421 = vpop.f32.mrb[0].mxu0
    %v3422 = vadd.f32 %v3217, %v3421
    %v3423 = vpop.f32.mrb[0].mxu0
    %3424 = vmatprep.mubr.f32.mxu0 0.0
    %3425 = vmatmul.mubr.f32.gmra.mrb[0].mxu0 %v3030
    %v3426 = vpop.f32.mrb[0].mxu0
    %v3427 = vadd.f32 %v3222, %v3426
    %v3428 = vpop.f32.mrb[0].mxu0
    %3429 = vmatprep.mubr.f32.mxu0 0.0
    %3430 = vmatmul.mubr.f32.gmra.mrb[0].mxu0 %v3031
    %v3431 = vpop.f32.mrb[0].mxu0
    %v3432 = vadd.f32 %v3227, %v3431
    %v3433 = vpop.f32.mrb[0].mxu0
    %3434 = vmatprep.mubr.f32.mxu0 0.0
    %3435 = vmatmul.mubr.f32.gmra.mrb[0].mxu0 %v3032
    %v3436 = vpop.f32.mrb[0].mxu0
    %v3437 = vadd.f32 %v3232, %v3436
    %v3438 = vpop.f32.mrb[0].mxu0
    %3439 = vmatprep.mubr.f32.mxu0 0.0
    %3440 = vmatmul.mubr.f32.gmra.mrb[0].mxu0 %v3033
    %v3441 = vpop.f32.mrb[0].mxu0
    %v3442 = vadd.f32 %v3237, %v3441
    %v3443 = vpop.f32.mrb[0].mxu0
    %3444 = vmatprep.mubr.f32.mxu0 0.0
    %3445 = vmatmul.mubr.f32.gmra.mrb[0].mxu0 %v3034
    %v3446 = vpop.f32.mrb[0].mxu0
    %v3447 = vadd.f32 %v3242, %v3446
    %v3448 = vpop.f32.mrb[0].mxu0
    %3449 = vmatprep.mubr.f32.mxu0 0.0
    %3450 = vmatmul.mubr.f32.gmra.mrb[0].mxu0 %v3035
    %v3451 = vpop.f32.mrb[0].mxu0
    %v3452 = vadd.f32 %v3247, %v3451
    %v3453 = vpop.f32.mrb[0].mxu0
    %3454 = vmatprep.mubr.f32.mxu0 0.0
    %3455 = vmatmul.mubr.f32.gmra.mrb[0].mxu0 %v3036
    %v3456 = vpop.f32.mrb[0].mxu0
    %v3457 = vadd.f32 %v3252, %v3456
    %v3458 = vpop.f32.mrb[0].mxu0
    %3459 = vmatprep.mubr.f32.mxu0 0.0
    %3460 = vmatmul.mubr.f32.gmra.mrb[0].mxu0 %v3037
    %v3461 = vpop.f32.mrb[0].mxu0
    %v3462 = vadd.f32 %v3257, %v3461
    %v3463 = vpop.f32.mrb[0].mxu0
    %3464 = vmatprep.mubr.f32.mxu0 0.0
    %3465 = vmatmul.mubr.f32.gmra.mrb[0].mxu0 %v3038
    %v3466 = vpop.f32.mrb[0].mxu0
    %v3467 = vadd.f32 %v3262, %v3466
    %v3468 = vpop.f32.mrb[0].mxu0
    %3469 = vmatprep.mubr.f32.mxu0 0.0
    %3470 = vmatmul.mubr.f32.gmra.mrb[0].mxu0 %v3039
    %v3471 = vpop.f32.mrb[0].mxu0
    %v3472 = vadd.f32 %v3267, %v3471
    %v3473 = vpop.f32.mrb[0].mxu0
    %3474 = vmatprep.mubr.f32.mxu0 0.0
    %3475 = vmatmul.mubr.f32.gmra.mrb[0].mxu0 %v3040
    %v3476 = vpop.f32.mrb[0].mxu0
    %v3477 = vadd.f32 %v3272, %v3476
    %v3478 = vpop.f32.mrb[0].mxu0
    %3479 = vmatprep.mubr.f32.mxu0 0.0
    %3480 = vmatmul.mubr.f32.gmra.mrb[0].mxu0 %v3041
    %v3481 = vpop.f32.mrb[0].mxu0
    %v3482 = vadd.f32 %v3277, %v3481
    %v3483 = vpop.f32.mrb[0].mxu0
    %3484 = vmatprep.mubr.f32.mxu0 0.0
    %3485 = vmatmul.mubr.f32.gmra.mrb[0].mxu0 %v3042
    %v3486 = vpop.f32.mrb[0].mxu0
    %v3487 = vadd.f32 %v3282, %v3486
    %v3488 = vpop.f32.mrb[0].mxu0
    %3489 = vmatprep.mubr.f32.mxu0 0.0
    %3490 = vmatmul.mubr.f32.gmra.mrb[0].mxu0 %v3043
    %v3491 = vpop.f32.mrb[0].mxu0
    %v3492 = vadd.f32 %v3287, %v3491
    %v3493 = vpop.f32.mrb[0].mxu0
    %3494 = vmatprep.mubr.f32.mxu0 0.0
    %3495 = vmatmul.mubr.f32.gmra.mrb[0].mxu0 %v3044
    %v3496 = vpop.f32.mrb[0].mxu0
    %v3497 = vadd.f32 %v3292, %v3496
    %v3498 = vpop.f32.mrb[0].mxu0
    %3499 = vmatprep.mubr.f32.mxu0 0.0
    %3500 = vmatmul.mubr.f32.gmra.mrb[0].mxu0 %v3045
    %v3501 = vpop.f32.mrb[0].mxu0
    %v3502 = vadd.f32 %v3297, %v3501
    %v3503 = vpop.f32.mrb[0].mxu0
    %3504 = vmatprep.mubr.f32.mxu0 0.0
    %3505 = vmatmul.mubr.f32.gmra.mrb[0].mxu0 %v3046
    %v3506 = vpop.f32.mrb[0].mxu0
    %v3507 = vadd.f32 %v3302, %v3506
    %v3508 = vpop.f32.mrb[0].mxu0
    %3509 = vmatprep.mubr.f32.mxu0 0.0
    %3510 = vmatmul.mubr.f32.gmra.mrb[0].mxu0 %v3047
    %v3511 = vpop.f32.mrb[0].mxu0
    %v3512 = vadd.f32 %v3307, %v3511
    %v3513 = vpop.f32.mrb[0].mxu0
    %3514 = vmatprep.mubr.f32.mxu0 0.0
    %3515 = vmatmul.mubr.f32.gmra.mrb[0].mxu0 %v3048
    %v3516 = vpop.f32.mrb[0].mxu0
    %v3517 = vadd.f32 %v3312, %v3516
    %v3518 = vpop.f32.mrb[0].mxu0
    %3519 = vdwg.mxu0
    %v3520 = vld [vmem:[#allocation2 + $0x2] sm:$0xff]
    %v3521 = vld [vmem:[#allocation2 + $0xa] sm:$0xff]
    %v3522 = vld [vmem:[#allocation2 + $0x12] sm:$0xff]
    %v3523 = vld [vmem:[#allocation2 + $0x1a] sm:$0xff]
    %v3524 = vld [vmem:[#allocation2 + $0x22] sm:$0xff]
    %v3525 = vld [vmem:[#allocation2 + $0x2a] sm:$0xff]
    %v3526 = vld [vmem:[#allocation2 + $0x32] sm:$0xff]
    %v3527 = vld [vmem:[#allocation2 + $0x3a] sm:$0xff]
    %v3528 = vld [vmem:[#allocation2 + $0x42] sm:$0xff]
    %v3529 = vld [vmem:[#allocation2 + $0x4a] sm:$0xff]
    %v3530 = vld [vmem:[#allocation2 + $0x52] sm:$0xff]
    %v3531 = vld [vmem:[#allocation2 + $0x5a] sm:$0xff]
    %v3532 = vld [vmem:[#allocation2 + $0x62] sm:$0xff]
    %v3533 = vld [vmem:[#allocation2 + $0x6a] sm:$0xff]
    %v3534 = vld [vmem:[#allocation2 + $0x72] sm:$0xff]
    %v3535 = vld [vmem:[#allocation2 + $0x7a] sm:$0xff]
    %v3536 = vld [vmem:[#allocation2 + $0x82] sm:$0xff]
    %v3537 = vld [vmem:[#allocation2 + $0x8a] sm:$0xff]
    %v3538 = vld [vmem:[#allocation2 + $0x92] sm:$0xff]
    %v3539 = vld [vmem:[#allocation2 + $0x9a] sm:$0xff]
    %v3540 = vld [vmem:[#allocation2 + $0xa2] sm:$0xff]
    %v3541 = vld [vmem:[#allocation2 + $0xaa] sm:$0xff]
    %v3542 = vld [vmem:[#allocation2 + $0xb2] sm:$0xff]
    %v3543 = vld [vmem:[#allocation2 + $0xba] sm:$0xff]
    %v3544 = vld [vmem:[#allocation2 + $0xc2] sm:$0xff]
    %v3545 = vld [vmem:[#allocation2 + $0xca] sm:$0xff]
    %v3546 = vld [vmem:[#allocation2 + $0xd2] sm:$0xff]
    %v3547 = vld [vmem:[#allocation2 + $0xda] sm:$0x3f]
    %s3548 = scalar_lea.vmem [#allocation6], 256
    %v3549 = vld [vmem:[%s3548] sm:$0xff]
    %v3550 = vld [vmem:[%s3548 + $0x8] sm:$0xff]
    %v3551 = vld [vmem:[%s3548 + $0x10] sm:$0xff]
    %v3552 = vld [vmem:[%s3548 + $0x18] sm:$0xff]
    %v3553 = vld [vmem:[%s3548 + $0x20] sm:$0xff]
    %v3554 = vld [vmem:[%s3548 + $0x28] sm:$0xff]
    %v3555 = vld [vmem:[%s3548 + $0x30] sm:$0xff]
    %v3556 = vld [vmem:[%s3548 + $0x38] sm:$0xff]
    %v3557 = vld [vmem:[%s3548 + $0x40] sm:$0xff]
    %v3558 = vld [vmem:[%s3548 + $0x48] sm:$0xff]
    %v3559 = vld [vmem:[%s3548 + $0x50] sm:$0xff]
    %v3560 = vld [vmem:[%s3548 + $0x58] sm:$0xff]
    %v3561 = vld [vmem:[%s3548 + $0x60] sm:$0xff]
    %v3562 = vld [vmem:[%s3548 + $0x68] sm:$0xff]
    %v3563 = vld [vmem:[%s3548 + $0x70] sm:$0xff]
    %v3564 = vld [vmem:[%s3548 + $0x78] sm:$0xff]
    %3565 = vmatprep.subr.mxu0 0.0
    %3566 = vmatpush1.msra.mxu0 %v3549
    %3567 = vmatprep.subr.mxu0 0.0
    %3568 = vmatpush1.msra.mxu0 %v3550
    %3569 = vmatprep.subr.mxu0 0.0
    %3570 = vmatpush1.msra.mxu0 %v3551
    %3571 = vmatprep.subr.mxu0 0.0
    %3572 = vmatpush1.msra.mxu0 %v3552
    %3573 = vmatprep.subr.mxu0 0.0
    %3574 = vmatpush1.msra.mxu0 %v3553
    %3575 = vmatprep.subr.mxu0 0.0
    %3576 = vmatpush1.msra.mxu0 %v3554
    %3577 = vmatprep.subr.mxu0 0.0
    %3578 = vmatpush1.msra.mxu0 %v3555
    %3579 = vmatprep.subr.mxu0 0.0
    %3580 = vmatpush1.msra.mxu0 %v3556
    %3581 = vmatprep.subr.mxu0 0.0
    %3582 = vmatpush1.msra.mxu0 %v3557
    %3583 = vmatprep.subr.mxu0 0.0
    %3584 = vmatpush1.msra.mxu0 %v3558
    %3585 = vmatprep.subr.mxu0 0.0
    %3586 = vmatpush1.msra.mxu0 %v3559
    %3587 = vmatprep.subr.mxu0 0.0
    %3588 = vmatpush1.msra.mxu0 %v3560
    %3589 = vmatprep.subr.mxu0 0.0
    %3590 = vmatpush1.msra.mxu0 %v3561
    %3591 = vmatprep.subr.mxu0 0.0
    %3592 = vmatpush1.msra.mxu0 %v3562
    %3593 = vmatprep.subr.mxu0 0.0
    %3594 = vmatpush1.msra.mxu0 %v3563
    %3595 = vmatprep.subr.mxu0 0.0
    %3596 = vmatpush1.msra.mxu0 %v3564
    %3597 = vmatprep.subr.mxu0 0.0
    %3598 = vmatpush1.msra.mxu0 0.0
    %3599 = vmatprep.subr.mxu0 0.0
    %3600 = vmatpush1.msra.mxu0 0.0
    %3601 = vmatprep.subr.mxu0 0.0
    %3602 = vmatpush1.msra.mxu0 0.0
    %3603 = vmatprep.subr.mxu0 0.0
    %3604 = vmatpush1.msra.mxu0 0.0
    %3605 = vmatprep.subr.mxu0 0.0
    %3606 = vmatpush1.msra.mxu0 0.0
    %3607 = vmatprep.subr.mxu0 0.0
    %3608 = vmatpush1.msra.mxu0 0.0
    %3609 = vmatprep.subr.mxu0 0.0
    %3610 = vmatpush1.msra.mxu0 0.0
    %3611 = vmatprep.subr.mxu0 0.0
    %3612 = vmatpush1.msra.mxu0 0.0
    %3613 = vmatprep.subr.mxu0 0.0
    %3614 = vmatpush1.msra.mxu0 0.0
    %3615 = vmatprep.subr.mxu0 0.0
    %3616 = vmatpush1.msra.mxu0 0.0
    %3617 = vmatprep.subr.mxu0 0.0
    %3618 = vmatpush1.msra.mxu0 0.0
    %3619 = vmatprep.subr.mxu0 0.0
    %3620 = vmatpush1.msra.mxu0 0.0
    %3621 = vmatprep.subr.mxu0 0.0
    %3622 = vmatpush1.msra.mxu0 0.0
    %3623 = vmatprep.subr.mxu0 0.0
    %3624 = vmatpush1.msra.mxu0 0.0
    %3625 = vmatprep.subr.mxu0 0.0
    %3626 = vmatpush1.msra.mxu0 0.0
    %3627 = vmatprep.subr.mxu0 0.0
    %3628 = vmatpush1.msra.mxu0 0.0
    %3629 = vmatprep.mubr.f32.mxu0 0.0
    %3630 = vmatmul.mubr.f32.gmra.mrb[0].mxu0 %v3520
    %v3631 = vpop.f32.mrb[0].mxu0
    %v3632 = vadd.f32 0.0, %v3631
    %v3633 = vpop.f32.mrb[0].mxu0
    %3634 = vmatprep.mubr.f32.mxu0 0.0
    %3635 = vmatmul.mubr.f32.gmra.mrb[0].mxu0 %v3521
    %v3636 = vpop.f32.mrb[0].mxu0
    %v3637 = vadd.f32 0.0, %v3636
    %v3638 = vpop.f32.mrb[0].mxu0
    %3639 = vmatprep.mubr.f32.mxu0 0.0
    %3640 = vmatmul.mubr.f32.gmra.mrb[0].mxu0 %v3522
    %v3641 = vpop.f32.mrb[0].mxu0
    %v3642 = vadd.f32 0.0, %v3641
    %v3643 = vpop.f32.mrb[0].mxu0
    %3644 = vmatprep.mubr.f32.mxu0 0.0
    %3645 = vmatmul.mubr.f32.gmra.mrb[0].mxu0 %v3523
    %v3646 = vpop.f32.mrb[0].mxu0
    %v3647 = vadd.f32 0.0, %v3646
    %v3648 = vpop.f32.mrb[0].mxu0
    %3649 = vmatprep.mubr.f32.mxu0 0.0
    %3650 = vmatmul.mubr.f32.gmra.mrb[0].mxu0 %v3524
    %v3651 = vpop.f32.mrb[0].mxu0
    %v3652 = vadd.f32 0.0, %v3651
    %v3653 = vpop.f32.mrb[0].mxu0
    %3654 = vmatprep.mubr.f32.mxu0 0.0
    %3655 = vmatmul.mubr.f32.gmra.mrb[0].mxu0 %v3525
    %v3656 = vpop.f32.mrb[0].mxu0
    %v3657 = vadd.f32 0.0, %v3656
    %v3658 = vpop.f32.mrb[0].mxu0
    %3659 = vmatprep.mubr.f32.mxu0 0.0
    %3660 = vmatmul.mubr.f32.gmra.mrb[0].mxu0 %v3526
    %v3661 = vpop.f32.mrb[0].mxu0
    %v3662 = vadd.f32 0.0, %v3661
    %v3663 = vpop.f32.mrb[0].mxu0
    %3664 = vmatprep.mubr.f32.mxu0 0.0
    %3665 = vmatmul.mubr.f32.gmra.mrb[0].mxu0 %v3527
    %v3666 = vpop.f32.mrb[0].mxu0
    %v3667 = vadd.f32 0.0, %v3666
    %v3668 = vpop.f32.mrb[0].mxu0
    %3669 = vmatprep.mubr.f32.mxu0 0.0
    %3670 = vmatmul.mubr.f32.gmra.mrb[0].mxu0 %v3528
    %v3671 = vpop.f32.mrb[0].mxu0
    %v3672 = vadd.f32 0.0, %v3671
    %v3673 = vpop.f32.mrb[0].mxu0
    %3674 = vmatprep.mubr.f32.mxu0 0.0
    %3675 = vmatmul.mubr.f32.gmra.mrb[0].mxu0 %v3529
    %v3676 = vpop.f32.mrb[0].mxu0
    %v3677 = vadd.f32 0.0, %v3676
    %v3678 = vpop.f32.mrb[0].mxu0
    %3679 = vmatprep.mubr.f32.mxu0 0.0
    %3680 = vmatmul.mubr.f32.gmra.mrb[0].mxu0 %v3530
    %v3681 = vpop.f32.mrb[0].mxu0
    %v3682 = vadd.f32 0.0, %v3681
    %v3683 = vpop.f32.mrb[0].mxu0
    %3684 = vmatprep.mubr.f32.mxu0 0.0
    %3685 = vmatmul.mubr.f32.gmra.mrb[0].mxu0 %v3531
    %v3686 = vpop.f32.mrb[0].mxu0
    %v3687 = vadd.f32 0.0, %v3686
    %v3688 = vpop.f32.mrb[0].mxu0
    %3689 = vmatprep.mubr.f32.mxu0 0.0
    %3690 = vmatmul.mubr.f32.gmra.mrb[0].mxu0 %v3532
    %v3691 = vpop.f32.mrb[0].mxu0
    %v3692 = vadd.f32 0.0, %v3691
    %v3693 = vpop.f32.mrb[0].mxu0
    %3694 = vmatprep.mubr.f32.mxu0 0.0
    %3695 = vmatmul.mubr.f32.gmra.mrb[0].mxu0 %v3533
    %v3696 = vpop.f32.mrb[0].mxu0
    %v3697 = vadd.f32 0.0, %v3696
    %v3698 = vpop.f32.mrb[0].mxu0
    %3699 = vmatprep.mubr.f32.mxu0 0.0
    %3700 = vmatmul.mubr.f32.gmra.mrb[0].mxu0 %v3534
    %v3701 = vpop.f32.mrb[0].mxu0
    %v3702 = vadd.f32 0.0, %v3701
    %v3703 = vpop.f32.mrb[0].mxu0
    %3704 = vmatprep.mubr.f32.mxu0 0.0
    %3705 = vmatmul.mubr.f32.gmra.mrb[0].mxu0 %v3535
    %v3706 = vpop.f32.mrb[0].mxu0
    %v3707 = vadd.f32 0.0, %v3706
    %v3708 = vpop.f32.mrb[0].mxu0
    %3709 = vmatprep.mubr.f32.mxu0 0.0
    %3710 = vmatmul.mubr.f32.gmra.mrb[0].mxu0 %v3536
    %v3711 = vpop.f32.mrb[0].mxu0
    %v3712 = vadd.f32 0.0, %v3711
    %v3713 = vpop.f32.mrb[0].mxu0
    %3714 = vmatprep.mubr.f32.mxu0 0.0
    %3715 = vmatmul.mubr.f32.gmra.mrb[0].mxu0 %v3537
    %v3716 = vpop.f32.mrb[0].mxu0
    %v3717 = vadd.f32 0.0, %v3716
    %v3718 = vpop.f32.mrb[0].mxu0
    %3719 = vmatprep.mubr.f32.mxu0 0.0
    %3720 = vmatmul.mubr.f32.gmra.mrb[0].mxu0 %v3538
    %v3721 = vpop.f32.mrb[0].mxu0
    %v3722 = vadd.f32 0.0, %v3721
    %v3723 = vpop.f32.mrb[0].mxu0
    %3724 = vmatprep.mubr.f32.mxu0 0.0
    %3725 = vmatmul.mubr.f32.gmra.mrb[0].mxu0 %v3539
    %v3726 = vpop.f32.mrb[0].mxu0
    %v3727 = vadd.f32 0.0, %v3726
    %v3728 = vpop.f32.mrb[0].mxu0
    %3729 = vmatprep.mubr.f32.mxu0 0.0
    %3730 = vmatmul.mubr.f32.gmra.mrb[0].mxu0 %v3540
    %v3731 = vpop.f32.mrb[0].mxu0
    %v3732 = vadd.f32 0.0, %v3731
    %v3733 = vpop.f32.mrb[0].mxu0
    %3734 = vmatprep.mubr.f32.mxu0 0.0
    %3735 = vmatmul.mubr.f32.gmra.mrb[0].mxu0 %v3541
    %v3736 = vpop.f32.mrb[0].mxu0
    %v3737 = vadd.f32 0.0, %v3736
    %v3738 = vpop.f32.mrb[0].mxu0
    %3739 = vmatprep.mubr.f32.mxu0 0.0
    %3740 = vmatmul.mubr.f32.gmra.mrb[0].mxu0 %v3542
    %v3741 = vpop.f32.mrb[0].mxu0
    %v3742 = vadd.f32 0.0, %v3741
    %v3743 = vpop.f32.mrb[0].mxu0
    %3744 = vmatprep.mubr.f32.mxu0 0.0
    %3745 = vmatmul.mubr.f32.gmra.mrb[0].mxu0 %v3543
    %v3746 = vpop.f32.mrb[0].mxu0
    %v3747 = vadd.f32 0.0, %v3746
    %v3748 = vpop.f32.mrb[0].mxu0
    %3749 = vmatprep.mubr.f32.mxu0 0.0
    %3750 = vmatmul.mubr.f32.gmra.mrb[0].mxu0 %v3544
    %v3751 = vpop.f32.mrb[0].mxu0
    %v3752 = vadd.f32 0.0, %v3751
    %v3753 = vpop.f32.mrb[0].mxu0
    %3754 = vmatprep.mubr.f32.mxu0 0.0
    %3755 = vmatmul.mubr.f32.gmra.mrb[0].mxu0 %v3545
    %v3756 = vpop.f32.mrb[0].mxu0
    %v3757 = vadd.f32 0.0, %v3756
    %v3758 = vpop.f32.mrb[0].mxu0
    %3759 = vmatprep.mubr.f32.mxu0 0.0
    %3760 = vmatmul.mubr.f32.gmra.mrb[0].mxu0 %v3546
    %v3761 = vpop.f32.mrb[0].mxu0
    %v3762 = vadd.f32 0.0, %v3761
    %v3763 = vpop.f32.mrb[0].mxu0
    %3764 = vmatprep.mubr.f32.mxu0 0.0
    %3765 = vmatmul.mubr.f32.gmra.mrb[0].mxu0 %v3547
    %v3766 = vpop.f32.mrb[0].mxu0
    %v3767 = vadd.f32 0.0, %v3766
    %v3768 = vpop.f32.mrb[0].mxu0
    %3769 = vdwg.mxu0
    %v3770 = vadd.f32 %v3382, %v3632
    %v3771 = vadd.f32 %v3387, %v3637
    %v3772 = vadd.f32 %v3392, %v3642
    %v3773 = vadd.f32 %v3397, %v3647
    %v3774 = vadd.f32 %v3402, %v3652
    %v3775 = vadd.f32 %v3407, %v3657
    %v3776 = vadd.f32 %v3412, %v3662
    %v3777 = vadd.f32 %v3417, %v3667
    %v3778 = vadd.f32 %v3422, %v3672
    %v3779 = vadd.f32 %v3427, %v3677
    %v3780 = vadd.f32 %v3432, %v3682
    %v3781 = vadd.f32 %v3437, %v3687
    %v3782 = vadd.f32 %v3442, %v3692
    %v3783 = vadd.f32 %v3447, %v3697
    %v3784 = vadd.f32 %v3452, %v3702
    %v3785 = vadd.f32 %v3457, %v3707
    %v3786 = vadd.f32 %v3462, %v3712
    %v3787 = vadd.f32 %v3467, %v3717
    %v3788 = vadd.f32 %v3472, %v3722
    %v3789 = vadd.f32 %v3477, %v3727
    %v3790 = vadd.f32 %v3482, %v3732
    %v3791 = vadd.f32 %v3487, %v3737
    %v3792 = vadd.f32 %v3492, %v3742
    %v3793 = vadd.f32 %v3497, %v3747
    %v3794 = vadd.f32 %v3502, %v3752
    %v3795 = vadd.f32 %v3507, %v3757
    %v3796 = vadd.f32 %v3512, %v3762
    %v3797 = vadd.f32 %v3517, %v3767
    %v3798 = vld [vmem:[#allocation2 + $0x10] sm:$0xff]
    %v3799 = vld [vmem:[#allocation2 + $0x18] sm:$0xff]
    %v3800 = vld [vmem:[#allocation2 + $0x20] sm:$0xff]
    %v3801 = vld [vmem:[#allocation2 + $0x28] sm:$0xff]
    %v3802 = vld [vmem:[#allocation2 + $0x30] sm:$0xff]
    %v3803 = vld [vmem:[#allocation2 + $0x38] sm:$0xff]
    %v3804 = vld [vmem:[#allocation2 + $0x40] sm:$0xff]
    %v3805 = vld [vmem:[#allocation2 + $0x48] sm:$0xff]
    %v3806 = vld [vmem:[#allocation2 + $0x50] sm:$0xff]
    %v3807 = vld [vmem:[#allocation2 + $0x58] sm:$0xff]
    %v3808 = vld [vmem:[#allocation2 + $0x60] sm:$0xff]
    %v3809 = vld [vmem:[#allocation2 + $0x68] sm:$0xff]
    %v3810 = vld [vmem:[#allocation2 + $0x70] sm:$0xff]
    %v3811 = vld [vmem:[#allocation2 + $0x78] sm:$0xff]
    %v3812 = vld [vmem:[#allocation2 + $0x80] sm:$0xff]
    %v3813 = vld [vmem:[#allocation2 + $0x88] sm:$0xff]
    %v3814 = vld [vmem:[#allocation2 + $0x90] sm:$0xff]
    %v3815 = vld [vmem:[#allocation2 + $0x98] sm:$0xff]
    %v3816 = vld [vmem:[#allocation2 + $0xa0] sm:$0xff]
    %v3817 = vld [vmem:[#allocation2 + $0xa8] sm:$0xff]
    %v3818 = vld [vmem:[#allocation2 + $0xb0] sm:$0xff]
    %v3819 = vld [vmem:[#allocation2 + $0xb8] sm:$0xff]
    %v3820 = vld [vmem:[#allocation2 + $0xc0] sm:$0xff]
    %v3821 = vld [vmem:[#allocation2 + $0xc8] sm:$0xff]
    %v3822 = vld [vmem:[#allocation2 + $0xd0] sm:$0xff]
    %v3823 = vld [vmem:[#allocation2 + $0xd8] sm:$0xff]
    %v3824 = vld [vmem:[#allocation2 + $0xe0] sm:$0xff]
    %v3825 = vld [vmem:[#allocation2 + $0xe8] sm:$0x3f]
    %s3826 = scalar_lea.vmem [#allocation6], 384
    %v3827 = vld [vmem:[%s3826] sm:$0xff]
    %v3828 = vld [vmem:[%s3826 + $0x8] sm:$0xff]
    %v3829 = vld [vmem:[%s3826 + $0x10] sm:$0xff]
    %v3830 = vld [vmem:[%s3826 + $0x18] sm:$0xff]
    %v3831 = vld [vmem:[%s3826 + $0x20] sm:$0xff]
    %v3832 = vld [vmem:[%s3826 + $0x28] sm:$0xff]
    %v3833 = vld [vmem:[%s3826 + $0x30] sm:$0xff]
    %v3834 = vld [vmem:[%s3826 + $0x38] sm:$0xff]
    %v3835 = vld [vmem:[%s3826 + $0x40] sm:$0xff]
    %v3836 = vld [vmem:[%s3826 + $0x48] sm:$0xff]
    %v3837 = vld [vmem:[%s3826 + $0x50] sm:$0xff]
    %v3838 = vld [vmem:[%s3826 + $0x58] sm:$0xff]
    %v3839 = vld [vmem:[%s3826 + $0x60] sm:$0xff]
    %v3840 = vld [vmem:[%s3826 + $0x68] sm:$0xff]
    %v3841 = vld [vmem:[%s3826 + $0x70] sm:$0xff]
    %v3842 = vld [vmem:[%s3826 + $0x78] sm:$0xff]
    %3843 = vmatprep.subr.mxu0 0.0
    %3844 = vmatpush1.msra.mxu0 %v3827
    %3845 = vmatprep.subr.mxu0 0.0
    %3846 = vmatpush1.msra.mxu0 %v3828
    %3847 = vmatprep.subr.mxu0 0.0
    %3848 = vmatpush1.msra.mxu0 %v3829
    %3849 = vmatprep.subr.mxu0 0.0
    %3850 = vmatpush1.msra.mxu0 %v3830
    %3851 = vmatprep.subr.mxu0 0.0
    %3852 = vmatpush1.msra.mxu0 %v3831
    %3853 = vmatprep.subr.mxu0 0.0
    %3854 = vmatpush1.msra.mxu0 %v3832
    %3855 = vmatprep.subr.mxu0 0.0
    %3856 = vmatpush1.msra.mxu0 %v3833
    %3857 = vmatprep.subr.mxu0 0.0
    %3858 = vmatpush1.msra.mxu0 %v3834
    %3859 = vmatprep.subr.mxu0 0.0
    %3860 = vmatpush1.msra.mxu0 %v3835
    %3861 = vmatprep.subr.mxu0 0.0
    %3862 = vmatpush1.msra.mxu0 %v3836
    %3863 = vmatprep.subr.mxu0 0.0
    %3864 = vmatpush1.msra.mxu0 %v3837
    %3865 = vmatprep.subr.mxu0 0.0
    %3866 = vmatpush1.msra.mxu0 %v3838
    %3867 = vmatprep.subr.mxu0 0.0
    %3868 = vmatpush1.msra.mxu0 %v3839
    %3869 = vmatprep.subr.mxu0 0.0
    %3870 = vmatpush1.msra.mxu0 %v3840
    %3871 = vmatprep.subr.mxu0 0.0
    %3872 = vmatpush1.msra.mxu0 %v3841
    %3873 = vmatprep.subr.mxu0 0.0
    %3874 = vmatpush1.msra.mxu0 %v3842
    %3875 = vmatprep.subr.mxu0 0.0
    %3876 = vmatpush1.msra.mxu0 0.0
    %3877 = vmatprep.subr.mxu0 0.0
    %3878 = vmatpush1.msra.mxu0 0.0
    %3879 = vmatprep.subr.mxu0 0.0
    %3880 = vmatpush1.msra.mxu0 0.0
    %3881 = vmatprep.subr.mxu0 0.0
    %3882 = vmatpush1.msra.mxu0 0.0
    %3883 = vmatprep.subr.mxu0 0.0
    %3884 = vmatpush1.msra.mxu0 0.0
    %3885 = vmatprep.subr.mxu0 0.0
    %3886 = vmatpush1.msra.mxu0 0.0
    %3887 = vmatprep.subr.mxu0 0.0
    %3888 = vmatpush1.msra.mxu0 0.0
    %3889 = vmatprep.subr.mxu0 0.0
    %3890 = vmatpush1.msra.mxu0 0.0
    %3891 = vmatprep.subr.mxu0 0.0
    %3892 = vmatpush1.msra.mxu0 0.0
    %3893 = vmatprep.subr.mxu0 0.0
    %3894 = vmatpush1.msra.mxu0 0.0
    %3895 = vmatprep.subr.mxu0 0.0
    %3896 = vmatpush1.msra.mxu0 0.0
    %3897 = vmatprep.subr.mxu0 0.0
    %3898 = vmatpush1.msra.mxu0 0.0
    %3899 = vmatprep.subr.mxu0 0.0
    %3900 = vmatpush1.msra.mxu0 0.0
    %3901 = vmatprep.subr.mxu0 0.0
    %3902 = vmatpush1.msra.mxu0 0.0
    %3903 = vmatprep.subr.mxu0 0.0
    %3904 = vmatpush1.msra.mxu0 0.0
    %3905 = vmatprep.subr.mxu0 0.0
    %3906 = vmatpush1.msra.mxu0 0.0
    %3907 = vmatprep.mubr.f32.mxu0 0.0
    %3908 = vmatmul.mubr.f32.gmra.mrb[0].mxu0 %v3798
    %v3909 = vpop.f32.mrb[0].mxu0
    %v3910 = vadd.f32 0.0, %v3909
    %v3911 = vpop.f32.mrb[0].mxu0
    %3912 = vmatprep.mubr.f32.mxu0 0.0
    %3913 = vmatmul.mubr.f32.gmra.mrb[0].mxu0 %v3799
    %v3914 = vpop.f32.mrb[0].mxu0
    %v3915 = vadd.f32 0.0, %v3914
    %v3916 = vpop.f32.mrb[0].mxu0
    %3917 = vmatprep.mubr.f32.mxu0 0.0
    %3918 = vmatmul.mubr.f32.gmra.mrb[0].mxu0 %v3800
    %v3919 = vpop.f32.mrb[0].mxu0
    %v3920 = vadd.f32 0.0, %v3919
    %v3921 = vpop.f32.mrb[0].mxu0
    %3922 = vmatprep.mubr.f32.mxu0 0.0
    %3923 = vmatmul.mubr.f32.gmra.mrb[0].mxu0 %v3801
    %v3924 = vpop.f32.mrb[0].mxu0
    %v3925 = vadd.f32 0.0, %v3924
    %v3926 = vpop.f32.mrb[0].mxu0
    %3927 = vmatprep.mubr.f32.mxu0 0.0
    %3928 = vmatmul.mubr.f32.gmra.mrb[0].mxu0 %v3802
    %v3929 = vpop.f32.mrb[0].mxu0
    %v3930 = vadd.f32 0.0, %v3929
    %v3931 = vpop.f32.mrb[0].mxu0
    %3932 = vmatprep.mubr.f32.mxu0 0.0
    %3933 = vmatmul.mubr.f32.gmra.mrb[0].mxu0 %v3803
    %v3934 = vpop.f32.mrb[0].mxu0
    %v3935 = vadd.f32 0.0, %v3934
    %v3936 = vpop.f32.mrb[0].mxu0
    %3937 = vmatprep.mubr.f32.mxu0 0.0
    %3938 = vmatmul.mubr.f32.gmra.mrb[0].mxu0 %v3804
    %v3939 = vpop.f32.mrb[0].mxu0
    %v3940 = vadd.f32 0.0, %v3939
    %v3941 = vpop.f32.mrb[0].mxu0
    %3942 = vmatprep.mubr.f32.mxu0 0.0
    %3943 = vmatmul.mubr.f32.gmra.mrb[0].mxu0 %v3805
    %v3944 = vpop.f32.mrb[0].mxu0
    %v3945 = vadd.f32 0.0, %v3944
    %v3946 = vpop.f32.mrb[0].mxu0
    %3947 = vmatprep.mubr.f32.mxu0 0.0
    %3948 = vmatmul.mubr.f32.gmra.mrb[0].mxu0 %v3806
    %v3949 = vpop.f32.mrb[0].mxu0
    %v3950 = vadd.f32 0.0, %v3949
    %v3951 = vpop.f32.mrb[0].mxu0
    %3952 = vmatprep.mubr.f32.mxu0 0.0
    %3953 = vmatmul.mubr.f32.gmra.mrb[0].mxu0 %v3807
    %v3954 = vpop.f32.mrb[0].mxu0
    %v3955 = vadd.f32 0.0, %v3954
    %v3956 = vpop.f32.mrb[0].mxu0
    %3957 = vmatprep.mubr.f32.mxu0 0.0
    %3958 = vmatmul.mubr.f32.gmra.mrb[0].mxu0 %v3808
    %v3959 = vpop.f32.mrb[0].mxu0
    %v3960 = vadd.f32 0.0, %v3959
    %v3961 = vpop.f32.mrb[0].mxu0
    %3962 = vmatprep.mubr.f32.mxu0 0.0
    %3963 = vmatmul.mubr.f32.gmra.mrb[0].mxu0 %v3809
    %v3964 = vpop.f32.mrb[0].mxu0
    %v3965 = vadd.f32 0.0, %v3964
    %v3966 = vpop.f32.mrb[0].mxu0
    %3967 = vmatprep.mubr.f32.mxu0 0.0
    %3968 = vmatmul.mubr.f32.gmra.mrb[0].mxu0 %v3810
    %v3969 = vpop.f32.mrb[0].mxu0
    %v3970 = vadd.f32 0.0, %v3969
    %v3971 = vpop.f32.mrb[0].mxu0
    %3972 = vmatprep.mubr.f32.mxu0 0.0
    %3973 = vmatmul.mubr.f32.gmra.mrb[0].mxu0 %v3811
    %v3974 = vpop.f32.mrb[0].mxu0
    %v3975 = vadd.f32 0.0, %v3974
    %v3976 = vpop.f32.mrb[0].mxu0
    %3977 = vmatprep.mubr.f32.mxu0 0.0
    %3978 = vmatmul.mubr.f32.gmra.mrb[0].mxu0 %v3812
    %v3979 = vpop.f32.mrb[0].mxu0
    %v3980 = vadd.f32 0.0, %v3979
    %v3981 = vpop.f32.mrb[0].mxu0
    %3982 = vmatprep.mubr.f32.mxu0 0.0
    %3983 = vmatmul.mubr.f32.gmra.mrb[0].mxu0 %v3813
    %v3984 = vpop.f32.mrb[0].mxu0
    %v3985 = vadd.f32 0.0, %v3984
    %v3986 = vpop.f32.mrb[0].mxu0
    %3987 = vmatprep.mubr.f32.mxu0 0.0
    %3988 = vmatmul.mubr.f32.gmra.mrb[0].mxu0 %v3814
    %v3989 = vpop.f32.mrb[0].mxu0
    %v3990 = vadd.f32 0.0, %v3989
    %v3991 = vpop.f32.mrb[0].mxu0
    %3992 = vmatprep.mubr.f32.mxu0 0.0
    %3993 = vmatmul.mubr.f32.gmra.mrb[0].mxu0 %v3815
    %v3994 = vpop.f32.mrb[0].mxu0
    %v3995 = vadd.f32 0.0, %v3994
    %v3996 = vpop.f32.mrb[0].mxu0
    %3997 = vmatprep.mubr.f32.mxu0 0.0
    %3998 = vmatmul.mubr.f32.gmra.mrb[0].mxu0 %v3816
    %v3999 = vpop.f32.mrb[0].mxu0
    %v4000 = vadd.f32 0.0, %v3999
    %v4001 = vpop.f32.mrb[0].mxu0
    %4002 = vmatprep.mubr.f32.mxu0 0.0
    %4003 = vmatmul.mubr.f32.gmra.mrb[0].mxu0 %v3817
    %v4004 = vpop.f32.mrb[0].mxu0
    %v4005 = vadd.f32 0.0, %v4004
    %v4006 = vpop.f32.mrb[0].mxu0
    %4007 = vmatprep.mubr.f32.mxu0 0.0
    %4008 = vmatmul.mubr.f32.gmra.mrb[0].mxu0 %v3818
    %v4009 = vpop.f32.mrb[0].mxu0
    %v4010 = vadd.f32 0.0, %v4009
    %v4011 = vpop.f32.mrb[0].mxu0
    %4012 = vmatprep.mubr.f32.mxu0 0.0
    %4013 = vmatmul.mubr.f32.gmra.mrb[0].mxu0 %v3819
    %v4014 = vpop.f32.mrb[0].mxu0
    %v4015 = vadd.f32 0.0, %v4014
    %v4016 = vpop.f32.mrb[0].mxu0
    %4017 = vmatprep.mubr.f32.mxu0 0.0
    %4018 = vmatmul.mubr.f32.gmra.mrb[0].mxu0 %v3820
    %v4019 = vpop.f32.mrb[0].mxu0
    %v4020 = vadd.f32 0.0, %v4019
    %v4021 = vpop.f32.mrb[0].mxu0
    %4022 = vmatprep.mubr.f32.mxu0 0.0
    %4023 = vmatmul.mubr.f32.gmra.mrb[0].mxu0 %v3821
    %v4024 = vpop.f32.mrb[0].mxu0
    %v4025 = vadd.f32 0.0, %v4024
    %v4026 = vpop.f32.mrb[0].mxu0
    %4027 = vmatprep.mubr.f32.mxu0 0.0
    %4028 = vmatmul.mubr.f32.gmra.mrb[0].mxu0 %v3822
    %v4029 = vpop.f32.mrb[0].mxu0
    %v4030 = vadd.f32 0.0, %v4029
    %v4031 = vpop.f32.mrb[0].mxu0
    %4032 = vmatprep.mubr.f32.mxu0 0.0
    %4033 = vmatmul.mubr.f32.gmra.mrb[0].mxu0 %v3823
    %v4034 = vpop.f32.mrb[0].mxu0
    %v4035 = vadd.f32 0.0, %v4034
    %v4036 = vpop.f32.mrb[0].mxu0
    %4037 = vmatprep.mubr.f32.mxu0 0.0
    %4038 = vmatmul.mubr.f32.gmra.mrb[0].mxu0 %v3824
    %v4039 = vpop.f32.mrb[0].mxu0
    %v4040 = vadd.f32 0.0, %v4039
    %v4041 = vpop.f32.mrb[0].mxu0
    %4042 = vmatprep.mubr.f32.mxu0 0.0
    %4043 = vmatmul.mubr.f32.gmra.mrb[0].mxu0 %v3825
    %v4044 = vpop.f32.mrb[0].mxu0
    %v4045 = vadd.f32 0.0, %v4044
    %v4046 = vpop.f32.mrb[0].mxu0
    %4047 = vdwg.mxu0
    %v4048 = vadd.f32 %v3770, %v3910
    %v4049 = vadd.f32 %v3771, %v3915
    %v4050 = vadd.f32 %v3772, %v3920
    %v4051 = vadd.f32 %v3773, %v3925
    %v4052 = vadd.f32 %v3774, %v3930
    %v4053 = vadd.f32 %v3775, %v3935
    %v4054 = vadd.f32 %v3776, %v3940
    %v4055 = vadd.f32 %v3777, %v3945
    %v4056 = vadd.f32 %v3778, %v3950
    %v4057 = vadd.f32 %v3779, %v3955
    %v4058 = vadd.f32 %v3780, %v3960
    %v4059 = vadd.f32 %v3781, %v3965
    %v4060 = vadd.f32 %v3782, %v3970
    %v4061 = vadd.f32 %v3783, %v3975
    %v4062 = vadd.f32 %v3784, %v3980
    %v4063 = vadd.f32 %v3785, %v3985
    %v4064 = vadd.f32 %v3786, %v3990
    %v4065 = vadd.f32 %v3787, %v3995
    %v4066 = vadd.f32 %v3788, %v4000
    %v4067 = vadd.f32 %v3789, %v4005
    %v4068 = vadd.f32 %v3790, %v4010
    %v4069 = vadd.f32 %v3791, %v4015
    %v4070 = vadd.f32 %v3792, %v4020
    %v4071 = vadd.f32 %v3793, %v4025
    %v4072 = vadd.f32 %v3794, %v4030
    %v4073 = vadd.f32 %v3795, %v4035
    %v4074 = vadd.f32 %v3796, %v4040
    %v4075 = vadd.f32 %v3797, %v4045
    %v4076 = vld [vmem:[#allocation2 + $0x11] sm:$0xff]
    %v4077 = vld [vmem:[#allocation2 + $0x19] sm:$0xff]
    %v4078 = vld [vmem:[#allocation2 + $0x21] sm:$0xff]
    %v4079 = vld [vmem:[#allocation2 + $0x29] sm:$0xff]
    %v4080 = vld [vmem:[#allocation2 + $0x31] sm:$0xff]
    %v4081 = vld [vmem:[#allocation2 + $0x39] sm:$0xff]
    %v4082 = vld [vmem:[#allocation2 + $0x41] sm:$0xff]
    %v4083 = vld [vmem:[#allocation2 + $0x49] sm:$0xff]
    %v4084 = vld [vmem:[#allocation2 + $0x51] sm:$0xff]
    %v4085 = vld [vmem:[#allocation2 + $0x59] sm:$0xff]
    %v4086 = vld [vmem:[#allocation2 + $0x61] sm:$0xff]
    %v4087 = vld [vmem:[#allocation2 + $0x69] sm:$0xff]
    %v4088 = vld [vmem:[#allocation2 + $0x71] sm:$0xff]
    %v4089 = vld [vmem:[#allocation2 + $0x79] sm:$0xff]
    %v4090 = vld [vmem:[#allocation2 + $0x81] sm:$0xff]
    %v4091 = vld [vmem:[#allocation2 + $0x89] sm:$0xff]
    %v4092 = vld [vmem:[#allocation2 + $0x91] sm:$0xff]
    %v4093 = vld [vmem:[#allocation2 + $0x99] sm:$0xff]
    %v4094 = vld [vmem:[#allocation2 + $0xa1] sm:$0xff]
    %v4095 = vld [vmem:[#allocation2 + $0xa9] sm:$0xff]
    %v4096 = vld [vmem:[#allocation2 + $0xb1] sm:$0xff]
    %v4097 = vld [vmem:[#allocation2 + $0xb9] sm:$0xff]
    %v4098 = vld [vmem:[#allocation2 + $0xc1] sm:$0xff]
    %v4099 = vld [vmem:[#allocation2 + $0xc9] sm:$0xff]
    %v4100 = vld [vmem:[#allocation2 + $0xd1] sm:$0xff]
    %v4101 = vld [vmem:[#allocation2 + $0xd9] sm:$0xff]
    %v4102 = vld [vmem:[#allocation2 + $0xe1] sm:$0xff]
    %v4103 = vld [vmem:[#allocation2 + $0xe9] sm:$0x3f]
    %s4104 = scalar_lea.vmem [#allocation6], 512
    %v4105 = vld [vmem:[%s4104] sm:$0xff]
    %v4106 = vld [vmem:[%s4104 + $0x8] sm:$0xff]
    %v4107 = vld [vmem:[%s4104 + $0x10] sm:$0xff]
    %v4108 = vld [vmem:[%s4104 + $0x18] sm:$0xff]
    %v4109 = vld [vmem:[%s4104 + $0x20] sm:$0xff]
    %v4110 = vld [vmem:[%s4104 + $0x28] sm:$0xff]
    %v4111 = vld [vmem:[%s4104 + $0x30] sm:$0xff]
    %v4112 = vld [vmem:[%s4104 + $0x38] sm:$0xff]
    %v4113 = vld [vmem:[%s4104 + $0x40] sm:$0xff]
    %v4114 = vld [vmem:[%s4104 + $0x48] sm:$0xff]
    %v4115 = vld [vmem:[%s4104 + $0x50] sm:$0xff]
    %v4116 = vld [vmem:[%s4104 + $0x58] sm:$0xff]
    %v4117 = vld [vmem:[%s4104 + $0x60] sm:$0xff]
    %v4118 = vld [vmem:[%s4104 + $0x68] sm:$0xff]
    %v4119 = vld [vmem:[%s4104 + $0x70] sm:$0xff]
    %v4120 = vld [vmem:[%s4104 + $0x78] sm:$0xff]
    %4121 = vmatprep.subr.mxu0 0.0
    %4122 = vmatpush1.msra.mxu0 %v4105
    %4123 = vmatprep.subr.mxu0 0.0
    %4124 = vmatpush1.msra.mxu0 %v4106
    %4125 = vmatprep.subr.mxu0 0.0
    %4126 = vmatpush1.msra.mxu0 %v4107
    %4127 = vmatprep.subr.mxu0 0.0
    %4128 = vmatpush1.msra.mxu0 %v4108
    %4129 = vmatprep.subr.mxu0 0.0
    %4130 = vmatpush1.msra.mxu0 %v4109
    %4131 = vmatprep.subr.mxu0 0.0
    %4132 = vmatpush1.msra.mxu0 %v4110
    %4133 = vmatprep.subr.mxu0 0.0
    %4134 = vmatpush1.msra.mxu0 %v4111
    %4135 = vmatprep.subr.mxu0 0.0
    %4136 = vmatpush1.msra.mxu0 %v4112
    %4137 = vmatprep.subr.mxu0 0.0
    %4138 = vmatpush1.msra.mxu0 %v4113
    %4139 = vmatprep.subr.mxu0 0.0
    %4140 = vmatpush1.msra.mxu0 %v4114
    %4141 = vmatprep.subr.mxu0 0.0
    %4142 = vmatpush1.msra.mxu0 %v4115
    %4143 = vmatprep.subr.mxu0 0.0
    %4144 = vmatpush1.msra.mxu0 %v4116
    %4145 = vmatprep.subr.mxu0 0.0
    %4146 = vmatpush1.msra.mxu0 %v4117
    %4147 = vmatprep.subr.mxu0 0.0
    %4148 = vmatpush1.msra.mxu0 %v4118
    %4149 = vmatprep.subr.mxu0 0.0
    %4150 = vmatpush1.msra.mxu0 %v4119
    %4151 = vmatprep.subr.mxu0 0.0
    %4152 = vmatpush1.msra.mxu0 %v4120
    %4153 = vmatprep.subr.mxu0 0.0
    %4154 = vmatpush1.msra.mxu0 0.0
    %4155 = vmatprep.subr.mxu0 0.0
    %4156 = vmatpush1.msra.mxu0 0.0
    %4157 = vmatprep.subr.mxu0 0.0
    %4158 = vmatpush1.msra.mxu0 0.0
    %4159 = vmatprep.subr.mxu0 0.0
    %4160 = vmatpush1.msra.mxu0 0.0
    %4161 = vmatprep.subr.mxu0 0.0
    %4162 = vmatpush1.msra.mxu0 0.0
    %4163 = vmatprep.subr.mxu0 0.0
    %4164 = vmatpush1.msra.mxu0 0.0
    %4165 = vmatprep.subr.mxu0 0.0
    %4166 = vmatpush1.msra.mxu0 0.0
    %4167 = vmatprep.subr.mxu0 0.0
    %4168 = vmatpush1.msra.mxu0 0.0
    %4169 = vmatprep.subr.mxu0 0.0
    %4170 = vmatpush1.msra.mxu0 0.0
    %4171 = vmatprep.subr.mxu0 0.0
    %4172 = vmatpush1.msra.mxu0 0.0
    %4173 = vmatprep.subr.mxu0 0.0
    %4174 = vmatpush1.msra.mxu0 0.0
    %4175 = vmatprep.subr.mxu0 0.0
    %4176 = vmatpush1.msra.mxu0 0.0
    %4177 = vmatprep.subr.mxu0 0.0
    %4178 = vmatpush1.msra.mxu0 0.0
    %4179 = vmatprep.subr.mxu0 0.0
    %4180 = vmatpush1.msra.mxu0 0.0
    %4181 = vmatprep.subr.mxu0 0.0
    %4182 = vmatpush1.msra.mxu0 0.0
    %4183 = vmatprep.subr.mxu0 0.0
    %4184 = vmatpush1.msra.mxu0 0.0
    %4185 = vmatprep.mubr.f32.mxu0 0.0
    %4186 = vmatmul.mubr.f32.gmra.mrb[0].mxu0 %v4076
    %v4187 = vpop.f32.mrb[0].mxu0
    %v4188 = vadd.f32 0.0, %v4187
    %v4189 = vpop.f32.mrb[0].mxu0
    %4190 = vmatprep.mubr.f32.mxu0 0.0
    %4191 = vmatmul.mubr.f32.gmra.mrb[0].mxu0 %v4077
    %v4192 = vpop.f32.mrb[0].mxu0
    %v4193 = vadd.f32 0.0, %v4192
    %v4194 = vpop.f32.mrb[0].mxu0
    %4195 = vmatprep.mubr.f32.mxu0 0.0
    %4196 = vmatmul.mubr.f32.gmra.mrb[0].mxu0 %v4078
    %v4197 = vpop.f32.mrb[0].mxu0
    %v4198 = vadd.f32 0.0, %v4197
    %v4199 = vpop.f32.mrb[0].mxu0
    %4200 = vmatprep.mubr.f32.mxu0 0.0
    %4201 = vmatmul.mubr.f32.gmra.mrb[0].mxu0 %v4079
    %v4202 = vpop.f32.mrb[0].mxu0
    %v4203 = vadd.f32 0.0, %v4202
    %v4204 = vpop.f32.mrb[0].mxu0
    %4205 = vmatprep.mubr.f32.mxu0 0.0
    %4206 = vmatmul.mubr.f32.gmra.mrb[0].mxu0 %v4080
    %v4207 = vpop.f32.mrb[0].mxu0
    %v4208 = vadd.f32 0.0, %v4207
    %v4209 = vpop.f32.mrb[0].mxu0
    %4210 = vmatprep.mubr.f32.mxu0 0.0
    %4211 = vmatmul.mubr.f32.gmra.mrb[0].mxu0 %v4081
    %v4212 = vpop.f32.mrb[0].mxu0
    %v4213 = vadd.f32 0.0, %v4212
    %v4214 = vpop.f32.mrb[0].mxu0
    %4215 = vmatprep.mubr.f32.mxu0 0.0
    %4216 = vmatmul.mubr.f32.gmra.mrb[0].mxu0 %v4082
    %v4217 = vpop.f32.mrb[0].mxu0
    %v4218 = vadd.f32 0.0, %v4217
    %v4219 = vpop.f32.mrb[0].mxu0
    %4220 = vmatprep.mubr.f32.mxu0 0.0
    %4221 = vmatmul.mubr.f32.gmra.mrb[0].mxu0 %v4083
    %v4222 = vpop.f32.mrb[0].mxu0
    %v4223 = vadd.f32 0.0, %v4222
    %v4224 = vpop.f32.mrb[0].mxu0
    %4225 = vmatprep.mubr.f32.mxu0 0.0
    %4226 = vmatmul.mubr.f32.gmra.mrb[0].mxu0 %v4084
    %v4227 = vpop.f32.mrb[0].mxu0
    %v4228 = vadd.f32 0.0, %v4227
    %v4229 = vpop.f32.mrb[0].mxu0
    %4230 = vmatprep.mubr.f32.mxu0 0.0
    %4231 = vmatmul.mubr.f32.gmra.mrb[0].mxu0 %v4085
    %v4232 = vpop.f32.mrb[0].mxu0
    %v4233 = vadd.f32 0.0, %v4232
    %v4234 = vpop.f32.mrb[0].mxu0
    %4235 = vmatprep.mubr.f32.mxu0 0.0
    %4236 = vmatmul.mubr.f32.gmra.mrb[0].mxu0 %v4086
    %v4237 = vpop.f32.mrb[0].mxu0
    %v4238 = vadd.f32 0.0, %v4237
    %v4239 = vpop.f32.mrb[0].mxu0
    %4240 = vmatprep.mubr.f32.mxu0 0.0
    %4241 = vmatmul.mubr.f32.gmra.mrb[0].mxu0 %v4087
    %v4242 = vpop.f32.mrb[0].mxu0
    %v4243 = vadd.f32 0.0, %v4242
    %v4244 = vpop.f32.mrb[0].mxu0
    %4245 = vmatprep.mubr.f32.mxu0 0.0
    %4246 = vmatmul.mubr.f32.gmra.mrb[0].mxu0 %v4088
    %v4247 = vpop.f32.mrb[0].mxu0
    %v4248 = vadd.f32 0.0, %v4247
    %v4249 = vpop.f32.mrb[0].mxu0
    %4250 = vmatprep.mubr.f32.mxu0 0.0
    %4251 = vmatmul.mubr.f32.gmra.mrb[0].mxu0 %v4089
    %v4252 = vpop.f32.mrb[0].mxu0
    %v4253 = vadd.f32 0.0, %v4252
    %v4254 = vpop.f32.mrb[0].mxu0
    %4255 = vmatprep.mubr.f32.mxu0 0.0
    %4256 = vmatmul.mubr.f32.gmra.mrb[0].mxu0 %v4090
    %v4257 = vpop.f32.mrb[0].mxu0
    %v4258 = vadd.f32 0.0, %v4257
    %v4259 = vpop.f32.mrb[0].mxu0
    %4260 = vmatprep.mubr.f32.mxu0 0.0
    %4261 = vmatmul.mubr.f32.gmra.mrb[0].mxu0 %v4091
    %v4262 = vpop.f32.mrb[0].mxu0
    %v4263 = vadd.f32 0.0, %v4262
    %v4264 = vpop.f32.mrb[0].mxu0
    %4265 = vmatprep.mubr.f32.mxu0 0.0
    %4266 = vmatmul.mubr.f32.gmra.mrb[0].mxu0 %v4092
    %v4267 = vpop.f32.mrb[0].mxu0
    %v4268 = vadd.f32 0.0, %v4267
    %v4269 = vpop.f32.mrb[0].mxu0
    %4270 = vmatprep.mubr.f32.mxu0 0.0
    %4271 = vmatmul.mubr.f32.gmra.mrb[0].mxu0 %v4093
    %v4272 = vpop.f32.mrb[0].mxu0
    %v4273 = vadd.f32 0.0, %v4272
    %v4274 = vpop.f32.mrb[0].mxu0
    %4275 = vmatprep.mubr.f32.mxu0 0.0
    %4276 = vmatmul.mubr.f32.gmra.mrb[0].mxu0 %v4094
    %v4277 = vpop.f32.mrb[0].mxu0
    %v4278 = vadd.f32 0.0, %v4277
    %v4279 = vpop.f32.mrb[0].mxu0
    %4280 = vmatprep.mubr.f32.mxu0 0.0
    %4281 = vmatmul.mubr.f32.gmra.mrb[0].mxu0 %v4095
    %v4282 = vpop.f32.mrb[0].mxu0
    %v4283 = vadd.f32 0.0, %v4282
    %v4284 = vpop.f32.mrb[0].mxu0
    %4285 = vmatprep.mubr.f32.mxu0 0.0
    %4286 = vmatmul.mubr.f32.gmra.mrb[0].mxu0 %v4096
    %v4287 = vpop.f32.mrb[0].mxu0
    %v4288 = vadd.f32 0.0, %v4287
    %v4289 = vpop.f32.mrb[0].mxu0
    %4290 = vmatprep.mubr.f32.mxu0 0.0
    %4291 = vmatmul.mubr.f32.gmra.mrb[0].mxu0 %v4097
    %v4292 = vpop.f32.mrb[0].mxu0
    %v4293 = vadd.f32 0.0, %v4292
    %v4294 = vpop.f32.mrb[0].mxu0
    %4295 = vmatprep.mubr.f32.mxu0 0.0
    %4296 = vmatmul.mubr.f32.gmra.mrb[0].mxu0 %v4098
    %v4297 = vpop.f32.mrb[0].mxu0
    %v4298 = vadd.f32 0.0, %v4297
    %v4299 = vpop.f32.mrb[0].mxu0
    %4300 = vmatprep.mubr.f32.mxu0 0.0
    %4301 = vmatmul.mubr.f32.gmra.mrb[0].mxu0 %v4099
    %v4302 = vpop.f32.mrb[0].mxu0
    %v4303 = vadd.f32 0.0, %v4302
    %v4304 = vpop.f32.mrb[0].mxu0
    %4305 = vmatprep.mubr.f32.mxu0 0.0
    %4306 = vmatmul.mubr.f32.gmra.mrb[0].mxu0 %v4100
    %v4307 = vpop.f32.mrb[0].mxu0
    %v4308 = vadd.f32 0.0, %v4307
    %v4309 = vpop.f32.mrb[0].mxu0
    %4310 = vmatprep.mubr.f32.mxu0 0.0
    %4311 = vmatmul.mubr.f32.gmra.mrb[0].mxu0 %v4101
    %v4312 = vpop.f32.mrb[0].mxu0
    %v4313 = vadd.f32 0.0, %v4312
    %v4314 = vpop.f32.mrb[0].mxu0
    %4315 = vmatprep.mubr.f32.mxu0 0.0
    %4316 = vmatmul.mubr.f32.gmra.mrb[0].mxu0 %v4102
    %v4317 = vpop.f32.mrb[0].mxu0
    %v4318 = vadd.f32 0.0, %v4317
    %v4319 = vpop.f32.mrb[0].mxu0
    %4320 = vmatprep.mubr.f32.mxu0 0.0
    %4321 = vmatmul.mubr.f32.gmra.mrb[0].mxu0 %v4103
    %v4322 = vpop.f32.mrb[0].mxu0
    %v4323 = vadd.f32 0.0, %v4322
    %v4324 = vpop.f32.mrb[0].mxu0
    %4325 = vdwg.mxu0
    %v4326 = vadd.f32 %v4048, %v4188
    %v4327 = vadd.f32 %v4049, %v4193
    %v4328 = vadd.f32 %v4050, %v4198
    %v4329 = vadd.f32 %v4051, %v4203
    %v4330 = vadd.f32 %v4052, %v4208
    %v4331 = vadd.f32 %v4053, %v4213
    %v4332 = vadd.f32 %v4054, %v4218
    %v4333 = vadd.f32 %v4055, %v4223
    %v4334 = vadd.f32 %v4056, %v4228
    %v4335 = vadd.f32 %v4057, %v4233
    %v4336 = vadd.f32 %v4058, %v4238
    %v4337 = vadd.f32 %v4059, %v4243
    %v4338 = vadd.f32 %v4060, %v4248
    %v4339 = vadd.f32 %v4061, %v4253
    %v4340 = vadd.f32 %v4062, %v4258
    %v4341 = vadd.f32 %v4063, %v4263
    %v4342 = vadd.f32 %v4064, %v4268
    %v4343 = vadd.f32 %v4065, %v4273
    %v4344 = vadd.f32 %v4066, %v4278
    %v4345 = vadd.f32 %v4067, %v4283
    %v4346 = vadd.f32 %v4068, %v4288
    %v4347 = vadd.f32 %v4069, %v4293
    %v4348 = vadd.f32 %v4070, %v4298
    %v4349 = vadd.f32 %v4071, %v4303
    %v4350 = vadd.f32 %v4072, %v4308
    %v4351 = vadd.f32 %v4073, %v4313
    %v4352 = vadd.f32 %v4074, %v4318
    %v4353 = vadd.f32 %v4075, %v4323
    %v4354 = vld [vmem:[#allocation2 + $0x12] sm:$0xff]
    %v4355 = vld [vmem:[#allocation2 + $0x1a] sm:$0xff]
    %v4356 = vld [vmem:[#allocation2 + $0x22] sm:$0xff]
    %v4357 = vld [vmem:[#allocation2 + $0x2a] sm:$0xff]
    %v4358 = vld [vmem:[#allocation2 + $0x32] sm:$0xff]
    %v4359 = vld [vmem:[#allocation2 + $0x3a] sm:$0xff]
    %v4360 = vld [vmem:[#allocation2 + $0x42] sm:$0xff]
    %v4361 = vld [vmem:[#allocation2 + $0x4a] sm:$0xff]
    %v4362 = vld [vmem:[#allocation2 + $0x52] sm:$0xff]
    %v4363 = vld [vmem:[#allocation2 + $0x5a] sm:$0xff]
    %v4364 = vld [vmem:[#allocation2 + $0x62] sm:$0xff]
    %v4365 = vld [vmem:[#allocation2 + $0x6a] sm:$0xff]
    %v4366 = vld [vmem:[#allocation2 + $0x72] sm:$0xff]
    %v4367 = vld [vmem:[#allocation2 + $0x7a] sm:$0xff]
    %v4368 = vld [vmem:[#allocation2 + $0x82] sm:$0xff]
    %v4369 = vld [vmem:[#allocation2 + $0x8a] sm:$0xff]
    %v4370 = vld [vmem:[#allocation2 + $0x92] sm:$0xff]
    %v4371 = vld [vmem:[#allocation2 + $0x9a] sm:$0xff]
    %v4372 = vld [vmem:[#allocation2 + $0xa2] sm:$0xff]
    %v4373 = vld [vmem:[#allocation2 + $0xaa] sm:$0xff]
    %v4374 = vld [vmem:[#allocation2 + $0xb2] sm:$0xff]
    %v4375 = vld [vmem:[#allocation2 + $0xba] sm:$0xff]
    %v4376 = vld [vmem:[#allocation2 + $0xc2] sm:$0xff]
    %v4377 = vld [vmem:[#allocation2 + $0xca] sm:$0xff]
    %v4378 = vld [vmem:[#allocation2 + $0xd2] sm:$0xff]
    %v4379 = vld [vmem:[#allocation2 + $0xda] sm:$0xff]
    %v4380 = vld [vmem:[#allocation2 + $0xe2] sm:$0xff]
    %v4381 = vld [vmem:[#allocation2 + $0xea] sm:$0x3f]
    %s4382 = scalar_lea.vmem [#allocation6], 640
    %v4383 = vld [vmem:[%s4382] sm:$0xff]
    %v4384 = vld [vmem:[%s4382 + $0x8] sm:$0xff]
    %v4385 = vld [vmem:[%s4382 + $0x10] sm:$0xff]
    %v4386 = vld [vmem:[%s4382 + $0x18] sm:$0xff]
    %v4387 = vld [vmem:[%s4382 + $0x20] sm:$0xff]
    %v4388 = vld [vmem:[%s4382 + $0x28] sm:$0xff]
    %v4389 = vld [vmem:[%s4382 + $0x30] sm:$0xff]
    %v4390 = vld [vmem:[%s4382 + $0x38] sm:$0xff]
    %v4391 = vld [vmem:[%s4382 + $0x40] sm:$0xff]
    %v4392 = vld [vmem:[%s4382 + $0x48] sm:$0xff]
    %v4393 = vld [vmem:[%s4382 + $0x50] sm:$0xff]
    %v4394 = vld [vmem:[%s4382 + $0x58] sm:$0xff]
    %v4395 = vld [vmem:[%s4382 + $0x60] sm:$0xff]
    %v4396 = vld [vmem:[%s4382 + $0x68] sm:$0xff]
    %v4397 = vld [vmem:[%s4382 + $0x70] sm:$0xff]
    %v4398 = vld [vmem:[%s4382 + $0x78] sm:$0xff]
    %4399 = vmatprep.subr.mxu0 0.0
    %4400 = vmatpush1.msra.mxu0 %v4383
    %4401 = vmatprep.subr.mxu0 0.0
    %4402 = vmatpush1.msra.mxu0 %v4384
    %4403 = vmatprep.subr.mxu0 0.0
    %4404 = vmatpush1.msra.mxu0 %v4385
    %4405 = vmatprep.subr.mxu0 0.0
    %4406 = vmatpush1.msra.mxu0 %v4386
    %4407 = vmatprep.subr.mxu0 0.0
    %4408 = vmatpush1.msra.mxu0 %v4387
    %4409 = vmatprep.subr.mxu0 0.0
    %4410 = vmatpush1.msra.mxu0 %v4388
    %4411 = vmatprep.subr.mxu0 0.0
    %4412 = vmatpush1.msra.mxu0 %v4389
    %4413 = vmatprep.subr.mxu0 0.0
    %4414 = vmatpush1.msra.mxu0 %v4390
    %4415 = vmatprep.subr.mxu0 0.0
    %4416 = vmatpush1.msra.mxu0 %v4391
    %4417 = vmatprep.subr.mxu0 0.0
    %4418 = vmatpush1.msra.mxu0 %v4392
    %4419 = vmatprep.subr.mxu0 0.0
    %4420 = vmatpush1.msra.mxu0 %v4393
    %4421 = vmatprep.subr.mxu0 0.0
    %4422 = vmatpush1.msra.mxu0 %v4394
    %4423 = vmatprep.subr.mxu0 0.0
    %4424 = vmatpush1.msra.mxu0 %v4395
    %4425 = vmatprep.subr.mxu0 0.0
    %4426 = vmatpush1.msra.mxu0 %v4396
    %4427 = vmatprep.subr.mxu0 0.0
    %4428 = vmatpush1.msra.mxu0 %v4397
    %4429 = vmatprep.subr.mxu0 0.0
    %4430 = vmatpush1.msra.mxu0 %v4398
    %4431 = vmatprep.subr.mxu0 0.0
    %4432 = vmatpush1.msra.mxu0 0.0
    %4433 = vmatprep.subr.mxu0 0.0
    %4434 = vmatpush1.msra.mxu0 0.0
    %4435 = vmatprep.subr.mxu0 0.0
    %4436 = vmatpush1.msra.mxu0 0.0
    %4437 = vmatprep.subr.mxu0 0.0
    %4438 = vmatpush1.msra.mxu0 0.0
    %4439 = vmatprep.subr.mxu0 0.0
    %4440 = vmatpush1.msra.mxu0 0.0
    %4441 = vmatprep.subr.mxu0 0.0
    %4442 = vmatpush1.msra.mxu0 0.0
    %4443 = vmatprep.subr.mxu0 0.0
    %4444 = vmatpush1.msra.mxu0 0.0
    %4445 = vmatprep.subr.mxu0 0.0
    %4446 = vmatpush1.msra.mxu0 0.0
    %4447 = vmatprep.subr.mxu0 0.0
    %4448 = vmatpush1.msra.mxu0 0.0
    %4449 = vmatprep.subr.mxu0 0.0
    %4450 = vmatpush1.msra.mxu0 0.0
    %4451 = vmatprep.subr.mxu0 0.0
    %4452 = vmatpush1.msra.mxu0 0.0
    %4453 = vmatprep.subr.mxu0 0.0
    %4454 = vmatpush1.msra.mxu0 0.0
    %4455 = vmatprep.subr.mxu0 0.0
    %4456 = vmatpush1.msra.mxu0 0.0
    %4457 = vmatprep.subr.mxu0 0.0
    %4458 = vmatpush1.msra.mxu0 0.0
    %4459 = vmatprep.subr.mxu0 0.0
    %4460 = vmatpush1.msra.mxu0 0.0
    %4461 = vmatprep.subr.mxu0 0.0
    %4462 = vmatpush1.msra.mxu0 0.0
    %4463 = vmatprep.mubr.f32.mxu0 0.0
    %4464 = vmatmul.mubr.f32.gmra.mrb[0].mxu0 %v4354
    %v4465 = vpop.f32.mrb[0].mxu0
    %v4466 = vadd.f32 0.0, %v4465
    %v4467 = vpop.f32.mrb[0].mxu0
    %4468 = vmatprep.mubr.f32.mxu0 0.0
    %4469 = vmatmul.mubr.f32.gmra.mrb[0].mxu0 %v4355
    %v4470 = vpop.f32.mrb[0].mxu0
    %v4471 = vadd.f32 0.0, %v4470
    %v4472 = vpop.f32.mrb[0].mxu0
    %4473 = vmatprep.mubr.f32.mxu0 0.0
    %4474 = vmatmul.mubr.f32.gmra.mrb[0].mxu0 %v4356
    %v4475 = vpop.f32.mrb[0].mxu0
    %v4476 = vadd.f32 0.0, %v4475
    %v4477 = vpop.f32.mrb[0].mxu0
    %4478 = vmatprep.mubr.f32.mxu0 0.0
    %4479 = vmatmul.mubr.f32.gmra.mrb[0].mxu0 %v4357
    %v4480 = vpop.f32.mrb[0].mxu0
    %v4481 = vadd.f32 0.0, %v4480
    %v4482 = vpop.f32.mrb[0].mxu0
    %4483 = vmatprep.mubr.f32.mxu0 0.0
    %4484 = vmatmul.mubr.f32.gmra.mrb[0].mxu0 %v4358
    %v4485 = vpop.f32.mrb[0].mxu0
    %v4486 = vadd.f32 0.0, %v4485
    %v4487 = vpop.f32.mrb[0].mxu0
    %4488 = vmatprep.mubr.f32.mxu0 0.0
    %4489 = vmatmul.mubr.f32.gmra.mrb[0].mxu0 %v4359
    %v4490 = vpop.f32.mrb[0].mxu0
    %v4491 = vadd.f32 0.0, %v4490
    %v4492 = vpop.f32.mrb[0].mxu0
    %4493 = vmatprep.mubr.f32.mxu0 0.0
    %4494 = vmatmul.mubr.f32.gmra.mrb[0].mxu0 %v4360
    %v4495 = vpop.f32.mrb[0].mxu0
    %v4496 = vadd.f32 0.0, %v4495
    %v4497 = vpop.f32.mrb[0].mxu0
    %4498 = vmatprep.mubr.f32.mxu0 0.0
    %4499 = vmatmul.mubr.f32.gmra.mrb[0].mxu0 %v4361
    %v4500 = vpop.f32.mrb[0].mxu0
    %v4501 = vadd.f32 0.0, %v4500
    %v4502 = vpop.f32.mrb[0].mxu0
    %4503 = vmatprep.mubr.f32.mxu0 0.0
    %4504 = vmatmul.mubr.f32.gmra.mrb[0].mxu0 %v4362
    %v4505 = vpop.f32.mrb[0].mxu0
    %v4506 = vadd.f32 0.0, %v4505
    %v4507 = vpop.f32.mrb[0].mxu0
    %4508 = vmatprep.mubr.f32.mxu0 0.0
    %4509 = vmatmul.mubr.f32.gmra.mrb[0].mxu0 %v4363
    %v4510 = vpop.f32.mrb[0].mxu0
    %v4511 = vadd.f32 0.0, %v4510
    %v4512 = vpop.f32.mrb[0].mxu0
    %4513 = vmatprep.mubr.f32.mxu0 0.0
    %4514 = vmatmul.mubr.f32.gmra.mrb[0].mxu0 %v4364
    %v4515 = vpop.f32.mrb[0].mxu0
    %v4516 = vadd.f32 0.0, %v4515
    %v4517 = vpop.f32.mrb[0].mxu0
    %4518 = vmatprep.mubr.f32.mxu0 0.0
    %4519 = vmatmul.mubr.f32.gmra.mrb[0].mxu0 %v4365
    %v4520 = vpop.f32.mrb[0].mxu0
    %v4521 = vadd.f32 0.0, %v4520
    %v4522 = vpop.f32.mrb[0].mxu0
    %4523 = vmatprep.mubr.f32.mxu0 0.0
    %4524 = vmatmul.mubr.f32.gmra.mrb[0].mxu0 %v4366
    %v4525 = vpop.f32.mrb[0].mxu0
    %v4526 = vadd.f32 0.0, %v4525
    %v4527 = vpop.f32.mrb[0].mxu0
    %4528 = vmatprep.mubr.f32.mxu0 0.0
    %4529 = vmatmul.mubr.f32.gmra.mrb[0].mxu0 %v4367
    %v4530 = vpop.f32.mrb[0].mxu0
    %v4531 = vadd.f32 0.0, %v4530
    %v4532 = vpop.f32.mrb[0].mxu0
    %4533 = vmatprep.mubr.f32.mxu0 0.0
    %4534 = vmatmul.mubr.f32.gmra.mrb[0].mxu0 %v4368
    %v4535 = vpop.f32.mrb[0].mxu0
    %v4536 = vadd.f32 0.0, %v4535
    %v4537 = vpop.f32.mrb[0].mxu0
    %4538 = vmatprep.mubr.f32.mxu0 0.0
    %4539 = vmatmul.mubr.f32.gmra.mrb[0].mxu0 %v4369
    %v4540 = vpop.f32.mrb[0].mxu0
    %v4541 = vadd.f32 0.0, %v4540
    %v4542 = vpop.f32.mrb[0].mxu0
    %4543 = vmatprep.mubr.f32.mxu0 0.0
    %4544 = vmatmul.mubr.f32.gmra.mrb[0].mxu0 %v4370
    %v4545 = vpop.f32.mrb[0].mxu0
    %v4546 = vadd.f32 0.0, %v4545
    %v4547 = vpop.f32.mrb[0].mxu0
    %4548 = vmatprep.mubr.f32.mxu0 0.0
    %4549 = vmatmul.mubr.f32.gmra.mrb[0].mxu0 %v4371
    %v4550 = vpop.f32.mrb[0].mxu0
    %v4551 = vadd.f32 0.0, %v4550
    %v4552 = vpop.f32.mrb[0].mxu0
    %4553 = vmatprep.mubr.f32.mxu0 0.0
    %4554 = vmatmul.mubr.f32.gmra.mrb[0].mxu0 %v4372
    %v4555 = vpop.f32.mrb[0].mxu0
    %v4556 = vadd.f32 0.0, %v4555
    %v4557 = vpop.f32.mrb[0].mxu0
    %4558 = vmatprep.mubr.f32.mxu0 0.0
    %4559 = vmatmul.mubr.f32.gmra.mrb[0].mxu0 %v4373
    %v4560 = vpop.f32.mrb[0].mxu0
    %v4561 = vadd.f32 0.0, %v4560
    %v4562 = vpop.f32.mrb[0].mxu0
    %4563 = vmatprep.mubr.f32.mxu0 0.0
    %4564 = vmatmul.mubr.f32.gmra.mrb[0].mxu0 %v4374
    %v4565 = vpop.f32.mrb[0].mxu0
    %v4566 = vadd.f32 0.0, %v4565
    %v4567 = vpop.f32.mrb[0].mxu0
    %4568 = vmatprep.mubr.f32.mxu0 0.0
    %4569 = vmatmul.mubr.f32.gmra.mrb[0].mxu0 %v4375
    %v4570 = vpop.f32.mrb[0].mxu0
    %v4571 = vadd.f32 0.0, %v4570
    %v4572 = vpop.f32.mrb[0].mxu0
    %4573 = vmatprep.mubr.f32.mxu0 0.0
    %4574 = vmatmul.mubr.f32.gmra.mrb[0].mxu0 %v4376
    %v4575 = vpop.f32.mrb[0].mxu0
    %v4576 = vadd.f32 0.0, %v4575
    %v4577 = vpop.f32.mrb[0].mxu0
    %4578 = vmatprep.mubr.f32.mxu0 0.0
    %4579 = vmatmul.mubr.f32.gmra.mrb[0].mxu0 %v4377
    %v4580 = vpop.f32.mrb[0].mxu0
    %v4581 = vadd.f32 0.0, %v4580
    %v4582 = vpop.f32.mrb[0].mxu0
    %4583 = vmatprep.mubr.f32.mxu0 0.0
    %4584 = vmatmul.mubr.f32.gmra.mrb[0].mxu0 %v4378
    %v4585 = vpop.f32.mrb[0].mxu0
    %v4586 = vadd.f32 0.0, %v4585
    %v4587 = vpop.f32.mrb[0].mxu0
    %4588 = vmatprep.mubr.f32.mxu0 0.0
    %4589 = vmatmul.mubr.f32.gmra.mrb[0].mxu0 %v4379
    %v4590 = vpop.f32.mrb[0].mxu0
    %v4591 = vadd.f32 0.0, %v4590
    %v4592 = vpop.f32.mrb[0].mxu0
    %4593 = vmatprep.mubr.f32.mxu0 0.0
    %4594 = vmatmul.mubr.f32.gmra.mrb[0].mxu0 %v4380
    %v4595 = vpop.f32.mrb[0].mxu0
    %v4596 = vadd.f32 0.0, %v4595
    %v4597 = vpop.f32.mrb[0].mxu0
    %4598 = vmatprep.mubr.f32.mxu0 0.0
    %4599 = vmatmul.mubr.f32.gmra.mrb[0].mxu0 %v4381
    %v4600 = vpop.f32.mrb[0].mxu0
    %v4601 = vadd.f32 0.0, %v4600
    %v4602 = vpop.f32.mrb[0].mxu0
    %4603 = vdwg.mxu0
    %v4604 = vadd.f32 %v4326, %v4466
    %v4605 = vadd.f32 %v4327, %v4471
    %v4606 = vadd.f32 %v4328, %v4476
    %v4607 = vadd.f32 %v4329, %v4481
    %v4608 = vadd.f32 %v4330, %v4486
    %v4609 = vadd.f32 %v4331, %v4491
    %v4610 = vadd.f32 %v4332, %v4496
    %v4611 = vadd.f32 %v4333, %v4501
    %v4612 = vadd.f32 %v4334, %v4506
    %v4613 = vadd.f32 %v4335, %v4511
    %v4614 = vadd.f32 %v4336, %v4516
    %v4615 = vadd.f32 %v4337, %v4521
    %v4616 = vadd.f32 %v4338, %v4526
    %v4617 = vadd.f32 %v4339, %v4531
    %v4618 = vadd.f32 %v4340, %v4536
    %v4619 = vadd.f32 %v4341, %v4541
    %v4620 = vadd.f32 %v4342, %v4546
    %v4621 = vadd.f32 %v4343, %v4551
    %v4622 = vadd.f32 %v4344, %v4556
    %v4623 = vadd.f32 %v4345, %v4561
    %v4624 = vadd.f32 %v4346, %v4566
    %v4625 = vadd.f32 %v4347, %v4571
    %v4626 = vadd.f32 %v4348, %v4576
    %v4627 = vadd.f32 %v4349, %v4581
    %v4628 = vadd.f32 %v4350, %v4586
    %v4629 = vadd.f32 %v4351, %v4591
    %v4630 = vadd.f32 %v4352, %v4596
    %v4631 = vadd.f32 %v4353, %v4601
    %v4632 = vld [vmem:[#allocation2 + $0x20] sm:$0xff]
    %v4633 = vld [vmem:[#allocation2 + $0x28] sm:$0xff]
    %v4634 = vld [vmem:[#allocation2 + $0x30] sm:$0xff]
    %v4635 = vld [vmem:[#allocation2 + $0x38] sm:$0xff]
    %v4636 = vld [vmem:[#allocation2 + $0x40] sm:$0xff]
    %v4637 = vld [vmem:[#allocation2 + $0x48] sm:$0xff]
    %v4638 = vld [vmem:[#allocation2 + $0x50] sm:$0xff]
    %v4639 = vld [vmem:[#allocation2 + $0x58] sm:$0xff]
    %v4640 = vld [vmem:[#allocation2 + $0x60] sm:$0xff]
    %v4641 = vld [vmem:[#allocation2 + $0x68] sm:$0xff]
    %v4642 = vld [vmem:[#allocation2 + $0x70] sm:$0xff]
    %v4643 = vld [vmem:[#allocation2 + $0x78] sm:$0xff]
    %v4644 = vld [vmem:[#allocation2 + $0x80] sm:$0xff]
    %v4645 = vld [vmem:[#allocation2 + $0x88] sm:$0xff]
    %v4646 = vld [vmem:[#allocation2 + $0x90] sm:$0xff]
    %v4647 = vld [vmem:[#allocation2 + $0x98] sm:$0xff]
    %v4648 = vld [vmem:[#allocation2 + $0xa0] sm:$0xff]
    %v4649 = vld [vmem:[#allocation2 + $0xa8] sm:$0xff]
    %v4650 = vld [vmem:[#allocation2 + $0xb0] sm:$0xff]
    %v4651 = vld [vmem:[#allocation2 + $0xb8] sm:$0xff]
    %v4652 = vld [vmem:[#allocation2 + $0xc0] sm:$0xff]
    %v4653 = vld [vmem:[#allocation2 + $0xc8] sm:$0xff]
    %v4654 = vld [vmem:[#allocation2 + $0xd0] sm:$0xff]
    %v4655 = vld [vmem:[#allocation2 + $0xd8] sm:$0xff]
    %v4656 = vld [vmem:[#allocation2 + $0xe0] sm:$0xff]
    %v4657 = vld [vmem:[#allocation2 + $0xe8] sm:$0xff]
    %v4658 = vld [vmem:[#allocation2 + $0xf0] sm:$0xff]
    %v4659 = vld [vmem:[#allocation2 + $0xf8] sm:$0x3f]
    %s4660 = scalar_lea.vmem [#allocation6], 768
    %v4661 = vld [vmem:[%s4660] sm:$0xff]
    %v4662 = vld [vmem:[%s4660 + $0x8] sm:$0xff]
    %v4663 = vld [vmem:[%s4660 + $0x10] sm:$0xff]
    %v4664 = vld [vmem:[%s4660 + $0x18] sm:$0xff]
    %v4665 = vld [vmem:[%s4660 + $0x20] sm:$0xff]
    %v4666 = vld [vmem:[%s4660 + $0x28] sm:$0xff]
    %v4667 = vld [vmem:[%s4660 + $0x30] sm:$0xff]
    %v4668 = vld [vmem:[%s4660 + $0x38] sm:$0xff]
    %v4669 = vld [vmem:[%s4660 + $0x40] sm:$0xff]
    %v4670 = vld [vmem:[%s4660 + $0x48] sm:$0xff]
    %v4671 = vld [vmem:[%s4660 + $0x50] sm:$0xff]
    %v4672 = vld [vmem:[%s4660 + $0x58] sm:$0xff]
    %v4673 = vld [vmem:[%s4660 + $0x60] sm:$0xff]
    %v4674 = vld [vmem:[%s4660 + $0x68] sm:$0xff]
    %v4675 = vld [vmem:[%s4660 + $0x70] sm:$0xff]
    %v4676 = vld [vmem:[%s4660 + $0x78] sm:$0xff]
    %4677 = vmatprep.subr.mxu0 0.0
    %4678 = vmatpush1.msra.mxu0 %v4661
    %4679 = vmatprep.subr.mxu0 0.0
    %4680 = vmatpush1.msra.mxu0 %v4662
    %4681 = vmatprep.subr.mxu0 0.0
    %4682 = vmatpush1.msra.mxu0 %v4663
    %4683 = vmatprep.subr.mxu0 0.0
    %4684 = vmatpush1.msra.mxu0 %v4664
    %4685 = vmatprep.subr.mxu0 0.0
    %4686 = vmatpush1.msra.mxu0 %v4665
    %4687 = vmatprep.subr.mxu0 0.0
    %4688 = vmatpush1.msra.mxu0 %v4666
    %4689 = vmatprep.subr.mxu0 0.0
    %4690 = vmatpush1.msra.mxu0 %v4667
    %4691 = vmatprep.subr.mxu0 0.0
    %4692 = vmatpush1.msra.mxu0 %v4668
    %4693 = vmatprep.subr.mxu0 0.0
    %4694 = vmatpush1.msra.mxu0 %v4669
    %4695 = vmatprep.subr.mxu0 0.0
    %4696 = vmatpush1.msra.mxu0 %v4670
    %4697 = vmatprep.subr.mxu0 0.0
    %4698 = vmatpush1.msra.mxu0 %v4671
    %4699 = vmatprep.subr.mxu0 0.0
    %4700 = vmatpush1.msra.mxu0 %v4672
    %4701 = vmatprep.subr.mxu0 0.0
    %4702 = vmatpush1.msra.mxu0 %v4673
    %4703 = vmatprep.subr.mxu0 0.0
    %4704 = vmatpush1.msra.mxu0 %v4674
    %4705 = vmatprep.subr.mxu0 0.0
    %4706 = vmatpush1.msra.mxu0 %v4675
    %4707 = vmatprep.subr.mxu0 0.0
    %4708 = vmatpush1.msra.mxu0 %v4676
    %4709 = vmatprep.subr.mxu0 0.0
    %4710 = vmatpush1.msra.mxu0 0.0
    %4711 = vmatprep.subr.mxu0 0.0
    %4712 = vmatpush1.msra.mxu0 0.0
    %4713 = vmatprep.subr.mxu0 0.0
    %4714 = vmatpush1.msra.mxu0 0.0
    %4715 = vmatprep.subr.mxu0 0.0
    %4716 = vmatpush1.msra.mxu0 0.0
    %4717 = vmatprep.subr.mxu0 0.0
    %4718 = vmatpush1.msra.mxu0 0.0
    %4719 = vmatprep.subr.mxu0 0.0
    %4720 = vmatpush1.msra.mxu0 0.0
    %4721 = vmatprep.subr.mxu0 0.0
    %4722 = vmatpush1.msra.mxu0 0.0
    %4723 = vmatprep.subr.mxu0 0.0
    %4724 = vmatpush1.msra.mxu0 0.0
    %4725 = vmatprep.subr.mxu0 0.0
    %4726 = vmatpush1.msra.mxu0 0.0
    %4727 = vmatprep.subr.mxu0 0.0
    %4728 = vmatpush1.msra.mxu0 0.0
    %4729 = vmatprep.subr.mxu0 0.0
    %4730 = vmatpush1.msra.mxu0 0.0
    %4731 = vmatprep.subr.mxu0 0.0
    %4732 = vmatpush1.msra.mxu0 0.0
    %4733 = vmatprep.subr.mxu0 0.0
    %4734 = vmatpush1.msra.mxu0 0.0
    %4735 = vmatprep.subr.mxu0 0.0
    %4736 = vmatpush1.msra.mxu0 0.0
    %4737 = vmatprep.subr.mxu0 0.0
    %4738 = vmatpush1.msra.mxu0 0.0
    %4739 = vmatprep.subr.mxu0 0.0
    %4740 = vmatpush1.msra.mxu0 0.0
    %4741 = vmatprep.mubr.f32.mxu0 0.0
    %4742 = vmatmul.mubr.f32.gmra.mrb[0].mxu0 %v4632
    %v4743 = vpop.f32.mrb[0].mxu0
    %v4744 = vadd.f32 0.0, %v4743
    %v4745 = vpop.f32.mrb[0].mxu0
    %4746 = vmatprep.mubr.f32.mxu0 0.0
    %4747 = vmatmul.mubr.f32.gmra.mrb[0].mxu0 %v4633
    %v4748 = vpop.f32.mrb[0].mxu0
    %v4749 = vadd.f32 0.0, %v4748
    %v4750 = vpop.f32.mrb[0].mxu0
    %4751 = vmatprep.mubr.f32.mxu0 0.0
    %4752 = vmatmul.mubr.f32.gmra.mrb[0].mxu0 %v4634
    %v4753 = vpop.f32.mrb[0].mxu0
    %v4754 = vadd.f32 0.0, %v4753
    %v4755 = vpop.f32.mrb[0].mxu0
    %4756 = vmatprep.mubr.f32.mxu0 0.0
    %4757 = vmatmul.mubr.f32.gmra.mrb[0].mxu0 %v4635
    %v4758 = vpop.f32.mrb[0].mxu0
    %v4759 = vadd.f32 0.0, %v4758
    %v4760 = vpop.f32.mrb[0].mxu0
    %4761 = vmatprep.mubr.f32.mxu0 0.0
    %4762 = vmatmul.mubr.f32.gmra.mrb[0].mxu0 %v4636
    %v4763 = vpop.f32.mrb[0].mxu0
    %v4764 = vadd.f32 0.0, %v4763
    %v4765 = vpop.f32.mrb[0].mxu0
    %4766 = vmatprep.mubr.f32.mxu0 0.0
    %4767 = vmatmul.mubr.f32.gmra.mrb[0].mxu0 %v4637
    %v4768 = vpop.f32.mrb[0].mxu0
    %v4769 = vadd.f32 0.0, %v4768
    %v4770 = vpop.f32.mrb[0].mxu0
    %4771 = vmatprep.mubr.f32.mxu0 0.0
    %4772 = vmatmul.mubr.f32.gmra.mrb[0].mxu0 %v4638
    %v4773 = vpop.f32.mrb[0].mxu0
    %v4774 = vadd.f32 0.0, %v4773
    %v4775 = vpop.f32.mrb[0].mxu0
    %4776 = vmatprep.mubr.f32.mxu0 0.0
    %4777 = vmatmul.mubr.f32.gmra.mrb[0].mxu0 %v4639
    %v4778 = vpop.f32.mrb[0].mxu0
    %v4779 = vadd.f32 0.0, %v4778
    %v4780 = vpop.f32.mrb[0].mxu0
    %4781 = vmatprep.mubr.f32.mxu0 0.0
    %4782 = vmatmul.mubr.f32.gmra.mrb[0].mxu0 %v4640
    %v4783 = vpop.f32.mrb[0].mxu0
    %v4784 = vadd.f32 0.0, %v4783
    %v4785 = vpop.f32.mrb[0].mxu0
    %4786 = vmatprep.mubr.f32.mxu0 0.0
    %4787 = vmatmul.mubr.f32.gmra.mrb[0].mxu0 %v4641
    %v4788 = vpop.f32.mrb[0].mxu0
    %v4789 = vadd.f32 0.0, %v4788
    %v4790 = vpop.f32.mrb[0].mxu0
    %4791 = vmatprep.mubr.f32.mxu0 0.0
    %4792 = vmatmul.mubr.f32.gmra.mrb[0].mxu0 %v4642
    %v4793 = vpop.f32.mrb[0].mxu0
    %v4794 = vadd.f32 0.0, %v4793
    %v4795 = vpop.f32.mrb[0].mxu0
    %4796 = vmatprep.mubr.f32.mxu0 0.0
    %4797 = vmatmul.mubr.f32.gmra.mrb[0].mxu0 %v4643
    %v4798 = vpop.f32.mrb[0].mxu0
    %v4799 = vadd.f32 0.0, %v4798
    %v4800 = vpop.f32.mrb[0].mxu0
    %4801 = vmatprep.mubr.f32.mxu0 0.0
    %4802 = vmatmul.mubr.f32.gmra.mrb[0].mxu0 %v4644
    %v4803 = vpop.f32.mrb[0].mxu0
    %v4804 = vadd.f32 0.0, %v4803
    %v4805 = vpop.f32.mrb[0].mxu0
    %4806 = vmatprep.mubr.f32.mxu0 0.0
    %4807 = vmatmul.mubr.f32.gmra.mrb[0].mxu0 %v4645
    %v4808 = vpop.f32.mrb[0].mxu0
    %v4809 = vadd.f32 0.0, %v4808
    %v4810 = vpop.f32.mrb[0].mxu0
    %4811 = vmatprep.mubr.f32.mxu0 0.0
    %4812 = vmatmul.mubr.f32.gmra.mrb[0].mxu0 %v4646
    %v4813 = vpop.f32.mrb[0].mxu0
    %v4814 = vadd.f32 0.0, %v4813
    %v4815 = vpop.f32.mrb[0].mxu0
    %4816 = vmatprep.mubr.f32.mxu0 0.0
    %4817 = vmatmul.mubr.f32.gmra.mrb[0].mxu0 %v4647
    %v4818 = vpop.f32.mrb[0].mxu0
    %v4819 = vadd.f32 0.0, %v4818
    %v4820 = vpop.f32.mrb[0].mxu0
    %4821 = vmatprep.mubr.f32.mxu0 0.0
    %4822 = vmatmul.mubr.f32.gmra.mrb[0].mxu0 %v4648
    %v4823 = vpop.f32.mrb[0].mxu0
    %v4824 = vadd.f32 0.0, %v4823
    %v4825 = vpop.f32.mrb[0].mxu0
    %4826 = vmatprep.mubr.f32.mxu0 0.0
    %4827 = vmatmul.mubr.f32.gmra.mrb[0].mxu0 %v4649
    %v4828 = vpop.f32.mrb[0].mxu0
    %v4829 = vadd.f32 0.0, %v4828
    %v4830 = vpop.f32.mrb[0].mxu0
    %4831 = vmatprep.mubr.f32.mxu0 0.0
    %4832 = vmatmul.mubr.f32.gmra.mrb[0].mxu0 %v4650
    %v4833 = vpop.f32.mrb[0].mxu0
    %v4834 = vadd.f32 0.0, %v4833
    %v4835 = vpop.f32.mrb[0].mxu0
    %4836 = vmatprep.mubr.f32.mxu0 0.0
    %4837 = vmatmul.mubr.f32.gmra.mrb[0].mxu0 %v4651
    %v4838 = vpop.f32.mrb[0].mxu0
    %v4839 = vadd.f32 0.0, %v4838
    %v4840 = vpop.f32.mrb[0].mxu0
    %4841 = vmatprep.mubr.f32.mxu0 0.0
    %4842 = vmatmul.mubr.f32.gmra.mrb[0].mxu0 %v4652
    %v4843 = vpop.f32.mrb[0].mxu0
    %v4844 = vadd.f32 0.0, %v4843
    %v4845 = vpop.f32.mrb[0].mxu0
    %4846 = vmatprep.mubr.f32.mxu0 0.0
    %4847 = vmatmul.mubr.f32.gmra.mrb[0].mxu0 %v4653
    %v4848 = vpop.f32.mrb[0].mxu0
    %v4849 = vadd.f32 0.0, %v4848
    %v4850 = vpop.f32.mrb[0].mxu0
    %4851 = vmatprep.mubr.f32.mxu0 0.0
    %4852 = vmatmul.mubr.f32.gmra.mrb[0].mxu0 %v4654
    %v4853 = vpop.f32.mrb[0].mxu0
    %v4854 = vadd.f32 0.0, %v4853
    %v4855 = vpop.f32.mrb[0].mxu0
    %4856 = vmatprep.mubr.f32.mxu0 0.0
    %4857 = vmatmul.mubr.f32.gmra.mrb[0].mxu0 %v4655
    %v4858 = vpop.f32.mrb[0].mxu0
    %v4859 = vadd.f32 0.0, %v4858
    %v4860 = vpop.f32.mrb[0].mxu0
    %4861 = vmatprep.mubr.f32.mxu0 0.0
    %4862 = vmatmul.mubr.f32.gmra.mrb[0].mxu0 %v4656
    %v4863 = vpop.f32.mrb[0].mxu0
    %v4864 = vadd.f32 0.0, %v4863
    %v4865 = vpop.f32.mrb[0].mxu0
    %4866 = vmatprep.mubr.f32.mxu0 0.0
    %4867 = vmatmul.mubr.f32.gmra.mrb[0].mxu0 %v4657
    %v4868 = vpop.f32.mrb[0].mxu0
    %v4869 = vadd.f32 0.0, %v4868
    %v4870 = vpop.f32.mrb[0].mxu0
    %4871 = vmatprep.mubr.f32.mxu0 0.0
    %4872 = vmatmul.mubr.f32.gmra.mrb[0].mxu0 %v4658
    %v4873 = vpop.f32.mrb[0].mxu0
    %v4874 = vadd.f32 0.0, %v4873
    %v4875 = vpop.f32.mrb[0].mxu0
    %4876 = vmatprep.mubr.f32.mxu0 0.0
    %4877 = vmatmul.mubr.f32.gmra.mrb[0].mxu0 %v4659
    %v4878 = vpop.f32.mrb[0].mxu0
    %v4879 = vadd.f32 0.0, %v4878
    %v4880 = vpop.f32.mrb[0].mxu0
    %4881 = vdwg.mxu0
    %v4882 = vadd.f32 %v4604, %v4744
    %v4883 = vadd.f32 %v4605, %v4749
    %v4884 = vadd.f32 %v4606, %v4754
    %v4885 = vadd.f32 %v4607, %v4759
    %v4886 = vadd.f32 %v4608, %v4764
    %v4887 = vadd.f32 %v4609, %v4769
    %v4888 = vadd.f32 %v4610, %v4774
    %v4889 = vadd.f32 %v4611, %v4779
    %v4890 = vadd.f32 %v4612, %v4784
    %v4891 = vadd.f32 %v4613, %v4789
    %v4892 = vadd.f32 %v4614, %v4794
    %v4893 = vadd.f32 %v4615, %v4799
    %v4894 = vadd.f32 %v4616, %v4804
    %v4895 = vadd.f32 %v4617, %v4809
    %v4896 = vadd.f32 %v4618, %v4814
    %v4897 = vadd.f32 %v4619, %v4819
    %v4898 = vadd.f32 %v4620, %v4824
    %v4899 = vadd.f32 %v4621, %v4829
    %v4900 = vadd.f32 %v4622, %v4834
    %v4901 = vadd.f32 %v4623, %v4839
    %v4902 = vadd.f32 %v4624, %v4844
    %v4903 = vadd.f32 %v4625, %v4849
    %v4904 = vadd.f32 %v4626, %v4854
    %v4905 = vadd.f32 %v4627, %v4859
    %v4906 = vadd.f32 %v4628, %v4864
    %v4907 = vadd.f32 %v4629, %v4869
    %v4908 = vadd.f32 %v4630, %v4874
    %v4909 = vadd.f32 %v4631, %v4879
    %v4910 = vld [vmem:[#allocation2 + $0x21] sm:$0xff]
    %v4911 = vld [vmem:[#allocation2 + $0x29] sm:$0xff]
    %v4912 = vld [vmem:[#allocation2 + $0x31] sm:$0xff]
    %v4913 = vld [vmem:[#allocation2 + $0x39] sm:$0xff]
    %v4914 = vld [vmem:[#allocation2 + $0x41] sm:$0xff]
    %v4915 = vld [vmem:[#allocation2 + $0x49] sm:$0xff]
    %v4916 = vld [vmem:[#allocation2 + $0x51] sm:$0xff]
    %v4917 = vld [vmem:[#allocation2 + $0x59] sm:$0xff]
    %v4918 = vld [vmem:[#allocation2 + $0x61] sm:$0xff]
    %v4919 = vld [vmem:[#allocation2 + $0x69] sm:$0xff]
    %v4920 = vld [vmem:[#allocation2 + $0x71] sm:$0xff]
    %v4921 = vld [vmem:[#allocation2 + $0x79] sm:$0xff]
    %v4922 = vld [vmem:[#allocation2 + $0x81] sm:$0xff]
    %v4923 = vld [vmem:[#allocation2 + $0x89] sm:$0xff]
    %v4924 = vld [vmem:[#allocation2 + $0x91] sm:$0xff]
    %v4925 = vld [vmem:[#allocation2 + $0x99] sm:$0xff]
    %v4926 = vld [vmem:[#allocation2 + $0xa1] sm:$0xff]
    %v4927 = vld [vmem:[#allocation2 + $0xa9] sm:$0xff]
    %v4928 = vld [vmem:[#allocation2 + $0xb1] sm:$0xff]
    %v4929 = vld [vmem:[#allocation2 + $0xb9] sm:$0xff]
    %v4930 = vld [vmem:[#allocation2 + $0xc1] sm:$0xff]
    %v4931 = vld [vmem:[#allocation2 + $0xc9] sm:$0xff]
    %v4932 = vld [vmem:[#allocation2 + $0xd1] sm:$0xff]
    %v4933 = vld [vmem:[#allocation2 + $0xd9] sm:$0xff]
    %v4934 = vld [vmem:[#allocation2 + $0xe1] sm:$0xff]
    %v4935 = vld [vmem:[#allocation2 + $0xe9] sm:$0xff]
    %v4936 = vld [vmem:[#allocation2 + $0xf1] sm:$0xff]
    %v4937 = vld [vmem:[#allocation2 + $0xf9] sm:$0x3f]
    %s4938 = scalar_lea.vmem [#allocation6], 896
    %v4939 = vld [vmem:[%s4938] sm:$0xff]
    %v4940 = vld [vmem:[%s4938 + $0x8] sm:$0xff]
    %v4941 = vld [vmem:[%s4938 + $0x10] sm:$0xff]
    %v4942 = vld [vmem:[%s4938 + $0x18] sm:$0xff]
    %v4943 = vld [vmem:[%s4938 + $0x20] sm:$0xff]
    %v4944 = vld [vmem:[%s4938 + $0x28] sm:$0xff]
    %v4945 = vld [vmem:[%s4938 + $0x30] sm:$0xff]
    %v4946 = vld [vmem:[%s4938 + $0x38] sm:$0xff]
    %v4947 = vld [vmem:[%s4938 + $0x40] sm:$0xff]
    %v4948 = vld [vmem:[%s4938 + $0x48] sm:$0xff]
    %v4949 = vld [vmem:[%s4938 + $0x50] sm:$0xff]
    %v4950 = vld [vmem:[%s4938 + $0x58] sm:$0xff]
    %v4951 = vld [vmem:[%s4938 + $0x60] sm:$0xff]
    %v4952 = vld [vmem:[%s4938 + $0x68] sm:$0xff]
    %v4953 = vld [vmem:[%s4938 + $0x70] sm:$0xff]
    %v4954 = vld [vmem:[%s4938 + $0x78] sm:$0xff]
    %4955 = vmatprep.subr.mxu0 0.0
    %4956 = vmatpush1.msra.mxu0 %v4939
    %4957 = vmatprep.subr.mxu0 0.0
    %4958 = vmatpush1.msra.mxu0 %v4940
    %4959 = vmatprep.subr.mxu0 0.0
    %4960 = vmatpush1.msra.mxu0 %v4941
    %4961 = vmatprep.subr.mxu0 0.0
    %4962 = vmatpush1.msra.mxu0 %v4942
    %4963 = vmatprep.subr.mxu0 0.0
    %4964 = vmatpush1.msra.mxu0 %v4943
    %4965 = vmatprep.subr.mxu0 0.0
    %4966 = vmatpush1.msra.mxu0 %v4944
    %4967 = vmatprep.subr.mxu0 0.0
    %4968 = vmatpush1.msra.mxu0 %v4945
    %4969 = vmatprep.subr.mxu0 0.0
    %4970 = vmatpush1.msra.mxu0 %v4946
    %4971 = vmatprep.subr.mxu0 0.0
    %4972 = vmatpush1.msra.mxu0 %v4947
    %4973 = vmatprep.subr.mxu0 0.0
    %4974 = vmatpush1.msra.mxu0 %v4948
    %4975 = vmatprep.subr.mxu0 0.0
    %4976 = vmatpush1.msra.mxu0 %v4949
    %4977 = vmatprep.subr.mxu0 0.0
    %4978 = vmatpush1.msra.mxu0 %v4950
    %4979 = vmatprep.subr.mxu0 0.0
    %4980 = vmatpush1.msra.mxu0 %v4951
    %4981 = vmatprep.subr.mxu0 0.0
    %4982 = vmatpush1.msra.mxu0 %v4952
    %4983 = vmatprep.subr.mxu0 0.0
    %4984 = vmatpush1.msra.mxu0 %v4953
    %4985 = vmatprep.subr.mxu0 0.0
    %4986 = vmatpush1.msra.mxu0 %v4954
    %4987 = vmatprep.subr.mxu0 0.0
    %4988 = vmatpush1.msra.mxu0 0.0
    %4989 = vmatprep.subr.mxu0 0.0
    %4990 = vmatpush1.msra.mxu0 0.0
    %4991 = vmatprep.subr.mxu0 0.0
    %4992 = vmatpush1.msra.mxu0 0.0
    %4993 = vmatprep.subr.mxu0 0.0
    %4994 = vmatpush1.msra.mxu0 0.0
    %4995 = vmatprep.subr.mxu0 0.0
    %4996 = vmatpush1.msra.mxu0 0.0
    %4997 = vmatprep.subr.mxu0 0.0
    %4998 = vmatpush1.msra.mxu0 0.0
    %4999 = vmatprep.subr.mxu0 0.0
    %5000 = vmatpush1.msra.mxu0 0.0
    %5001 = vmatprep.subr.mxu0 0.0
    %5002 = vmatpush1.msra.mxu0 0.0
    %5003 = vmatprep.subr.mxu0 0.0
    %5004 = vmatpush1.msra.mxu0 0.0
    %5005 = vmatprep.subr.mxu0 0.0
    %5006 = vmatpush1.msra.mxu0 0.0
    %5007 = vmatprep.subr.mxu0 0.0
    %5008 = vmatpush1.msra.mxu0 0.0
    %5009 = vmatprep.subr.mxu0 0.0
    %5010 = vmatpush1.msra.mxu0 0.0
    %5011 = vmatprep.subr.mxu0 0.0
    %5012 = vmatpush1.msra.mxu0 0.0
    %5013 = vmatprep.subr.mxu0 0.0
    %5014 = vmatpush1.msra.mxu0 0.0
    %5015 = vmatprep.subr.mxu0 0.0
    %5016 = vmatpush1.msra.mxu0 0.0
    %5017 = vmatprep.subr.mxu0 0.0
    %5018 = vmatpush1.msra.mxu0 0.0
    %5019 = vmatprep.mubr.f32.mxu0 0.0
    %5020 = vmatmul.mubr.f32.gmra.mrb[0].mxu0 %v4910
    %v5021 = vpop.f32.mrb[0].mxu0
    %v5022 = vadd.f32 0.0, %v5021
    %v5023 = vpop.f32.mrb[0].mxu0
    %5024 = vmatprep.mubr.f32.mxu0 0.0
    %5025 = vmatmul.mubr.f32.gmra.mrb[0].mxu0 %v4911
    %v5026 = vpop.f32.mrb[0].mxu0
    %v5027 = vadd.f32 0.0, %v5026
    %v5028 = vpop.f32.mrb[0].mxu0
    %5029 = vmatprep.mubr.f32.mxu0 0.0
    %5030 = vmatmul.mubr.f32.gmra.mrb[0].mxu0 %v4912
    %v5031 = vpop.f32.mrb[0].mxu0
    %v5032 = vadd.f32 0.0, %v5031
    %v5033 = vpop.f32.mrb[0].mxu0
    %5034 = vmatprep.mubr.f32.mxu0 0.0
    %5035 = vmatmul.mubr.f32.gmra.mrb[0].mxu0 %v4913
    %v5036 = vpop.f32.mrb[0].mxu0
    %v5037 = vadd.f32 0.0, %v5036
    %v5038 = vpop.f32.mrb[0].mxu0
    %5039 = vmatprep.mubr.f32.mxu0 0.0
    %5040 = vmatmul.mubr.f32.gmra.mrb[0].mxu0 %v4914
    %v5041 = vpop.f32.mrb[0].mxu0
    %v5042 = vadd.f32 0.0, %v5041
    %v5043 = vpop.f32.mrb[0].mxu0
    %5044 = vmatprep.mubr.f32.mxu0 0.0
    %5045 = vmatmul.mubr.f32.gmra.mrb[0].mxu0 %v4915
    %v5046 = vpop.f32.mrb[0].mxu0
    %v5047 = vadd.f32 0.0, %v5046
    %v5048 = vpop.f32.mrb[0].mxu0
    %5049 = vmatprep.mubr.f32.mxu0 0.0
    %5050 = vmatmul.mubr.f32.gmra.mrb[0].mxu0 %v4916
    %v5051 = vpop.f32.mrb[0].mxu0
    %v5052 = vadd.f32 0.0, %v5051
    %v5053 = vpop.f32.mrb[0].mxu0
    %5054 = vmatprep.mubr.f32.mxu0 0.0
    %5055 = vmatmul.mubr.f32.gmra.mrb[0].mxu0 %v4917
    %v5056 = vpop.f32.mrb[0].mxu0
    %v5057 = vadd.f32 0.0, %v5056
    %v5058 = vpop.f32.mrb[0].mxu0
    %5059 = vmatprep.mubr.f32.mxu0 0.0
    %5060 = vmatmul.mubr.f32.gmra.mrb[0].mxu0 %v4918
    %v5061 = vpop.f32.mrb[0].mxu0
    %v5062 = vadd.f32 0.0, %v5061
    %v5063 = vpop.f32.mrb[0].mxu0
    %5064 = vmatprep.mubr.f32.mxu0 0.0
    %5065 = vmatmul.mubr.f32.gmra.mrb[0].mxu0 %v4919
    %v5066 = vpop.f32.mrb[0].mxu0
    %v5067 = vadd.f32 0.0, %v5066
    %v5068 = vpop.f32.mrb[0].mxu0
    %5069 = vmatprep.mubr.f32.mxu0 0.0
    %5070 = vmatmul.mubr.f32.gmra.mrb[0].mxu0 %v4920
    %v5071 = vpop.f32.mrb[0].mxu0
    %v5072 = vadd.f32 0.0, %v5071
    %v5073 = vpop.f32.mrb[0].mxu0
    %5074 = vmatprep.mubr.f32.mxu0 0.0
    %5075 = vmatmul.mubr.f32.gmra.mrb[0].mxu0 %v4921
    %v5076 = vpop.f32.mrb[0].mxu0
    %v5077 = vadd.f32 0.0, %v5076
    %v5078 = vpop.f32.mrb[0].mxu0
    %5079 = vmatprep.mubr.f32.mxu0 0.0
    %5080 = vmatmul.mubr.f32.gmra.mrb[0].mxu0 %v4922
    %v5081 = vpop.f32.mrb[0].mxu0
    %v5082 = vadd.f32 0.0, %v5081
    %v5083 = vpop.f32.mrb[0].mxu0
    %5084 = vmatprep.mubr.f32.mxu0 0.0
    %5085 = vmatmul.mubr.f32.gmra.mrb[0].mxu0 %v4923
    %v5086 = vpop.f32.mrb[0].mxu0
    %v5087 = vadd.f32 0.0, %v5086
    %v5088 = vpop.f32.mrb[0].mxu0
    %5089 = vmatprep.mubr.f32.mxu0 0.0
    %5090 = vmatmul.mubr.f32.gmra.mrb[0].mxu0 %v4924
    %v5091 = vpop.f32.mrb[0].mxu0
    %v5092 = vadd.f32 0.0, %v5091
    %v5093 = vpop.f32.mrb[0].mxu0
    %5094 = vmatprep.mubr.f32.mxu0 0.0
    %5095 = vmatmul.mubr.f32.gmra.mrb[0].mxu0 %v4925
    %v5096 = vpop.f32.mrb[0].mxu0
    %v5097 = vadd.f32 0.0, %v5096
    %v5098 = vpop.f32.mrb[0].mxu0
    %5099 = vmatprep.mubr.f32.mxu0 0.0
    %5100 = vmatmul.mubr.f32.gmra.mrb[0].mxu0 %v4926
    %v5101 = vpop.f32.mrb[0].mxu0
    %v5102 = vadd.f32 0.0, %v5101
    %v5103 = vpop.f32.mrb[0].mxu0
    %5104 = vmatprep.mubr.f32.mxu0 0.0
    %5105 = vmatmul.mubr.f32.gmra.mrb[0].mxu0 %v4927
    %v5106 = vpop.f32.mrb[0].mxu0
    %v5107 = vadd.f32 0.0, %v5106
    %v5108 = vpop.f32.mrb[0].mxu0
    %5109 = vmatprep.mubr.f32.mxu0 0.0
    %5110 = vmatmul.mubr.f32.gmra.mrb[0].mxu0 %v4928
    %v5111 = vpop.f32.mrb[0].mxu0
    %v5112 = vadd.f32 0.0, %v5111
    %v5113 = vpop.f32.mrb[0].mxu0
    %5114 = vmatprep.mubr.f32.mxu0 0.0
    %5115 = vmatmul.mubr.f32.gmra.mrb[0].mxu0 %v4929
    %v5116 = vpop.f32.mrb[0].mxu0
    %v5117 = vadd.f32 0.0, %v5116
    %v5118 = vpop.f32.mrb[0].mxu0
    %5119 = vmatprep.mubr.f32.mxu0 0.0
    %5120 = vmatmul.mubr.f32.gmra.mrb[0].mxu0 %v4930
    %v5121 = vpop.f32.mrb[0].mxu0
    %v5122 = vadd.f32 0.0, %v5121
    %v5123 = vpop.f32.mrb[0].mxu0
    %5124 = vmatprep.mubr.f32.mxu0 0.0
    %5125 = vmatmul.mubr.f32.gmra.mrb[0].mxu0 %v4931
    %v5126 = vpop.f32.mrb[0].mxu0
    %v5127 = vadd.f32 0.0, %v5126
    %v5128 = vpop.f32.mrb[0].mxu0
    %5129 = vmatprep.mubr.f32.mxu0 0.0
    %5130 = vmatmul.mubr.f32.gmra.mrb[0].mxu0 %v4932
    %v5131 = vpop.f32.mrb[0].mxu0
    %v5132 = vadd.f32 0.0, %v5131
    %v5133 = vpop.f32.mrb[0].mxu0
    %5134 = vmatprep.mubr.f32.mxu0 0.0
    %5135 = vmatmul.mubr.f32.gmra.mrb[0].mxu0 %v4933
    %v5136 = vpop.f32.mrb[0].mxu0
    %v5137 = vadd.f32 0.0, %v5136
    %v5138 = vpop.f32.mrb[0].mxu0
    %5139 = vmatprep.mubr.f32.mxu0 0.0
    %5140 = vmatmul.mubr.f32.gmra.mrb[0].mxu0 %v4934
    %v5141 = vpop.f32.mrb[0].mxu0
    %v5142 = vadd.f32 0.0, %v5141
    %v5143 = vpop.f32.mrb[0].mxu0
    %5144 = vmatprep.mubr.f32.mxu0 0.0
    %5145 = vmatmul.mubr.f32.gmra.mrb[0].mxu0 %v4935
    %v5146 = vpop.f32.mrb[0].mxu0
    %v5147 = vadd.f32 0.0, %v5146
    %v5148 = vpop.f32.mrb[0].mxu0
    %5149 = vmatprep.mubr.f32.mxu0 0.0
    %5150 = vmatmul.mubr.f32.gmra.mrb[0].mxu0 %v4936
    %v5151 = vpop.f32.mrb[0].mxu0
    %v5152 = vadd.f32 0.0, %v5151
    %v5153 = vpop.f32.mrb[0].mxu0
    %5154 = vmatprep.mubr.f32.mxu0 0.0
    %5155 = vmatmul.mubr.f32.gmra.mrb[0].mxu0 %v4937
    %v5156 = vpop.f32.mrb[0].mxu0
    %v5157 = vadd.f32 0.0, %v5156
    %v5158 = vpop.f32.mrb[0].mxu0
    %5159 = vdwg.mxu0
    %v5160 = vadd.f32 %v4882, %v5022
    %v5161 = vadd.f32 %v4883, %v5027
    %v5162 = vadd.f32 %v4884, %v5032
    %v5163 = vadd.f32 %v4885, %v5037
    %v5164 = vadd.f32 %v4886, %v5042
    %v5165 = vadd.f32 %v4887, %v5047
    %v5166 = vadd.f32 %v4888, %v5052
    %v5167 = vadd.f32 %v4889, %v5057
    %v5168 = vadd.f32 %v4890, %v5062
    %v5169 = vadd.f32 %v4891, %v5067
    %v5170 = vadd.f32 %v4892, %v5072
    %v5171 = vadd.f32 %v4893, %v5077
    %v5172 = vadd.f32 %v4894, %v5082
    %v5173 = vadd.f32 %v4895, %v5087
    %v5174 = vadd.f32 %v4896, %v5092
    %v5175 = vadd.f32 %v4897, %v5097
    %v5176 = vadd.f32 %v4898, %v5102
    %v5177 = vadd.f32 %v4899, %v5107
    %v5178 = vadd.f32 %v4900, %v5112
    %v5179 = vadd.f32 %v4901, %v5117
    %v5180 = vadd.f32 %v4902, %v5122
    %v5181 = vadd.f32 %v4903, %v5127
    %v5182 = vadd.f32 %v4904, %v5132
    %v5183 = vadd.f32 %v4905, %v5137
    %v5184 = vadd.f32 %v4906, %v5142
    %v5185 = vadd.f32 %v4907, %v5147
    %v5186 = vadd.f32 %v4908, %v5152
    %v5187 = vadd.f32 %v4909, %v5157
    %v5188 = vld [vmem:[#allocation2 + $0x22] sm:$0xff]
    %v5189 = vld [vmem:[#allocation2 + $0x2a] sm:$0xff]
    %v5190 = vld [vmem:[#allocation2 + $0x32] sm:$0xff]
    %v5191 = vld [vmem:[#allocation2 + $0x3a] sm:$0xff]
    %v5192 = vld [vmem:[#allocation2 + $0x42] sm:$0xff]
    %v5193 = vld [vmem:[#allocation2 + $0x4a] sm:$0xff]
    %v5194 = vld [vmem:[#allocation2 + $0x52] sm:$0xff]
    %v5195 = vld [vmem:[#allocation2 + $0x5a] sm:$0xff]
    %v5196 = vld [vmem:[#allocation2 + $0x62] sm:$0xff]
    %v5197 = vld [vmem:[#allocation2 + $0x6a] sm:$0xff]
    %v5198 = vld [vmem:[#allocation2 + $0x72] sm:$0xff]
    %v5199 = vld [vmem:[#allocation2 + $0x7a] sm:$0xff]
    %v5200 = vld [vmem:[#allocation2 + $0x82] sm:$0xff]
    %v5201 = vld [vmem:[#allocation2 + $0x8a] sm:$0xff]
    %v5202 = vld [vmem:[#allocation2 + $0x92] sm:$0xff]
    %v5203 = vld [vmem:[#allocation2 + $0x9a] sm:$0xff]
    %v5204 = vld [vmem:[#allocation2 + $0xa2] sm:$0xff]
    %v5205 = vld [vmem:[#allocation2 + $0xaa] sm:$0xff]
    %v5206 = vld [vmem:[#allocation2 + $0xb2] sm:$0xff]
    %v5207 = vld [vmem:[#allocation2 + $0xba] sm:$0xff]
    %v5208 = vld [vmem:[#allocation2 + $0xc2] sm:$0xff]
    %v5209 = vld [vmem:[#allocation2 + $0xca] sm:$0xff]
    %v5210 = vld [vmem:[#allocation2 + $0xd2] sm:$0xff]
    %v5211 = vld [vmem:[#allocation2 + $0xda] sm:$0xff]
    %v5212 = vld [vmem:[#allocation2 + $0xe2] sm:$0xff]
    %v5213 = vld [vmem:[#allocation2 + $0xea] sm:$0xff]
    %v5214 = vld [vmem:[#allocation2 + $0xf2] sm:$0xff]
    %v5215 = vld [vmem:[#allocation2 + $0xfa] sm:$0x3f]
    %s5216 = scalar_lea.vmem [#allocation6], 1024
    %v5217 = vld [vmem:[%s5216] sm:$0xff]
    %v5218 = vld [vmem:[%s5216 + $0x8] sm:$0xff]
    %v5219 = vld [vmem:[%s5216 + $0x10] sm:$0xff]
    %v5220 = vld [vmem:[%s5216 + $0x18] sm:$0xff]
    %v5221 = vld [vmem:[%s5216 + $0x20] sm:$0xff]
    %v5222 = vld [vmem:[%s5216 + $0x28] sm:$0xff]
    %v5223 = vld [vmem:[%s5216 + $0x30] sm:$0xff]
    %v5224 = vld [vmem:[%s5216 + $0x38] sm:$0xff]
    %v5225 = vld [vmem:[%s5216 + $0x40] sm:$0xff]
    %v5226 = vld [vmem:[%s5216 + $0x48] sm:$0xff]
    %v5227 = vld [vmem:[%s5216 + $0x50] sm:$0xff]
    %v5228 = vld [vmem:[%s5216 + $0x58] sm:$0xff]
    %v5229 = vld [vmem:[%s5216 + $0x60] sm:$0xff]
    %v5230 = vld [vmem:[%s5216 + $0x68] sm:$0xff]
    %v5231 = vld [vmem:[%s5216 + $0x70] sm:$0xff]
    %v5232 = vld [vmem:[%s5216 + $0x78] sm:$0xff]
    %5233 = vmatprep.subr.mxu0 0.0
    %5234 = vmatpush1.msra.mxu0 %v5217
    %5235 = vmatprep.subr.mxu0 0.0
    %5236 = vmatpush1.msra.mxu0 %v5218
    %5237 = vmatprep.subr.mxu0 0.0
    %5238 = vmatpush1.msra.mxu0 %v5219
    %5239 = vmatprep.subr.mxu0 0.0
    %5240 = vmatpush1.msra.mxu0 %v5220
    %5241 = vmatprep.subr.mxu0 0.0
    %5242 = vmatpush1.msra.mxu0 %v5221
    %5243 = vmatprep.subr.mxu0 0.0
    %5244 = vmatpush1.msra.mxu0 %v5222
    %5245 = vmatprep.subr.mxu0 0.0
    %5246 = vmatpush1.msra.mxu0 %v5223
    %5247 = vmatprep.subr.mxu0 0.0
    %5248 = vmatpush1.msra.mxu0 %v5224
    %5249 = vmatprep.subr.mxu0 0.0
    %5250 = vmatpush1.msra.mxu0 %v5225
    %5251 = vmatprep.subr.mxu0 0.0
    %5252 = vmatpush1.msra.mxu0 %v5226
    %5253 = vmatprep.subr.mxu0 0.0
    %5254 = vmatpush1.msra.mxu0 %v5227
    %5255 = vmatprep.subr.mxu0 0.0
    %5256 = vmatpush1.msra.mxu0 %v5228
    %5257 = vmatprep.subr.mxu0 0.0
    %5258 = vmatpush1.msra.mxu0 %v5229
    %5259 = vmatprep.subr.mxu0 0.0
    %5260 = vmatpush1.msra.mxu0 %v5230
    %5261 = vmatprep.subr.mxu0 0.0
    %5262 = vmatpush1.msra.mxu0 %v5231
    %5263 = vmatprep.subr.mxu0 0.0
    %5264 = vmatpush1.msra.mxu0 %v5232
    %5265 = vmatprep.subr.mxu0 0.0
    %5266 = vmatpush1.msra.mxu0 0.0
    %5267 = vmatprep.subr.mxu0 0.0
    %5268 = vmatpush1.msra.mxu0 0.0
    %5269 = vmatprep.subr.mxu0 0.0
    %5270 = vmatpush1.msra.mxu0 0.0
    %5271 = vmatprep.subr.mxu0 0.0
    %5272 = vmatpush1.msra.mxu0 0.0
    %5273 = vmatprep.subr.mxu0 0.0
    %5274 = vmatpush1.msra.mxu0 0.0
    %5275 = vmatprep.subr.mxu0 0.0
    %5276 = vmatpush1.msra.mxu0 0.0
    %5277 = vmatprep.subr.mxu0 0.0
    %5278 = vmatpush1.msra.mxu0 0.0
    %5279 = vmatprep.subr.mxu0 0.0
    %5280 = vmatpush1.msra.mxu0 0.0
    %5281 = vmatprep.subr.mxu0 0.0
    %5282 = vmatpush1.msra.mxu0 0.0
    %5283 = vmatprep.subr.mxu0 0.0
    %5284 = vmatpush1.msra.mxu0 0.0
    %5285 = vmatprep.subr.mxu0 0.0
    %5286 = vmatpush1.msra.mxu0 0.0
    %5287 = vmatprep.subr.mxu0 0.0
    %5288 = vmatpush1.msra.mxu0 0.0
    %5289 = vmatprep.subr.mxu0 0.0
    %5290 = vmatpush1.msra.mxu0 0.0
    %5291 = vmatprep.subr.mxu0 0.0
    %5292 = vmatpush1.msra.mxu0 0.0
    %5293 = vmatprep.subr.mxu0 0.0
    %5294 = vmatpush1.msra.mxu0 0.0
    %5295 = vmatprep.subr.mxu0 0.0
    %5296 = vmatpush1.msra.mxu0 0.0
    %5297 = vmatprep.mubr.f32.mxu0 0.0
    %5298 = vmatmul.mubr.f32.gmra.mrb[0].mxu0 %v5188
    %v5299 = vpop.f32.mrb[0].mxu0
    %v5300 = vadd.f32 0.0, %v5299
    %v5301 = vpop.f32.mrb[0].mxu0
    %5302 = vmatprep.mubr.f32.mxu0 0.0
    %5303 = vmatmul.mubr.f32.gmra.mrb[0].mxu0 %v5189
    %v5304 = vpop.f32.mrb[0].mxu0
    %v5305 = vadd.f32 0.0, %v5304
    %v5306 = vpop.f32.mrb[0].mxu0
    %5307 = vmatprep.mubr.f32.mxu0 0.0
    %5308 = vmatmul.mubr.f32.gmra.mrb[0].mxu0 %v5190
    %v5309 = vpop.f32.mrb[0].mxu0
    %v5310 = vadd.f32 0.0, %v5309
    %v5311 = vpop.f32.mrb[0].mxu0
    %5312 = vmatprep.mubr.f32.mxu0 0.0
    %5313 = vmatmul.mubr.f32.gmra.mrb[0].mxu0 %v5191
    %v5314 = vpop.f32.mrb[0].mxu0
    %v5315 = vadd.f32 0.0, %v5314
    %v5316 = vpop.f32.mrb[0].mxu0
    %5317 = vmatprep.mubr.f32.mxu0 0.0
    %5318 = vmatmul.mubr.f32.gmra.mrb[0].mxu0 %v5192
    %v5319 = vpop.f32.mrb[0].mxu0
    %v5320 = vadd.f32 0.0, %v5319
    %v5321 = vpop.f32.mrb[0].mxu0
    %5322 = vmatprep.mubr.f32.mxu0 0.0
    %5323 = vmatmul.mubr.f32.gmra.mrb[0].mxu0 %v5193
    %v5324 = vpop.f32.mrb[0].mxu0
    %v5325 = vadd.f32 0.0, %v5324
    %v5326 = vpop.f32.mrb[0].mxu0
    %5327 = vmatprep.mubr.f32.mxu0 0.0
    %5328 = vmatmul.mubr.f32.gmra.mrb[0].mxu0 %v5194
    %v5329 = vpop.f32.mrb[0].mxu0
    %v5330 = vadd.f32 0.0, %v5329
    %v5331 = vpop.f32.mrb[0].mxu0
    %5332 = vmatprep.mubr.f32.mxu0 0.0
    %5333 = vmatmul.mubr.f32.gmra.mrb[0].mxu0 %v5195
    %v5334 = vpop.f32.mrb[0].mxu0
    %v5335 = vadd.f32 0.0, %v5334
    %v5336 = vpop.f32.mrb[0].mxu0
    %5337 = vmatprep.mubr.f32.mxu0 0.0
    %5338 = vmatmul.mubr.f32.gmra.mrb[0].mxu0 %v5196
    %v5339 = vpop.f32.mrb[0].mxu0
    %v5340 = vadd.f32 0.0, %v5339
    %v5341 = vpop.f32.mrb[0].mxu0
    %5342 = vmatprep.mubr.f32.mxu0 0.0
    %5343 = vmatmul.mubr.f32.gmra.mrb[0].mxu0 %v5197
    %v5344 = vpop.f32.mrb[0].mxu0
    %v5345 = vadd.f32 0.0, %v5344
    %v5346 = vpop.f32.mrb[0].mxu0
    %5347 = vmatprep.mubr.f32.mxu0 0.0
    %5348 = vmatmul.mubr.f32.gmra.mrb[0].mxu0 %v5198
    %v5349 = vpop.f32.mrb[0].mxu0
    %v5350 = vadd.f32 0.0, %v5349
    %v5351 = vpop.f32.mrb[0].mxu0
    %5352 = vmatprep.mubr.f32.mxu0 0.0
    %5353 = vmatmul.mubr.f32.gmra.mrb[0].mxu0 %v5199
    %v5354 = vpop.f32.mrb[0].mxu0
    %v5355 = vadd.f32 0.0, %v5354
    %v5356 = vpop.f32.mrb[0].mxu0
    %5357 = vmatprep.mubr.f32.mxu0 0.0
    %5358 = vmatmul.mubr.f32.gmra.mrb[0].mxu0 %v5200
    %v5359 = vpop.f32.mrb[0].mxu0
    %v5360 = vadd.f32 0.0, %v5359
    %v5361 = vpop.f32.mrb[0].mxu0
    %5362 = vmatprep.mubr.f32.mxu0 0.0
    %5363 = vmatmul.mubr.f32.gmra.mrb[0].mxu0 %v5201
    %v5364 = vpop.f32.mrb[0].mxu0
    %v5365 = vadd.f32 0.0, %v5364
    %v5366 = vpop.f32.mrb[0].mxu0
    %5367 = vmatprep.mubr.f32.mxu0 0.0
    %5368 = vmatmul.mubr.f32.gmra.mrb[0].mxu0 %v5202
    %v5369 = vpop.f32.mrb[0].mxu0
    %v5370 = vadd.f32 0.0, %v5369
    %v5371 = vpop.f32.mrb[0].mxu0
    %5372 = vmatprep.mubr.f32.mxu0 0.0
    %5373 = vmatmul.mubr.f32.gmra.mrb[0].mxu0 %v5203
    %v5374 = vpop.f32.mrb[0].mxu0
    %v5375 = vadd.f32 0.0, %v5374
    %v5376 = vpop.f32.mrb[0].mxu0
    %5377 = vmatprep.mubr.f32.mxu0 0.0
    %5378 = vmatmul.mubr.f32.gmra.mrb[0].mxu0 %v5204
    %v5379 = vpop.f32.mrb[0].mxu0
    %v5380 = vadd.f32 0.0, %v5379
    %v5381 = vpop.f32.mrb[0].mxu0
    %5382 = vmatprep.mubr.f32.mxu0 0.0
    %5383 = vmatmul.mubr.f32.gmra.mrb[0].mxu0 %v5205
    %v5384 = vpop.f32.mrb[0].mxu0
    %v5385 = vadd.f32 0.0, %v5384
    %v5386 = vpop.f32.mrb[0].mxu0
    %5387 = vmatprep.mubr.f32.mxu0 0.0
    %5388 = vmatmul.mubr.f32.gmra.mrb[0].mxu0 %v5206
    %v5389 = vpop.f32.mrb[0].mxu0
    %v5390 = vadd.f32 0.0, %v5389
    %v5391 = vpop.f32.mrb[0].mxu0
    %5392 = vmatprep.mubr.f32.mxu0 0.0
    %5393 = vmatmul.mubr.f32.gmra.mrb[0].mxu0 %v5207
    %v5394 = vpop.f32.mrb[0].mxu0
    %v5395 = vadd.f32 0.0, %v5394
    %v5396 = vpop.f32.mrb[0].mxu0
    %5397 = vmatprep.mubr.f32.mxu0 0.0
    %5398 = vmatmul.mubr.f32.gmra.mrb[0].mxu0 %v5208
    %v5399 = vpop.f32.mrb[0].mxu0
    %v5400 = vadd.f32 0.0, %v5399
    %v5401 = vpop.f32.mrb[0].mxu0
    %5402 = vmatprep.mubr.f32.mxu0 0.0
    %5403 = vmatmul.mubr.f32.gmra.mrb[0].mxu0 %v5209
    %v5404 = vpop.f32.mrb[0].mxu0
    %v5405 = vadd.f32 0.0, %v5404
    %v5406 = vpop.f32.mrb[0].mxu0
    %5407 = vmatprep.mubr.f32.mxu0 0.0
    %5408 = vmatmul.mubr.f32.gmra.mrb[0].mxu0 %v5210
    %v5409 = vpop.f32.mrb[0].mxu0
    %v5410 = vadd.f32 0.0, %v5409
    %v5411 = vpop.f32.mrb[0].mxu0
    %5412 = vmatprep.mubr.f32.mxu0 0.0
    %5413 = vmatmul.mubr.f32.gmra.mrb[0].mxu0 %v5211
    %v5414 = vpop.f32.mrb[0].mxu0
    %v5415 = vadd.f32 0.0, %v5414
    %v5416 = vpop.f32.mrb[0].mxu0
    %5417 = vmatprep.mubr.f32.mxu0 0.0
    %5418 = vmatmul.mubr.f32.gmra.mrb[0].mxu0 %v5212
    %v5419 = vpop.f32.mrb[0].mxu0
    %v5420 = vadd.f32 0.0, %v5419
    %v5421 = vpop.f32.mrb[0].mxu0
    %5422 = vmatprep.mubr.f32.mxu0 0.0
    %5423 = vmatmul.mubr.f32.gmra.mrb[0].mxu0 %v5213
    %v5424 = vpop.f32.mrb[0].mxu0
    %v5425 = vadd.f32 0.0, %v5424
    %v5426 = vpop.f32.mrb[0].mxu0
    %5427 = vmatprep.mubr.f32.mxu0 0.0
    %5428 = vmatmul.mubr.f32.gmra.mrb[0].mxu0 %v5214
    %v5429 = vpop.f32.mrb[0].mxu0
    %v5430 = vadd.f32 0.0, %v5429
    %v5431 = vpop.f32.mrb[0].mxu0
    %5432 = vmatprep.mubr.f32.mxu0 0.0
    %5433 = vmatmul.mubr.f32.gmra.mrb[0].mxu0 %v5215
    %v5434 = vpop.f32.mrb[0].mxu0
    %v5435 = vadd.f32 0.0, %v5434
    %v5436 = vpop.f32.mrb[0].mxu0
    %5437 = vdwg.mxu0
    %v5438 = vadd.f32 %v5160, %v5300
    %v5439 = vadd.f32 %v5161, %v5305
    %v5440 = vadd.f32 %v5162, %v5310
    %v5441 = vadd.f32 %v5163, %v5315
    %v5442 = vadd.f32 %v5164, %v5320
    %v5443 = vadd.f32 %v5165, %v5325
    %v5444 = vadd.f32 %v5166, %v5330
    %v5445 = vadd.f32 %v5167, %v5335
    %v5446 = vadd.f32 %v5168, %v5340
    %v5447 = vadd.f32 %v5169, %v5345
    %v5448 = vadd.f32 %v5170, %v5350
    %v5449 = vadd.f32 %v5171, %v5355
    %v5450 = vadd.f32 %v5172, %v5360
    %v5451 = vadd.f32 %v5173, %v5365
    %v5452 = vadd.f32 %v5174, %v5370
    %v5453 = vadd.f32 %v5175, %v5375
    %v5454 = vadd.f32 %v5176, %v5380
    %v5455 = vadd.f32 %v5177, %v5385
    %v5456 = vadd.f32 %v5178, %v5390
    %v5457 = vadd.f32 %v5179, %v5395
    %v5458 = vadd.f32 %v5180, %v5400
    %v5459 = vadd.f32 %v5181, %v5405
    %v5460 = vadd.f32 %v5182, %v5410
    %v5461 = vadd.f32 %v5183, %v5415
    %v5462 = vadd.f32 %v5184, %v5420
    %v5463 = vadd.f32 %v5185, %v5425
    %v5464 = vadd.f32 %v5186, %v5430
    %v5465 = vadd.f32 %v5187, %v5435
    %v5466 = vld [vmem:[%s5] sm:$0x1]
    %v5468 = vlaneseq
    %v5469 = vshrl.u32 %v5468, 7
    %v5470 = vsub.s32 0, %v5469
    %v5471 = vrot.slane %v5466, %v5470
    %v5473 = vadd.f32 %v5438, %v5471
    %v5474 = vadd.f32 %v5439, %v5471
    %v5475 = vadd.f32 %v5440, %v5471
    %v5476 = vadd.f32 %v5441, %v5471
    %v5477 = vadd.f32 %v5442, %v5471
    %v5478 = vadd.f32 %v5443, %v5471
    %v5479 = vadd.f32 %v5444, %v5471
    %v5480 = vadd.f32 %v5445, %v5471
    %v5481 = vadd.f32 %v5446, %v5471
    %v5482 = vadd.f32 %v5447, %v5471
    %v5483 = vadd.f32 %v5448, %v5471
    %v5484 = vadd.f32 %v5449, %v5471
    %v5485 = vadd.f32 %v5450, %v5471
    %v5486 = vadd.f32 %v5451, %v5471
    %v5487 = vadd.f32 %v5452, %v5471
    %v5488 = vadd.f32 %v5453, %v5471
    %v5489 = vadd.f32 %v5454, %v5471
    %v5490 = vadd.f32 %v5455, %v5471
    %v5491 = vadd.f32 %v5456, %v5471
    %v5492 = vadd.f32 %v5457, %v5471
    %v5493 = vadd.f32 %v5458, %v5471
    %v5494 = vadd.f32 %v5459, %v5471
    %v5495 = vadd.f32 %v5460, %v5471
    %v5496 = vadd.f32 %v5461, %v5471
    %v5497 = vadd.f32 %v5462, %v5471
    %v5498 = vadd.f32 %v5463, %v5471
    %v5499 = vadd.f32 %v5464, %v5471
    %v5500 = vadd.f32 %v5465, %v5471
    %vm5501 = vcmp.ge.f32.partialorder %v5473, 0.0
    %vm5502 = vcmp.ge.f32.partialorder %v5474, 0.0
    %vm5503 = vcmp.ge.f32.partialorder %v5475, 0.0
    %vm5504 = vcmp.ge.f32.partialorder %v5476, 0.0
    %vm5505 = vcmp.ge.f32.partialorder %v5477, 0.0
    %vm5506 = vcmp.ge.f32.partialorder %v5478, 0.0
    %vm5507 = vcmp.ge.f32.partialorder %v5479, 0.0
    %vm5508 = vcmp.ge.f32.partialorder %v5480, 0.0
    %vm5509 = vcmp.ge.f32.partialorder %v5481, 0.0
    %vm5510 = vcmp.ge.f32.partialorder %v5482, 0.0
    %vm5511 = vcmp.ge.f32.partialorder %v5483, 0.0
    %vm5512 = vcmp.ge.f32.partialorder %v5484, 0.0
    %vm5513 = vcmp.ge.f32.partialorder %v5485, 0.0
    %vm5514 = vcmp.ge.f32.partialorder %v5486, 0.0
    %vm5515 = vcmp.ge.f32.partialorder %v5487, 0.0
    %vm5516 = vcmp.ge.f32.partialorder %v5488, 0.0
    %vm5517 = vcmp.ge.f32.partialorder %v5489, 0.0
    %vm5518 = vcmp.ge.f32.partialorder %v5490, 0.0
    %vm5519 = vcmp.ge.f32.partialorder %v5491, 0.0
    %vm5520 = vcmp.ge.f32.partialorder %v5492, 0.0
    %vm5521 = vcmp.ge.f32.partialorder %v5493, 0.0
    %vm5522 = vcmp.ge.f32.partialorder %v5494, 0.0
    %vm5523 = vcmp.ge.f32.partialorder %v5495, 0.0
    %vm5524 = vcmp.ge.f32.partialorder %v5496, 0.0
    %vm5525 = vcmp.ge.f32.partialorder %v5497, 0.0
    %vm5526 = vcmp.ge.f32.partialorder %v5498, 0.0
    %vm5527 = vcmp.ge.f32.partialorder %v5499, 0.0
    %vm5528 = vcmp.ge.f32.partialorder %v5500, 0.0
    %v5529 = vmul.f32 %v5473, 0.01
    %v5530 = vmul.f32 %v5474, 0.01
    %v5531 = vmul.f32 %v5475, 0.01
    %v5532 = vmul.f32 %v5476, 0.01
    %v5533 = vmul.f32 %v5477, 0.01
    %v5534 = vmul.f32 %v5478, 0.01
    %v5535 = vmul.f32 %v5479, 0.01
    %v5536 = vmul.f32 %v5480, 0.01
    %v5537 = vmul.f32 %v5481, 0.01
    %v5538 = vmul.f32 %v5482, 0.01
    %v5539 = vmul.f32 %v5483, 0.01
    %v5540 = vmul.f32 %v5484, 0.01
    %v5541 = vmul.f32 %v5485, 0.01
    %v5542 = vmul.f32 %v5486, 0.01
    %v5543 = vmul.f32 %v5487, 0.01
    %v5544 = vmul.f32 %v5488, 0.01
    %v5545 = vmul.f32 %v5489, 0.01
    %v5546 = vmul.f32 %v5490, 0.01
    %v5547 = vmul.f32 %v5491, 0.01
    %v5548 = vmul.f32 %v5492, 0.01
    %v5549 = vmul.f32 %v5493, 0.01
    %v5550 = vmul.f32 %v5494, 0.01
    %v5551 = vmul.f32 %v5495, 0.01
    %v5552 = vmul.f32 %v5496, 0.01
    %v5553 = vmul.f32 %v5497, 0.01
    %v5554 = vmul.f32 %v5498, 0.01
    %v5555 = vmul.f32 %v5499, 0.01
    %v5556 = vmul.f32 %v5500, 0.01
    %v5557 = vsel %vm5501, %v5473, %v5529
    %v5558 = vsel %vm5502, %v5474, %v5530
    %v5559 = vsel %vm5503, %v5475, %v5531
    %v5560 = vsel %vm5504, %v5476, %v5532
    %v5561 = vsel %vm5505, %v5477, %v5533
    %v5562 = vsel %vm5506, %v5478, %v5534
    %v5563 = vsel %vm5507, %v5479, %v5535
    %v5564 = vsel %vm5508, %v5480, %v5536
    %v5565 = vsel %vm5509, %v5481, %v5537
    %v5566 = vsel %vm5510, %v5482, %v5538
    %v5567 = vsel %vm5511, %v5483, %v5539
    %v5568 = vsel %vm5512, %v5484, %v5540
    %v5569 = vsel %vm5513, %v5485, %v5541
    %v5570 = vsel %vm5514, %v5486, %v5542
    %v5571 = vsel %vm5515, %v5487, %v5543
    %v5572 = vsel %vm5516, %v5488, %v5544
    %v5573 = vsel %vm5517, %v5489, %v5545
    %v5574 = vsel %vm5518, %v5490, %v5546
    %v5575 = vsel %vm5519, %v5491, %v5547
    %v5576 = vsel %vm5520, %v5492, %v5548
    %v5577 = vsel %vm5521, %v5493, %v5549
    %v5578 = vsel %vm5522, %v5494, %v5550
    %v5579 = vsel %vm5523, %v5495, %v5551
    %v5580 = vsel %vm5524, %v5496, %v5552
    %v5581 = vsel %vm5525, %v5497, %v5553
    %v5582 = vsel %vm5526, %v5498, %v5554
    %v5583 = vsel %vm5527, %v5499, %v5555
    %v5584 = vsel %vm5528, %v5500, %v5556
    %v5585 = vld [vmem:[%s6] sm:$0xff]
    %v5586 = vld [vmem:[%s6 + $0x8] sm:$0xff]
    %v5587 = vld [vmem:[%s6 + $0x10] sm:$0xff]
    %v5588 = vld [vmem:[%s6 + $0x18] sm:$0xff]
    %v5589 = vld [vmem:[%s6 + $0x20] sm:$0xff]
    %v5590 = vld [vmem:[%s6 + $0x28] sm:$0xff]
    %v5591 = vld [vmem:[%s6 + $0x30] sm:$0xff]
    %v5592 = vld [vmem:[%s6 + $0x38] sm:$0xff]
    %v5593 = vld [vmem:[%s6 + $0x40] sm:$0xff]
    %v5594 = vld [vmem:[%s6 + $0x48] sm:$0xff]
    %v5595 = vld [vmem:[%s6 + $0x50] sm:$0xff]
    %v5596 = vld [vmem:[%s6 + $0x58] sm:$0xff]
    %v5597 = vld [vmem:[%s6 + $0x60] sm:$0xff]
    %v5598 = vld [vmem:[%s6 + $0x68] sm:$0xff]
    %v5599 = vld [vmem:[%s6 + $0x70] sm:$0xff]
    %v5600 = vld [vmem:[%s6 + $0x78] sm:$0xff]
    %v5601 = vld [vmem:[%s6 + $0x80] sm:$0xff]
    %v5602 = vld [vmem:[%s6 + $0x88] sm:$0xff]
    %v5603 = vld [vmem:[%s6 + $0x90] sm:$0xff]
    %v5604 = vld [vmem:[%s6 + $0x98] sm:$0xff]
    %v5605 = vld [vmem:[%s6 + $0xa0] sm:$0xff]
    %v5606 = vld [vmem:[%s6 + $0xa8] sm:$0xff]
    %v5607 = vld [vmem:[%s6 + $0xb0] sm:$0xff]
    %v5608 = vld [vmem:[%s6 + $0xb8] sm:$0xff]
    %v5609 = vld [vmem:[%s6 + $0xc0] sm:$0xff]
    %v5610 = vld [vmem:[%s6 + $0xc8] sm:$0xff]
    %v5611 = vld [vmem:[%s6 + $0xd0] sm:$0xff]
    %v5612 = vld [vmem:[%s6 + $0xd8] sm:$0xff]
    %v5613 = vld [vmem:[%s6 + $0xe0] sm:$0xff]
    %v5614 = vld [vmem:[%s6 + $0xe8] sm:$0xff]
    %v5615 = vld [vmem:[%s6 + $0xf0] sm:$0xff]
    %v5616 = vld [vmem:[%s6 + $0xf8] sm:$0xff]
    %v5617 = vld [vmem:[%s6 + $0x100] sm:$0xff]
    %v5618 = vld [vmem:[%s6 + $0x108] sm:$0xff]
    %v5619 = vld [vmem:[%s6 + $0x110] sm:$0xff]
    %v5620 = vld [vmem:[%s6 + $0x118] sm:$0xff]
    %v5621 = vld [vmem:[%s6 + $0x120] sm:$0xff]
    %v5622 = vld [vmem:[%s6 + $0x128] sm:$0xff]
    %v5623 = vld [vmem:[%s6 + $0x130] sm:$0xff]
    %v5624 = vld [vmem:[%s6 + $0x138] sm:$0xff]
    %v5625 = vld [vmem:[%s6 + $0x140] sm:$0xff]
    %v5626 = vld [vmem:[%s6 + $0x148] sm:$0xff]
    %v5627 = vld [vmem:[%s6 + $0x150] sm:$0xff]
    %v5628 = vld [vmem:[%s6 + $0x158] sm:$0xff]
    %v5629 = vld [vmem:[%s6 + $0x160] sm:$0xff]
    %v5630 = vld [vmem:[%s6 + $0x168] sm:$0xff]
    %v5631 = vld [vmem:[%s6 + $0x170] sm:$0xff]
    %v5632 = vld [vmem:[%s6 + $0x178] sm:$0xff]
    %v5633 = vld [vmem:[%s6 + $0x180] sm:$0xff]
    %v5634 = vld [vmem:[%s6 + $0x188] sm:$0xff]
    %v5635 = vld [vmem:[%s6 + $0x190] sm:$0xff]
    %v5636 = vld [vmem:[%s6 + $0x198] sm:$0xff]
    %v5637 = vld [vmem:[%s6 + $0x1a0] sm:$0xff]
    %v5638 = vld [vmem:[%s6 + $0x1a8] sm:$0xff]
    %v5639 = vld [vmem:[%s6 + $0x1b0] sm:$0xff]
    %v5640 = vld [vmem:[%s6 + $0x1b8] sm:$0xff]
    %v5641 = vld [vmem:[%s6 + $0x1c0] sm:$0xff]
    %v5642 = vld [vmem:[%s6 + $0x1c8] sm:$0xff]
    %v5643 = vld [vmem:[%s6 + $0x1d0] sm:$0xff]
    %v5644 = vld [vmem:[%s6 + $0x1d8] sm:$0xff]
    %v5645 = vld [vmem:[%s6 + $0x1e0] sm:$0xff]
    %v5646 = vld [vmem:[%s6 + $0x1e8] sm:$0xff]
    %v5647 = vld [vmem:[%s6 + $0x1f0] sm:$0xff]
    %v5648 = vld [vmem:[%s6 + $0x1f8] sm:$0xff]
    %v5650 = vsel %vm2663, %v5586, 0
    %v5653 = vsel %vm2663, %v5588, 0
    %v5656 = vsel %vm2663, %v5590, 0
    %v5659 = vsel %vm2663, %v5592, 0
    %v5662 = vsel %vm2663, %v5594, 0
    %v5665 = vsel %vm2663, %v5596, 0
    %v5668 = vsel %vm2663, %v5598, 0
    %v5671 = vsel %vm2663, %v5600, 0
    %v5674 = vsel %vm2663, %v5602, 0
    %v5677 = vsel %vm2663, %v5604, 0
    %v5680 = vsel %vm2663, %v5606, 0
    %v5683 = vsel %vm2663, %v5608, 0
    %v5686 = vsel %vm2663, %v5610, 0
    %v5689 = vsel %vm2663, %v5612, 0
    %v5692 = vsel %vm2663, %v5614, 0
    %v5695 = vsel %vm2663, %v5616, 0
    %v5698 = vsel %vm2663, %v5618, 0
    %v5701 = vsel %vm2663, %v5620, 0
    %v5704 = vsel %vm2663, %v5622, 0
    %v5707 = vsel %vm2663, %v5624, 0
    %v5710 = vsel %vm2663, %v5626, 0
    %v5713 = vsel %vm2663, %v5628, 0
    %v5716 = vsel %vm2663, %v5630, 0
    %v5719 = vsel %vm2663, %v5632, 0
    %v5722 = vsel %vm2663, %v5634, 0
    %v5725 = vsel %vm2663, %v5636, 0
    %v5728 = vsel %vm2663, %v5638, 0
    %v5731 = vsel %vm2663, %v5640, 0
    %v5734 = vsel %vm2663, %v5642, 0
    %v5737 = vsel %vm2663, %v5644, 0
    %v5740 = vsel %vm2663, %v5646, 0
    %v5743 = vsel %vm2663, %v5648, 0
    %v5746 = vsel %vm2760, %v5584, 0
    %5748 = vmatprep.subr.mxu0 0.0
    %5749 = vmatpush1.msra.mxu0 %v5557
    %5750 = vmatprep.subr.mxu0 0.0
    %5751 = vmatpush1.msra.mxu0 %v5558
    %5752 = vmatprep.subr.mxu0 0.0
    %5753 = vmatpush1.msra.mxu0 %v5559
    %5754 = vmatprep.subr.mxu0 0.0
    %5755 = vmatpush1.msra.mxu0 %v5560
    %5756 = vmatprep.subr.mxu0 0.0
    %5757 = vmatpush1.msra.mxu0 %v5561
    %5758 = vmatprep.subr.mxu0 0.0
    %5759 = vmatpush1.msra.mxu0 %v5562
    %5760 = vmatprep.subr.mxu0 0.0
    %5761 = vmatpush1.msra.mxu0 %v5563
    %5762 = vmatprep.subr.mxu0 0.0
    %5763 = vmatpush1.msra.mxu0 %v5564
    %5764 = vmatprep.subr.mxu0 0.0
    %5765 = vmatpush1.msra.mxu0 %v5565
    %5766 = vmatprep.subr.mxu0 0.0
    %5767 = vmatpush1.msra.mxu0 %v5566
    %5768 = vmatprep.subr.mxu0 0.0
    %5769 = vmatpush1.msra.mxu0 %v5567
    %5770 = vmatprep.subr.mxu0 0.0
    %5771 = vmatpush1.msra.mxu0 %v5568
    %5772 = vmatprep.subr.mxu0 0.0
    %5773 = vmatpush1.msra.mxu0 %v5569
    %5774 = vmatprep.subr.mxu0 0.0
    %5775 = vmatpush1.msra.mxu0 %v5570
    %5776 = vmatprep.subr.mxu0 0.0
    %5777 = vmatpush1.msra.mxu0 %v5571
    %5778 = vmatprep.subr.mxu0 0.0
    %5779 = vmatpush1.msra.mxu0 %v5572
    %5780 = vmatprep.subr.mxu0 0.0
    %5781 = vmatpush1.msra.mxu0 %v5573
    %5782 = vmatprep.subr.mxu0 0.0
    %5783 = vmatpush1.msra.mxu0 %v5574
    %5784 = vmatprep.subr.mxu0 0.0
    %5785 = vmatpush1.msra.mxu0 %v5575
    %5786 = vmatprep.subr.mxu0 0.0
    %5787 = vmatpush1.msra.mxu0 %v5576
    %5788 = vmatprep.subr.mxu0 0.0
    %5789 = vmatpush1.msra.mxu0 %v5577
    %5790 = vmatprep.subr.mxu0 0.0
    %5791 = vmatpush1.msra.mxu0 %v5578
    %5792 = vmatprep.subr.mxu0 0.0
    %5793 = vmatpush1.msra.mxu0 %v5579
    %5794 = vmatprep.subr.mxu0 0.0
    %5795 = vmatpush1.msra.mxu0 %v5580
    %5796 = vmatprep.subr.mxu0 0.0
    %5797 = vmatpush1.msra.mxu0 %v5581
    %5798 = vmatprep.subr.mxu0 0.0
    %5799 = vmatpush1.msra.mxu0 %v5582
    %5800 = vmatprep.subr.mxu0 0.0
    %5801 = vmatpush1.msra.mxu0 %v5583
    %5802 = vmatprep.subr.mxu0 0.0
    %5803 = vmatpush1.msra.mxu0 %v5746
    %5804 = vmatprep.subr.mxu0 0.0
    %5805 = vmatpush1.msra.mxu0 0.0
    %5806 = vmatprep.subr.mxu0 0.0
    %5807 = vmatpush1.msra.mxu0 0.0
    %5808 = vmatprep.subr.mxu0 0.0
    %5809 = vmatpush1.msra.mxu0 0.0
    %5810 = vmatprep.subr.mxu0 0.0
    %5811 = vmatpush1.msra.mxu0 0.0
    %5812 = vmatprep.mubr.f32.mxu0 %v5650
    %5813 = vmatmul.mubr.f32.gmra.mrb[0].mxu0 %v5585
    %v5814 = vpop.f32.mrb[0].mxu0
    %v5815 = vadd.f32 0.0, %v5814
    %v5816 = vpop.f32.mrb[0].mxu0
    %5817 = vmatprep.mubr.f32.mxu0 %v5653
    %5818 = vmatmul.mubr.f32.gmra.mrb[0].mxu0 %v5587
    %v5819 = vpop.f32.mrb[0].mxu0
    %v5820 = vadd.f32 0.0, %v5819
    %v5821 = vpop.f32.mrb[0].mxu0
    %5822 = vmatprep.mubr.f32.mxu0 %v5656
    %5823 = vmatmul.mubr.f32.gmra.mrb[0].mxu0 %v5589
    %v5824 = vpop.f32.mrb[0].mxu0
    %v5825 = vadd.f32 0.0, %v5824
    %v5826 = vpop.f32.mrb[0].mxu0
    %5827 = vmatprep.mubr.f32.mxu0 %v5659
    %5828 = vmatmul.mubr.f32.gmra.mrb[0].mxu0 %v5591
    %v5829 = vpop.f32.mrb[0].mxu0
    %v5830 = vadd.f32 0.0, %v5829
    %v5831 = vpop.f32.mrb[0].mxu0
    %5832 = vmatprep.mubr.f32.mxu0 %v5662
    %5833 = vmatmul.mubr.f32.gmra.mrb[0].mxu0 %v5593
    %v5834 = vpop.f32.mrb[0].mxu0
    %v5835 = vadd.f32 0.0, %v5834
    %v5836 = vpop.f32.mrb[0].mxu0
    %5837 = vmatprep.mubr.f32.mxu0 %v5665
    %5838 = vmatmul.mubr.f32.gmra.mrb[0].mxu0 %v5595
    %v5839 = vpop.f32.mrb[0].mxu0
    %v5840 = vadd.f32 0.0, %v5839
    %v5841 = vpop.f32.mrb[0].mxu0
    %5842 = vmatprep.mubr.f32.mxu0 %v5668
    %5843 = vmatmul.mubr.f32.gmra.mrb[0].mxu0 %v5597
    %v5844 = vpop.f32.mrb[0].mxu0
    %v5845 = vadd.f32 0.0, %v5844
    %v5846 = vpop.f32.mrb[0].mxu0
    %5847 = vmatprep.mubr.f32.mxu0 %v5671
    %5848 = vmatmul.mubr.f32.gmra.mrb[0].mxu0 %v5599
    %v5849 = vpop.f32.mrb[0].mxu0
    %v5850 = vadd.f32 0.0, %v5849
    %v5851 = vpop.f32.mrb[0].mxu0
    %5852 = vmatprep.mubr.f32.mxu0 %v5674
    %5853 = vmatmul.mubr.f32.gmra.mrb[0].mxu0 %v5601
    %v5854 = vpop.f32.mrb[0].mxu0
    %v5855 = vadd.f32 0.0, %v5854
    %v5856 = vpop.f32.mrb[0].mxu0
    %5857 = vmatprep.mubr.f32.mxu0 %v5677
    %5858 = vmatmul.mubr.f32.gmra.mrb[0].mxu0 %v5603
    %v5859 = vpop.f32.mrb[0].mxu0
    %v5860 = vadd.f32 0.0, %v5859
    %v5861 = vpop.f32.mrb[0].mxu0
    %5862 = vmatprep.mubr.f32.mxu0 %v5680
    %5863 = vmatmul.mubr.f32.gmra.mrb[0].mxu0 %v5605
    %v5864 = vpop.f32.mrb[0].mxu0
    %v5865 = vadd.f32 0.0, %v5864
    %v5866 = vpop.f32.mrb[0].mxu0
    %5867 = vmatprep.mubr.f32.mxu0 %v5683
    %5868 = vmatmul.mubr.f32.gmra.mrb[0].mxu0 %v5607
    %v5869 = vpop.f32.mrb[0].mxu0
    %v5870 = vadd.f32 0.0, %v5869
    %v5871 = vpop.f32.mrb[0].mxu0
    %5872 = vmatprep.mubr.f32.mxu0 %v5686
    %5873 = vmatmul.mubr.f32.gmra.mrb[0].mxu0 %v5609
    %v5874 = vpop.f32.mrb[0].mxu0
    %v5875 = vadd.f32 0.0, %v5874
    %v5876 = vpop.f32.mrb[0].mxu0
    %5877 = vmatprep.mubr.f32.mxu0 %v5689
    %5878 = vmatmul.mubr.f32.gmra.mrb[0].mxu0 %v5611
    %v5879 = vpop.f32.mrb[0].mxu0
    %v5880 = vadd.f32 0.0, %v5879
    %v5881 = vpop.f32.mrb[0].mxu0
    %5882 = vmatprep.mubr.f32.mxu0 %v5692
    %5883 = vmatmul.mubr.f32.gmra.mrb[0].mxu0 %v5613
    %v5884 = vpop.f32.mrb[0].mxu0
    %v5885 = vadd.f32 0.0, %v5884
    %v5886 = vpop.f32.mrb[0].mxu0
    %5887 = vmatprep.mubr.f32.mxu0 %v5695
    %5888 = vmatmul.mubr.f32.gmra.mrb[0].mxu0 %v5615
    %v5889 = vpop.f32.mrb[0].mxu0
    %v5890 = vadd.f32 0.0, %v5889
    %v5891 = vpop.f32.mrb[0].mxu0
    %5892 = vmatprep.mubr.f32.mxu0 %v5698
    %5893 = vmatmul.mubr.f32.gmra.mrb[0].mxu0 %v5617
    %v5894 = vpop.f32.mrb[0].mxu0
    %v5895 = vadd.f32 0.0, %v5894
    %v5896 = vpop.f32.mrb[0].mxu0
    %5897 = vmatprep.mubr.f32.mxu0 %v5701
    %5898 = vmatmul.mubr.f32.gmra.mrb[0].mxu0 %v5619
    %v5899 = vpop.f32.mrb[0].mxu0
    %v5900 = vadd.f32 0.0, %v5899
    %v5901 = vpop.f32.mrb[0].mxu0
    %5902 = vmatprep.mubr.f32.mxu0 %v5704
    %5903 = vmatmul.mubr.f32.gmra.mrb[0].mxu0 %v5621
    %v5904 = vpop.f32.mrb[0].mxu0
    %v5905 = vadd.f32 0.0, %v5904
    %v5906 = vpop.f32.mrb[0].mxu0
    %5907 = vmatprep.mubr.f32.mxu0 %v5707
    %5908 = vmatmul.mubr.f32.gmra.mrb[0].mxu0 %v5623
    %v5909 = vpop.f32.mrb[0].mxu0
    %v5910 = vadd.f32 0.0, %v5909
    %v5911 = vpop.f32.mrb[0].mxu0
    %5912 = vmatprep.mubr.f32.mxu0 %v5710
    %5913 = vmatmul.mubr.f32.gmra.mrb[0].mxu0 %v5625
    %v5914 = vpop.f32.mrb[0].mxu0
    %v5915 = vadd.f32 0.0, %v5914
    %v5916 = vpop.f32.mrb[0].mxu0
    %5917 = vmatprep.mubr.f32.mxu0 %v5713
    %5918 = vmatmul.mubr.f32.gmra.mrb[0].mxu0 %v5627
    %v5919 = vpop.f32.mrb[0].mxu0
    %v5920 = vadd.f32 0.0, %v5919
    %v5921 = vpop.f32.mrb[0].mxu0
    %5922 = vmatprep.mubr.f32.mxu0 %v5716
    %5923 = vmatmul.mubr.f32.gmra.mrb[0].mxu0 %v5629
    %v5924 = vpop.f32.mrb[0].mxu0
    %v5925 = vadd.f32 0.0, %v5924
    %v5926 = vpop.f32.mrb[0].mxu0
    %5927 = vmatprep.mubr.f32.mxu0 %v5719
    %5928 = vmatmul.mubr.f32.gmra.mrb[0].mxu0 %v5631
    %v5929 = vpop.f32.mrb[0].mxu0
    %v5930 = vadd.f32 0.0, %v5929
    %v5931 = vpop.f32.mrb[0].mxu0
    %5932 = vmatprep.mubr.f32.mxu0 %v5722
    %5933 = vmatmul.mubr.f32.gmra.mrb[0].mxu0 %v5633
    %v5934 = vpop.f32.mrb[0].mxu0
    %v5935 = vadd.f32 0.0, %v5934
    %v5936 = vpop.f32.mrb[0].mxu0
    %5937 = vmatprep.mubr.f32.mxu0 %v5725
    %5938 = vmatmul.mubr.f32.gmra.mrb[0].mxu0 %v5635
    %v5939 = vpop.f32.mrb[0].mxu0
    %v5940 = vadd.f32 0.0, %v5939
    %v5941 = vpop.f32.mrb[0].mxu0
    %5942 = vmatprep.mubr.f32.mxu0 %v5728
    %5943 = vmatmul.mubr.f32.gmra.mrb[0].mxu0 %v5637
    %v5944 = vpop.f32.mrb[0].mxu0
    %v5945 = vadd.f32 0.0, %v5944
    %v5946 = vpop.f32.mrb[0].mxu0
    %5947 = vmatprep.mubr.f32.mxu0 %v5731
    %5948 = vmatmul.mubr.f32.gmra.mrb[0].mxu0 %v5639
    %v5949 = vpop.f32.mrb[0].mxu0
    %v5950 = vadd.f32 0.0, %v5949
    %v5951 = vpop.f32.mrb[0].mxu0
    %5952 = vmatprep.mubr.f32.mxu0 %v5734
    %5953 = vmatmul.mubr.f32.gmra.mrb[0].mxu0 %v5641
    %v5954 = vpop.f32.mrb[0].mxu0
    %v5955 = vadd.f32 0.0, %v5954
    %v5956 = vpop.f32.mrb[0].mxu0
    %5957 = vmatprep.mubr.f32.mxu0 %v5737
    %5958 = vmatmul.mubr.f32.gmra.mrb[0].mxu0 %v5643
    %v5959 = vpop.f32.mrb[0].mxu0
    %v5960 = vadd.f32 0.0, %v5959
    %v5961 = vpop.f32.mrb[0].mxu0
    %5962 = vmatprep.mubr.f32.mxu0 %v5740
    %5963 = vmatmul.mubr.f32.gmra.mrb[0].mxu0 %v5645
    %v5964 = vpop.f32.mrb[0].mxu0
    %v5965 = vadd.f32 0.0, %v5964
    %v5966 = vpop.f32.mrb[0].mxu0
    %5967 = vmatprep.mubr.f32.mxu0 %v5743
    %5968 = vmatmul.mubr.f32.gmra.mrb[0].mxu0 %v5647
    %v5969 = vpop.f32.mrb[0].mxu0
    %v5970 = vadd.f32 0.0, %v5969
    %v5971 = vpop.f32.mrb[0].mxu0
    %5972 = vdwg.mxu0
    %5973 = vst [vmem:[#allocation3] sm:$0xff] %v5815
    %5974 = vst [vmem:[#allocation3 + $0x8] sm:$0xff] %v5820
    %5975 = vst [vmem:[#allocation3 + $0x10] sm:$0xff] %v5825
    %5976 = vst [vmem:[#allocation3 + $0x18] sm:$0xff] %v5830
    %5977 = vst [vmem:[#allocation3 + $0x20] sm:$0xff] %v5835
    %5978 = vst [vmem:[#allocation3 + $0x28] sm:$0xff] %v5840
    %5979 = vst [vmem:[#allocation3 + $0x30] sm:$0xff] %v5845
    %5980 = vst [vmem:[#allocation3 + $0x38] sm:$0xff] %v5850
    %5981 = vst [vmem:[#allocation3 + $0x40] sm:$0xff] %v5855
    %5982 = vst [vmem:[#allocation3 + $0x48] sm:$0xff] %v5860
    %5983 = vst [vmem:[#allocation3 + $0x50] sm:$0xff] %v5865
    %5984 = vst [vmem:[#allocation3 + $0x58] sm:$0xff] %v5870
    %5985 = vst [vmem:[#allocation3 + $0x60] sm:$0xff] %v5875
    %5986 = vst [vmem:[#allocation3 + $0x68] sm:$0xff] %v5880
    %5987 = vst [vmem:[#allocation3 + $0x70] sm:$0xff] %v5885
    %5988 = vst [vmem:[#allocation3 + $0x78] sm:$0xff] %v5890
    %5989 = vst [vmem:[#allocation3 + $0x80] sm:$0xff] %v5895
    %5990 = vst [vmem:[#allocation3 + $0x88] sm:$0xff] %v5900
    %5991 = vst [vmem:[#allocation3 + $0x90] sm:$0xff] %v5905
    %5992 = vst [vmem:[#allocation3 + $0x98] sm:$0xff] %v5910
    %5993 = vst [vmem:[#allocation3 + $0xa0] sm:$0xff] %v5915
    %5994 = vst [vmem:[#allocation3 + $0xa8] sm:$0xff] %v5920
    %5995 = vst [vmem:[#allocation3 + $0xb0] sm:$0xff] %v5925
    %5996 = vst [vmem:[#allocation3 + $0xb8] sm:$0xff] %v5930
    %5997 = vst [vmem:[#allocation3 + $0xc0] sm:$0xff] %v5935
    %5998 = vst [vmem:[#allocation3 + $0xc8] sm:$0xff] %v5940
    %5999 = vst [vmem:[#allocation3 + $0xd0] sm:$0xff] %v5945
    %6000 = vst [vmem:[#allocation3 + $0xd8] sm:$0xff] %v5950
    %6001 = vst [vmem:[#allocation3 + $0xe0] sm:$0xff] %v5955
    %6002 = vst [vmem:[#allocation3 + $0xe8] sm:$0xff] %v5960
    %6003 = vst [vmem:[#allocation3 + $0xf0] sm:$0xff] %v5965
    %6004 = vst [vmem:[#allocation3 + $0xf8] sm:$0xff] %v5970
    %v6005 = vld [vmem:[#allocation3] sm:$0xff]
    %v6006 = vld [vmem:[#allocation3 + $0x8] sm:$0xff]
    %v6007 = vld [vmem:[#allocation3 + $0x10] sm:$0xff]
    %v6008 = vld [vmem:[#allocation3 + $0x18] sm:$0xff]
    %v6009 = vld [vmem:[#allocation3 + $0x20] sm:$0xff]
    %v6010 = vld [vmem:[#allocation3 + $0x28] sm:$0xff]
    %v6011 = vld [vmem:[#allocation3 + $0x30] sm:$0xff]
    %v6012 = vld [vmem:[#allocation3 + $0x38] sm:$0xff]
    %v6013 = vld [vmem:[#allocation3 + $0x40] sm:$0xff]
    %v6014 = vld [vmem:[#allocation3 + $0x48] sm:$0xff]
    %v6015 = vld [vmem:[#allocation3 + $0x50] sm:$0xff]
    %v6016 = vld [vmem:[#allocation3 + $0x58] sm:$0xff]
    %v6017 = vld [vmem:[#allocation3 + $0x60] sm:$0xff]
    %v6018 = vld [vmem:[#allocation3 + $0x68] sm:$0xff]
    %v6019 = vld [vmem:[#allocation3 + $0x70] sm:$0xff]
    %v6020 = vld [vmem:[#allocation3 + $0x78] sm:$0xff]
    %v6021 = vld [vmem:[#allocation3 + $0x80] sm:$0xff]
    %v6022 = vld [vmem:[#allocation3 + $0x88] sm:$0xff]
    %v6023 = vld [vmem:[#allocation3 + $0x90] sm:$0xff]
    %v6024 = vld [vmem:[#allocation3 + $0x98] sm:$0xff]
    %v6025 = vld [vmem:[#allocation3 + $0xa0] sm:$0xff]
    %v6026 = vld [vmem:[#allocation3 + $0xa8] sm:$0xff]
    %v6027 = vld [vmem:[#allocation3 + $0xb0] sm:$0xff]
    %v6028 = vld [vmem:[#allocation3 + $0xb8] sm:$0xff]
    %v6029 = vld [vmem:[#allocation3 + $0xc0] sm:$0xff]
    %v6030 = vld [vmem:[#allocation3 + $0xc8] sm:$0xff]
    %v6031 = vld [vmem:[#allocation3 + $0xd0] sm:$0xff]
    %v6032 = vld [vmem:[#allocation3 + $0xd8] sm:$0x3f]
    %v6033 = vld [vmem:[#allocation9] sm:$0xff]
    %v6034 = vld [vmem:[#allocation9 + $0x8] sm:$0xff]
    %v6035 = vld [vmem:[#allocation9 + $0x10] sm:$0xff]
    %v6036 = vld [vmem:[#allocation9 + $0x18] sm:$0xff]
    %v6037 = vld [vmem:[#allocation9 + $0x20] sm:$0xff]
    %v6038 = vld [vmem:[#allocation9 + $0x28] sm:$0xff]
    %v6039 = vld [vmem:[#allocation9 + $0x30] sm:$0xff]
    %v6040 = vld [vmem:[#allocation9 + $0x38] sm:$0xff]
    %v6041 = vld [vmem:[#allocation9 + $0x40] sm:$0xff]
    %v6042 = vld [vmem:[#allocation9 + $0x48] sm:$0xff]
    %v6043 = vld [vmem:[#allocation9 + $0x50] sm:$0xff]
    %v6044 = vld [vmem:[#allocation9 + $0x58] sm:$0xff]
    %v6045 = vld [vmem:[#allocation9 + $0x60] sm:$0xff]
    %v6046 = vld [vmem:[#allocation9 + $0x68] sm:$0xff]
    %v6047 = vld [vmem:[#allocation9 + $0x70] sm:$0xff]
    %v6048 = vld [vmem:[#allocation9 + $0x78] sm:$0xff]
    %v6049 = vld [vmem:[#allocation3 + $0x1] sm:$0xff]
    %v6050 = vld [vmem:[#allocation3 + $0x9] sm:$0xff]
    %v6051 = vld [vmem:[#allocation3 + $0x11] sm:$0xff]
    %v6052 = vld [vmem:[#allocation3 + $0x19] sm:$0xff]
    %v6053 = vld [vmem:[#allocation3 + $0x21] sm:$0xff]
    %v6054 = vld [vmem:[#allocation3 + $0x29] sm:$0xff]
    %v6055 = vld [vmem:[#allocation3 + $0x31] sm:$0xff]
    %v6056 = vld [vmem:[#allocation3 + $0x39] sm:$0xff]
    %v6057 = vld [vmem:[#allocation3 + $0x41] sm:$0xff]
    %v6058 = vld [vmem:[#allocation3 + $0x49] sm:$0xff]
    %v6059 = vld [vmem:[#allocation3 + $0x51] sm:$0xff]
    %v6060 = vld [vmem:[#allocation3 + $0x59] sm:$0xff]
    %v6061 = vld [vmem:[#allocation3 + $0x61] sm:$0xff]
    %v6062 = vld [vmem:[#allocation3 + $0x69] sm:$0xff]
    %v6063 = vld [vmem:[#allocation3 + $0x71] sm:$0xff]
    %v6064 = vld [vmem:[#allocation3 + $0x79] sm:$0xff]
    %v6065 = vld [vmem:[#allocation3 + $0x81] sm:$0xff]
    %v6066 = vld [vmem:[#allocation3 + $0x89] sm:$0xff]
    %v6067 = vld [vmem:[#allocation3 + $0x91] sm:$0xff]
    %v6068 = vld [vmem:[#allocation3 + $0x99] sm:$0xff]
    %v6069 = vld [vmem:[#allocation3 + $0xa1] sm:$0xff]
    %v6070 = vld [vmem:[#allocation3 + $0xa9] sm:$0xff]
    %v6071 = vld [vmem:[#allocation3 + $0xb1] sm:$0xff]
    %v6072 = vld [vmem:[#allocation3 + $0xb9] sm:$0xff]
    %v6073 = vld [vmem:[#allocation3 + $0xc1] sm:$0xff]
    %v6074 = vld [vmem:[#allocation3 + $0xc9] sm:$0xff]
    %v6075 = vld [vmem:[#allocation3 + $0xd1] sm:$0xff]
    %v6076 = vld [vmem:[#allocation3 + $0xd9] sm:$0x3f]
    %s6077 = scalar_lea.vmem [#allocation9], 128
    %v6078 = vld [vmem:[%s6077] sm:$0xff]
    %v6079 = vld [vmem:[%s6077 + $0x8] sm:$0xff]
    %v6080 = vld [vmem:[%s6077 + $0x10] sm:$0xff]
    %v6081 = vld [vmem:[%s6077 + $0x18] sm:$0xff]
    %v6082 = vld [vmem:[%s6077 + $0x20] sm:$0xff]
    %v6083 = vld [vmem:[%s6077 + $0x28] sm:$0xff]
    %v6084 = vld [vmem:[%s6077 + $0x30] sm:$0xff]
    %v6085 = vld [vmem:[%s6077 + $0x38] sm:$0xff]
    %v6086 = vld [vmem:[%s6077 + $0x40] sm:$0xff]
    %v6087 = vld [vmem:[%s6077 + $0x48] sm:$0xff]
    %v6088 = vld [vmem:[%s6077 + $0x50] sm:$0xff]
    %v6089 = vld [vmem:[%s6077 + $0x58] sm:$0xff]
    %v6090 = vld [vmem:[%s6077 + $0x60] sm:$0xff]
    %v6091 = vld [vmem:[%s6077 + $0x68] sm:$0xff]
    %v6092 = vld [vmem:[%s6077 + $0x70] sm:$0xff]
    %v6093 = vld [vmem:[%s6077 + $0x78] sm:$0xff]
    %6094 = vmatprep.subr.mxu0 0.0
    %6095 = vmatpush1.msra.mxu0 %v6078
    %6096 = vmatprep.subr.mxu0 0.0
    %6097 = vmatpush1.msra.mxu0 %v6079
    %6098 = vmatprep.subr.mxu0 0.0
    %6099 = vmatpush1.msra.mxu0 %v6080
    %6100 = vmatprep.subr.mxu0 0.0
    %6101 = vmatpush1.msra.mxu0 %v6081
    %6102 = vmatprep.subr.mxu0 0.0
    %6103 = vmatpush1.msra.mxu0 %v6082
    %6104 = vmatprep.subr.mxu0 0.0
    %6105 = vmatpush1.msra.mxu0 %v6083
    %6106 = vmatprep.subr.mxu0 0.0
    %6107 = vmatpush1.msra.mxu0 %v6084
    %6108 = vmatprep.subr.mxu0 0.0
    %6109 = vmatpush1.msra.mxu0 %v6085
    %6110 = vmatprep.subr.mxu0 0.0
    %6111 = vmatpush1.msra.mxu0 %v6086
    %6112 = vmatprep.subr.mxu0 0.0
    %6113 = vmatpush1.msra.mxu0 %v6087
    %6114 = vmatprep.subr.mxu0 0.0
    %6115 = vmatpush1.msra.mxu0 %v6088
    %6116 = vmatprep.subr.mxu0 0.0
    %6117 = vmatpush1.msra.mxu0 %v6089
    %6118 = vmatprep.subr.mxu0 0.0
    %6119 = vmatpush1.msra.mxu0 %v6090
    %6120 = vmatprep.subr.mxu0 0.0
    %6121 = vmatpush1.msra.mxu0 %v6091
    %6122 = vmatprep.subr.mxu0 0.0
    %6123 = vmatpush1.msra.mxu0 %v6092
    %6124 = vmatprep.subr.mxu0 0.0
    %6125 = vmatpush1.msra.mxu0 %v6093
    %6126 = vmatprep.subr.mxu0 0.0
    %6127 = vmatpush1.msra.mxu0 0.0
    %6128 = vmatprep.subr.mxu0 0.0
    %6129 = vmatpush1.msra.mxu0 0.0
    %6130 = vmatprep.subr.mxu0 0.0
    %6131 = vmatpush1.msra.mxu0 0.0
    %6132 = vmatprep.subr.mxu0 0.0
    %6133 = vmatpush1.msra.mxu0 0.0
    %6134 = vmatprep.subr.mxu0 0.0
    %6135 = vmatpush1.msra.mxu0 0.0
    %6136 = vmatprep.subr.mxu0 0.0
    %6137 = vmatpush1.msra.mxu0 0.0
    %6138 = vmatprep.subr.mxu0 0.0
    %6139 = vmatpush1.msra.mxu0 0.0
    %6140 = vmatprep.subr.mxu0 0.0
    %6141 = vmatpush1.msra.mxu0 0.0
    %6142 = vmatprep.subr.mxu0 0.0
    %6143 = vmatpush1.msra.mxu0 0.0
    %6144 = vmatprep.subr.mxu0 0.0
    %6145 = vmatpush1.msra.mxu0 0.0
    %6146 = vmatprep.subr.mxu0 0.0
    %6147 = vmatpush1.msra.mxu0 0.0
    %6148 = vmatprep.subr.mxu0 0.0
    %6149 = vmatpush1.msra.mxu0 0.0
    %6150 = vmatprep.subr.mxu0 0.0
    %6151 = vmatpush1.msra.mxu0 0.0
    %6152 = vmatprep.subr.mxu0 0.0
    %6153 = vmatpush1.msra.mxu0 0.0
    %6154 = vmatprep.subr.mxu0 0.0
    %6155 = vmatpush1.msra.mxu0 0.0
    %6156 = vmatprep.subr.mxu0 0.0
    %6157 = vmatpush1.msra.mxu0 0.0
    %6158 = vmatprep.mubr.f32.mxu0 0.0
    %6159 = vmatmul.mubr.f32.gmra.mrb[0].mxu0 %v6049
    %v6160 = vpop.f32.mrb[0].mxu0
    %v6161 = vadd.f32 0.0, %v6160
    %v6162 = vpop.f32.mrb[0].mxu0
    %6163 = vmatprep.mubr.f32.mxu0 0.0
    %6164 = vmatmul.mubr.f32.gmra.mrb[0].mxu0 %v6050
    %v6165 = vpop.f32.mrb[0].mxu0
    %v6166 = vadd.f32 0.0, %v6165
    %v6167 = vpop.f32.mrb[0].mxu0
    %6168 = vmatprep.mubr.f32.mxu0 0.0
    %6169 = vmatmul.mubr.f32.gmra.mrb[0].mxu0 %v6051
    %v6170 = vpop.f32.mrb[0].mxu0
    %v6171 = vadd.f32 0.0, %v6170
    %v6172 = vpop.f32.mrb[0].mxu0
    %6173 = vmatprep.mubr.f32.mxu0 0.0
    %6174 = vmatmul.mubr.f32.gmra.mrb[0].mxu0 %v6052
    %v6175 = vpop.f32.mrb[0].mxu0
    %v6176 = vadd.f32 0.0, %v6175
    %v6177 = vpop.f32.mrb[0].mxu0
    %6178 = vmatprep.mubr.f32.mxu0 0.0
    %6179 = vmatmul.mubr.f32.gmra.mrb[0].mxu0 %v6053
    %v6180 = vpop.f32.mrb[0].mxu0
    %v6181 = vadd.f32 0.0, %v6180
    %v6182 = vpop.f32.mrb[0].mxu0
    %6183 = vmatprep.mubr.f32.mxu0 0.0
    %6184 = vmatmul.mubr.f32.gmra.mrb[0].mxu0 %v6054
    %v6185 = vpop.f32.mrb[0].mxu0
    %v6186 = vadd.f32 0.0, %v6185
    %v6187 = vpop.f32.mrb[0].mxu0
    %6188 = vmatprep.mubr.f32.mxu0 0.0
    %6189 = vmatmul.mubr.f32.gmra.mrb[0].mxu0 %v6055
    %v6190 = vpop.f32.mrb[0].mxu0
    %v6191 = vadd.f32 0.0, %v6190
    %v6192 = vpop.f32.mrb[0].mxu0
    %6193 = vmatprep.mubr.f32.mxu0 0.0
    %6194 = vmatmul.mubr.f32.gmra.mrb[0].mxu0 %v6056
    %v6195 = vpop.f32.mrb[0].mxu0
    %v6196 = vadd.f32 0.0, %v6195
    %v6197 = vpop.f32.mrb[0].mxu0
    %6198 = vmatprep.mubr.f32.mxu0 0.0
    %6199 = vmatmul.mubr.f32.gmra.mrb[0].mxu0 %v6057
    %v6200 = vpop.f32.mrb[0].mxu0
    %v6201 = vadd.f32 0.0, %v6200
    %v6202 = vpop.f32.mrb[0].mxu0
    %6203 = vmatprep.mubr.f32.mxu0 0.0
    %6204 = vmatmul.mubr.f32.gmra.mrb[0].mxu0 %v6058
    %v6205 = vpop.f32.mrb[0].mxu0
    %v6206 = vadd.f32 0.0, %v6205
    %v6207 = vpop.f32.mrb[0].mxu0
    %6208 = vmatprep.mubr.f32.mxu0 0.0
    %6209 = vmatmul.mubr.f32.gmra.mrb[0].mxu0 %v6059
    %v6210 = vpop.f32.mrb[0].mxu0
    %v6211 = vadd.f32 0.0, %v6210
    %v6212 = vpop.f32.mrb[0].mxu0
    %6213 = vmatprep.mubr.f32.mxu0 0.0
    %6214 = vmatmul.mubr.f32.gmra.mrb[0].mxu0 %v6060
    %v6215 = vpop.f32.mrb[0].mxu0
    %v6216 = vadd.f32 0.0, %v6215
    %v6217 = vpop.f32.mrb[0].mxu0
    %6218 = vmatprep.mubr.f32.mxu0 0.0
    %6219 = vmatmul.mubr.f32.gmra.mrb[0].mxu0 %v6061
    %v6220 = vpop.f32.mrb[0].mxu0
    %v6221 = vadd.f32 0.0, %v6220
    %v6222 = vpop.f32.mrb[0].mxu0
    %6223 = vmatprep.mubr.f32.mxu0 0.0
    %6224 = vmatmul.mubr.f32.gmra.mrb[0].mxu0 %v6062
    %v6225 = vpop.f32.mrb[0].mxu0
    %v6226 = vadd.f32 0.0, %v6225
    %v6227 = vpop.f32.mrb[0].mxu0
    %6228 = vmatprep.mubr.f32.mxu0 0.0
    %6229 = vmatmul.mubr.f32.gmra.mrb[0].mxu0 %v6063
    %v6230 = vpop.f32.mrb[0].mxu0
    %v6231 = vadd.f32 0.0, %v6230
    %v6232 = vpop.f32.mrb[0].mxu0
    %6233 = vmatprep.mubr.f32.mxu0 0.0
    %6234 = vmatmul.mubr.f32.gmra.mrb[0].mxu0 %v6064
    %v6235 = vpop.f32.mrb[0].mxu0
    %v6236 = vadd.f32 0.0, %v6235
    %v6237 = vpop.f32.mrb[0].mxu0
    %6238 = vmatprep.mubr.f32.mxu0 0.0
    %6239 = vmatmul.mubr.f32.gmra.mrb[0].mxu0 %v6065
    %v6240 = vpop.f32.mrb[0].mxu0
    %v6241 = vadd.f32 0.0, %v6240
    %v6242 = vpop.f32.mrb[0].mxu0
    %6243 = vmatprep.mubr.f32.mxu0 0.0
    %6244 = vmatmul.mubr.f32.gmra.mrb[0].mxu0 %v6066
    %v6245 = vpop.f32.mrb[0].mxu0
    %v6246 = vadd.f32 0.0, %v6245
    %v6247 = vpop.f32.mrb[0].mxu0
    %6248 = vmatprep.mubr.f32.mxu0 0.0
    %6249 = vmatmul.mubr.f32.gmra.mrb[0].mxu0 %v6067
    %v6250 = vpop.f32.mrb[0].mxu0
    %v6251 = vadd.f32 0.0, %v6250
    %v6252 = vpop.f32.mrb[0].mxu0
    %6253 = vmatprep.mubr.f32.mxu0 0.0
    %6254 = vmatmul.mubr.f32.gmra.mrb[0].mxu0 %v6068
    %v6255 = vpop.f32.mrb[0].mxu0
    %v6256 = vadd.f32 0.0, %v6255
    %v6257 = vpop.f32.mrb[0].mxu0
    %6258 = vmatprep.mubr.f32.mxu0 0.0
    %6259 = vmatmul.mubr.f32.gmra.mrb[0].mxu0 %v6069
    %v6260 = vpop.f32.mrb[0].mxu0
    %v6261 = vadd.f32 0.0, %v6260
    %v6262 = vpop.f32.mrb[0].mxu0
    %6263 = vmatprep.mubr.f32.mxu0 0.0
    %6264 = vmatmul.mubr.f32.gmra.mrb[0].mxu0 %v6070
    %v6265 = vpop.f32.mrb[0].mxu0
    %v6266 = vadd.f32 0.0, %v6265
    %v6267 = vpop.f32.mrb[0].mxu0
    %6268 = vmatprep.mubr.f32.mxu0 0.0
    %6269 = vmatmul.mubr.f32.gmra.mrb[0].mxu0 %v6071
    %v6270 = vpop.f32.mrb[0].mxu0
    %v6271 = vadd.f32 0.0, %v6270
    %v6272 = vpop.f32.mrb[0].mxu0
    %6273 = vmatprep.mubr.f32.mxu0 0.0
    %6274 = vmatmul.mubr.f32.gmra.mrb[0].mxu0 %v6072
    %v6275 = vpop.f32.mrb[0].mxu0
    %v6276 = vadd.f32 0.0, %v6275
    %v6277 = vpop.f32.mrb[0].mxu0
    %6278 = vmatprep.mubr.f32.mxu0 0.0
    %6279 = vmatmul.mubr.f32.gmra.mrb[0].mxu0 %v6073
    %v6280 = vpop.f32.mrb[0].mxu0
    %v6281 = vadd.f32 0.0, %v6280
    %v6282 = vpop.f32.mrb[0].mxu0
    %6283 = vmatprep.mubr.f32.mxu0 0.0
    %6284 = vmatmul.mubr.f32.gmra.mrb[0].mxu0 %v6074
    %v6285 = vpop.f32.mrb[0].mxu0
    %v6286 = vadd.f32 0.0, %v6285
    %v6287 = vpop.f32.mrb[0].mxu0
    %6288 = vmatprep.mubr.f32.mxu0 0.0
    %6289 = vmatmul.mubr.f32.gmra.mrb[0].mxu0 %v6075
    %v6290 = vpop.f32.mrb[0].mxu0
    %v6291 = vadd.f32 0.0, %v6290
    %v6292 = vpop.f32.mrb[0].mxu0
    %6293 = vmatprep.mubr.f32.mxu0 0.0
    %6294 = vmatmul.mubr.f32.gmra.mrb[0].mxu0 %v6076
    %v6295 = vpop.f32.mrb[0].mxu0
    %v6296 = vadd.f32 0.0, %v6295
    %v6297 = vpop.f32.mrb[0].mxu0
    %6298 = vdwg.mxu0
    %6299 = vmatprep.subr.mxu0 0.0
    %6300 = vmatpush1.msra.mxu0 %v6033
    %6301 = vmatprep.subr.mxu0 0.0
    %6302 = vmatpush1.msra.mxu0 %v6034
    %6303 = vmatprep.subr.mxu0 0.0
    %6304 = vmatpush1.msra.mxu0 %v6035
    %6305 = vmatprep.subr.mxu0 0.0
    %6306 = vmatpush1.msra.mxu0 %v6036
    %6307 = vmatprep.subr.mxu0 0.0
    %6308 = vmatpush1.msra.mxu0 %v6037
    %6309 = vmatprep.subr.mxu0 0.0
    %6310 = vmatpush1.msra.mxu0 %v6038
    %6311 = vmatprep.subr.mxu0 0.0
    %6312 = vmatpush1.msra.mxu0 %v6039
    %6313 = vmatprep.subr.mxu0 0.0
    %6314 = vmatpush1.msra.mxu0 %v6040
    %6315 = vmatprep.subr.mxu0 0.0
    %6316 = vmatpush1.msra.mxu0 %v6041
    %6317 = vmatprep.subr.mxu0 0.0
    %6318 = vmatpush1.msra.mxu0 %v6042
    %6319 = vmatprep.subr.mxu0 0.0
    %6320 = vmatpush1.msra.mxu0 %v6043
    %6321 = vmatprep.subr.mxu0 0.0
    %6322 = vmatpush1.msra.mxu0 %v6044
    %6323 = vmatprep.subr.mxu0 0.0
    %6324 = vmatpush1.msra.mxu0 %v6045
    %6325 = vmatprep.subr.mxu0 0.0
    %6326 = vmatpush1.msra.mxu0 %v6046
    %6327 = vmatprep.subr.mxu0 0.0
    %6328 = vmatpush1.msra.mxu0 %v6047
    %6329 = vmatprep.subr.mxu0 0.0
    %6330 = vmatpush1.msra.mxu0 %v6048
    %6331 = vmatprep.subr.mxu0 0.0
    %6332 = vmatpush1.msra.mxu0 0.0
    %6333 = vmatprep.subr.mxu0 0.0
    %6334 = vmatpush1.msra.mxu0 0.0
    %6335 = vmatprep.subr.mxu0 0.0
    %6336 = vmatpush1.msra.mxu0 0.0
    %6337 = vmatprep.subr.mxu0 0.0
    %6338 = vmatpush1.msra.mxu0 0.0
    %6339 = vmatprep.subr.mxu0 0.0
    %6340 = vmatpush1.msra.mxu0 0.0
    %6341 = vmatprep.subr.mxu0 0.0
    %6342 = vmatpush1.msra.mxu0 0.0
    %6343 = vmatprep.subr.mxu0 0.0
    %6344 = vmatpush1.msra.mxu0 0.0
    %6345 = vmatprep.subr.mxu0 0.0
    %6346 = vmatpush1.msra.mxu0 0.0
    %6347 = vmatprep.subr.mxu0 0.0
    %6348 = vmatpush1.msra.mxu0 0.0
    %6349 = vmatprep.subr.mxu0 0.0
    %6350 = vmatpush1.msra.mxu0 0.0
    %6351 = vmatprep.subr.mxu0 0.0
    %6352 = vmatpush1.msra.mxu0 0.0
    %6353 = vmatprep.subr.mxu0 0.0
    %6354 = vmatpush1.msra.mxu0 0.0
    %6355 = vmatprep.subr.mxu0 0.0
    %6356 = vmatpush1.msra.mxu0 0.0
    %6357 = vmatprep.subr.mxu0 0.0
    %6358 = vmatpush1.msra.mxu0 0.0
    %6359 = vmatprep.subr.mxu0 0.0
    %6360 = vmatpush1.msra.mxu0 0.0
    %6361 = vmatprep.subr.mxu0 0.0
    %6362 = vmatpush1.msra.mxu0 0.0
    %6363 = vmatprep.mubr.f32.mxu0 0.0
    %6364 = vmatmul.mubr.f32.gmra.mrb[0].mxu0 %v6005
    %v6365 = vpop.f32.mrb[0].mxu0
    %v6366 = vadd.f32 %v6161, %v6365
    %v6367 = vpop.f32.mrb[0].mxu0
    %6368 = vmatprep.mubr.f32.mxu0 0.0
    %6369 = vmatmul.mubr.f32.gmra.mrb[0].mxu0 %v6006
    %v6370 = vpop.f32.mrb[0].mxu0
    %v6371 = vadd.f32 %v6166, %v6370
    %v6372 = vpop.f32.mrb[0].mxu0
    %6373 = vmatprep.mubr.f32.mxu0 0.0
    %6374 = vmatmul.mubr.f32.gmra.mrb[0].mxu0 %v6007
    %v6375 = vpop.f32.mrb[0].mxu0
    %v6376 = vadd.f32 %v6171, %v6375
    %v6377 = vpop.f32.mrb[0].mxu0
    %6378 = vmatprep.mubr.f32.mxu0 0.0
    %6379 = vmatmul.mubr.f32.gmra.mrb[0].mxu0 %v6008
    %v6380 = vpop.f32.mrb[0].mxu0
    %v6381 = vadd.f32 %v6176, %v6380
    %v6382 = vpop.f32.mrb[0].mxu0
    %6383 = vmatprep.mubr.f32.mxu0 0.0
    %6384 = vmatmul.mubr.f32.gmra.mrb[0].mxu0 %v6009
    %v6385 = vpop.f32.mrb[0].mxu0
    %v6386 = vadd.f32 %v6181, %v6385
    %v6387 = vpop.f32.mrb[0].mxu0
    %6388 = vmatprep.mubr.f32.mxu0 0.0
    %6389 = vmatmul.mubr.f32.gmra.mrb[0].mxu0 %v6010
    %v6390 = vpop.f32.mrb[0].mxu0
    %v6391 = vadd.f32 %v6186, %v6390
    %v6392 = vpop.f32.mrb[0].mxu0
    %6393 = vmatprep.mubr.f32.mxu0 0.0
    %6394 = vmatmul.mubr.f32.gmra.mrb[0].mxu0 %v6011
    %v6395 = vpop.f32.mrb[0].mxu0
    %v6396 = vadd.f32 %v6191, %v6395
    %v6397 = vpop.f32.mrb[0].mxu0
    %6398 = vmatprep.mubr.f32.mxu0 0.0
    %6399 = vmatmul.mubr.f32.gmra.mrb[0].mxu0 %v6012
    %v6400 = vpop.f32.mrb[0].mxu0
    %v6401 = vadd.f32 %v6196, %v6400
    %v6402 = vpop.f32.mrb[0].mxu0
    %6403 = vmatprep.mubr.f32.mxu0 0.0
    %6404 = vmatmul.mubr.f32.gmra.mrb[0].mxu0 %v6013
    %v6405 = vpop.f32.mrb[0].mxu0
    %v6406 = vadd.f32 %v6201, %v6405
    %v6407 = vpop.f32.mrb[0].mxu0
    %6408 = vmatprep.mubr.f32.mxu0 0.0
    %6409 = vmatmul.mubr.f32.gmra.mrb[0].mxu0 %v6014
    %v6410 = vpop.f32.mrb[0].mxu0
    %v6411 = vadd.f32 %v6206, %v6410
    %v6412 = vpop.f32.mrb[0].mxu0
    %6413 = vmatprep.mubr.f32.mxu0 0.0
    %6414 = vmatmul.mubr.f32.gmra.mrb[0].mxu0 %v6015
    %v6415 = vpop.f32.mrb[0].mxu0
    %v6416 = vadd.f32 %v6211, %v6415
    %v6417 = vpop.f32.mrb[0].mxu0
    %6418 = vmatprep.mubr.f32.mxu0 0.0
    %6419 = vmatmul.mubr.f32.gmra.mrb[0].mxu0 %v6016
    %v6420 = vpop.f32.mrb[0].mxu0
    %v6421 = vadd.f32 %v6216, %v6420
    %v6422 = vpop.f32.mrb[0].mxu0
    %6423 = vmatprep.mubr.f32.mxu0 0.0
    %6424 = vmatmul.mubr.f32.gmra.mrb[0].mxu0 %v6017
    %v6425 = vpop.f32.mrb[0].mxu0
    %v6426 = vadd.f32 %v6221, %v6425
    %v6427 = vpop.f32.mrb[0].mxu0
    %6428 = vmatprep.mubr.f32.mxu0 0.0
    %6429 = vmatmul.mubr.f32.gmra.mrb[0].mxu0 %v6018
    %v6430 = vpop.f32.mrb[0].mxu0
    %v6431 = vadd.f32 %v6226, %v6430
    %v6432 = vpop.f32.mrb[0].mxu0
    %6433 = vmatprep.mubr.f32.mxu0 0.0
    %6434 = vmatmul.mubr.f32.gmra.mrb[0].mxu0 %v6019
    %v6435 = vpop.f32.mrb[0].mxu0
    %v6436 = vadd.f32 %v6231, %v6435
    %v6437 = vpop.f32.mrb[0].mxu0
    %6438 = vmatprep.mubr.f32.mxu0 0.0
    %6439 = vmatmul.mubr.f32.gmra.mrb[0].mxu0 %v6020
    %v6440 = vpop.f32.mrb[0].mxu0
    %v6441 = vadd.f32 %v6236, %v6440
    %v6442 = vpop.f32.mrb[0].mxu0
    %6443 = vmatprep.mubr.f32.mxu0 0.0
    %6444 = vmatmul.mubr.f32.gmra.mrb[0].mxu0 %v6021
    %v6445 = vpop.f32.mrb[0].mxu0
    %v6446 = vadd.f32 %v6241, %v6445
    %v6447 = vpop.f32.mrb[0].mxu0
    %6448 = vmatprep.mubr.f32.mxu0 0.0
    %6449 = vmatmul.mubr.f32.gmra.mrb[0].mxu0 %v6022
    %v6450 = vpop.f32.mrb[0].mxu0
    %v6451 = vadd.f32 %v6246, %v6450
    %v6452 = vpop.f32.mrb[0].mxu0
    %6453 = vmatprep.mubr.f32.mxu0 0.0
    %6454 = vmatmul.mubr.f32.gmra.mrb[0].mxu0 %v6023
    %v6455 = vpop.f32.mrb[0].mxu0
    %v6456 = vadd.f32 %v6251, %v6455
    %v6457 = vpop.f32.mrb[0].mxu0
    %6458 = vmatprep.mubr.f32.mxu0 0.0
    %6459 = vmatmul.mubr.f32.gmra.mrb[0].mxu0 %v6024
    %v6460 = vpop.f32.mrb[0].mxu0
    %v6461 = vadd.f32 %v6256, %v6460
    %v6462 = vpop.f32.mrb[0].mxu0
    %6463 = vmatprep.mubr.f32.mxu0 0.0
    %6464 = vmatmul.mubr.f32.gmra.mrb[0].mxu0 %v6025
    %v6465 = vpop.f32.mrb[0].mxu0
    %v6466 = vadd.f32 %v6261, %v6465
    %v6467 = vpop.f32.mrb[0].mxu0
    %6468 = vmatprep.mubr.f32.mxu0 0.0
    %6469 = vmatmul.mubr.f32.gmra.mrb[0].mxu0 %v6026
    %v6470 = vpop.f32.mrb[0].mxu0
    %v6471 = vadd.f32 %v6266, %v6470
    %v6472 = vpop.f32.mrb[0].mxu0
    %6473 = vmatprep.mubr.f32.mxu0 0.0
    %6474 = vmatmul.mubr.f32.gmra.mrb[0].mxu0 %v6027
    %v6475 = vpop.f32.mrb[0].mxu0
    %v6476 = vadd.f32 %v6271, %v6475
    %v6477 = vpop.f32.mrb[0].mxu0
    %6478 = vmatprep.mubr.f32.mxu0 0.0
    %6479 = vmatmul.mubr.f32.gmra.mrb[0].mxu0 %v6028
    %v6480 = vpop.f32.mrb[0].mxu0
    %v6481 = vadd.f32 %v6276, %v6480
    %v6482 = vpop.f32.mrb[0].mxu0
    %6483 = vmatprep.mubr.f32.mxu0 0.0
    %6484 = vmatmul.mubr.f32.gmra.mrb[0].mxu0 %v6029
    %v6485 = vpop.f32.mrb[0].mxu0
    %v6486 = vadd.f32 %v6281, %v6485
    %v6487 = vpop.f32.mrb[0].mxu0
    %6488 = vmatprep.mubr.f32.mxu0 0.0
    %6489 = vmatmul.mubr.f32.gmra.mrb[0].mxu0 %v6030
    %v6490 = vpop.f32.mrb[0].mxu0
    %v6491 = vadd.f32 %v6286, %v6490
    %v6492 = vpop.f32.mrb[0].mxu0
    %6493 = vmatprep.mubr.f32.mxu0 0.0
    %6494 = vmatmul.mubr.f32.gmra.mrb[0].mxu0 %v6031
    %v6495 = vpop.f32.mrb[0].mxu0
    %v6496 = vadd.f32 %v6291, %v6495
    %v6497 = vpop.f32.mrb[0].mxu0
    %6498 = vmatprep.mubr.f32.mxu0 0.0
    %6499 = vmatmul.mubr.f32.gmra.mrb[0].mxu0 %v6032
    %v6500 = vpop.f32.mrb[0].mxu0
    %v6501 = vadd.f32 %v6296, %v6500
    %v6502 = vpop.f32.mrb[0].mxu0
    %6503 = vdwg.mxu0
    %v6504 = vld [vmem:[#allocation3 + $0x2] sm:$0xff]
    %v6505 = vld [vmem:[#allocation3 + $0xa] sm:$0xff]
    %v6506 = vld [vmem:[#allocation3 + $0x12] sm:$0xff]
    %v6507 = vld [vmem:[#allocation3 + $0x1a] sm:$0xff]
    %v6508 = vld [vmem:[#allocation3 + $0x22] sm:$0xff]
    %v6509 = vld [vmem:[#allocation3 + $0x2a] sm:$0xff]
    %v6510 = vld [vmem:[#allocation3 + $0x32] sm:$0xff]
    %v6511 = vld [vmem:[#allocation3 + $0x3a] sm:$0xff]
    %v6512 = vld [vmem:[#allocation3 + $0x42] sm:$0xff]
    %v6513 = vld [vmem:[#allocation3 + $0x4a] sm:$0xff]
    %v6514 = vld [vmem:[#allocation3 + $0x52] sm:$0xff]
    %v6515 = vld [vmem:[#allocation3 + $0x5a] sm:$0xff]
    %v6516 = vld [vmem:[#allocation3 + $0x62] sm:$0xff]
    %v6517 = vld [vmem:[#allocation3 + $0x6a] sm:$0xff]
    %v6518 = vld [vmem:[#allocation3 + $0x72] sm:$0xff]
    %v6519 = vld [vmem:[#allocation3 + $0x7a] sm:$0xff]
    %v6520 = vld [vmem:[#allocation3 + $0x82] sm:$0xff]
    %v6521 = vld [vmem:[#allocation3 + $0x8a] sm:$0xff]
    %v6522 = vld [vmem:[#allocation3 + $0x92] sm:$0xff]
    %v6523 = vld [vmem:[#allocation3 + $0x9a] sm:$0xff]
    %v6524 = vld [vmem:[#allocation3 + $0xa2] sm:$0xff]
    %v6525 = vld [vmem:[#allocation3 + $0xaa] sm:$0xff]
    %v6526 = vld [vmem:[#allocation3 + $0xb2] sm:$0xff]
    %v6527 = vld [vmem:[#allocation3 + $0xba] sm:$0xff]
    %v6528 = vld [vmem:[#allocation3 + $0xc2] sm:$0xff]
    %v6529 = vld [vmem:[#allocation3 + $0xca] sm:$0xff]
    %v6530 = vld [vmem:[#allocation3 + $0xd2] sm:$0xff]
    %v6531 = vld [vmem:[#allocation3 + $0xda] sm:$0x3f]
    %s6532 = scalar_lea.vmem [#allocation9], 256
    %v6533 = vld [vmem:[%s6532] sm:$0xff]
    %v6534 = vld [vmem:[%s6532 + $0x8] sm:$0xff]
    %v6535 = vld [vmem:[%s6532 + $0x10] sm:$0xff]
    %v6536 = vld [vmem:[%s6532 + $0x18] sm:$0xff]
    %v6537 = vld [vmem:[%s6532 + $0x20] sm:$0xff]
    %v6538 = vld [vmem:[%s6532 + $0x28] sm:$0xff]
    %v6539 = vld [vmem:[%s6532 + $0x30] sm:$0xff]
    %v6540 = vld [vmem:[%s6532 + $0x38] sm:$0xff]
    %v6541 = vld [vmem:[%s6532 + $0x40] sm:$0xff]
    %v6542 = vld [vmem:[%s6532 + $0x48] sm:$0xff]
    %v6543 = vld [vmem:[%s6532 + $0x50] sm:$0xff]
    %v6544 = vld [vmem:[%s6532 + $0x58] sm:$0xff]
    %v6545 = vld [vmem:[%s6532 + $0x60] sm:$0xff]
    %v6546 = vld [vmem:[%s6532 + $0x68] sm:$0xff]
    %v6547 = vld [vmem:[%s6532 + $0x70] sm:$0xff]
    %v6548 = vld [vmem:[%s6532 + $0x78] sm:$0xff]
    %6549 = vmatprep.subr.mxu0 0.0
    %6550 = vmatpush1.msra.mxu0 %v6533
    %6551 = vmatprep.subr.mxu0 0.0
    %6552 = vmatpush1.msra.mxu0 %v6534
    %6553 = vmatprep.subr.mxu0 0.0
    %6554 = vmatpush1.msra.mxu0 %v6535
    %6555 = vmatprep.subr.mxu0 0.0
    %6556 = vmatpush1.msra.mxu0 %v6536
    %6557 = vmatprep.subr.mxu0 0.0
    %6558 = vmatpush1.msra.mxu0 %v6537
    %6559 = vmatprep.subr.mxu0 0.0
    %6560 = vmatpush1.msra.mxu0 %v6538
    %6561 = vmatprep.subr.mxu0 0.0
    %6562 = vmatpush1.msra.mxu0 %v6539
    %6563 = vmatprep.subr.mxu0 0.0
    %6564 = vmatpush1.msra.mxu0 %v6540
    %6565 = vmatprep.subr.mxu0 0.0
    %6566 = vmatpush1.msra.mxu0 %v6541
    %6567 = vmatprep.subr.mxu0 0.0
    %6568 = vmatpush1.msra.mxu0 %v6542
    %6569 = vmatprep.subr.mxu0 0.0
    %6570 = vmatpush1.msra.mxu0 %v6543
    %6571 = vmatprep.subr.mxu0 0.0
    %6572 = vmatpush1.msra.mxu0 %v6544
    %6573 = vmatprep.subr.mxu0 0.0
    %6574 = vmatpush1.msra.mxu0 %v6545
    %6575 = vmatprep.subr.mxu0 0.0
    %6576 = vmatpush1.msra.mxu0 %v6546
    %6577 = vmatprep.subr.mxu0 0.0
    %6578 = vmatpush1.msra.mxu0 %v6547
    %6579 = vmatprep.subr.mxu0 0.0
    %6580 = vmatpush1.msra.mxu0 %v6548
    %6581 = vmatprep.subr.mxu0 0.0
    %6582 = vmatpush1.msra.mxu0 0.0
    %6583 = vmatprep.subr.mxu0 0.0
    %6584 = vmatpush1.msra.mxu0 0.0
    %6585 = vmatprep.subr.mxu0 0.0
    %6586 = vmatpush1.msra.mxu0 0.0
    %6587 = vmatprep.subr.mxu0 0.0
    %6588 = vmatpush1.msra.mxu0 0.0
    %6589 = vmatprep.subr.mxu0 0.0
    %6590 = vmatpush1.msra.mxu0 0.0
    %6591 = vmatprep.subr.mxu0 0.0
    %6592 = vmatpush1.msra.mxu0 0.0
    %6593 = vmatprep.subr.mxu0 0.0
    %6594 = vmatpush1.msra.mxu0 0.0
    %6595 = vmatprep.subr.mxu0 0.0
    %6596 = vmatpush1.msra.mxu0 0.0
    %6597 = vmatprep.subr.mxu0 0.0
    %6598 = vmatpush1.msra.mxu0 0.0
    %6599 = vmatprep.subr.mxu0 0.0
    %6600 = vmatpush1.msra.mxu0 0.0
    %6601 = vmatprep.subr.mxu0 0.0
    %6602 = vmatpush1.msra.mxu0 0.0
    %6603 = vmatprep.subr.mxu0 0.0
    %6604 = vmatpush1.msra.mxu0 0.0
    %6605 = vmatprep.subr.mxu0 0.0
    %6606 = vmatpush1.msra.mxu0 0.0
    %6607 = vmatprep.subr.mxu0 0.0
    %6608 = vmatpush1.msra.mxu0 0.0
    %6609 = vmatprep.subr.mxu0 0.0
    %6610 = vmatpush1.msra.mxu0 0.0
    %6611 = vmatprep.subr.mxu0 0.0
    %6612 = vmatpush1.msra.mxu0 0.0
    %6613 = vmatprep.mubr.f32.mxu0 0.0
    %6614 = vmatmul.mubr.f32.gmra.mrb[0].mxu0 %v6504
    %v6615 = vpop.f32.mrb[0].mxu0
    %v6616 = vadd.f32 0.0, %v6615
    %v6617 = vpop.f32.mrb[0].mxu0
    %6618 = vmatprep.mubr.f32.mxu0 0.0
    %6619 = vmatmul.mubr.f32.gmra.mrb[0].mxu0 %v6505
    %v6620 = vpop.f32.mrb[0].mxu0
    %v6621 = vadd.f32 0.0, %v6620
    %v6622 = vpop.f32.mrb[0].mxu0
    %6623 = vmatprep.mubr.f32.mxu0 0.0
    %6624 = vmatmul.mubr.f32.gmra.mrb[0].mxu0 %v6506
    %v6625 = vpop.f32.mrb[0].mxu0
    %v6626 = vadd.f32 0.0, %v6625
    %v6627 = vpop.f32.mrb[0].mxu0
    %6628 = vmatprep.mubr.f32.mxu0 0.0
    %6629 = vmatmul.mubr.f32.gmra.mrb[0].mxu0 %v6507
    %v6630 = vpop.f32.mrb[0].mxu0
    %v6631 = vadd.f32 0.0, %v6630
    %v6632 = vpop.f32.mrb[0].mxu0
    %6633 = vmatprep.mubr.f32.mxu0 0.0
    %6634 = vmatmul.mubr.f32.gmra.mrb[0].mxu0 %v6508
    %v6635 = vpop.f32.mrb[0].mxu0
    %v6636 = vadd.f32 0.0, %v6635
    %v6637 = vpop.f32.mrb[0].mxu0
    %6638 = vmatprep.mubr.f32.mxu0 0.0
    %6639 = vmatmul.mubr.f32.gmra.mrb[0].mxu0 %v6509
    %v6640 = vpop.f32.mrb[0].mxu0
    %v6641 = vadd.f32 0.0, %v6640
    %v6642 = vpop.f32.mrb[0].mxu0
    %6643 = vmatprep.mubr.f32.mxu0 0.0
    %6644 = vmatmul.mubr.f32.gmra.mrb[0].mxu0 %v6510
    %v6645 = vpop.f32.mrb[0].mxu0
    %v6646 = vadd.f32 0.0, %v6645
    %v6647 = vpop.f32.mrb[0].mxu0
    %6648 = vmatprep.mubr.f32.mxu0 0.0
    %6649 = vmatmul.mubr.f32.gmra.mrb[0].mxu0 %v6511
    %v6650 = vpop.f32.mrb[0].mxu0
    %v6651 = vadd.f32 0.0, %v6650
    %v6652 = vpop.f32.mrb[0].mxu0
    %6653 = vmatprep.mubr.f32.mxu0 0.0
    %6654 = vmatmul.mubr.f32.gmra.mrb[0].mxu0 %v6512
    %v6655 = vpop.f32.mrb[0].mxu0
    %v6656 = vadd.f32 0.0, %v6655
    %v6657 = vpop.f32.mrb[0].mxu0
    %6658 = vmatprep.mubr.f32.mxu0 0.0
    %6659 = vmatmul.mubr.f32.gmra.mrb[0].mxu0 %v6513
    %v6660 = vpop.f32.mrb[0].mxu0
    %v6661 = vadd.f32 0.0, %v6660
    %v6662 = vpop.f32.mrb[0].mxu0
    %6663 = vmatprep.mubr.f32.mxu0 0.0
    %6664 = vmatmul.mubr.f32.gmra.mrb[0].mxu0 %v6514
    %v6665 = vpop.f32.mrb[0].mxu0
    %v6666 = vadd.f32 0.0, %v6665
    %v6667 = vpop.f32.mrb[0].mxu0
    %6668 = vmatprep.mubr.f32.mxu0 0.0
    %6669 = vmatmul.mubr.f32.gmra.mrb[0].mxu0 %v6515
    %v6670 = vpop.f32.mrb[0].mxu0
    %v6671 = vadd.f32 0.0, %v6670
    %v6672 = vpop.f32.mrb[0].mxu0
    %6673 = vmatprep.mubr.f32.mxu0 0.0
    %6674 = vmatmul.mubr.f32.gmra.mrb[0].mxu0 %v6516
    %v6675 = vpop.f32.mrb[0].mxu0
    %v6676 = vadd.f32 0.0, %v6675
    %v6677 = vpop.f32.mrb[0].mxu0
    %6678 = vmatprep.mubr.f32.mxu0 0.0
    %6679 = vmatmul.mubr.f32.gmra.mrb[0].mxu0 %v6517
    %v6680 = vpop.f32.mrb[0].mxu0
    %v6681 = vadd.f32 0.0, %v6680
    %v6682 = vpop.f32.mrb[0].mxu0
    %6683 = vmatprep.mubr.f32.mxu0 0.0
    %6684 = vmatmul.mubr.f32.gmra.mrb[0].mxu0 %v6518
    %v6685 = vpop.f32.mrb[0].mxu0
    %v6686 = vadd.f32 0.0, %v6685
    %v6687 = vpop.f32.mrb[0].mxu0
    %6688 = vmatprep.mubr.f32.mxu0 0.0
    %6689 = vmatmul.mubr.f32.gmra.mrb[0].mxu0 %v6519
    %v6690 = vpop.f32.mrb[0].mxu0
    %v6691 = vadd.f32 0.0, %v6690
    %v6692 = vpop.f32.mrb[0].mxu0
    %6693 = vmatprep.mubr.f32.mxu0 0.0
    %6694 = vmatmul.mubr.f32.gmra.mrb[0].mxu0 %v6520
    %v6695 = vpop.f32.mrb[0].mxu0
    %v6696 = vadd.f32 0.0, %v6695
    %v6697 = vpop.f32.mrb[0].mxu0
    %6698 = vmatprep.mubr.f32.mxu0 0.0
    %6699 = vmatmul.mubr.f32.gmra.mrb[0].mxu0 %v6521
    %v6700 = vpop.f32.mrb[0].mxu0
    %v6701 = vadd.f32 0.0, %v6700
    %v6702 = vpop.f32.mrb[0].mxu0
    %6703 = vmatprep.mubr.f32.mxu0 0.0
    %6704 = vmatmul.mubr.f32.gmra.mrb[0].mxu0 %v6522
    %v6705 = vpop.f32.mrb[0].mxu0
    %v6706 = vadd.f32 0.0, %v6705
    %v6707 = vpop.f32.mrb[0].mxu0
    %6708 = vmatprep.mubr.f32.mxu0 0.0
    %6709 = vmatmul.mubr.f32.gmra.mrb[0].mxu0 %v6523
    %v6710 = vpop.f32.mrb[0].mxu0
    %v6711 = vadd.f32 0.0, %v6710
    %v6712 = vpop.f32.mrb[0].mxu0
    %6713 = vmatprep.mubr.f32.mxu0 0.0
    %6714 = vmatmul.mubr.f32.gmra.mrb[0].mxu0 %v6524
    %v6715 = vpop.f32.mrb[0].mxu0
    %v6716 = vadd.f32 0.0, %v6715
    %v6717 = vpop.f32.mrb[0].mxu0
    %6718 = vmatprep.mubr.f32.mxu0 0.0
    %6719 = vmatmul.mubr.f32.gmra.mrb[0].mxu0 %v6525
    %v6720 = vpop.f32.mrb[0].mxu0
    %v6721 = vadd.f32 0.0, %v6720
    %v6722 = vpop.f32.mrb[0].mxu0
    %6723 = vmatprep.mubr.f32.mxu0 0.0
    %6724 = vmatmul.mubr.f32.gmra.mrb[0].mxu0 %v6526
    %v6725 = vpop.f32.mrb[0].mxu0
    %v6726 = vadd.f32 0.0, %v6725
    %v6727 = vpop.f32.mrb[0].mxu0
    %6728 = vmatprep.mubr.f32.mxu0 0.0
    %6729 = vmatmul.mubr.f32.gmra.mrb[0].mxu0 %v6527
    %v6730 = vpop.f32.mrb[0].mxu0
    %v6731 = vadd.f32 0.0, %v6730
    %v6732 = vpop.f32.mrb[0].mxu0
    %6733 = vmatprep.mubr.f32.mxu0 0.0
    %6734 = vmatmul.mubr.f32.gmra.mrb[0].mxu0 %v6528
    %v6735 = vpop.f32.mrb[0].mxu0
    %v6736 = vadd.f32 0.0, %v6735
    %v6737 = vpop.f32.mrb[0].mxu0
    %6738 = vmatprep.mubr.f32.mxu0 0.0
    %6739 = vmatmul.mubr.f32.gmra.mrb[0].mxu0 %v6529
    %v6740 = vpop.f32.mrb[0].mxu0
    %v6741 = vadd.f32 0.0, %v6740
    %v6742 = vpop.f32.mrb[0].mxu0
    %6743 = vmatprep.mubr.f32.mxu0 0.0
    %6744 = vmatmul.mubr.f32.gmra.mrb[0].mxu0 %v6530
    %v6745 = vpop.f32.mrb[0].mxu0
    %v6746 = vadd.f32 0.0, %v6745
    %v6747 = vpop.f32.mrb[0].mxu0
    %6748 = vmatprep.mubr.f32.mxu0 0.0
    %6749 = vmatmul.mubr.f32.gmra.mrb[0].mxu0 %v6531
    %v6750 = vpop.f32.mrb[0].mxu0
    %v6751 = vadd.f32 0.0, %v6750
    %v6752 = vpop.f32.mrb[0].mxu0
    %6753 = vdwg.mxu0
    %v6754 = vadd.f32 %v6366, %v6616
    %v6755 = vadd.f32 %v6371, %v6621
    %v6756 = vadd.f32 %v6376, %v6626
    %v6757 = vadd.f32 %v6381, %v6631
    %v6758 = vadd.f32 %v6386, %v6636
    %v6759 = vadd.f32 %v6391, %v6641
    %v6760 = vadd.f32 %v6396, %v6646
    %v6761 = vadd.f32 %v6401, %v6651
    %v6762 = vadd.f32 %v6406, %v6656
    %v6763 = vadd.f32 %v6411, %v6661
    %v6764 = vadd.f32 %v6416, %v6666
    %v6765 = vadd.f32 %v6421, %v6671
    %v6766 = vadd.f32 %v6426, %v6676
    %v6767 = vadd.f32 %v6431, %v6681
    %v6768 = vadd.f32 %v6436, %v6686
    %v6769 = vadd.f32 %v6441, %v6691
    %v6770 = vadd.f32 %v6446, %v6696
    %v6771 = vadd.f32 %v6451, %v6701
    %v6772 = vadd.f32 %v6456, %v6706
    %v6773 = vadd.f32 %v6461, %v6711
    %v6774 = vadd.f32 %v6466, %v6716
    %v6775 = vadd.f32 %v6471, %v6721
    %v6776 = vadd.f32 %v6476, %v6726
    %v6777 = vadd.f32 %v6481, %v6731
    %v6778 = vadd.f32 %v6486, %v6736
    %v6779 = vadd.f32 %v6491, %v6741
    %v6780 = vadd.f32 %v6496, %v6746
    %v6781 = vadd.f32 %v6501, %v6751
    %v6782 = vld [vmem:[#allocation3 + $0x10] sm:$0xff]
    %v6783 = vld [vmem:[#allocation3 + $0x18] sm:$0xff]
    %v6784 = vld [vmem:[#allocation3 + $0x20] sm:$0xff]
    %v6785 = vld [vmem:[#allocation3 + $0x28] sm:$0xff]
    %v6786 = vld [vmem:[#allocation3 + $0x30] sm:$0xff]
    %v6787 = vld [vmem:[#allocation3 + $0x38] sm:$0xff]
    %v6788 = vld [vmem:[#allocation3 + $0x40] sm:$0xff]
    %v6789 = vld [vmem:[#allocation3 + $0x48] sm:$0xff]
    %v6790 = vld [vmem:[#allocation3 + $0x50] sm:$0xff]
    %v6791 = vld [vmem:[#allocation3 + $0x58] sm:$0xff]
    %v6792 = vld [vmem:[#allocation3 + $0x60] sm:$0xff]
    %v6793 = vld [vmem:[#allocation3 + $0x68] sm:$0xff]
    %v6794 = vld [vmem:[#allocation3 + $0x70] sm:$0xff]
    %v6795 = vld [vmem:[#allocation3 + $0x78] sm:$0xff]
    %v6796 = vld [vmem:[#allocation3 + $0x80] sm:$0xff]
    %v6797 = vld [vmem:[#allocation3 + $0x88] sm:$0xff]
    %v6798 = vld [vmem:[#allocation3 + $0x90] sm:$0xff]
    %v6799 = vld [vmem:[#allocation3 + $0x98] sm:$0xff]
    %v6800 = vld [vmem:[#allocation3 + $0xa0] sm:$0xff]
    %v6801 = vld [vmem:[#allocation3 + $0xa8] sm:$0xff]
    %v6802 = vld [vmem:[#allocation3 + $0xb0] sm:$0xff]
    %v6803 = vld [vmem:[#allocation3 + $0xb8] sm:$0xff]
    %v6804 = vld [vmem:[#allocation3 + $0xc0] sm:$0xff]
    %v6805 = vld [vmem:[#allocation3 + $0xc8] sm:$0xff]
    %v6806 = vld [vmem:[#allocation3 + $0xd0] sm:$0xff]
    %v6807 = vld [vmem:[#allocation3 + $0xd8] sm:$0xff]
    %v6808 = vld [vmem:[#allocation3 + $0xe0] sm:$0xff]
    %v6809 = vld [vmem:[#allocation3 + $0xe8] sm:$0x3f]
    %s6810 = scalar_lea.vmem [#allocation9], 384
    %v6811 = vld [vmem:[%s6810] sm:$0xff]
    %v6812 = vld [vmem:[%s6810 + $0x8] sm:$0xff]
    %v6813 = vld [vmem:[%s6810 + $0x10] sm:$0xff]
    %v6814 = vld [vmem:[%s6810 + $0x18] sm:$0xff]
    %v6815 = vld [vmem:[%s6810 + $0x20] sm:$0xff]
    %v6816 = vld [vmem:[%s6810 + $0x28] sm:$0xff]
    %v6817 = vld [vmem:[%s6810 + $0x30] sm:$0xff]
    %v6818 = vld [vmem:[%s6810 + $0x38] sm:$0xff]
    %v6819 = vld [vmem:[%s6810 + $0x40] sm:$0xff]
    %v6820 = vld [vmem:[%s6810 + $0x48] sm:$0xff]
    %v6821 = vld [vmem:[%s6810 + $0x50] sm:$0xff]
    %v6822 = vld [vmem:[%s6810 + $0x58] sm:$0xff]
    %v6823 = vld [vmem:[%s6810 + $0x60] sm:$0xff]
    %v6824 = vld [vmem:[%s6810 + $0x68] sm:$0xff]
    %v6825 = vld [vmem:[%s6810 + $0x70] sm:$0xff]
    %v6826 = vld [vmem:[%s6810 + $0x78] sm:$0xff]
    %6827 = vmatprep.subr.mxu0 0.0
    %6828 = vmatpush1.msra.mxu0 %v6811
    %6829 = vmatprep.subr.mxu0 0.0
    %6830 = vmatpush1.msra.mxu0 %v6812
    %6831 = vmatprep.subr.mxu0 0.0
    %6832 = vmatpush1.msra.mxu0 %v6813
    %6833 = vmatprep.subr.mxu0 0.0
    %6834 = vmatpush1.msra.mxu0 %v6814
    %6835 = vmatprep.subr.mxu0 0.0
    %6836 = vmatpush1.msra.mxu0 %v6815
    %6837 = vmatprep.subr.mxu0 0.0
    %6838 = vmatpush1.msra.mxu0 %v6816
    %6839 = vmatprep.subr.mxu0 0.0
    %6840 = vmatpush1.msra.mxu0 %v6817
    %6841 = vmatprep.subr.mxu0 0.0
    %6842 = vmatpush1.msra.mxu0 %v6818
    %6843 = vmatprep.subr.mxu0 0.0
    %6844 = vmatpush1.msra.mxu0 %v6819
    %6845 = vmatprep.subr.mxu0 0.0
    %6846 = vmatpush1.msra.mxu0 %v6820
    %6847 = vmatprep.subr.mxu0 0.0
    %6848 = vmatpush1.msra.mxu0 %v6821
    %6849 = vmatprep.subr.mxu0 0.0
    %6850 = vmatpush1.msra.mxu0 %v6822
    %6851 = vmatprep.subr.mxu0 0.0
    %6852 = vmatpush1.msra.mxu0 %v6823
    %6853 = vmatprep.subr.mxu0 0.0
    %6854 = vmatpush1.msra.mxu0 %v6824
    %6855 = vmatprep.subr.mxu0 0.0
    %6856 = vmatpush1.msra.mxu0 %v6825
    %6857 = vmatprep.subr.mxu0 0.0
    %6858 = vmatpush1.msra.mxu0 %v6826
    %6859 = vmatprep.subr.mxu0 0.0
    %6860 = vmatpush1.msra.mxu0 0.0
    %6861 = vmatprep.subr.mxu0 0.0
    %6862 = vmatpush1.msra.mxu0 0.0
    %6863 = vmatprep.subr.mxu0 0.0
    %6864 = vmatpush1.msra.mxu0 0.0
    %6865 = vmatprep.subr.mxu0 0.0
    %6866 = vmatpush1.msra.mxu0 0.0
    %6867 = vmatprep.subr.mxu0 0.0
    %6868 = vmatpush1.msra.mxu0 0.0
    %6869 = vmatprep.subr.mxu0 0.0
    %6870 = vmatpush1.msra.mxu0 0.0
    %6871 = vmatprep.subr.mxu0 0.0
    %6872 = vmatpush1.msra.mxu0 0.0
    %6873 = vmatprep.subr.mxu0 0.0
    %6874 = vmatpush1.msra.mxu0 0.0
    %6875 = vmatprep.subr.mxu0 0.0
    %6876 = vmatpush1.msra.mxu0 0.0
    %6877 = vmatprep.subr.mxu0 0.0
    %6878 = vmatpush1.msra.mxu0 0.0
    %6879 = vmatprep.subr.mxu0 0.0
    %6880 = vmatpush1.msra.mxu0 0.0
    %6881 = vmatprep.subr.mxu0 0.0
    %6882 = vmatpush1.msra.mxu0 0.0
    %6883 = vmatprep.subr.mxu0 0.0
    %6884 = vmatpush1.msra.mxu0 0.0
    %6885 = vmatprep.subr.mxu0 0.0
    %6886 = vmatpush1.msra.mxu0 0.0
    %6887 = vmatprep.subr.mxu0 0.0
    %6888 = vmatpush1.msra.mxu0 0.0
    %6889 = vmatprep.subr.mxu0 0.0
    %6890 = vmatpush1.msra.mxu0 0.0
    %6891 = vmatprep.mubr.f32.mxu0 0.0
    %6892 = vmatmul.mubr.f32.gmra.mrb[0].mxu0 %v6782
    %v6893 = vpop.f32.mrb[0].mxu0
    %v6894 = vadd.f32 0.0, %v6893
    %v6895 = vpop.f32.mrb[0].mxu0
    %6896 = vmatprep.mubr.f32.mxu0 0.0
    %6897 = vmatmul.mubr.f32.gmra.mrb[0].mxu0 %v6783
    %v6898 = vpop.f32.mrb[0].mxu0
    %v6899 = vadd.f32 0.0, %v6898
    %v6900 = vpop.f32.mrb[0].mxu0
    %6901 = vmatprep.mubr.f32.mxu0 0.0
    %6902 = vmatmul.mubr.f32.gmra.mrb[0].mxu0 %v6784
    %v6903 = vpop.f32.mrb[0].mxu0
    %v6904 = vadd.f32 0.0, %v6903
    %v6905 = vpop.f32.mrb[0].mxu0
    %6906 = vmatprep.mubr.f32.mxu0 0.0
    %6907 = vmatmul.mubr.f32.gmra.mrb[0].mxu0 %v6785
    %v6908 = vpop.f32.mrb[0].mxu0
    %v6909 = vadd.f32 0.0, %v6908
    %v6910 = vpop.f32.mrb[0].mxu0
    %6911 = vmatprep.mubr.f32.mxu0 0.0
    %6912 = vmatmul.mubr.f32.gmra.mrb[0].mxu0 %v6786
    %v6913 = vpop.f32.mrb[0].mxu0
    %v6914 = vadd.f32 0.0, %v6913
    %v6915 = vpop.f32.mrb[0].mxu0
    %6916 = vmatprep.mubr.f32.mxu0 0.0
    %6917 = vmatmul.mubr.f32.gmra.mrb[0].mxu0 %v6787
    %v6918 = vpop.f32.mrb[0].mxu0
    %v6919 = vadd.f32 0.0, %v6918
    %v6920 = vpop.f32.mrb[0].mxu0
    %6921 = vmatprep.mubr.f32.mxu0 0.0
    %6922 = vmatmul.mubr.f32.gmra.mrb[0].mxu0 %v6788
    %v6923 = vpop.f32.mrb[0].mxu0
    %v6924 = vadd.f32 0.0, %v6923
    %v6925 = vpop.f32.mrb[0].mxu0
    %6926 = vmatprep.mubr.f32.mxu0 0.0
    %6927 = vmatmul.mubr.f32.gmra.mrb[0].mxu0 %v6789
    %v6928 = vpop.f32.mrb[0].mxu0
    %v6929 = vadd.f32 0.0, %v6928
    %v6930 = vpop.f32.mrb[0].mxu0
    %6931 = vmatprep.mubr.f32.mxu0 0.0
    %6932 = vmatmul.mubr.f32.gmra.mrb[0].mxu0 %v6790
    %v6933 = vpop.f32.mrb[0].mxu0
    %v6934 = vadd.f32 0.0, %v6933
    %v6935 = vpop.f32.mrb[0].mxu0
    %6936 = vmatprep.mubr.f32.mxu0 0.0
    %6937 = vmatmul.mubr.f32.gmra.mrb[0].mxu0 %v6791
    %v6938 = vpop.f32.mrb[0].mxu0
    %v6939 = vadd.f32 0.0, %v6938
    %v6940 = vpop.f32.mrb[0].mxu0
    %6941 = vmatprep.mubr.f32.mxu0 0.0
    %6942 = vmatmul.mubr.f32.gmra.mrb[0].mxu0 %v6792
    %v6943 = vpop.f32.mrb[0].mxu0
    %v6944 = vadd.f32 0.0, %v6943
    %v6945 = vpop.f32.mrb[0].mxu0
    %6946 = vmatprep.mubr.f32.mxu0 0.0
    %6947 = vmatmul.mubr.f32.gmra.mrb[0].mxu0 %v6793
    %v6948 = vpop.f32.mrb[0].mxu0
    %v6949 = vadd.f32 0.0, %v6948
    %v6950 = vpop.f32.mrb[0].mxu0
    %6951 = vmatprep.mubr.f32.mxu0 0.0
    %6952 = vmatmul.mubr.f32.gmra.mrb[0].mxu0 %v6794
    %v6953 = vpop.f32.mrb[0].mxu0
    %v6954 = vadd.f32 0.0, %v6953
    %v6955 = vpop.f32.mrb[0].mxu0
    %6956 = vmatprep.mubr.f32.mxu0 0.0
    %6957 = vmatmul.mubr.f32.gmra.mrb[0].mxu0 %v6795
    %v6958 = vpop.f32.mrb[0].mxu0
    %v6959 = vadd.f32 0.0, %v6958
    %v6960 = vpop.f32.mrb[0].mxu0
    %6961 = vmatprep.mubr.f32.mxu0 0.0
    %6962 = vmatmul.mubr.f32.gmra.mrb[0].mxu0 %v6796
    %v6963 = vpop.f32.mrb[0].mxu0
    %v6964 = vadd.f32 0.0, %v6963
    %v6965 = vpop.f32.mrb[0].mxu0
    %6966 = vmatprep.mubr.f32.mxu0 0.0
    %6967 = vmatmul.mubr.f32.gmra.mrb[0].mxu0 %v6797
    %v6968 = vpop.f32.mrb[0].mxu0
    %v6969 = vadd.f32 0.0, %v6968
    %v6970 = vpop.f32.mrb[0].mxu0
    %6971 = vmatprep.mubr.f32.mxu0 0.0
    %6972 = vmatmul.mubr.f32.gmra.mrb[0].mxu0 %v6798
    %v6973 = vpop.f32.mrb[0].mxu0
    %v6974 = vadd.f32 0.0, %v6973
    %v6975 = vpop.f32.mrb[0].mxu0
    %6976 = vmatprep.mubr.f32.mxu0 0.0
    %6977 = vmatmul.mubr.f32.gmra.mrb[0].mxu0 %v6799
    %v6978 = vpop.f32.mrb[0].mxu0
    %v6979 = vadd.f32 0.0, %v6978
    %v6980 = vpop.f32.mrb[0].mxu0
    %6981 = vmatprep.mubr.f32.mxu0 0.0
    %6982 = vmatmul.mubr.f32.gmra.mrb[0].mxu0 %v6800
    %v6983 = vpop.f32.mrb[0].mxu0
    %v6984 = vadd.f32 0.0, %v6983
    %v6985 = vpop.f32.mrb[0].mxu0
    %6986 = vmatprep.mubr.f32.mxu0 0.0
    %6987 = vmatmul.mubr.f32.gmra.mrb[0].mxu0 %v6801
    %v6988 = vpop.f32.mrb[0].mxu0
    %v6989 = vadd.f32 0.0, %v6988
    %v6990 = vpop.f32.mrb[0].mxu0
    %6991 = vmatprep.mubr.f32.mxu0 0.0
    %6992 = vmatmul.mubr.f32.gmra.mrb[0].mxu0 %v6802
    %v6993 = vpop.f32.mrb[0].mxu0
    %v6994 = vadd.f32 0.0, %v6993
    %v6995 = vpop.f32.mrb[0].mxu0
    %6996 = vmatprep.mubr.f32.mxu0 0.0
    %6997 = vmatmul.mubr.f32.gmra.mrb[0].mxu0 %v6803
    %v6998 = vpop.f32.mrb[0].mxu0
    %v6999 = vadd.f32 0.0, %v6998
    %v7000 = vpop.f32.mrb[0].mxu0
    %7001 = vmatprep.mubr.f32.mxu0 0.0
    %7002 = vmatmul.mubr.f32.gmra.mrb[0].mxu0 %v6804
    %v7003 = vpop.f32.mrb[0].mxu0
    %v7004 = vadd.f32 0.0, %v7003
    %v7005 = vpop.f32.mrb[0].mxu0
    %7006 = vmatprep.mubr.f32.mxu0 0.0
    %7007 = vmatmul.mubr.f32.gmra.mrb[0].mxu0 %v6805
    %v7008 = vpop.f32.mrb[0].mxu0
    %v7009 = vadd.f32 0.0, %v7008
    %v7010 = vpop.f32.mrb[0].mxu0
    %7011 = vmatprep.mubr.f32.mxu0 0.0
    %7012 = vmatmul.mubr.f32.gmra.mrb[0].mxu0 %v6806
    %v7013 = vpop.f32.mrb[0].mxu0
    %v7014 = vadd.f32 0.0, %v7013
    %v7015 = vpop.f32.mrb[0].mxu0
    %7016 = vmatprep.mubr.f32.mxu0 0.0
    %7017 = vmatmul.mubr.f32.gmra.mrb[0].mxu0 %v6807
    %v7018 = vpop.f32.mrb[0].mxu0
    %v7019 = vadd.f32 0.0, %v7018
    %v7020 = vpop.f32.mrb[0].mxu0
    %7021 = vmatprep.mubr.f32.mxu0 0.0
    %7022 = vmatmul.mubr.f32.gmra.mrb[0].mxu0 %v6808
    %v7023 = vpop.f32.mrb[0].mxu0
    %v7024 = vadd.f32 0.0, %v7023
    %v7025 = vpop.f32.mrb[0].mxu0
    %7026 = vmatprep.mubr.f32.mxu0 0.0
    %7027 = vmatmul.mubr.f32.gmra.mrb[0].mxu0 %v6809
    %v7028 = vpop.f32.mrb[0].mxu0
    %v7029 = vadd.f32 0.0, %v7028
    %v7030 = vpop.f32.mrb[0].mxu0
    %7031 = vdwg.mxu0
    %v7032 = vadd.f32 %v6754, %v6894
    %v7033 = vadd.f32 %v6755, %v6899
    %v7034 = vadd.f32 %v6756, %v6904
    %v7035 = vadd.f32 %v6757, %v6909
    %v7036 = vadd.f32 %v6758, %v6914
    %v7037 = vadd.f32 %v6759, %v6919
    %v7038 = vadd.f32 %v6760, %v6924
    %v7039 = vadd.f32 %v6761, %v6929
    %v7040 = vadd.f32 %v6762, %v6934
    %v7041 = vadd.f32 %v6763, %v6939
    %v7042 = vadd.f32 %v6764, %v6944
    %v7043 = vadd.f32 %v6765, %v6949
    %v7044 = vadd.f32 %v6766, %v6954
    %v7045 = vadd.f32 %v6767, %v6959
    %v7046 = vadd.f32 %v6768, %v6964
    %v7047 = vadd.f32 %v6769, %v6969
    %v7048 = vadd.f32 %v6770, %v6974
    %v7049 = vadd.f32 %v6771, %v6979
    %v7050 = vadd.f32 %v6772, %v6984
    %v7051 = vadd.f32 %v6773, %v6989
    %v7052 = vadd.f32 %v6774, %v6994
    %v7053 = vadd.f32 %v6775, %v6999
    %v7054 = vadd.f32 %v6776, %v7004
    %v7055 = vadd.f32 %v6777, %v7009
    %v7056 = vadd.f32 %v6778, %v7014
    %v7057 = vadd.f32 %v6779, %v7019
    %v7058 = vadd.f32 %v6780, %v7024
    %v7059 = vadd.f32 %v6781, %v7029
    %v7060 = vld [vmem:[#allocation3 + $0x11] sm:$0xff]
    %v7061 = vld [vmem:[#allocation3 + $0x19] sm:$0xff]
    %v7062 = vld [vmem:[#allocation3 + $0x21] sm:$0xff]
    %v7063 = vld [vmem:[#allocation3 + $0x29] sm:$0xff]
    %v7064 = vld [vmem:[#allocation3 + $0x31] sm:$0xff]
    %v7065 = vld [vmem:[#allocation3 + $0x39] sm:$0xff]
    %v7066 = vld [vmem:[#allocation3 + $0x41] sm:$0xff]
    %v7067 = vld [vmem:[#allocation3 + $0x49] sm:$0xff]
    %v7068 = vld [vmem:[#allocation3 + $0x51] sm:$0xff]
    %v7069 = vld [vmem:[#allocation3 + $0x59] sm:$0xff]
    %v7070 = vld [vmem:[#allocation3 + $0x61] sm:$0xff]
    %v7071 = vld [vmem:[#allocation3 + $0x69] sm:$0xff]
    %v7072 = vld [vmem:[#allocation3 + $0x71] sm:$0xff]
    %v7073 = vld [vmem:[#allocation3 + $0x79] sm:$0xff]
    %v7074 = vld [vmem:[#allocation3 + $0x81] sm:$0xff]
    %v7075 = vld [vmem:[#allocation3 + $0x89] sm:$0xff]
    %v7076 = vld [vmem:[#allocation3 + $0x91] sm:$0xff]
    %v7077 = vld [vmem:[#allocation3 + $0x99] sm:$0xff]
    %v7078 = vld [vmem:[#allocation3 + $0xa1] sm:$0xff]
    %v7079 = vld [vmem:[#allocation3 + $0xa9] sm:$0xff]
    %v7080 = vld [vmem:[#allocation3 + $0xb1] sm:$0xff]
    %v7081 = vld [vmem:[#allocation3 + $0xb9] sm:$0xff]
    %v7082 = vld [vmem:[#allocation3 + $0xc1] sm:$0xff]
    %v7083 = vld [vmem:[#allocation3 + $0xc9] sm:$0xff]
    %v7084 = vld [vmem:[#allocation3 + $0xd1] sm:$0xff]
    %v7085 = vld [vmem:[#allocation3 + $0xd9] sm:$0xff]
    %v7086 = vld [vmem:[#allocation3 + $0xe1] sm:$0xff]
    %v7087 = vld [vmem:[#allocation3 + $0xe9] sm:$0x3f]
    %s7088 = scalar_lea.vmem [#allocation9], 512
    %v7089 = vld [vmem:[%s7088] sm:$0xff]
    %v7090 = vld [vmem:[%s7088 + $0x8] sm:$0xff]
    %v7091 = vld [vmem:[%s7088 + $0x10] sm:$0xff]
    %v7092 = vld [vmem:[%s7088 + $0x18] sm:$0xff]
    %v7093 = vld [vmem:[%s7088 + $0x20] sm:$0xff]
    %v7094 = vld [vmem:[%s7088 + $0x28] sm:$0xff]
    %v7095 = vld [vmem:[%s7088 + $0x30] sm:$0xff]
    %v7096 = vld [vmem:[%s7088 + $0x38] sm:$0xff]
    %v7097 = vld [vmem:[%s7088 + $0x40] sm:$0xff]
    %v7098 = vld [vmem:[%s7088 + $0x48] sm:$0xff]
    %v7099 = vld [vmem:[%s7088 + $0x50] sm:$0xff]
    %v7100 = vld [vmem:[%s7088 + $0x58] sm:$0xff]
    %v7101 = vld [vmem:[%s7088 + $0x60] sm:$0xff]
    %v7102 = vld [vmem:[%s7088 + $0x68] sm:$0xff]
    %v7103 = vld [vmem:[%s7088 + $0x70] sm:$0xff]
    %v7104 = vld [vmem:[%s7088 + $0x78] sm:$0xff]
    %7105 = vmatprep.subr.mxu0 0.0
    %7106 = vmatpush1.msra.mxu0 %v7089
    %7107 = vmatprep.subr.mxu0 0.0
    %7108 = vmatpush1.msra.mxu0 %v7090
    %7109 = vmatprep.subr.mxu0 0.0
    %7110 = vmatpush1.msra.mxu0 %v7091
    %7111 = vmatprep.subr.mxu0 0.0
    %7112 = vmatpush1.msra.mxu0 %v7092
    %7113 = vmatprep.subr.mxu0 0.0
    %7114 = vmatpush1.msra.mxu0 %v7093
    %7115 = vmatprep.subr.mxu0 0.0
    %7116 = vmatpush1.msra.mxu0 %v7094
    %7117 = vmatprep.subr.mxu0 0.0
    %7118 = vmatpush1.msra.mxu0 %v7095
    %7119 = vmatprep.subr.mxu0 0.0
    %7120 = vmatpush1.msra.mxu0 %v7096
    %7121 = vmatprep.subr.mxu0 0.0
    %7122 = vmatpush1.msra.mxu0 %v7097
    %7123 = vmatprep.subr.mxu0 0.0
    %7124 = vmatpush1.msra.mxu0 %v7098
    %7125 = vmatprep.subr.mxu0 0.0
    %7126 = vmatpush1.msra.mxu0 %v7099
    %7127 = vmatprep.subr.mxu0 0.0
    %7128 = vmatpush1.msra.mxu0 %v7100
    %7129 = vmatprep.subr.mxu0 0.0
    %7130 = vmatpush1.msra.mxu0 %v7101
    %7131 = vmatprep.subr.mxu0 0.0
    %7132 = vmatpush1.msra.mxu0 %v7102
    %7133 = vmatprep.subr.mxu0 0.0
    %7134 = vmatpush1.msra.mxu0 %v7103
    %7135 = vmatprep.subr.mxu0 0.0
    %7136 = vmatpush1.msra.mxu0 %v7104
    %7137 = vmatprep.subr.mxu0 0.0
    %7138 = vmatpush1.msra.mxu0 0.0
    %7139 = vmatprep.subr.mxu0 0.0
    %7140 = vmatpush1.msra.mxu0 0.0
    %7141 = vmatprep.subr.mxu0 0.0
    %7142 = vmatpush1.msra.mxu0 0.0
    %7143 = vmatprep.subr.mxu0 0.0
    %7144 = vmatpush1.msra.mxu0 0.0
    %7145 = vmatprep.subr.mxu0 0.0
    %7146 = vmatpush1.msra.mxu0 0.0
    %7147 = vmatprep.subr.mxu0 0.0
    %7148 = vmatpush1.msra.mxu0 0.0
    %7149 = vmatprep.subr.mxu0 0.0
    %7150 = vmatpush1.msra.mxu0 0.0
    %7151 = vmatprep.subr.mxu0 0.0
    %7152 = vmatpush1.msra.mxu0 0.0
    %7153 = vmatprep.subr.mxu0 0.0
    %7154 = vmatpush1.msra.mxu0 0.0
    %7155 = vmatprep.subr.mxu0 0.0
    %7156 = vmatpush1.msra.mxu0 0.0
    %7157 = vmatprep.subr.mxu0 0.0
    %7158 = vmatpush1.msra.mxu0 0.0
    %7159 = vmatprep.subr.mxu0 0.0
    %7160 = vmatpush1.msra.mxu0 0.0
    %7161 = vmatprep.subr.mxu0 0.0
    %7162 = vmatpush1.msra.mxu0 0.0
    %7163 = vmatprep.subr.mxu0 0.0
    %7164 = vmatpush1.msra.mxu0 0.0
    %7165 = vmatprep.subr.mxu0 0.0
    %7166 = vmatpush1.msra.mxu0 0.0
    %7167 = vmatprep.subr.mxu0 0.0
    %7168 = vmatpush1.msra.mxu0 0.0
    %7169 = vmatprep.mubr.f32.mxu0 0.0
    %7170 = vmatmul.mubr.f32.gmra.mrb[0].mxu0 %v7060
    %v7171 = vpop.f32.mrb[0].mxu0
    %v7172 = vadd.f32 0.0, %v7171
    %v7173 = vpop.f32.mrb[0].mxu0
    %7174 = vmatprep.mubr.f32.mxu0 0.0
    %7175 = vmatmul.mubr.f32.gmra.mrb[0].mxu0 %v7061
    %v7176 = vpop.f32.mrb[0].mxu0
    %v7177 = vadd.f32 0.0, %v7176
    %v7178 = vpop.f32.mrb[0].mxu0
    %7179 = vmatprep.mubr.f32.mxu0 0.0
    %7180 = vmatmul.mubr.f32.gmra.mrb[0].mxu0 %v7062
    %v7181 = vpop.f32.mrb[0].mxu0
    %v7182 = vadd.f32 0.0, %v7181
    %v7183 = vpop.f32.mrb[0].mxu0
    %7184 = vmatprep.mubr.f32.mxu0 0.0
    %7185 = vmatmul.mubr.f32.gmra.mrb[0].mxu0 %v7063
    %v7186 = vpop.f32.mrb[0].mxu0
    %v7187 = vadd.f32 0.0, %v7186
    %v7188 = vpop.f32.mrb[0].mxu0
    %7189 = vmatprep.mubr.f32.mxu0 0.0
    %7190 = vmatmul.mubr.f32.gmra.mrb[0].mxu0 %v7064
    %v7191 = vpop.f32.mrb[0].mxu0
    %v7192 = vadd.f32 0.0, %v7191
    %v7193 = vpop.f32.mrb[0].mxu0
    %7194 = vmatprep.mubr.f32.mxu0 0.0
    %7195 = vmatmul.mubr.f32.gmra.mrb[0].mxu0 %v7065
    %v7196 = vpop.f32.mrb[0].mxu0
    %v7197 = vadd.f32 0.0, %v7196
    %v7198 = vpop.f32.mrb[0].mxu0
    %7199 = vmatprep.mubr.f32.mxu0 0.0
    %7200 = vmatmul.mubr.f32.gmra.mrb[0].mxu0 %v7066
    %v7201 = vpop.f32.mrb[0].mxu0
    %v7202 = vadd.f32 0.0, %v7201
    %v7203 = vpop.f32.mrb[0].mxu0
    %7204 = vmatprep.mubr.f32.mxu0 0.0
    %7205 = vmatmul.mubr.f32.gmra.mrb[0].mxu0 %v7067
    %v7206 = vpop.f32.mrb[0].mxu0
    %v7207 = vadd.f32 0.0, %v7206
    %v7208 = vpop.f32.mrb[0].mxu0
    %7209 = vmatprep.mubr.f32.mxu0 0.0
    %7210 = vmatmul.mubr.f32.gmra.mrb[0].mxu0 %v7068
    %v7211 = vpop.f32.mrb[0].mxu0
    %v7212 = vadd.f32 0.0, %v7211
    %v7213 = vpop.f32.mrb[0].mxu0
    %7214 = vmatprep.mubr.f32.mxu0 0.0
    %7215 = vmatmul.mubr.f32.gmra.mrb[0].mxu0 %v7069
    %v7216 = vpop.f32.mrb[0].mxu0
    %v7217 = vadd.f32 0.0, %v7216
    %v7218 = vpop.f32.mrb[0].mxu0
    %7219 = vmatprep.mubr.f32.mxu0 0.0
    %7220 = vmatmul.mubr.f32.gmra.mrb[0].mxu0 %v7070
    %v7221 = vpop.f32.mrb[0].mxu0
    %v7222 = vadd.f32 0.0, %v7221
    %v7223 = vpop.f32.mrb[0].mxu0
    %7224 = vmatprep.mubr.f32.mxu0 0.0
    %7225 = vmatmul.mubr.f32.gmra.mrb[0].mxu0 %v7071
    %v7226 = vpop.f32.mrb[0].mxu0
    %v7227 = vadd.f32 0.0, %v7226
    %v7228 = vpop.f32.mrb[0].mxu0
    %7229 = vmatprep.mubr.f32.mxu0 0.0
    %7230 = vmatmul.mubr.f32.gmra.mrb[0].mxu0 %v7072
    %v7231 = vpop.f32.mrb[0].mxu0
    %v7232 = vadd.f32 0.0, %v7231
    %v7233 = vpop.f32.mrb[0].mxu0
    %7234 = vmatprep.mubr.f32.mxu0 0.0
    %7235 = vmatmul.mubr.f32.gmra.mrb[0].mxu0 %v7073
    %v7236 = vpop.f32.mrb[0].mxu0
    %v7237 = vadd.f32 0.0, %v7236
    %v7238 = vpop.f32.mrb[0].mxu0
    %7239 = vmatprep.mubr.f32.mxu0 0.0
    %7240 = vmatmul.mubr.f32.gmra.mrb[0].mxu0 %v7074
    %v7241 = vpop.f32.mrb[0].mxu0
    %v7242 = vadd.f32 0.0, %v7241
    %v7243 = vpop.f32.mrb[0].mxu0
    %7244 = vmatprep.mubr.f32.mxu0 0.0
    %7245 = vmatmul.mubr.f32.gmra.mrb[0].mxu0 %v7075
    %v7246 = vpop.f32.mrb[0].mxu0
    %v7247 = vadd.f32 0.0, %v7246
    %v7248 = vpop.f32.mrb[0].mxu0
    %7249 = vmatprep.mubr.f32.mxu0 0.0
    %7250 = vmatmul.mubr.f32.gmra.mrb[0].mxu0 %v7076
    %v7251 = vpop.f32.mrb[0].mxu0
    %v7252 = vadd.f32 0.0, %v7251
    %v7253 = vpop.f32.mrb[0].mxu0
    %7254 = vmatprep.mubr.f32.mxu0 0.0
    %7255 = vmatmul.mubr.f32.gmra.mrb[0].mxu0 %v7077
    %v7256 = vpop.f32.mrb[0].mxu0
    %v7257 = vadd.f32 0.0, %v7256
    %v7258 = vpop.f32.mrb[0].mxu0
    %7259 = vmatprep.mubr.f32.mxu0 0.0
    %7260 = vmatmul.mubr.f32.gmra.mrb[0].mxu0 %v7078
    %v7261 = vpop.f32.mrb[0].mxu0
    %v7262 = vadd.f32 0.0, %v7261
    %v7263 = vpop.f32.mrb[0].mxu0
    %7264 = vmatprep.mubr.f32.mxu0 0.0
    %7265 = vmatmul.mubr.f32.gmra.mrb[0].mxu0 %v7079
    %v7266 = vpop.f32.mrb[0].mxu0
    %v7267 = vadd.f32 0.0, %v7266
    %v7268 = vpop.f32.mrb[0].mxu0
    %7269 = vmatprep.mubr.f32.mxu0 0.0
    %7270 = vmatmul.mubr.f32.gmra.mrb[0].mxu0 %v7080
    %v7271 = vpop.f32.mrb[0].mxu0
    %v7272 = vadd.f32 0.0, %v7271
    %v7273 = vpop.f32.mrb[0].mxu0
    %7274 = vmatprep.mubr.f32.mxu0 0.0
    %7275 = vmatmul.mubr.f32.gmra.mrb[0].mxu0 %v7081
    %v7276 = vpop.f32.mrb[0].mxu0
    %v7277 = vadd.f32 0.0, %v7276
    %v7278 = vpop.f32.mrb[0].mxu0
    %7279 = vmatprep.mubr.f32.mxu0 0.0
    %7280 = vmatmul.mubr.f32.gmra.mrb[0].mxu0 %v7082
    %v7281 = vpop.f32.mrb[0].mxu0
    %v7282 = vadd.f32 0.0, %v7281
    %v7283 = vpop.f32.mrb[0].mxu0
    %7284 = vmatprep.mubr.f32.mxu0 0.0
    %7285 = vmatmul.mubr.f32.gmra.mrb[0].mxu0 %v7083
    %v7286 = vpop.f32.mrb[0].mxu0
    %v7287 = vadd.f32 0.0, %v7286
    %v7288 = vpop.f32.mrb[0].mxu0
    %7289 = vmatprep.mubr.f32.mxu0 0.0
    %7290 = vmatmul.mubr.f32.gmra.mrb[0].mxu0 %v7084
    %v7291 = vpop.f32.mrb[0].mxu0
    %v7292 = vadd.f32 0.0, %v7291
    %v7293 = vpop.f32.mrb[0].mxu0
    %7294 = vmatprep.mubr.f32.mxu0 0.0
    %7295 = vmatmul.mubr.f32.gmra.mrb[0].mxu0 %v7085
    %v7296 = vpop.f32.mrb[0].mxu0
    %v7297 = vadd.f32 0.0, %v7296
    %v7298 = vpop.f32.mrb[0].mxu0
    %7299 = vmatprep.mubr.f32.mxu0 0.0
    %7300 = vmatmul.mubr.f32.gmra.mrb[0].mxu0 %v7086
    %v7301 = vpop.f32.mrb[0].mxu0
    %v7302 = vadd.f32 0.0, %v7301
    %v7303 = vpop.f32.mrb[0].mxu0
    %7304 = vmatprep.mubr.f32.mxu0 0.0
    %7305 = vmatmul.mubr.f32.gmra.mrb[0].mxu0 %v7087
    %v7306 = vpop.f32.mrb[0].mxu0
    %v7307 = vadd.f32 0.0, %v7306
    %v7308 = vpop.f32.mrb[0].mxu0
    %7309 = vdwg.mxu0
    %v7310 = vadd.f32 %v7032, %v7172
    %v7311 = vadd.f32 %v7033, %v7177
    %v7312 = vadd.f32 %v7034, %v7182
    %v7313 = vadd.f32 %v7035, %v7187
    %v7314 = vadd.f32 %v7036, %v7192
    %v7315 = vadd.f32 %v7037, %v7197
    %v7316 = vadd.f32 %v7038, %v7202
    %v7317 = vadd.f32 %v7039, %v7207
    %v7318 = vadd.f32 %v7040, %v7212
    %v7319 = vadd.f32 %v7041, %v7217
    %v7320 = vadd.f32 %v7042, %v7222
    %v7321 = vadd.f32 %v7043, %v7227
    %v7322 = vadd.f32 %v7044, %v7232
    %v7323 = vadd.f32 %v7045, %v7237
    %v7324 = vadd.f32 %v7046, %v7242
    %v7325 = vadd.f32 %v7047, %v7247
    %v7326 = vadd.f32 %v7048, %v7252
    %v7327 = vadd.f32 %v7049, %v7257
    %v7328 = vadd.f32 %v7050, %v7262
    %v7329 = vadd.f32 %v7051, %v7267
    %v7330 = vadd.f32 %v7052, %v7272
    %v7331 = vadd.f32 %v7053, %v7277
    %v7332 = vadd.f32 %v7054, %v7282
    %v7333 = vadd.f32 %v7055, %v7287
    %v7334 = vadd.f32 %v7056, %v7292
    %v7335 = vadd.f32 %v7057, %v7297
    %v7336 = vadd.f32 %v7058, %v7302
    %v7337 = vadd.f32 %v7059, %v7307
    %v7338 = vld [vmem:[#allocation3 + $0x12] sm:$0xff]
    %v7339 = vld [vmem:[#allocation3 + $0x1a] sm:$0xff]
    %v7340 = vld [vmem:[#allocation3 + $0x22] sm:$0xff]
    %v7341 = vld [vmem:[#allocation3 + $0x2a] sm:$0xff]
    %v7342 = vld [vmem:[#allocation3 + $0x32] sm:$0xff]
    %v7343 = vld [vmem:[#allocation3 + $0x3a] sm:$0xff]
    %v7344 = vld [vmem:[#allocation3 + $0x42] sm:$0xff]
    %v7345 = vld [vmem:[#allocation3 + $0x4a] sm:$0xff]
    %v7346 = vld [vmem:[#allocation3 + $0x52] sm:$0xff]
    %v7347 = vld [vmem:[#allocation3 + $0x5a] sm:$0xff]
    %v7348 = vld [vmem:[#allocation3 + $0x62] sm:$0xff]
    %v7349 = vld [vmem:[#allocation3 + $0x6a] sm:$0xff]
    %v7350 = vld [vmem:[#allocation3 + $0x72] sm:$0xff]
    %v7351 = vld [vmem:[#allocation3 + $0x7a] sm:$0xff]
    %v7352 = vld [vmem:[#allocation3 + $0x82] sm:$0xff]
    %v7353 = vld [vmem:[#allocation3 + $0x8a] sm:$0xff]
    %v7354 = vld [vmem:[#allocation3 + $0x92] sm:$0xff]
    %v7355 = vld [vmem:[#allocation3 + $0x9a] sm:$0xff]
    %v7356 = vld [vmem:[#allocation3 + $0xa2] sm:$0xff]
    %v7357 = vld [vmem:[#allocation3 + $0xaa] sm:$0xff]
    %v7358 = vld [vmem:[#allocation3 + $0xb2] sm:$0xff]
    %v7359 = vld [vmem:[#allocation3 + $0xba] sm:$0xff]
    %v7360 = vld [vmem:[#allocation3 + $0xc2] sm:$0xff]
    %v7361 = vld [vmem:[#allocation3 + $0xca] sm:$0xff]
    %v7362 = vld [vmem:[#allocation3 + $0xd2] sm:$0xff]
    %v7363 = vld [vmem:[#allocation3 + $0xda] sm:$0xff]
    %v7364 = vld [vmem:[#allocation3 + $0xe2] sm:$0xff]
    %v7365 = vld [vmem:[#allocation3 + $0xea] sm:$0x3f]
    %s7366 = scalar_lea.vmem [#allocation9], 640
    %v7367 = vld [vmem:[%s7366] sm:$0xff]
    %v7368 = vld [vmem:[%s7366 + $0x8] sm:$0xff]
    %v7369 = vld [vmem:[%s7366 + $0x10] sm:$0xff]
    %v7370 = vld [vmem:[%s7366 + $0x18] sm:$0xff]
    %v7371 = vld [vmem:[%s7366 + $0x20] sm:$0xff]
    %v7372 = vld [vmem:[%s7366 + $0x28] sm:$0xff]
    %v7373 = vld [vmem:[%s7366 + $0x30] sm:$0xff]
    %v7374 = vld [vmem:[%s7366 + $0x38] sm:$0xff]
    %v7375 = vld [vmem:[%s7366 + $0x40] sm:$0xff]
    %v7376 = vld [vmem:[%s7366 + $0x48] sm:$0xff]
    %v7377 = vld [vmem:[%s7366 + $0x50] sm:$0xff]
    %v7378 = vld [vmem:[%s7366 + $0x58] sm:$0xff]
    %v7379 = vld [vmem:[%s7366 + $0x60] sm:$0xff]
    %v7380 = vld [vmem:[%s7366 + $0x68] sm:$0xff]
    %v7381 = vld [vmem:[%s7366 + $0x70] sm:$0xff]
    %v7382 = vld [vmem:[%s7366 + $0x78] sm:$0xff]
    %7383 = vmatprep.subr.mxu0 0.0
    %7384 = vmatpush1.msra.mxu0 %v7367
    %7385 = vmatprep.subr.mxu0 0.0
    %7386 = vmatpush1.msra.mxu0 %v7368
    %7387 = vmatprep.subr.mxu0 0.0
    %7388 = vmatpush1.msra.mxu0 %v7369
    %7389 = vmatprep.subr.mxu0 0.0
    %7390 = vmatpush1.msra.mxu0 %v7370
    %7391 = vmatprep.subr.mxu0 0.0
    %7392 = vmatpush1.msra.mxu0 %v7371
    %7393 = vmatprep.subr.mxu0 0.0
    %7394 = vmatpush1.msra.mxu0 %v7372
    %7395 = vmatprep.subr.mxu0 0.0
    %7396 = vmatpush1.msra.mxu0 %v7373
    %7397 = vmatprep.subr.mxu0 0.0
    %7398 = vmatpush1.msra.mxu0 %v7374
    %7399 = vmatprep.subr.mxu0 0.0
    %7400 = vmatpush1.msra.mxu0 %v7375
    %7401 = vmatprep.subr.mxu0 0.0
    %7402 = vmatpush1.msra.mxu0 %v7376
    %7403 = vmatprep.subr.mxu0 0.0
    %7404 = vmatpush1.msra.mxu0 %v7377
    %7405 = vmatprep.subr.mxu0 0.0
    %7406 = vmatpush1.msra.mxu0 %v7378
    %7407 = vmatprep.subr.mxu0 0.0
    %7408 = vmatpush1.msra.mxu0 %v7379
    %7409 = vmatprep.subr.mxu0 0.0
    %7410 = vmatpush1.msra.mxu0 %v7380
    %7411 = vmatprep.subr.mxu0 0.0
    %7412 = vmatpush1.msra.mxu0 %v7381
    %7413 = vmatprep.subr.mxu0 0.0
    %7414 = vmatpush1.msra.mxu0 %v7382
    %7415 = vmatprep.subr.mxu0 0.0
    %7416 = vmatpush1.msra.mxu0 0.0
    %7417 = vmatprep.subr.mxu0 0.0
    %7418 = vmatpush1.msra.mxu0 0.0
    %7419 = vmatprep.subr.mxu0 0.0
    %7420 = vmatpush1.msra.mxu0 0.0
    %7421 = vmatprep.subr.mxu0 0.0
    %7422 = vmatpush1.msra.mxu0 0.0
    %7423 = vmatprep.subr.mxu0 0.0
    %7424 = vmatpush1.msra.mxu0 0.0
    %7425 = vmatprep.subr.mxu0 0.0
    %7426 = vmatpush1.msra.mxu0 0.0
    %7427 = vmatprep.subr.mxu0 0.0
    %7428 = vmatpush1.msra.mxu0 0.0
    %7429 = vmatprep.subr.mxu0 0.0
    %7430 = vmatpush1.msra.mxu0 0.0
    %7431 = vmatprep.subr.mxu0 0.0
    %7432 = vmatpush1.msra.mxu0 0.0
    %7433 = vmatprep.subr.mxu0 0.0
    %7434 = vmatpush1.msra.mxu0 0.0
    %7435 = vmatprep.subr.mxu0 0.0
    %7436 = vmatpush1.msra.mxu0 0.0
    %7437 = vmatprep.subr.mxu0 0.0
    %7438 = vmatpush1.msra.mxu0 0.0
    %7439 = vmatprep.subr.mxu0 0.0
    %7440 = vmatpush1.msra.mxu0 0.0
    %7441 = vmatprep.subr.mxu0 0.0
    %7442 = vmatpush1.msra.mxu0 0.0
    %7443 = vmatprep.subr.mxu0 0.0
    %7444 = vmatpush1.msra.mxu0 0.0
    %7445 = vmatprep.subr.mxu0 0.0
    %7446 = vmatpush1.msra.mxu0 0.0
    %7447 = vmatprep.mubr.f32.mxu0 0.0
    %7448 = vmatmul.mubr.f32.gmra.mrb[0].mxu0 %v7338
    %v7449 = vpop.f32.mrb[0].mxu0
    %v7450 = vadd.f32 0.0, %v7449
    %v7451 = vpop.f32.mrb[0].mxu0
    %7452 = vmatprep.mubr.f32.mxu0 0.0
    %7453 = vmatmul.mubr.f32.gmra.mrb[0].mxu0 %v7339
    %v7454 = vpop.f32.mrb[0].mxu0
    %v7455 = vadd.f32 0.0, %v7454
    %v7456 = vpop.f32.mrb[0].mxu0
    %7457 = vmatprep.mubr.f32.mxu0 0.0
    %7458 = vmatmul.mubr.f32.gmra.mrb[0].mxu0 %v7340
    %v7459 = vpop.f32.mrb[0].mxu0
    %v7460 = vadd.f32 0.0, %v7459
    %v7461 = vpop.f32.mrb[0].mxu0
    %7462 = vmatprep.mubr.f32.mxu0 0.0
    %7463 = vmatmul.mubr.f32.gmra.mrb[0].mxu0 %v7341
    %v7464 = vpop.f32.mrb[0].mxu0
    %v7465 = vadd.f32 0.0, %v7464
    %v7466 = vpop.f32.mrb[0].mxu0
    %7467 = vmatprep.mubr.f32.mxu0 0.0
    %7468 = vmatmul.mubr.f32.gmra.mrb[0].mxu0 %v7342
    %v7469 = vpop.f32.mrb[0].mxu0
    %v7470 = vadd.f32 0.0, %v7469
    %v7471 = vpop.f32.mrb[0].mxu0
    %7472 = vmatprep.mubr.f32.mxu0 0.0
    %7473 = vmatmul.mubr.f32.gmra.mrb[0].mxu0 %v7343
    %v7474 = vpop.f32.mrb[0].mxu0
    %v7475 = vadd.f32 0.0, %v7474
    %v7476 = vpop.f32.mrb[0].mxu0
    %7477 = vmatprep.mubr.f32.mxu0 0.0
    %7478 = vmatmul.mubr.f32.gmra.mrb[0].mxu0 %v7344
    %v7479 = vpop.f32.mrb[0].mxu0
    %v7480 = vadd.f32 0.0, %v7479
    %v7481 = vpop.f32.mrb[0].mxu0
    %7482 = vmatprep.mubr.f32.mxu0 0.0
    %7483 = vmatmul.mubr.f32.gmra.mrb[0].mxu0 %v7345
    %v7484 = vpop.f32.mrb[0].mxu0
    %v7485 = vadd.f32 0.0, %v7484
    %v7486 = vpop.f32.mrb[0].mxu0
    %7487 = vmatprep.mubr.f32.mxu0 0.0
    %7488 = vmatmul.mubr.f32.gmra.mrb[0].mxu0 %v7346
    %v7489 = vpop.f32.mrb[0].mxu0
    %v7490 = vadd.f32 0.0, %v7489
    %v7491 = vpop.f32.mrb[0].mxu0
    %7492 = vmatprep.mubr.f32.mxu0 0.0
    %7493 = vmatmul.mubr.f32.gmra.mrb[0].mxu0 %v7347
    %v7494 = vpop.f32.mrb[0].mxu0
    %v7495 = vadd.f32 0.0, %v7494
    %v7496 = vpop.f32.mrb[0].mxu0
    %7497 = vmatprep.mubr.f32.mxu0 0.0
    %7498 = vmatmul.mubr.f32.gmra.mrb[0].mxu0 %v7348
    %v7499 = vpop.f32.mrb[0].mxu0
    %v7500 = vadd.f32 0.0, %v7499
    %v7501 = vpop.f32.mrb[0].mxu0
    %7502 = vmatprep.mubr.f32.mxu0 0.0
    %7503 = vmatmul.mubr.f32.gmra.mrb[0].mxu0 %v7349
    %v7504 = vpop.f32.mrb[0].mxu0
    %v7505 = vadd.f32 0.0, %v7504
    %v7506 = vpop.f32.mrb[0].mxu0
    %7507 = vmatprep.mubr.f32.mxu0 0.0
    %7508 = vmatmul.mubr.f32.gmra.mrb[0].mxu0 %v7350
    %v7509 = vpop.f32.mrb[0].mxu0
    %v7510 = vadd.f32 0.0, %v7509
    %v7511 = vpop.f32.mrb[0].mxu0
    %7512 = vmatprep.mubr.f32.mxu0 0.0
    %7513 = vmatmul.mubr.f32.gmra.mrb[0].mxu0 %v7351
    %v7514 = vpop.f32.mrb[0].mxu0
    %v7515 = vadd.f32 0.0, %v7514
    %v7516 = vpop.f32.mrb[0].mxu0
    %7517 = vmatprep.mubr.f32.mxu0 0.0
    %7518 = vmatmul.mubr.f32.gmra.mrb[0].mxu0 %v7352
    %v7519 = vpop.f32.mrb[0].mxu0
    %v7520 = vadd.f32 0.0, %v7519
    %v7521 = vpop.f32.mrb[0].mxu0
    %7522 = vmatprep.mubr.f32.mxu0 0.0
    %7523 = vmatmul.mubr.f32.gmra.mrb[0].mxu0 %v7353
    %v7524 = vpop.f32.mrb[0].mxu0
    %v7525 = vadd.f32 0.0, %v7524
    %v7526 = vpop.f32.mrb[0].mxu0
    %7527 = vmatprep.mubr.f32.mxu0 0.0
    %7528 = vmatmul.mubr.f32.gmra.mrb[0].mxu0 %v7354
    %v7529 = vpop.f32.mrb[0].mxu0
    %v7530 = vadd.f32 0.0, %v7529
    %v7531 = vpop.f32.mrb[0].mxu0
    %7532 = vmatprep.mubr.f32.mxu0 0.0
    %7533 = vmatmul.mubr.f32.gmra.mrb[0].mxu0 %v7355
    %v7534 = vpop.f32.mrb[0].mxu0
    %v7535 = vadd.f32 0.0, %v7534
    %v7536 = vpop.f32.mrb[0].mxu0
    %7537 = vmatprep.mubr.f32.mxu0 0.0
    %7538 = vmatmul.mubr.f32.gmra.mrb[0].mxu0 %v7356
    %v7539 = vpop.f32.mrb[0].mxu0
    %v7540 = vadd.f32 0.0, %v7539
    %v7541 = vpop.f32.mrb[0].mxu0
    %7542 = vmatprep.mubr.f32.mxu0 0.0
    %7543 = vmatmul.mubr.f32.gmra.mrb[0].mxu0 %v7357
    %v7544 = vpop.f32.mrb[0].mxu0
    %v7545 = vadd.f32 0.0, %v7544
    %v7546 = vpop.f32.mrb[0].mxu0
    %7547 = vmatprep.mubr.f32.mxu0 0.0
    %7548 = vmatmul.mubr.f32.gmra.mrb[0].mxu0 %v7358
    %v7549 = vpop.f32.mrb[0].mxu0
    %v7550 = vadd.f32 0.0, %v7549
    %v7551 = vpop.f32.mrb[0].mxu0
    %7552 = vmatprep.mubr.f32.mxu0 0.0
    %7553 = vmatmul.mubr.f32.gmra.mrb[0].mxu0 %v7359
    %v7554 = vpop.f32.mrb[0].mxu0
    %v7555 = vadd.f32 0.0, %v7554
    %v7556 = vpop.f32.mrb[0].mxu0
    %7557 = vmatprep.mubr.f32.mxu0 0.0
    %7558 = vmatmul.mubr.f32.gmra.mrb[0].mxu0 %v7360
    %v7559 = vpop.f32.mrb[0].mxu0
    %v7560 = vadd.f32 0.0, %v7559
    %v7561 = vpop.f32.mrb[0].mxu0
    %7562 = vmatprep.mubr.f32.mxu0 0.0
    %7563 = vmatmul.mubr.f32.gmra.mrb[0].mxu0 %v7361
    %v7564 = vpop.f32.mrb[0].mxu0
    %v7565 = vadd.f32 0.0, %v7564
    %v7566 = vpop.f32.mrb[0].mxu0
    %7567 = vmatprep.mubr.f32.mxu0 0.0
    %7568 = vmatmul.mubr.f32.gmra.mrb[0].mxu0 %v7362
    %v7569 = vpop.f32.mrb[0].mxu0
    %v7570 = vadd.f32 0.0, %v7569
    %v7571 = vpop.f32.mrb[0].mxu0
    %7572 = vmatprep.mubr.f32.mxu0 0.0
    %7573 = vmatmul.mubr.f32.gmra.mrb[0].mxu0 %v7363
    %v7574 = vpop.f32.mrb[0].mxu0
    %v7575 = vadd.f32 0.0, %v7574
    %v7576 = vpop.f32.mrb[0].mxu0
    %7577 = vmatprep.mubr.f32.mxu0 0.0
    %7578 = vmatmul.mubr.f32.gmra.mrb[0].mxu0 %v7364
    %v7579 = vpop.f32.mrb[0].mxu0
    %v7580 = vadd.f32 0.0, %v7579
    %v7581 = vpop.f32.mrb[0].mxu0
    %7582 = vmatprep.mubr.f32.mxu0 0.0
    %7583 = vmatmul.mubr.f32.gmra.mrb[0].mxu0 %v7365
    %v7584 = vpop.f32.mrb[0].mxu0
    %v7585 = vadd.f32 0.0, %v7584
    %v7586 = vpop.f32.mrb[0].mxu0
    %7587 = vdwg.mxu0
    %v7588 = vadd.f32 %v7310, %v7450
    %v7589 = vadd.f32 %v7311, %v7455
    %v7590 = vadd.f32 %v7312, %v7460
    %v7591 = vadd.f32 %v7313, %v7465
    %v7592 = vadd.f32 %v7314, %v7470
    %v7593 = vadd.f32 %v7315, %v7475
    %v7594 = vadd.f32 %v7316, %v7480
    %v7595 = vadd.f32 %v7317, %v7485
    %v7596 = vadd.f32 %v7318, %v7490
    %v7597 = vadd.f32 %v7319, %v7495
    %v7598 = vadd.f32 %v7320, %v7500
    %v7599 = vadd.f32 %v7321, %v7505
    %v7600 = vadd.f32 %v7322, %v7510
    %v7601 = vadd.f32 %v7323, %v7515
    %v7602 = vadd.f32 %v7324, %v7520
    %v7603 = vadd.f32 %v7325, %v7525
    %v7604 = vadd.f32 %v7326, %v7530
    %v7605 = vadd.f32 %v7327, %v7535
    %v7606 = vadd.f32 %v7328, %v7540
    %v7607 = vadd.f32 %v7329, %v7545
    %v7608 = vadd.f32 %v7330, %v7550
    %v7609 = vadd.f32 %v7331, %v7555
    %v7610 = vadd.f32 %v7332, %v7560
    %v7611 = vadd.f32 %v7333, %v7565
    %v7612 = vadd.f32 %v7334, %v7570
    %v7613 = vadd.f32 %v7335, %v7575
    %v7614 = vadd.f32 %v7336, %v7580
    %v7615 = vadd.f32 %v7337, %v7585
    %v7616 = vld [vmem:[#allocation3 + $0x20] sm:$0xff]
    %v7617 = vld [vmem:[#allocation3 + $0x28] sm:$0xff]
    %v7618 = vld [vmem:[#allocation3 + $0x30] sm:$0xff]
    %v7619 = vld [vmem:[#allocation3 + $0x38] sm:$0xff]
    %v7620 = vld [vmem:[#allocation3 + $0x40] sm:$0xff]
    %v7621 = vld [vmem:[#allocation3 + $0x48] sm:$0xff]
    %v7622 = vld [vmem:[#allocation3 + $0x50] sm:$0xff]
    %v7623 = vld [vmem:[#allocation3 + $0x58] sm:$0xff]
    %v7624 = vld [vmem:[#allocation3 + $0x60] sm:$0xff]
    %v7625 = vld [vmem:[#allocation3 + $0x68] sm:$0xff]
    %v7626 = vld [vmem:[#allocation3 + $0x70] sm:$0xff]
    %v7627 = vld [vmem:[#allocation3 + $0x78] sm:$0xff]
    %v7628 = vld [vmem:[#allocation3 + $0x80] sm:$0xff]
    %v7629 = vld [vmem:[#allocation3 + $0x88] sm:$0xff]
    %v7630 = vld [vmem:[#allocation3 + $0x90] sm:$0xff]
    %v7631 = vld [vmem:[#allocation3 + $0x98] sm:$0xff]
    %v7632 = vld [vmem:[#allocation3 + $0xa0] sm:$0xff]
    %v7633 = vld [vmem:[#allocation3 + $0xa8] sm:$0xff]
    %v7634 = vld [vmem:[#allocation3 + $0xb0] sm:$0xff]
    %v7635 = vld [vmem:[#allocation3 + $0xb8] sm:$0xff]
    %v7636 = vld [vmem:[#allocation3 + $0xc0] sm:$0xff]
    %v7637 = vld [vmem:[#allocation3 + $0xc8] sm:$0xff]
    %v7638 = vld [vmem:[#allocation3 + $0xd0] sm:$0xff]
    %v7639 = vld [vmem:[#allocation3 + $0xd8] sm:$0xff]
    %v7640 = vld [vmem:[#allocation3 + $0xe0] sm:$0xff]
    %v7641 = vld [vmem:[#allocation3 + $0xe8] sm:$0xff]
    %v7642 = vld [vmem:[#allocation3 + $0xf0] sm:$0xff]
    %v7643 = vld [vmem:[#allocation3 + $0xf8] sm:$0x3f]
    %s7644 = scalar_lea.vmem [#allocation9], 768
    %v7645 = vld [vmem:[%s7644] sm:$0xff]
    %v7646 = vld [vmem:[%s7644 + $0x8] sm:$0xff]
    %v7647 = vld [vmem:[%s7644 + $0x10] sm:$0xff]
    %v7648 = vld [vmem:[%s7644 + $0x18] sm:$0xff]
    %v7649 = vld [vmem:[%s7644 + $0x20] sm:$0xff]
    %v7650 = vld [vmem:[%s7644 + $0x28] sm:$0xff]
    %v7651 = vld [vmem:[%s7644 + $0x30] sm:$0xff]
    %v7652 = vld [vmem:[%s7644 + $0x38] sm:$0xff]
    %v7653 = vld [vmem:[%s7644 + $0x40] sm:$0xff]
    %v7654 = vld [vmem:[%s7644 + $0x48] sm:$0xff]
    %v7655 = vld [vmem:[%s7644 + $0x50] sm:$0xff]
    %v7656 = vld [vmem:[%s7644 + $0x58] sm:$0xff]
    %v7657 = vld [vmem:[%s7644 + $0x60] sm:$0xff]
    %v7658 = vld [vmem:[%s7644 + $0x68] sm:$0xff]
    %v7659 = vld [vmem:[%s7644 + $0x70] sm:$0xff]
    %v7660 = vld [vmem:[%s7644 + $0x78] sm:$0xff]
    %7661 = vmatprep.subr.mxu0 0.0
    %7662 = vmatpush1.msra.mxu0 %v7645
    %7663 = vmatprep.subr.mxu0 0.0
    %7664 = vmatpush1.msra.mxu0 %v7646
    %7665 = vmatprep.subr.mxu0 0.0
    %7666 = vmatpush1.msra.mxu0 %v7647
    %7667 = vmatprep.subr.mxu0 0.0
    %7668 = vmatpush1.msra.mxu0 %v7648
    %7669 = vmatprep.subr.mxu0 0.0
    %7670 = vmatpush1.msra.mxu0 %v7649
    %7671 = vmatprep.subr.mxu0 0.0
    %7672 = vmatpush1.msra.mxu0 %v7650
    %7673 = vmatprep.subr.mxu0 0.0
    %7674 = vmatpush1.msra.mxu0 %v7651
    %7675 = vmatprep.subr.mxu0 0.0
    %7676 = vmatpush1.msra.mxu0 %v7652
    %7677 = vmatprep.subr.mxu0 0.0
    %7678 = vmatpush1.msra.mxu0 %v7653
    %7679 = vmatprep.subr.mxu0 0.0
    %7680 = vmatpush1.msra.mxu0 %v7654
    %7681 = vmatprep.subr.mxu0 0.0
    %7682 = vmatpush1.msra.mxu0 %v7655
    %7683 = vmatprep.subr.mxu0 0.0
    %7684 = vmatpush1.msra.mxu0 %v7656
    %7685 = vmatprep.subr.mxu0 0.0
    %7686 = vmatpush1.msra.mxu0 %v7657
    %7687 = vmatprep.subr.mxu0 0.0
    %7688 = vmatpush1.msra.mxu0 %v7658
    %7689 = vmatprep.subr.mxu0 0.0
    %7690 = vmatpush1.msra.mxu0 %v7659
    %7691 = vmatprep.subr.mxu0 0.0
    %7692 = vmatpush1.msra.mxu0 %v7660
    %7693 = vmatprep.subr.mxu0 0.0
    %7694 = vmatpush1.msra.mxu0 0.0
    %7695 = vmatprep.subr.mxu0 0.0
    %7696 = vmatpush1.msra.mxu0 0.0
    %7697 = vmatprep.subr.mxu0 0.0
    %7698 = vmatpush1.msra.mxu0 0.0
    %7699 = vmatprep.subr.mxu0 0.0
    %7700 = vmatpush1.msra.mxu0 0.0
    %7701 = vmatprep.subr.mxu0 0.0
    %7702 = vmatpush1.msra.mxu0 0.0
    %7703 = vmatprep.subr.mxu0 0.0
    %7704 = vmatpush1.msra.mxu0 0.0
    %7705 = vmatprep.subr.mxu0 0.0
    %7706 = vmatpush1.msra.mxu0 0.0
    %7707 = vmatprep.subr.mxu0 0.0
    %7708 = vmatpush1.msra.mxu0 0.0
    %7709 = vmatprep.subr.mxu0 0.0
    %7710 = vmatpush1.msra.mxu0 0.0
    %7711 = vmatprep.subr.mxu0 0.0
    %7712 = vmatpush1.msra.mxu0 0.0
    %7713 = vmatprep.subr.mxu0 0.0
    %7714 = vmatpush1.msra.mxu0 0.0
    %7715 = vmatprep.subr.mxu0 0.0
    %7716 = vmatpush1.msra.mxu0 0.0
    %7717 = vmatprep.subr.mxu0 0.0
    %7718 = vmatpush1.msra.mxu0 0.0
    %7719 = vmatprep.subr.mxu0 0.0
    %7720 = vmatpush1.msra.mxu0 0.0
    %7721 = vmatprep.subr.mxu0 0.0
    %7722 = vmatpush1.msra.mxu0 0.0
    %7723 = vmatprep.subr.mxu0 0.0
    %7724 = vmatpush1.msra.mxu0 0.0
    %7725 = vmatprep.mubr.f32.mxu0 0.0
    %7726 = vmatmul.mubr.f32.gmra.mrb[0].mxu0 %v7616
    %v7727 = vpop.f32.mrb[0].mxu0
    %v7728 = vadd.f32 0.0, %v7727
    %v7729 = vpop.f32.mrb[0].mxu0
    %7730 = vmatprep.mubr.f32.mxu0 0.0
    %7731 = vmatmul.mubr.f32.gmra.mrb[0].mxu0 %v7617
    %v7732 = vpop.f32.mrb[0].mxu0
    %v7733 = vadd.f32 0.0, %v7732
    %v7734 = vpop.f32.mrb[0].mxu0
    %7735 = vmatprep.mubr.f32.mxu0 0.0
    %7736 = vmatmul.mubr.f32.gmra.mrb[0].mxu0 %v7618
    %v7737 = vpop.f32.mrb[0].mxu0
    %v7738 = vadd.f32 0.0, %v7737
    %v7739 = vpop.f32.mrb[0].mxu0
    %7740 = vmatprep.mubr.f32.mxu0 0.0
    %7741 = vmatmul.mubr.f32.gmra.mrb[0].mxu0 %v7619
    %v7742 = vpop.f32.mrb[0].mxu0
    %v7743 = vadd.f32 0.0, %v7742
    %v7744 = vpop.f32.mrb[0].mxu0
    %7745 = vmatprep.mubr.f32.mxu0 0.0
    %7746 = vmatmul.mubr.f32.gmra.mrb[0].mxu0 %v7620
    %v7747 = vpop.f32.mrb[0].mxu0
    %v7748 = vadd.f32 0.0, %v7747
    %v7749 = vpop.f32.mrb[0].mxu0
    %7750 = vmatprep.mubr.f32.mxu0 0.0
    %7751 = vmatmul.mubr.f32.gmra.mrb[0].mxu0 %v7621
    %v7752 = vpop.f32.mrb[0].mxu0
    %v7753 = vadd.f32 0.0, %v7752
    %v7754 = vpop.f32.mrb[0].mxu0
    %7755 = vmatprep.mubr.f32.mxu0 0.0
    %7756 = vmatmul.mubr.f32.gmra.mrb[0].mxu0 %v7622
    %v7757 = vpop.f32.mrb[0].mxu0
    %v7758 = vadd.f32 0.0, %v7757
    %v7759 = vpop.f32.mrb[0].mxu0
    %7760 = vmatprep.mubr.f32.mxu0 0.0
    %7761 = vmatmul.mubr.f32.gmra.mrb[0].mxu0 %v7623
    %v7762 = vpop.f32.mrb[0].mxu0
    %v7763 = vadd.f32 0.0, %v7762
    %v7764 = vpop.f32.mrb[0].mxu0
    %7765 = vmatprep.mubr.f32.mxu0 0.0
    %7766 = vmatmul.mubr.f32.gmra.mrb[0].mxu0 %v7624
    %v7767 = vpop.f32.mrb[0].mxu0
    %v7768 = vadd.f32 0.0, %v7767
    %v7769 = vpop.f32.mrb[0].mxu0
    %7770 = vmatprep.mubr.f32.mxu0 0.0
    %7771 = vmatmul.mubr.f32.gmra.mrb[0].mxu0 %v7625
    %v7772 = vpop.f32.mrb[0].mxu0
    %v7773 = vadd.f32 0.0, %v7772
    %v7774 = vpop.f32.mrb[0].mxu0
    %7775 = vmatprep.mubr.f32.mxu0 0.0
    %7776 = vmatmul.mubr.f32.gmra.mrb[0].mxu0 %v7626
    %v7777 = vpop.f32.mrb[0].mxu0
    %v7778 = vadd.f32 0.0, %v7777
    %v7779 = vpop.f32.mrb[0].mxu0
    %7780 = vmatprep.mubr.f32.mxu0 0.0
    %7781 = vmatmul.mubr.f32.gmra.mrb[0].mxu0 %v7627
    %v7782 = vpop.f32.mrb[0].mxu0
    %v7783 = vadd.f32 0.0, %v7782
    %v7784 = vpop.f32.mrb[0].mxu0
    %7785 = vmatprep.mubr.f32.mxu0 0.0
    %7786 = vmatmul.mubr.f32.gmra.mrb[0].mxu0 %v7628
    %v7787 = vpop.f32.mrb[0].mxu0
    %v7788 = vadd.f32 0.0, %v7787
    %v7789 = vpop.f32.mrb[0].mxu0
    %7790 = vmatprep.mubr.f32.mxu0 0.0
    %7791 = vmatmul.mubr.f32.gmra.mrb[0].mxu0 %v7629
    %v7792 = vpop.f32.mrb[0].mxu0
    %v7793 = vadd.f32 0.0, %v7792
    %v7794 = vpop.f32.mrb[0].mxu0
    %7795 = vmatprep.mubr.f32.mxu0 0.0
    %7796 = vmatmul.mubr.f32.gmra.mrb[0].mxu0 %v7630
    %v7797 = vpop.f32.mrb[0].mxu0
    %v7798 = vadd.f32 0.0, %v7797
    %v7799 = vpop.f32.mrb[0].mxu0
    %7800 = vmatprep.mubr.f32.mxu0 0.0
    %7801 = vmatmul.mubr.f32.gmra.mrb[0].mxu0 %v7631
    %v7802 = vpop.f32.mrb[0].mxu0
    %v7803 = vadd.f32 0.0, %v7802
    %v7804 = vpop.f32.mrb[0].mxu0
    %7805 = vmatprep.mubr.f32.mxu0 0.0
    %7806 = vmatmul.mubr.f32.gmra.mrb[0].mxu0 %v7632
    %v7807 = vpop.f32.mrb[0].mxu0
    %v7808 = vadd.f32 0.0, %v7807
    %v7809 = vpop.f32.mrb[0].mxu0
    %7810 = vmatprep.mubr.f32.mxu0 0.0
    %7811 = vmatmul.mubr.f32.gmra.mrb[0].mxu0 %v7633
    %v7812 = vpop.f32.mrb[0].mxu0
    %v7813 = vadd.f32 0.0, %v7812
    %v7814 = vpop.f32.mrb[0].mxu0
    %7815 = vmatprep.mubr.f32.mxu0 0.0
    %7816 = vmatmul.mubr.f32.gmra.mrb[0].mxu0 %v7634
    %v7817 = vpop.f32.mrb[0].mxu0
    %v7818 = vadd.f32 0.0, %v7817
    %v7819 = vpop.f32.mrb[0].mxu0
    %7820 = vmatprep.mubr.f32.mxu0 0.0
    %7821 = vmatmul.mubr.f32.gmra.mrb[0].mxu0 %v7635
    %v7822 = vpop.f32.mrb[0].mxu0
    %v7823 = vadd.f32 0.0, %v7822
    %v7824 = vpop.f32.mrb[0].mxu0
    %7825 = vmatprep.mubr.f32.mxu0 0.0
    %7826 = vmatmul.mubr.f32.gmra.mrb[0].mxu0 %v7636
    %v7827 = vpop.f32.mrb[0].mxu0
    %v7828 = vadd.f32 0.0, %v7827
    %v7829 = vpop.f32.mrb[0].mxu0
    %7830 = vmatprep.mubr.f32.mxu0 0.0
    %7831 = vmatmul.mubr.f32.gmra.mrb[0].mxu0 %v7637
    %v7832 = vpop.f32.mrb[0].mxu0
    %v7833 = vadd.f32 0.0, %v7832
    %v7834 = vpop.f32.mrb[0].mxu0
    %7835 = vmatprep.mubr.f32.mxu0 0.0
    %7836 = vmatmul.mubr.f32.gmra.mrb[0].mxu0 %v7638
    %v7837 = vpop.f32.mrb[0].mxu0
    %v7838 = vadd.f32 0.0, %v7837
    %v7839 = vpop.f32.mrb[0].mxu0
    %7840 = vmatprep.mubr.f32.mxu0 0.0
    %7841 = vmatmul.mubr.f32.gmra.mrb[0].mxu0 %v7639
    %v7842 = vpop.f32.mrb[0].mxu0
    %v7843 = vadd.f32 0.0, %v7842
    %v7844 = vpop.f32.mrb[0].mxu0
    %7845 = vmatprep.mubr.f32.mxu0 0.0
    %7846 = vmatmul.mubr.f32.gmra.mrb[0].mxu0 %v7640
    %v7847 = vpop.f32.mrb[0].mxu0
    %v7848 = vadd.f32 0.0, %v7847
    %v7849 = vpop.f32.mrb[0].mxu0
    %7850 = vmatprep.mubr.f32.mxu0 0.0
    %7851 = vmatmul.mubr.f32.gmra.mrb[0].mxu0 %v7641
    %v7852 = vpop.f32.mrb[0].mxu0
    %v7853 = vadd.f32 0.0, %v7852
    %v7854 = vpop.f32.mrb[0].mxu0
    %7855 = vmatprep.mubr.f32.mxu0 0.0
    %7856 = vmatmul.mubr.f32.gmra.mrb[0].mxu0 %v7642
    %v7857 = vpop.f32.mrb[0].mxu0
    %v7858 = vadd.f32 0.0, %v7857
    %v7859 = vpop.f32.mrb[0].mxu0
    %7860 = vmatprep.mubr.f32.mxu0 0.0
    %7861 = vmatmul.mubr.f32.gmra.mrb[0].mxu0 %v7643
    %v7862 = vpop.f32.mrb[0].mxu0
    %v7863 = vadd.f32 0.0, %v7862
    %v7864 = vpop.f32.mrb[0].mxu0
    %7865 = vdwg.mxu0
    %v7866 = vadd.f32 %v7588, %v7728
    %v7867 = vadd.f32 %v7589, %v7733
    %v7868 = vadd.f32 %v7590, %v7738
    %v7869 = vadd.f32 %v7591, %v7743
    %v7870 = vadd.f32 %v7592, %v7748
    %v7871 = vadd.f32 %v7593, %v7753
    %v7872 = vadd.f32 %v7594, %v7758
    %v7873 = vadd.f32 %v7595, %v7763
    %v7874 = vadd.f32 %v7596, %v7768
    %v7875 = vadd.f32 %v7597, %v7773
    %v7876 = vadd.f32 %v7598, %v7778
    %v7877 = vadd.f32 %v7599, %v7783
    %v7878 = vadd.f32 %v7600, %v7788
    %v7879 = vadd.f32 %v7601, %v7793
    %v7880 = vadd.f32 %v7602, %v7798
    %v7881 = vadd.f32 %v7603, %v7803
    %v7882 = vadd.f32 %v7604, %v7808
    %v7883 = vadd.f32 %v7605, %v7813
    %v7884 = vadd.f32 %v7606, %v7818
    %v7885 = vadd.f32 %v7607, %v7823
    %v7886 = vadd.f32 %v7608, %v7828
    %v7887 = vadd.f32 %v7609, %v7833
    %v7888 = vadd.f32 %v7610, %v7838
    %v7889 = vadd.f32 %v7611, %v7843
    %v7890 = vadd.f32 %v7612, %v7848
    %v7891 = vadd.f32 %v7613, %v7853
    %v7892 = vadd.f32 %v7614, %v7858
    %v7893 = vadd.f32 %v7615, %v7863
    %v7894 = vld [vmem:[#allocation3 + $0x21] sm:$0xff]
    %v7895 = vld [vmem:[#allocation3 + $0x29] sm:$0xff]
    %v7896 = vld [vmem:[#allocation3 + $0x31] sm:$0xff]
    %v7897 = vld [vmem:[#allocation3 + $0x39] sm:$0xff]
    %v7898 = vld [vmem:[#allocation3 + $0x41] sm:$0xff]
    %v7899 = vld [vmem:[#allocation3 + $0x49] sm:$0xff]
    %v7900 = vld [vmem:[#allocation3 + $0x51] sm:$0xff]
    %v7901 = vld [vmem:[#allocation3 + $0x59] sm:$0xff]
    %v7902 = vld [vmem:[#allocation3 + $0x61] sm:$0xff]
    %v7903 = vld [vmem:[#allocation3 + $0x69] sm:$0xff]
    %v7904 = vld [vmem:[#allocation3 + $0x71] sm:$0xff]
    %v7905 = vld [vmem:[#allocation3 + $0x79] sm:$0xff]
    %v7906 = vld [vmem:[#allocation3 + $0x81] sm:$0xff]
    %v7907 = vld [vmem:[#allocation3 + $0x89] sm:$0xff]
    %v7908 = vld [vmem:[#allocation3 + $0x91] sm:$0xff]
    %v7909 = vld [vmem:[#allocation3 + $0x99] sm:$0xff]
    %v7910 = vld [vmem:[#allocation3 + $0xa1] sm:$0xff]
    %v7911 = vld [vmem:[#allocation3 + $0xa9] sm:$0xff]
    %v7912 = vld [vmem:[#allocation3 + $0xb1] sm:$0xff]
    %v7913 = vld [vmem:[#allocation3 + $0xb9] sm:$0xff]
    %v7914 = vld [vmem:[#allocation3 + $0xc1] sm:$0xff]
    %v7915 = vld [vmem:[#allocation3 + $0xc9] sm:$0xff]
    %v7916 = vld [vmem:[#allocation3 + $0xd1] sm:$0xff]
    %v7917 = vld [vmem:[#allocation3 + $0xd9] sm:$0xff]
    %v7918 = vld [vmem:[#allocation3 + $0xe1] sm:$0xff]
    %v7919 = vld [vmem:[#allocation3 + $0xe9] sm:$0xff]
    %v7920 = vld [vmem:[#allocation3 + $0xf1] sm:$0xff]
    %v7921 = vld [vmem:[#allocation3 + $0xf9] sm:$0x3f]
    %s7922 = scalar_lea.vmem [#allocation9], 896
    %v7923 = vld [vmem:[%s7922] sm:$0xff]
    %v7924 = vld [vmem:[%s7922 + $0x8] sm:$0xff]
    %v7925 = vld [vmem:[%s7922 + $0x10] sm:$0xff]
    %v7926 = vld [vmem:[%s7922 + $0x18] sm:$0xff]
    %v7927 = vld [vmem:[%s7922 + $0x20] sm:$0xff]
    %v7928 = vld [vmem:[%s7922 + $0x28] sm:$0xff]
    %v7929 = vld [vmem:[%s7922 + $0x30] sm:$0xff]
    %v7930 = vld [vmem:[%s7922 + $0x38] sm:$0xff]
    %v7931 = vld [vmem:[%s7922 + $0x40] sm:$0xff]
    %v7932 = vld [vmem:[%s7922 + $0x48] sm:$0xff]
    %v7933 = vld [vmem:[%s7922 + $0x50] sm:$0xff]
    %v7934 = vld [vmem:[%s7922 + $0x58] sm:$0xff]
    %v7935 = vld [vmem:[%s7922 + $0x60] sm:$0xff]
    %v7936 = vld [vmem:[%s7922 + $0x68] sm:$0xff]
    %v7937 = vld [vmem:[%s7922 + $0x70] sm:$0xff]
    %v7938 = vld [vmem:[%s7922 + $0x78] sm:$0xff]
    %7939 = vmatprep.subr.mxu0 0.0
    %7940 = vmatpush1.msra.mxu0 %v7923
    %7941 = vmatprep.subr.mxu0 0.0
    %7942 = vmatpush1.msra.mxu0 %v7924
    %7943 = vmatprep.subr.mxu0 0.0
    %7944 = vmatpush1.msra.mxu0 %v7925
    %7945 = vmatprep.subr.mxu0 0.0
    %7946 = vmatpush1.msra.mxu0 %v7926
    %7947 = vmatprep.subr.mxu0 0.0
    %7948 = vmatpush1.msra.mxu0 %v7927
    %7949 = vmatprep.subr.mxu0 0.0
    %7950 = vmatpush1.msra.mxu0 %v7928
    %7951 = vmatprep.subr.mxu0 0.0
    %7952 = vmatpush1.msra.mxu0 %v7929
    %7953 = vmatprep.subr.mxu0 0.0
    %7954 = vmatpush1.msra.mxu0 %v7930
    %7955 = vmatprep.subr.mxu0 0.0
    %7956 = vmatpush1.msra.mxu0 %v7931
    %7957 = vmatprep.subr.mxu0 0.0
    %7958 = vmatpush1.msra.mxu0 %v7932
    %7959 = vmatprep.subr.mxu0 0.0
    %7960 = vmatpush1.msra.mxu0 %v7933
    %7961 = vmatprep.subr.mxu0 0.0
    %7962 = vmatpush1.msra.mxu0 %v7934
    %7963 = vmatprep.subr.mxu0 0.0
    %7964 = vmatpush1.msra.mxu0 %v7935
    %7965 = vmatprep.subr.mxu0 0.0
    %7966 = vmatpush1.msra.mxu0 %v7936
    %7967 = vmatprep.subr.mxu0 0.0
    %7968 = vmatpush1.msra.mxu0 %v7937
    %7969 = vmatprep.subr.mxu0 0.0
    %7970 = vmatpush1.msra.mxu0 %v7938
    %7971 = vmatprep.subr.mxu0 0.0
    %7972 = vmatpush1.msra.mxu0 0.0
    %7973 = vmatprep.subr.mxu0 0.0
    %7974 = vmatpush1.msra.mxu0 0.0
    %7975 = vmatprep.subr.mxu0 0.0
    %7976 = vmatpush1.msra.mxu0 0.0
    %7977 = vmatprep.subr.mxu0 0.0
    %7978 = vmatpush1.msra.mxu0 0.0
    %7979 = vmatprep.subr.mxu0 0.0
    %7980 = vmatpush1.msra.mxu0 0.0
    %7981 = vmatprep.subr.mxu0 0.0
    %7982 = vmatpush1.msra.mxu0 0.0
    %7983 = vmatprep.subr.mxu0 0.0
    %7984 = vmatpush1.msra.mxu0 0.0
    %7985 = vmatprep.subr.mxu0 0.0
    %7986 = vmatpush1.msra.mxu0 0.0
    %7987 = vmatprep.subr.mxu0 0.0
    %7988 = vmatpush1.msra.mxu0 0.0
    %7989 = vmatprep.subr.mxu0 0.0
    %7990 = vmatpush1.msra.mxu0 0.0
    %7991 = vmatprep.subr.mxu0 0.0
    %7992 = vmatpush1.msra.mxu0 0.0
    %7993 = vmatprep.subr.mxu0 0.0
    %7994 = vmatpush1.msra.mxu0 0.0
    %7995 = vmatprep.subr.mxu0 0.0
    %7996 = vmatpush1.msra.mxu0 0.0
    %7997 = vmatprep.subr.mxu0 0.0
    %7998 = vmatpush1.msra.mxu0 0.0
    %7999 = vmatprep.subr.mxu0 0.0
    %8000 = vmatpush1.msra.mxu0 0.0
    %8001 = vmatprep.subr.mxu0 0.0
    %8002 = vmatpush1.msra.mxu0 0.0
    %8003 = vmatprep.mubr.f32.mxu0 0.0
    %8004 = vmatmul.mubr.f32.gmra.mrb[0].mxu0 %v7894
    %v8005 = vpop.f32.mrb[0].mxu0
    %v8006 = vadd.f32 0.0, %v8005
    %v8007 = vpop.f32.mrb[0].mxu0
    %8008 = vmatprep.mubr.f32.mxu0 0.0
    %8009 = vmatmul.mubr.f32.gmra.mrb[0].mxu0 %v7895
    %v8010 = vpop.f32.mrb[0].mxu0
    %v8011 = vadd.f32 0.0, %v8010
    %v8012 = vpop.f32.mrb[0].mxu0
    %8013 = vmatprep.mubr.f32.mxu0 0.0
    %8014 = vmatmul.mubr.f32.gmra.mrb[0].mxu0 %v7896
    %v8015 = vpop.f32.mrb[0].mxu0
    %v8016 = vadd.f32 0.0, %v8015
    %v8017 = vpop.f32.mrb[0].mxu0
    %8018 = vmatprep.mubr.f32.mxu0 0.0
    %8019 = vmatmul.mubr.f32.gmra.mrb[0].mxu0 %v7897
    %v8020 = vpop.f32.mrb[0].mxu0
    %v8021 = vadd.f32 0.0, %v8020
    %v8022 = vpop.f32.mrb[0].mxu0
    %8023 = vmatprep.mubr.f32.mxu0 0.0
    %8024 = vmatmul.mubr.f32.gmra.mrb[0].mxu0 %v7898
    %v8025 = vpop.f32.mrb[0].mxu0
    %v8026 = vadd.f32 0.0, %v8025
    %v8027 = vpop.f32.mrb[0].mxu0
    %8028 = vmatprep.mubr.f32.mxu0 0.0
    %8029 = vmatmul.mubr.f32.gmra.mrb[0].mxu0 %v7899
    %v8030 = vpop.f32.mrb[0].mxu0
    %v8031 = vadd.f32 0.0, %v8030
    %v8032 = vpop.f32.mrb[0].mxu0
    %8033 = vmatprep.mubr.f32.mxu0 0.0
    %8034 = vmatmul.mubr.f32.gmra.mrb[0].mxu0 %v7900
    %v8035 = vpop.f32.mrb[0].mxu0
    %v8036 = vadd.f32 0.0, %v8035
    %v8037 = vpop.f32.mrb[0].mxu0
    %8038 = vmatprep.mubr.f32.mxu0 0.0
    %8039 = vmatmul.mubr.f32.gmra.mrb[0].mxu0 %v7901
    %v8040 = vpop.f32.mrb[0].mxu0
    %v8041 = vadd.f32 0.0, %v8040
    %v8042 = vpop.f32.mrb[0].mxu0
    %8043 = vmatprep.mubr.f32.mxu0 0.0
    %8044 = vmatmul.mubr.f32.gmra.mrb[0].mxu0 %v7902
    %v8045 = vpop.f32.mrb[0].mxu0
    %v8046 = vadd.f32 0.0, %v8045
    %v8047 = vpop.f32.mrb[0].mxu0
    %8048 = vmatprep.mubr.f32.mxu0 0.0
    %8049 = vmatmul.mubr.f32.gmra.mrb[0].mxu0 %v7903
    %v8050 = vpop.f32.mrb[0].mxu0
    %v8051 = vadd.f32 0.0, %v8050
    %v8052 = vpop.f32.mrb[0].mxu0
    %8053 = vmatprep.mubr.f32.mxu0 0.0
    %8054 = vmatmul.mubr.f32.gmra.mrb[0].mxu0 %v7904
    %v8055 = vpop.f32.mrb[0].mxu0
    %v8056 = vadd.f32 0.0, %v8055
    %v8057 = vpop.f32.mrb[0].mxu0
    %8058 = vmatprep.mubr.f32.mxu0 0.0
    %8059 = vmatmul.mubr.f32.gmra.mrb[0].mxu0 %v7905
    %v8060 = vpop.f32.mrb[0].mxu0
    %v8061 = vadd.f32 0.0, %v8060
    %v8062 = vpop.f32.mrb[0].mxu0
    %8063 = vmatprep.mubr.f32.mxu0 0.0
    %8064 = vmatmul.mubr.f32.gmra.mrb[0].mxu0 %v7906
    %v8065 = vpop.f32.mrb[0].mxu0
    %v8066 = vadd.f32 0.0, %v8065
    %v8067 = vpop.f32.mrb[0].mxu0
    %8068 = vmatprep.mubr.f32.mxu0 0.0
    %8069 = vmatmul.mubr.f32.gmra.mrb[0].mxu0 %v7907
    %v8070 = vpop.f32.mrb[0].mxu0
    %v8071 = vadd.f32 0.0, %v8070
    %v8072 = vpop.f32.mrb[0].mxu0
    %8073 = vmatprep.mubr.f32.mxu0 0.0
    %8074 = vmatmul.mubr.f32.gmra.mrb[0].mxu0 %v7908
    %v8075 = vpop.f32.mrb[0].mxu0
    %v8076 = vadd.f32 0.0, %v8075
    %v8077 = vpop.f32.mrb[0].mxu0
    %8078 = vmatprep.mubr.f32.mxu0 0.0
    %8079 = vmatmul.mubr.f32.gmra.mrb[0].mxu0 %v7909
    %v8080 = vpop.f32.mrb[0].mxu0
    %v8081 = vadd.f32 0.0, %v8080
    %v8082 = vpop.f32.mrb[0].mxu0
    %8083 = vmatprep.mubr.f32.mxu0 0.0
    %8084 = vmatmul.mubr.f32.gmra.mrb[0].mxu0 %v7910
    %v8085 = vpop.f32.mrb[0].mxu0
    %v8086 = vadd.f32 0.0, %v8085
    %v8087 = vpop.f32.mrb[0].mxu0
    %8088 = vmatprep.mubr.f32.mxu0 0.0
    %8089 = vmatmul.mubr.f32.gmra.mrb[0].mxu0 %v7911
    %v8090 = vpop.f32.mrb[0].mxu0
    %v8091 = vadd.f32 0.0, %v8090
    %v8092 = vpop.f32.mrb[0].mxu0
    %8093 = vmatprep.mubr.f32.mxu0 0.0
    %8094 = vmatmul.mubr.f32.gmra.mrb[0].mxu0 %v7912
    %v8095 = vpop.f32.mrb[0].mxu0
    %v8096 = vadd.f32 0.0, %v8095
    %v8097 = vpop.f32.mrb[0].mxu0
    %8098 = vmatprep.mubr.f32.mxu0 0.0
    %8099 = vmatmul.mubr.f32.gmra.mrb[0].mxu0 %v7913
    %v8100 = vpop.f32.mrb[0].mxu0
    %v8101 = vadd.f32 0.0, %v8100
    %v8102 = vpop.f32.mrb[0].mxu0
    %8103 = vmatprep.mubr.f32.mxu0 0.0
    %8104 = vmatmul.mubr.f32.gmra.mrb[0].mxu0 %v7914
    %v8105 = vpop.f32.mrb[0].mxu0
    %v8106 = vadd.f32 0.0, %v8105
    %v8107 = vpop.f32.mrb[0].mxu0
    %8108 = vmatprep.mubr.f32.mxu0 0.0
    %8109 = vmatmul.mubr.f32.gmra.mrb[0].mxu0 %v7915
    %v8110 = vpop.f32.mrb[0].mxu0
    %v8111 = vadd.f32 0.0, %v8110
    %v8112 = vpop.f32.mrb[0].mxu0
    %8113 = vmatprep.mubr.f32.mxu0 0.0
    %8114 = vmatmul.mubr.f32.gmra.mrb[0].mxu0 %v7916
    %v8115 = vpop.f32.mrb[0].mxu0
    %v8116 = vadd.f32 0.0, %v8115
    %v8117 = vpop.f32.mrb[0].mxu0
    %8118 = vmatprep.mubr.f32.mxu0 0.0
    %8119 = vmatmul.mubr.f32.gmra.mrb[0].mxu0 %v7917
    %v8120 = vpop.f32.mrb[0].mxu0
    %v8121 = vadd.f32 0.0, %v8120
    %v8122 = vpop.f32.mrb[0].mxu0
    %8123 = vmatprep.mubr.f32.mxu0 0.0
    %8124 = vmatmul.mubr.f32.gmra.mrb[0].mxu0 %v7918
    %v8125 = vpop.f32.mrb[0].mxu0
    %v8126 = vadd.f32 0.0, %v8125
    %v8127 = vpop.f32.mrb[0].mxu0
    %8128 = vmatprep.mubr.f32.mxu0 0.0
    %8129 = vmatmul.mubr.f32.gmra.mrb[0].mxu0 %v7919
    %v8130 = vpop.f32.mrb[0].mxu0
    %v8131 = vadd.f32 0.0, %v8130
    %v8132 = vpop.f32.mrb[0].mxu0
    %8133 = vmatprep.mubr.f32.mxu0 0.0
    %8134 = vmatmul.mubr.f32.gmra.mrb[0].mxu0 %v7920
    %v8135 = vpop.f32.mrb[0].mxu0
    %v8136 = vadd.f32 0.0, %v8135
    %v8137 = vpop.f32.mrb[0].mxu0
    %8138 = vmatprep.mubr.f32.mxu0 0.0
    %8139 = vmatmul.mubr.f32.gmra.mrb[0].mxu0 %v7921
    %v8140 = vpop.f32.mrb[0].mxu0
    %v8141 = vadd.f32 0.0, %v8140
    %v8142 = vpop.f32.mrb[0].mxu0
    %8143 = vdwg.mxu0
    %v8144 = vadd.f32 %v7866, %v8006
    %v8145 = vadd.f32 %v7867, %v8011
    %v8146 = vadd.f32 %v7868, %v8016
    %v8147 = vadd.f32 %v7869, %v8021
    %v8148 = vadd.f32 %v7870, %v8026
    %v8149 = vadd.f32 %v7871, %v8031
    %v8150 = vadd.f32 %v7872, %v8036
    %v8151 = vadd.f32 %v7873, %v8041
    %v8152 = vadd.f32 %v7874, %v8046
    %v8153 = vadd.f32 %v7875, %v8051
    %v8154 = vadd.f32 %v7876, %v8056
    %v8155 = vadd.f32 %v7877, %v8061
    %v8156 = vadd.f32 %v7878, %v8066
    %v8157 = vadd.f32 %v7879, %v8071
    %v8158 = vadd.f32 %v7880, %v8076
    %v8159 = vadd.f32 %v7881, %v8081
    %v8160 = vadd.f32 %v7882, %v8086
    %v8161 = vadd.f32 %v7883, %v8091
    %v8162 = vadd.f32 %v7884, %v8096
    %v8163 = vadd.f32 %v7885, %v8101
    %v8164 = vadd.f32 %v7886, %v8106
    %v8165 = vadd.f32 %v7887, %v8111
    %v8166 = vadd.f32 %v7888, %v8116
    %v8167 = vadd.f32 %v7889, %v8121
    %v8168 = vadd.f32 %v7890, %v8126
    %v8169 = vadd.f32 %v7891, %v8131
    %v8170 = vadd.f32 %v7892, %v8136
    %v8171 = vadd.f32 %v7893, %v8141
    %v8172 = vld [vmem:[#allocation3 + $0x22] sm:$0xff]
    %v8173 = vld [vmem:[#allocation3 + $0x2a] sm:$0xff]
    %v8174 = vld [vmem:[#allocation3 + $0x32] sm:$0xff]
    %v8175 = vld [vmem:[#allocation3 + $0x3a] sm:$0xff]
    %v8176 = vld [vmem:[#allocation3 + $0x42] sm:$0xff]
    %v8177 = vld [vmem:[#allocation3 + $0x4a] sm:$0xff]
    %v8178 = vld [vmem:[#allocation3 + $0x52] sm:$0xff]
    %v8179 = vld [vmem:[#allocation3 + $0x5a] sm:$0xff]
    %v8180 = vld [vmem:[#allocation3 + $0x62] sm:$0xff]
    %v8181 = vld [vmem:[#allocation3 + $0x6a] sm:$0xff]
    %v8182 = vld [vmem:[#allocation3 + $0x72] sm:$0xff]
    %v8183 = vld [vmem:[#allocation3 + $0x7a] sm:$0xff]
    %v8184 = vld [vmem:[#allocation3 + $0x82] sm:$0xff]
    %v8185 = vld [vmem:[#allocation3 + $0x8a] sm:$0xff]
    %v8186 = vld [vmem:[#allocation3 + $0x92] sm:$0xff]
    %v8187 = vld [vmem:[#allocation3 + $0x9a] sm:$0xff]
    %v8188 = vld [vmem:[#allocation3 + $0xa2] sm:$0xff]
    %v8189 = vld [vmem:[#allocation3 + $0xaa] sm:$0xff]
    %v8190 = vld [vmem:[#allocation3 + $0xb2] sm:$0xff]
    %v8191 = vld [vmem:[#allocation3 + $0xba] sm:$0xff]
    %v8192 = vld [vmem:[#allocation3 + $0xc2] sm:$0xff]
    %v8193 = vld [vmem:[#allocation3 + $0xca] sm:$0xff]
    %v8194 = vld [vmem:[#allocation3 + $0xd2] sm:$0xff]
    %v8195 = vld [vmem:[#allocation3 + $0xda] sm:$0xff]
    %v8196 = vld [vmem:[#allocation3 + $0xe2] sm:$0xff]
    %v8197 = vld [vmem:[#allocation3 + $0xea] sm:$0xff]
    %v8198 = vld [vmem:[#allocation3 + $0xf2] sm:$0xff]
    %v8199 = vld [vmem:[#allocation3 + $0xfa] sm:$0x3f]
    %s8200 = scalar_lea.vmem [#allocation9], 1024
    %v8201 = vld [vmem:[%s8200] sm:$0xff]
    %v8202 = vld [vmem:[%s8200 + $0x8] sm:$0xff]
    %v8203 = vld [vmem:[%s8200 + $0x10] sm:$0xff]
    %v8204 = vld [vmem:[%s8200 + $0x18] sm:$0xff]
    %v8205 = vld [vmem:[%s8200 + $0x20] sm:$0xff]
    %v8206 = vld [vmem:[%s8200 + $0x28] sm:$0xff]
    %v8207 = vld [vmem:[%s8200 + $0x30] sm:$0xff]
    %v8208 = vld [vmem:[%s8200 + $0x38] sm:$0xff]
    %v8209 = vld [vmem:[%s8200 + $0x40] sm:$0xff]
    %v8210 = vld [vmem:[%s8200 + $0x48] sm:$0xff]
    %v8211 = vld [vmem:[%s8200 + $0x50] sm:$0xff]
    %v8212 = vld [vmem:[%s8200 + $0x58] sm:$0xff]
    %v8213 = vld [vmem:[%s8200 + $0x60] sm:$0xff]
    %v8214 = vld [vmem:[%s8200 + $0x68] sm:$0xff]
    %v8215 = vld [vmem:[%s8200 + $0x70] sm:$0xff]
    %v8216 = vld [vmem:[%s8200 + $0x78] sm:$0xff]
    %8217 = vmatprep.subr.mxu0 0.0
    %8218 = vmatpush1.msra.mxu0 %v8201
    %8219 = vmatprep.subr.mxu0 0.0
    %8220 = vmatpush1.msra.mxu0 %v8202
    %8221 = vmatprep.subr.mxu0 0.0
    %8222 = vmatpush1.msra.mxu0 %v8203
    %8223 = vmatprep.subr.mxu0 0.0
    %8224 = vmatpush1.msra.mxu0 %v8204
    %8225 = vmatprep.subr.mxu0 0.0
    %8226 = vmatpush1.msra.mxu0 %v8205
    %8227 = vmatprep.subr.mxu0 0.0
    %8228 = vmatpush1.msra.mxu0 %v8206
    %8229 = vmatprep.subr.mxu0 0.0
    %8230 = vmatpush1.msra.mxu0 %v8207
    %8231 = vmatprep.subr.mxu0 0.0
    %8232 = vmatpush1.msra.mxu0 %v8208
    %8233 = vmatprep.subr.mxu0 0.0
    %8234 = vmatpush1.msra.mxu0 %v8209
    %8235 = vmatprep.subr.mxu0 0.0
    %8236 = vmatpush1.msra.mxu0 %v8210
    %8237 = vmatprep.subr.mxu0 0.0
    %8238 = vmatpush1.msra.mxu0 %v8211
    %8239 = vmatprep.subr.mxu0 0.0
    %8240 = vmatpush1.msra.mxu0 %v8212
    %8241 = vmatprep.subr.mxu0 0.0
    %8242 = vmatpush1.msra.mxu0 %v8213
    %8243 = vmatprep.subr.mxu0 0.0
    %8244 = vmatpush1.msra.mxu0 %v8214
    %8245 = vmatprep.subr.mxu0 0.0
    %8246 = vmatpush1.msra.mxu0 %v8215
    %8247 = vmatprep.subr.mxu0 0.0
    %8248 = vmatpush1.msra.mxu0 %v8216
    %8249 = vmatprep.subr.mxu0 0.0
    %8250 = vmatpush1.msra.mxu0 0.0
    %8251 = vmatprep.subr.mxu0 0.0
    %8252 = vmatpush1.msra.mxu0 0.0
    %8253 = vmatprep.subr.mxu0 0.0
    %8254 = vmatpush1.msra.mxu0 0.0
    %8255 = vmatprep.subr.mxu0 0.0
    %8256 = vmatpush1.msra.mxu0 0.0
    %8257 = vmatprep.subr.mxu0 0.0
    %8258 = vmatpush1.msra.mxu0 0.0
    %8259 = vmatprep.subr.mxu0 0.0
    %8260 = vmatpush1.msra.mxu0 0.0
    %8261 = vmatprep.subr.mxu0 0.0
    %8262 = vmatpush1.msra.mxu0 0.0
    %8263 = vmatprep.subr.mxu0 0.0
    %8264 = vmatpush1.msra.mxu0 0.0
    %8265 = vmatprep.subr.mxu0 0.0
    %8266 = vmatpush1.msra.mxu0 0.0
    %8267 = vmatprep.subr.mxu0 0.0
    %8268 = vmatpush1.msra.mxu0 0.0
    %8269 = vmatprep.subr.mxu0 0.0
    %8270 = vmatpush1.msra.mxu0 0.0
    %8271 = vmatprep.subr.mxu0 0.0
    %8272 = vmatpush1.msra.mxu0 0.0
    %8273 = vmatprep.subr.mxu0 0.0
    %8274 = vmatpush1.msra.mxu0 0.0
    %8275 = vmatprep.subr.mxu0 0.0
    %8276 = vmatpush1.msra.mxu0 0.0
    %8277 = vmatprep.subr.mxu0 0.0
    %8278 = vmatpush1.msra.mxu0 0.0
    %8279 = vmatprep.subr.mxu0 0.0
    %8280 = vmatpush1.msra.mxu0 0.0
    %8281 = vmatprep.mubr.f32.mxu0 0.0
    %8282 = vmatmul.mubr.f32.gmra.mrb[0].mxu0 %v8172
    %v8283 = vpop.f32.mrb[0].mxu0
    %v8284 = vadd.f32 0.0, %v8283
    %v8285 = vpop.f32.mrb[0].mxu0
    %8286 = vmatprep.mubr.f32.mxu0 0.0
    %8287 = vmatmul.mubr.f32.gmra.mrb[0].mxu0 %v8173
    %v8288 = vpop.f32.mrb[0].mxu0
    %v8289 = vadd.f32 0.0, %v8288
    %v8290 = vpop.f32.mrb[0].mxu0
    %8291 = vmatprep.mubr.f32.mxu0 0.0
    %8292 = vmatmul.mubr.f32.gmra.mrb[0].mxu0 %v8174
    %v8293 = vpop.f32.mrb[0].mxu0
    %v8294 = vadd.f32 0.0, %v8293
    %v8295 = vpop.f32.mrb[0].mxu0
    %8296 = vmatprep.mubr.f32.mxu0 0.0
    %8297 = vmatmul.mubr.f32.gmra.mrb[0].mxu0 %v8175
    %v8298 = vpop.f32.mrb[0].mxu0
    %v8299 = vadd.f32 0.0, %v8298
    %v8300 = vpop.f32.mrb[0].mxu0
    %8301 = vmatprep.mubr.f32.mxu0 0.0
    %8302 = vmatmul.mubr.f32.gmra.mrb[0].mxu0 %v8176
    %v8303 = vpop.f32.mrb[0].mxu0
    %v8304 = vadd.f32 0.0, %v8303
    %v8305 = vpop.f32.mrb[0].mxu0
    %8306 = vmatprep.mubr.f32.mxu0 0.0
    %8307 = vmatmul.mubr.f32.gmra.mrb[0].mxu0 %v8177
    %v8308 = vpop.f32.mrb[0].mxu0
    %v8309 = vadd.f32 0.0, %v8308
    %v8310 = vpop.f32.mrb[0].mxu0
    %8311 = vmatprep.mubr.f32.mxu0 0.0
    %8312 = vmatmul.mubr.f32.gmra.mrb[0].mxu0 %v8178
    %v8313 = vpop.f32.mrb[0].mxu0
    %v8314 = vadd.f32 0.0, %v8313
    %v8315 = vpop.f32.mrb[0].mxu0
    %8316 = vmatprep.mubr.f32.mxu0 0.0
    %8317 = vmatmul.mubr.f32.gmra.mrb[0].mxu0 %v8179
    %v8318 = vpop.f32.mrb[0].mxu0
    %v8319 = vadd.f32 0.0, %v8318
    %v8320 = vpop.f32.mrb[0].mxu0
    %8321 = vmatprep.mubr.f32.mxu0 0.0
    %8322 = vmatmul.mubr.f32.gmra.mrb[0].mxu0 %v8180
    %v8323 = vpop.f32.mrb[0].mxu0
    %v8324 = vadd.f32 0.0, %v8323
    %v8325 = vpop.f32.mrb[0].mxu0
    %8326 = vmatprep.mubr.f32.mxu0 0.0
    %8327 = vmatmul.mubr.f32.gmra.mrb[0].mxu0 %v8181
    %v8328 = vpop.f32.mrb[0].mxu0
    %v8329 = vadd.f32 0.0, %v8328
    %v8330 = vpop.f32.mrb[0].mxu0
    %8331 = vmatprep.mubr.f32.mxu0 0.0
    %8332 = vmatmul.mubr.f32.gmra.mrb[0].mxu0 %v8182
    %v8333 = vpop.f32.mrb[0].mxu0
    %v8334 = vadd.f32 0.0, %v8333
    %v8335 = vpop.f32.mrb[0].mxu0
    %8336 = vmatprep.mubr.f32.mxu0 0.0
    %8337 = vmatmul.mubr.f32.gmra.mrb[0].mxu0 %v8183
    %v8338 = vpop.f32.mrb[0].mxu0
    %v8339 = vadd.f32 0.0, %v8338
    %v8340 = vpop.f32.mrb[0].mxu0
    %8341 = vmatprep.mubr.f32.mxu0 0.0
    %8342 = vmatmul.mubr.f32.gmra.mrb[0].mxu0 %v8184
    %v8343 = vpop.f32.mrb[0].mxu0
    %v8344 = vadd.f32 0.0, %v8343
    %v8345 = vpop.f32.mrb[0].mxu0
    %8346 = vmatprep.mubr.f32.mxu0 0.0
    %8347 = vmatmul.mubr.f32.gmra.mrb[0].mxu0 %v8185
    %v8348 = vpop.f32.mrb[0].mxu0
    %v8349 = vadd.f32 0.0, %v8348
    %v8350 = vpop.f32.mrb[0].mxu0
    %8351 = vmatprep.mubr.f32.mxu0 0.0
    %8352 = vmatmul.mubr.f32.gmra.mrb[0].mxu0 %v8186
    %v8353 = vpop.f32.mrb[0].mxu0
    %v8354 = vadd.f32 0.0, %v8353
    %v8355 = vpop.f32.mrb[0].mxu0
    %8356 = vmatprep.mubr.f32.mxu0 0.0
    %8357 = vmatmul.mubr.f32.gmra.mrb[0].mxu0 %v8187
    %v8358 = vpop.f32.mrb[0].mxu0
    %v8359 = vadd.f32 0.0, %v8358
    %v8360 = vpop.f32.mrb[0].mxu0
    %8361 = vmatprep.mubr.f32.mxu0 0.0
    %8362 = vmatmul.mubr.f32.gmra.mrb[0].mxu0 %v8188
    %v8363 = vpop.f32.mrb[0].mxu0
    %v8364 = vadd.f32 0.0, %v8363
    %v8365 = vpop.f32.mrb[0].mxu0
    %8366 = vmatprep.mubr.f32.mxu0 0.0
    %8367 = vmatmul.mubr.f32.gmra.mrb[0].mxu0 %v8189
    %v8368 = vpop.f32.mrb[0].mxu0
    %v8369 = vadd.f32 0.0, %v8368
    %v8370 = vpop.f32.mrb[0].mxu0
    %8371 = vmatprep.mubr.f32.mxu0 0.0
    %8372 = vmatmul.mubr.f32.gmra.mrb[0].mxu0 %v8190
    %v8373 = vpop.f32.mrb[0].mxu0
    %v8374 = vadd.f32 0.0, %v8373
    %v8375 = vpop.f32.mrb[0].mxu0
    %8376 = vmatprep.mubr.f32.mxu0 0.0
    %8377 = vmatmul.mubr.f32.gmra.mrb[0].mxu0 %v8191
    %v8378 = vpop.f32.mrb[0].mxu0
    %v8379 = vadd.f32 0.0, %v8378
    %v8380 = vpop.f32.mrb[0].mxu0
    %8381 = vmatprep.mubr.f32.mxu0 0.0
    %8382 = vmatmul.mubr.f32.gmra.mrb[0].mxu0 %v8192
    %v8383 = vpop.f32.mrb[0].mxu0
    %v8384 = vadd.f32 0.0, %v8383
    %v8385 = vpop.f32.mrb[0].mxu0
    %8386 = vmatprep.mubr.f32.mxu0 0.0
    %8387 = vmatmul.mubr.f32.gmra.mrb[0].mxu0 %v8193
    %v8388 = vpop.f32.mrb[0].mxu0
    %v8389 = vadd.f32 0.0, %v8388
    %v8390 = vpop.f32.mrb[0].mxu0
    %8391 = vmatprep.mubr.f32.mxu0 0.0
    %8392 = vmatmul.mubr.f32.gmra.mrb[0].mxu0 %v8194
    %v8393 = vpop.f32.mrb[0].mxu0
    %v8394 = vadd.f32 0.0, %v8393
    %v8395 = vpop.f32.mrb[0].mxu0
    %8396 = vmatprep.mubr.f32.mxu0 0.0
    %8397 = vmatmul.mubr.f32.gmra.mrb[0].mxu0 %v8195
    %v8398 = vpop.f32.mrb[0].mxu0
    %v8399 = vadd.f32 0.0, %v8398
    %v8400 = vpop.f32.mrb[0].mxu0
    %8401 = vmatprep.mubr.f32.mxu0 0.0
    %8402 = vmatmul.mubr.f32.gmra.mrb[0].mxu0 %v8196
    %v8403 = vpop.f32.mrb[0].mxu0
    %v8404 = vadd.f32 0.0, %v8403
    %v8405 = vpop.f32.mrb[0].mxu0
    %8406 = vmatprep.mubr.f32.mxu0 0.0
    %8407 = vmatmul.mubr.f32.gmra.mrb[0].mxu0 %v8197
    %v8408 = vpop.f32.mrb[0].mxu0
    %v8409 = vadd.f32 0.0, %v8408
    %v8410 = vpop.f32.mrb[0].mxu0
    %8411 = vmatprep.mubr.f32.mxu0 0.0
    %8412 = vmatmul.mubr.f32.gmra.mrb[0].mxu0 %v8198
    %v8413 = vpop.f32.mrb[0].mxu0
    %v8414 = vadd.f32 0.0, %v8413
    %v8415 = vpop.f32.mrb[0].mxu0
    %8416 = vmatprep.mubr.f32.mxu0 0.0
    %8417 = vmatmul.mubr.f32.gmra.mrb[0].mxu0 %v8199
    %v8418 = vpop.f32.mrb[0].mxu0
    %v8419 = vadd.f32 0.0, %v8418
    %v8420 = vpop.f32.mrb[0].mxu0
    %8421 = vdwg.mxu0
    %v8422 = vadd.f32 %v8144, %v8284
    %v8423 = vadd.f32 %v8145, %v8289
    %v8424 = vadd.f32 %v8146, %v8294
    %v8425 = vadd.f32 %v8147, %v8299
    %v8426 = vadd.f32 %v8148, %v8304
    %v8427 = vadd.f32 %v8149, %v8309
    %v8428 = vadd.f32 %v8150, %v8314
    %v8429 = vadd.f32 %v8151, %v8319
    %v8430 = vadd.f32 %v8152, %v8324
    %v8431 = vadd.f32 %v8153, %v8329
    %v8432 = vadd.f32 %v8154, %v8334
    %v8433 = vadd.f32 %v8155, %v8339
    %v8434 = vadd.f32 %v8156, %v8344
    %v8435 = vadd.f32 %v8157, %v8349
    %v8436 = vadd.f32 %v8158, %v8354
    %v8437 = vadd.f32 %v8159, %v8359
    %v8438 = vadd.f32 %v8160, %v8364
    %v8439 = vadd.f32 %v8161, %v8369
    %v8440 = vadd.f32 %v8162, %v8374
    %v8441 = vadd.f32 %v8163, %v8379
    %v8442 = vadd.f32 %v8164, %v8384
    %v8443 = vadd.f32 %v8165, %v8389
    %v8444 = vadd.f32 %v8166, %v8394
    %v8445 = vadd.f32 %v8167, %v8399
    %v8446 = vadd.f32 %v8168, %v8404
    %v8447 = vadd.f32 %v8169, %v8409
    %v8448 = vadd.f32 %v8170, %v8414
    %v8449 = vadd.f32 %v8171, %v8419
    %v8450 = vld [vmem:[%s8] sm:$0x1]
    %v8452 = vlaneseq
    %v8453 = vshrl.u32 %v8452, 7
    %v8454 = vsub.s32 0, %v8453
    %v8455 = vrot.slane %v8450, %v8454
    %v8457 = vadd.f32 %v8422, %v8455
    %v8458 = vadd.f32 %v8423, %v8455
    %v8459 = vadd.f32 %v8424, %v8455
    %v8460 = vadd.f32 %v8425, %v8455
    %v8461 = vadd.f32 %v8426, %v8455
    %v8462 = vadd.f32 %v8427, %v8455
    %v8463 = vadd.f32 %v8428, %v8455
    %v8464 = vadd.f32 %v8429, %v8455
    %v8465 = vadd.f32 %v8430, %v8455
    %v8466 = vadd.f32 %v8431, %v8455
    %v8467 = vadd.f32 %v8432, %v8455
    %v8468 = vadd.f32 %v8433, %v8455
    %v8469 = vadd.f32 %v8434, %v8455
    %v8470 = vadd.f32 %v8435, %v8455
    %v8471 = vadd.f32 %v8436, %v8455
    %v8472 = vadd.f32 %v8437, %v8455
    %v8473 = vadd.f32 %v8438, %v8455
    %v8474 = vadd.f32 %v8439, %v8455
    %v8475 = vadd.f32 %v8440, %v8455
    %v8476 = vadd.f32 %v8441, %v8455
    %v8477 = vadd.f32 %v8442, %v8455
    %v8478 = vadd.f32 %v8443, %v8455
    %v8479 = vadd.f32 %v8444, %v8455
    %v8480 = vadd.f32 %v8445, %v8455
    %v8481 = vadd.f32 %v8446, %v8455
    %v8482 = vadd.f32 %v8447, %v8455
    %v8483 = vadd.f32 %v8448, %v8455
    %v8484 = vadd.f32 %v8449, %v8455
    %vm8485 = vcmp.ge.f32.partialorder %v8457, 0.0
    %vm8486 = vcmp.ge.f32.partialorder %v8458, 0.0
    %vm8487 = vcmp.ge.f32.partialorder %v8459, 0.0
    %vm8488 = vcmp.ge.f32.partialorder %v8460, 0.0
    %vm8489 = vcmp.ge.f32.partialorder %v8461, 0.0
    %vm8490 = vcmp.ge.f32.partialorder %v8462, 0.0
    %vm8491 = vcmp.ge.f32.partialorder %v8463, 0.0
    %vm8492 = vcmp.ge.f32.partialorder %v8464, 0.0
    %vm8493 = vcmp.ge.f32.partialorder %v8465, 0.0
    %vm8494 = vcmp.ge.f32.partialorder %v8466, 0.0
    %vm8495 = vcmp.ge.f32.partialorder %v8467, 0.0
    %vm8496 = vcmp.ge.f32.partialorder %v8468, 0.0
    %vm8497 = vcmp.ge.f32.partialorder %v8469, 0.0
    %vm8498 = vcmp.ge.f32.partialorder %v8470, 0.0
    %vm8499 = vcmp.ge.f32.partialorder %v8471, 0.0
    %vm8500 = vcmp.ge.f32.partialorder %v8472, 0.0
    %vm8501 = vcmp.ge.f32.partialorder %v8473, 0.0
    %vm8502 = vcmp.ge.f32.partialorder %v8474, 0.0
    %vm8503 = vcmp.ge.f32.partialorder %v8475, 0.0
    %vm8504 = vcmp.ge.f32.partialorder %v8476, 0.0
    %vm8505 = vcmp.ge.f32.partialorder %v8477, 0.0
    %vm8506 = vcmp.ge.f32.partialorder %v8478, 0.0
    %vm8507 = vcmp.ge.f32.partialorder %v8479, 0.0
    %vm8508 = vcmp.ge.f32.partialorder %v8480, 0.0
    %vm8509 = vcmp.ge.f32.partialorder %v8481, 0.0
    %vm8510 = vcmp.ge.f32.partialorder %v8482, 0.0
    %vm8511 = vcmp.ge.f32.partialorder %v8483, 0.0
    %vm8512 = vcmp.ge.f32.partialorder %v8484, 0.0
    %v8513 = vmul.f32 %v8457, 0.01
    %v8514 = vmul.f32 %v8458, 0.01
    %v8515 = vmul.f32 %v8459, 0.01
    %v8516 = vmul.f32 %v8460, 0.01
    %v8517 = vmul.f32 %v8461, 0.01
    %v8518 = vmul.f32 %v8462, 0.01
    %v8519 = vmul.f32 %v8463, 0.01
    %v8520 = vmul.f32 %v8464, 0.01
    %v8521 = vmul.f32 %v8465, 0.01
    %v8522 = vmul.f32 %v8466, 0.01
    %v8523 = vmul.f32 %v8467, 0.01
    %v8524 = vmul.f32 %v8468, 0.01
    %v8525 = vmul.f32 %v8469, 0.01
    %v8526 = vmul.f32 %v8470, 0.01
    %v8527 = vmul.f32 %v8471, 0.01
    %v8528 = vmul.f32 %v8472, 0.01
    %v8529 = vmul.f32 %v8473, 0.01
    %v8530 = vmul.f32 %v8474, 0.01
    %v8531 = vmul.f32 %v8475, 0.01
    %v8532 = vmul.f32 %v8476, 0.01
    %v8533 = vmul.f32 %v8477, 0.01
    %v8534 = vmul.f32 %v8478, 0.01
    %v8535 = vmul.f32 %v8479, 0.01
    %v8536 = vmul.f32 %v8480, 0.01
    %v8537 = vmul.f32 %v8481, 0.01
    %v8538 = vmul.f32 %v8482, 0.01
    %v8539 = vmul.f32 %v8483, 0.01
    %v8540 = vmul.f32 %v8484, 0.01
    %v8541 = vsel %vm8485, %v8457, %v8513
    %v8542 = vsel %vm8486, %v8458, %v8514
    %v8543 = vsel %vm8487, %v8459, %v8515
    %v8544 = vsel %vm8488, %v8460, %v8516
    %v8545 = vsel %vm8489, %v8461, %v8517
    %v8546 = vsel %vm8490, %v8462, %v8518
    %v8547 = vsel %vm8491, %v8463, %v8519
    %v8548 = vsel %vm8492, %v8464, %v8520
    %v8549 = vsel %vm8493, %v8465, %v8521
    %v8550 = vsel %vm8494, %v8466, %v8522
    %v8551 = vsel %vm8495, %v8467, %v8523
    %v8552 = vsel %vm8496, %v8468, %v8524
    %v8553 = vsel %vm8497, %v8469, %v8525
    %v8554 = vsel %vm8498, %v8470, %v8526
    %v8555 = vsel %vm8499, %v8471, %v8527
    %v8556 = vsel %vm8500, %v8472, %v8528
    %v8557 = vsel %vm8501, %v8473, %v8529
    %v8558 = vsel %vm8502, %v8474, %v8530
    %v8559 = vsel %vm8503, %v8475, %v8531
    %v8560 = vsel %vm8504, %v8476, %v8532
    %v8561 = vsel %vm8505, %v8477, %v8533
    %v8562 = vsel %vm8506, %v8478, %v8534
    %v8563 = vsel %vm8507, %v8479, %v8535
    %v8564 = vsel %vm8508, %v8480, %v8536
    %v8565 = vsel %vm8509, %v8481, %v8537
    %v8566 = vsel %vm8510, %v8482, %v8538
    %v8567 = vsel %vm8511, %v8483, %v8539
    %v8568 = vsel %vm8512, %v8484, %v8540
    %8569 = vst [vmem:[#allocation4] sm:$0xff] %v8541
    %8570 = vst [vmem:[#allocation4 + $0x8] sm:$0xff] %v8542
    %8571 = vst [vmem:[#allocation4 + $0x10] sm:$0xff] %v8543
    %8572 = vst [vmem:[#allocation4 + $0x18] sm:$0xff] %v8544
    %8573 = vst [vmem:[#allocation4 + $0x20] sm:$0xff] %v8545
    %8574 = vst [vmem:[#allocation4 + $0x28] sm:$0xff] %v8546
    %8575 = vst [vmem:[#allocation4 + $0x30] sm:$0xff] %v8547
    %8576 = vst [vmem:[#allocation4 + $0x38] sm:$0xff] %v8548
    %8577 = vst [vmem:[#allocation4 + $0x40] sm:$0xff] %v8549
    %8578 = vst [vmem:[#allocation4 + $0x48] sm:$0xff] %v8550
    %8579 = vst [vmem:[#allocation4 + $0x50] sm:$0xff] %v8551
    %8580 = vst [vmem:[#allocation4 + $0x58] sm:$0xff] %v8552
    %8581 = vst [vmem:[#allocation4 + $0x60] sm:$0xff] %v8553
    %8582 = vst [vmem:[#allocation4 + $0x68] sm:$0xff] %v8554
    %8583 = vst [vmem:[#allocation4 + $0x70] sm:$0xff] %v8555
    %8584 = vst [vmem:[#allocation4 + $0x78] sm:$0xff] %v8556
    %8585 = vst [vmem:[#allocation4 + $0x80] sm:$0xff] %v8557
    %8586 = vst [vmem:[#allocation4 + $0x88] sm:$0xff] %v8558
    %8587 = vst [vmem:[#allocation4 + $0x90] sm:$0xff] %v8559
    %8588 = vst [vmem:[#allocation4 + $0x98] sm:$0xff] %v8560
    %8589 = vst [vmem:[#allocation4 + $0xa0] sm:$0xff] %v8561
    %8590 = vst [vmem:[#allocation4 + $0xa8] sm:$0xff] %v8562
    %8591 = vst [vmem:[#allocation4 + $0xb0] sm:$0xff] %v8563
    %8592 = vst [vmem:[#allocation4 + $0xb8] sm:$0xff] %v8564
    %8593 = vst [vmem:[#allocation4 + $0xc0] sm:$0xff] %v8565
    %8594 = vst [vmem:[#allocation4 + $0xc8] sm:$0xff] %v8566
    %8595 = vst [vmem:[#allocation4 + $0xd0] sm:$0xff] %v8567
    %8596 = vst [vmem:[#allocation4 + $0xd8] sm:$0x3f] %v8568
    %v8597 = vld [vmem:[#allocation4] sm:$0xff]
    %v8598 = vld [vmem:[#allocation4 + $0x8] sm:$0xff]
    %v8599 = vld [vmem:[#allocation4 + $0x10] sm:$0xff]
    %v8600 = vld [vmem:[#allocation4 + $0x18] sm:$0xff]
    %v8601 = vld [vmem:[#allocation4 + $0x20] sm:$0xff]
    %v8602 = vld [vmem:[#allocation4 + $0x28] sm:$0xff]
    %v8603 = vld [vmem:[#allocation4 + $0x30] sm:$0xff]
    %v8604 = vld [vmem:[#allocation4 + $0x38] sm:$0xff]
    %v8605 = vld [vmem:[#allocation4 + $0x40] sm:$0xff]
    %v8606 = vld [vmem:[#allocation4 + $0x48] sm:$0xff]
    %v8607 = vld [vmem:[#allocation4 + $0x50] sm:$0xff]
    %v8608 = vld [vmem:[#allocation4 + $0x58] sm:$0xff]
    %v8609 = vld [vmem:[#allocation4 + $0x60] sm:$0xff]
    %v8610 = vld [vmem:[#allocation4 + $0x68] sm:$0xff]
    %v8611 = vld [vmem:[#allocation4 + $0x70] sm:$0xff]
    %v8612 = vld [vmem:[#allocation4 + $0x78] sm:$0xff]
    %v8613 = vld [vmem:[#allocation4 + $0x80] sm:$0xff]
    %v8614 = vld [vmem:[#allocation4 + $0x88] sm:$0xff]
    %v8615 = vld [vmem:[#allocation4 + $0x90] sm:$0xff]
    %v8616 = vld [vmem:[#allocation4 + $0x98] sm:$0xff]
    %v8617 = vld [vmem:[#allocation4 + $0xa0] sm:$0xff]
    %v8618 = vld [vmem:[#allocation4 + $0xa8] sm:$0xff]
    %v8619 = vld [vmem:[#allocation4 + $0xb0] sm:$0xff]
    %v8620 = vld [vmem:[#allocation4 + $0xb8] sm:$0xff]
    %v8621 = vld [vmem:[#allocation4 + $0xc0] sm:$0xff]
    %v8622 = vld [vmem:[#allocation4 + $0xc8] sm:$0x1f]
    %v8623 = vld [vmem:[#allocation4 + $0x1] sm:$0xff]
    %v8624 = vld [vmem:[#allocation4 + $0x9] sm:$0xff]
    %v8625 = vld [vmem:[#allocation4 + $0x11] sm:$0xff]
    %v8626 = vld [vmem:[#allocation4 + $0x19] sm:$0xff]
    %v8627 = vld [vmem:[#allocation4 + $0x21] sm:$0xff]
    %v8628 = vld [vmem:[#allocation4 + $0x29] sm:$0xff]
    %v8629 = vld [vmem:[#allocation4 + $0x31] sm:$0xff]
    %v8630 = vld [vmem:[#allocation4 + $0x39] sm:$0xff]
    %v8631 = vld [vmem:[#allocation4 + $0x41] sm:$0xff]
    %v8632 = vld [vmem:[#allocation4 + $0x49] sm:$0xff]
    %v8633 = vld [vmem:[#allocation4 + $0x51] sm:$0xff]
    %v8634 = vld [vmem:[#allocation4 + $0x59] sm:$0xff]
    %v8635 = vld [vmem:[#allocation4 + $0x61] sm:$0xff]
    %v8636 = vld [vmem:[#allocation4 + $0x69] sm:$0xff]
    %v8637 = vld [vmem:[#allocation4 + $0x71] sm:$0xff]
    %v8638 = vld [vmem:[#allocation4 + $0x79] sm:$0xff]
    %v8639 = vld [vmem:[#allocation4 + $0x81] sm:$0xff]
    %v8640 = vld [vmem:[#allocation4 + $0x89] sm:$0xff]
    %v8641 = vld [vmem:[#allocation4 + $0x91] sm:$0xff]
    %v8642 = vld [vmem:[#allocation4 + $0x99] sm:$0xff]
    %v8643 = vld [vmem:[#allocation4 + $0xa1] sm:$0xff]
    %v8644 = vld [vmem:[#allocation4 + $0xa9] sm:$0xff]
    %v8645 = vld [vmem:[#allocation4 + $0xb1] sm:$0xff]
    %v8646 = vld [vmem:[#allocation4 + $0xb9] sm:$0xff]
    %v8647 = vld [vmem:[#allocation4 + $0xc1] sm:$0xff]
    %v8648 = vld [vmem:[#allocation4 + $0xc9] sm:$0x1f]
    %v8649 = vmax.f32 %v8597, %v8623
    %v8650 = vmax.f32 %v8598, %v8624
    %v8651 = vmax.f32 %v8599, %v8625
    %v8652 = vmax.f32 %v8600, %v8626
    %v8653 = vmax.f32 %v8601, %v8627
    %v8654 = vmax.f32 %v8602, %v8628
    %v8655 = vmax.f32 %v8603, %v8629
    %v8656 = vmax.f32 %v8604, %v8630
    %v8657 = vmax.f32 %v8605, %v8631
    %v8658 = vmax.f32 %v8606, %v8632
    %v8659 = vmax.f32 %v8607, %v8633
    %v8660 = vmax.f32 %v8608, %v8634
    %v8661 = vmax.f32 %v8609, %v8635
    %v8662 = vmax.f32 %v8610, %v8636
    %v8663 = vmax.f32 %v8611, %v8637
    %v8664 = vmax.f32 %v8612, %v8638
    %v8665 = vmax.f32 %v8613, %v8639
    %v8666 = vmax.f32 %v8614, %v8640
    %v8667 = vmax.f32 %v8615, %v8641
    %v8668 = vmax.f32 %v8616, %v8642
    %v8669 = vmax.f32 %v8617, %v8643
    %v8670 = vmax.f32 %v8618, %v8644
    %v8671 = vmax.f32 %v8619, %v8645
    %v8672 = vmax.f32 %v8620, %v8646
    %v8673 = vmax.f32 %v8621, %v8647
    %v8674 = vmax.f32 %v8622, %v8648
    %v8675 = vld [vmem:[#allocation4 + $0xc8] sm:$0xff]
    %v8676 = vld [vmem:[#allocation4 + $0xd0] sm:$0xff]
    %v8677 = vld [vmem:[#allocation4 + $0xd8] sm:$0x1f]
    %v8678 = vld [vmem:[#allocation4 + $0x11] sm:$0xff]
    %v8679 = vld [vmem:[#allocation4 + $0x19] sm:$0xff]
    %v8680 = vld [vmem:[#allocation4 + $0x21] sm:$0xff]
    %v8681 = vld [vmem:[#allocation4 + $0x29] sm:$0xff]
    %v8682 = vld [vmem:[#allocation4 + $0x31] sm:$0xff]
    %v8683 = vld [vmem:[#allocation4 + $0x39] sm:$0xff]
    %v8684 = vld [vmem:[#allocation4 + $0x41] sm:$0xff]
    %v8685 = vld [vmem:[#allocation4 + $0x49] sm:$0xff]
    %v8686 = vld [vmem:[#allocation4 + $0x51] sm:$0xff]
    %v8687 = vld [vmem:[#allocation4 + $0x59] sm:$0xff]
    %v8688 = vld [vmem:[#allocation4 + $0x61] sm:$0xff]
    %v8689 = vld [vmem:[#allocation4 + $0x69] sm:$0xff]
    %v8690 = vld [vmem:[#allocation4 + $0x71] sm:$0xff]
    %v8691 = vld [vmem:[#allocation4 + $0x79] sm:$0xff]
    %v8692 = vld [vmem:[#allocation4 + $0x81] sm:$0xff]
    %v8693 = vld [vmem:[#allocation4 + $0x89] sm:$0xff]
    %v8694 = vld [vmem:[#allocation4 + $0x91] sm:$0xff]
    %v8695 = vld [vmem:[#allocation4 + $0x99] sm:$0xff]
    %v8696 = vld [vmem:[#allocation4 + $0xa1] sm:$0xff]
    %v8697 = vld [vmem:[#allocation4 + $0xa9] sm:$0xff]
    %v8698 = vld [vmem:[#allocation4 + $0xb1] sm:$0xff]
    %v8699 = vld [vmem:[#allocation4 + $0xb9] sm:$0xff]
    %v8700 = vld [vmem:[#allocation4 + $0xc1] sm:$0xff]
    %v8701 = vld [vmem:[#allocation4 + $0xc9] sm:$0xff]
    %v8702 = vld [vmem:[#allocation4 + $0xd1] sm:$0xff]
    %v8703 = vld [vmem:[#allocation4 + $0xd9] sm:$0x1f]
    %v8704 = vmax.f32 %v8599, %v8678
    %v8705 = vmax.f32 %v8600, %v8679
    %v8706 = vmax.f32 %v8601, %v8680
    %v8707 = vmax.f32 %v8602, %v8681
    %v8708 = vmax.f32 %v8603, %v8682
    %v8709 = vmax.f32 %v8604, %v8683
    %v8710 = vmax.f32 %v8605, %v8684
    %v8711 = vmax.f32 %v8606, %v8685
    %v8712 = vmax.f32 %v8607, %v8686
    %v8713 = vmax.f32 %v8608, %v8687
    %v8714 = vmax.f32 %v8609, %v8688
    %v8715 = vmax.f32 %v8610, %v8689
    %v8716 = vmax.f32 %v8611, %v8690
    %v8717 = vmax.f32 %v8612, %v8691
    %v8718 = vmax.f32 %v8613, %v8692
    %v8719 = vmax.f32 %v8614, %v8693
    %v8720 = vmax.f32 %v8615, %v8694
    %v8721 = vmax.f32 %v8616, %v8695
    %v8722 = vmax.f32 %v8617, %v8696
    %v8723 = vmax.f32 %v8618, %v8697
    %v8724 = vmax.f32 %v8619, %v8698
    %v8725 = vmax.f32 %v8620, %v8699
    %v8726 = vmax.f32 %v8621, %v8700
    %v8727 = vmax.f32 %v8675, %v8701
    %v8728 = vmax.f32 %v8676, %v8702
    %v8729 = vmax.f32 %v8677, %v8703
    %v8730 = vmax.f32 %v8649, %v8704
    %v8731 = vmax.f32 %v8650, %v8705
    %v8732 = vmax.f32 %v8651, %v8706
    %v8733 = vmax.f32 %v8652, %v8707
    %v8734 = vmax.f32 %v8653, %v8708
    %v8735 = vmax.f32 %v8654, %v8709
    %v8736 = vmax.f32 %v8655, %v8710
    %v8737 = vmax.f32 %v8656, %v8711
    %v8738 = vmax.f32 %v8657, %v8712
    %v8739 = vmax.f32 %v8658, %v8713
    %v8740 = vmax.f32 %v8659, %v8714
    %v8741 = vmax.f32 %v8660, %v8715
    %v8742 = vmax.f32 %v8661, %v8716
    %v8743 = vmax.f32 %v8662, %v8717
    %v8744 = vmax.f32 %v8663, %v8718
    %v8745 = vmax.f32 %v8664, %v8719
    %v8746 = vmax.f32 %v8665, %v8720
    %v8747 = vmax.f32 %v8666, %v8721
    %v8748 = vmax.f32 %v8667, %v8722
    %v8749 = vmax.f32 %v8668, %v8723
    %v8750 = vmax.f32 %v8669, %v8724
    %v8751 = vmax.f32 %v8670, %v8725
    %v8752 = vmax.f32 %v8671, %v8726
    %v8753 = vmax.f32 %v8672, %v8727
    %v8754 = vmax.f32 %v8673, %v8728
    %v8755 = vmax.f32 %v8674, %v8729
    %v8756 = vld [vmem:[#allocation11] sm:$0xff]
    %v8757 = vld [vmem:[#allocation11 + $0x8] sm:$0xff]
    %v8758 = vld [vmem:[#allocation11 + $0x10] sm:$0xff]
    %v8759 = vld [vmem:[#allocation11 + $0x18] sm:$0xff]
    %v8760 = vld [vmem:[#allocation11 + $0x20] sm:$0xff]
    %v8761 = vld [vmem:[#allocation11 + $0x28] sm:$0xff]
    %v8762 = vld [vmem:[#allocation11 + $0x30] sm:$0xff]
    %v8763 = vld [vmem:[#allocation11 + $0x38] sm:$0xff]
    %v8764 = vld [vmem:[#allocation11 + $0x40] sm:$0xff]
    %v8765 = vld [vmem:[#allocation11 + $0x48] sm:$0xff]
    %v8766 = vld [vmem:[#allocation11 + $0x50] sm:$0xff]
    %v8767 = vld [vmem:[#allocation11 + $0x58] sm:$0xff]
    %v8768 = vld [vmem:[#allocation11 + $0x60] sm:$0xff]
    %v8769 = vld [vmem:[#allocation11 + $0x68] sm:$0xff]
    %v8770 = vld [vmem:[#allocation11 + $0x70] sm:$0xff]
    %v8771 = vld [vmem:[#allocation11 + $0x78] sm:$0xff]
    %v8772 = vld [vmem:[#allocation11 + $0x80] sm:$0xff]
    %v8773 = vld [vmem:[#allocation11 + $0x88] sm:$0xff]
    %v8774 = vld [vmem:[#allocation11 + $0x90] sm:$0xff]
    %v8775 = vld [vmem:[#allocation11 + $0x98] sm:$0xff]
    %v8776 = vld [vmem:[#allocation11 + $0xa0] sm:$0x1]
    %v8777 = vld [vmem:[#allocation11 + $0xa8] sm:$0x1]
    %vm8778 = vcmask 629760
    %v8780 = vsel %vm8778, %v8757, 0
    %v8783 = vsel %vm8778, %v8759, 0
    %v8786 = vsel %vm8778, %v8761, 0
    %v8789 = vsel %vm8778, %v8763, 0
    %v8792 = vsel %vm8778, %v8765, 0
    %v8795 = vsel %vm8778, %v8767, 0
    %v8798 = vsel %vm8778, %v8769, 0
    %v8801 = vsel %vm8778, %v8771, 0
    %v8804 = vsel %vm8778, %v8773, 0
    %v8807 = vsel %vm8778, %v8775, 0
    %v8810 = vsel %vm8778, %v8777, 0
    %vm8812 = vcmask 1044480
    %v8814 = vsel %vm8812, %v8755, 0
    %8816 = vmatprep.subr.mxu0 0.0
    %8817 = vmatpush1.msra.mxu0 %v8730
    %8818 = vmatprep.subr.mxu0 0.0
    %8819 = vmatpush1.msra.mxu0 %v8731
    %8820 = vmatprep.subr.mxu0 0.0
    %8821 = vmatpush1.msra.mxu0 %v8732
    %8822 = vmatprep.subr.mxu0 0.0
    %8823 = vmatpush1.msra.mxu0 %v8733
    %8824 = vmatprep.subr.mxu0 0.0
    %8825 = vmatpush1.msra.mxu0 %v8734
    %8826 = vmatprep.subr.mxu0 0.0
    %8827 = vmatpush1.msra.mxu0 %v8735
    %8828 = vmatprep.subr.mxu0 0.0
    %8829 = vmatpush1.msra.mxu0 %v8736
    %8830 = vmatprep.subr.mxu0 0.0
    %8831 = vmatpush1.msra.mxu0 %v8737
    %8832 = vmatprep.subr.mxu0 0.0
    %8833 = vmatpush1.msra.mxu0 %v8738
    %8834 = vmatprep.subr.mxu0 0.0
    %8835 = vmatpush1.msra.mxu0 %v8739
    %8836 = vmatprep.subr.mxu0 0.0
    %8837 = vmatpush1.msra.mxu0 %v8740
    %8838 = vmatprep.subr.mxu0 0.0
    %8839 = vmatpush1.msra.mxu0 %v8741
    %8840 = vmatprep.subr.mxu0 0.0
    %8841 = vmatpush1.msra.mxu0 %v8742
    %8842 = vmatprep.subr.mxu0 0.0
    %8843 = vmatpush1.msra.mxu0 %v8743
    %8844 = vmatprep.subr.mxu0 0.0
    %8845 = vmatpush1.msra.mxu0 %v8744
    %8846 = vmatprep.subr.mxu0 0.0
    %8847 = vmatpush1.msra.mxu0 %v8745
    %8848 = vmatprep.subr.mxu0 0.0
    %8849 = vmatpush1.msra.mxu0 %v8746
    %8850 = vmatprep.subr.mxu0 0.0
    %8851 = vmatpush1.msra.mxu0 %v8747
    %8852 = vmatprep.subr.mxu0 0.0
    %8853 = vmatpush1.msra.mxu0 %v8748
    %8854 = vmatprep.subr.mxu0 0.0
    %8855 = vmatpush1.msra.mxu0 %v8749
    %8856 = vmatprep.subr.mxu0 0.0
    %8857 = vmatpush1.msra.mxu0 %v8750
    %8858 = vmatprep.subr.mxu0 0.0
    %8859 = vmatpush1.msra.mxu0 %v8751
    %8860 = vmatprep.subr.mxu0 0.0
    %8861 = vmatpush1.msra.mxu0 %v8752
    %8862 = vmatprep.subr.mxu0 0.0
    %8863 = vmatpush1.msra.mxu0 %v8753
    %8864 = vmatprep.subr.mxu0 0.0
    %8865 = vmatpush1.msra.mxu0 %v8754
    %8866 = vmatprep.subr.mxu0 0.0
    %8867 = vmatpush1.msra.mxu0 %v8814
    %8868 = vmatprep.subr.mxu0 0.0
    %8869 = vmatpush1.msra.mxu0 0.0
    %8870 = vmatprep.subr.mxu0 0.0
    %8871 = vmatpush1.msra.mxu0 0.0
    %8872 = vmatprep.subr.mxu0 0.0
    %8873 = vmatpush1.msra.mxu0 0.0
    %8874 = vmatprep.subr.mxu0 0.0
    %8875 = vmatpush1.msra.mxu0 0.0
    %8876 = vmatprep.subr.mxu0 0.0
    %8877 = vmatpush1.msra.mxu0 0.0
    %8878 = vmatprep.subr.mxu0 0.0
    %8879 = vmatpush1.msra.mxu0 0.0
    %8880 = vmatprep.mubr.f32.mxu0 %v8780
    %8881 = vmatmul.mubr.f32.gmra.mrb[0].mxu0 %v8756
    %v8882 = vpop.f32.mrb[0].mxu0
    %v8883 = vadd.f32 0.0, %v8882
    %v8884 = vpop.f32.mrb[0].mxu0
    %8885 = vmatprep.mubr.f32.mxu0 %v8783
    %8886 = vmatmul.mubr.f32.gmra.mrb[0].mxu0 %v8758
    %v8887 = vpop.f32.mrb[0].mxu0
    %v8888 = vadd.f32 0.0, %v8887
    %v8889 = vpop.f32.mrb[0].mxu0
    %8890 = vmatprep.mubr.f32.mxu0 %v8786
    %8891 = vmatmul.mubr.f32.gmra.mrb[0].mxu0 %v8760
    %v8892 = vpop.f32.mrb[0].mxu0
    %v8893 = vadd.f32 0.0, %v8892
    %v8894 = vpop.f32.mrb[0].mxu0
    %8895 = vmatprep.mubr.f32.mxu0 %v8789
    %8896 = vmatmul.mubr.f32.gmra.mrb[0].mxu0 %v8762
    %v8897 = vpop.f32.mrb[0].mxu0
    %v8898 = vadd.f32 0.0, %v8897
    %v8899 = vpop.f32.mrb[0].mxu0
    %8900 = vmatprep.mubr.f32.mxu0 %v8792
    %8901 = vmatmul.mubr.f32.gmra.mrb[0].mxu0 %v8764
    %v8902 = vpop.f32.mrb[0].mxu0
    %v8903 = vadd.f32 0.0, %v8902
    %v8904 = vpop.f32.mrb[0].mxu0
    %8905 = vmatprep.mubr.f32.mxu0 %v8795
    %8906 = vmatmul.mubr.f32.gmra.mrb[0].mxu0 %v8766
    %v8907 = vpop.f32.mrb[0].mxu0
    %v8908 = vadd.f32 0.0, %v8907
    %v8909 = vpop.f32.mrb[0].mxu0
    %8910 = vmatprep.mubr.f32.mxu0 %v8798
    %8911 = vmatmul.mubr.f32.gmra.mrb[0].mxu0 %v8768
    %v8912 = vpop.f32.mrb[0].mxu0
    %v8913 = vadd.f32 0.0, %v8912
    %v8914 = vpop.f32.mrb[0].mxu0
    %8915 = vmatprep.mubr.f32.mxu0 %v8801
    %8916 = vmatmul.mubr.f32.gmra.mrb[0].mxu0 %v8770
    %v8917 = vpop.f32.mrb[0].mxu0
    %v8918 = vadd.f32 0.0, %v8917
    %v8919 = vpop.f32.mrb[0].mxu0
    %8920 = vmatprep.mubr.f32.mxu0 %v8804
    %8921 = vmatmul.mubr.f32.gmra.mrb[0].mxu0 %v8772
    %v8922 = vpop.f32.mrb[0].mxu0
    %v8923 = vadd.f32 0.0, %v8922
    %v8924 = vpop.f32.mrb[0].mxu0
    %8925 = vmatprep.mubr.f32.mxu0 %v8807
    %8926 = vmatmul.mubr.f32.gmra.mrb[0].mxu0 %v8774
    %v8927 = vpop.f32.mrb[0].mxu0
    %v8928 = vadd.f32 0.0, %v8927
    %v8929 = vpop.f32.mrb[0].mxu0
    %8930 = vmatprep.mubr.f32.mxu0 %v8810
    %8931 = vmatmul.mubr.f32.gmra.mrb[0].mxu0 %v8776
    %v8932 = vpop.f32.mrb[0].mxu0
    %v8933 = vadd.f32 0.0, %v8932
    %v8934 = vpop.f32.mrb[0].mxu0
    %8935 = vdwg.mxu0
    %8936 = vst [vmem:[#allocation5] sm:$0xff] %v8883
    %8937 = vst [vmem:[#allocation5 + $0x8] sm:$0xff] %v8888
    %8938 = vst [vmem:[#allocation5 + $0x10] sm:$0xff] %v8893
    %8939 = vst [vmem:[#allocation5 + $0x18] sm:$0xff] %v8898
    %8940 = vst [vmem:[#allocation5 + $0x20] sm:$0xff] %v8903
    %8941 = vst [vmem:[#allocation5 + $0x28] sm:$0xff] %v8908
    %8942 = vst [vmem:[#allocation5 + $0x30] sm:$0xff] %v8913
    %8943 = vst [vmem:[#allocation5 + $0x38] sm:$0xff] %v8918
    %8944 = vst [vmem:[#allocation5 + $0x40] sm:$0xff] %v8923
    %8945 = vst [vmem:[#allocation5 + $0x48] sm:$0xff] %v8928
    %8946 = vst [vmem:[#allocation5 + $0x50] sm:$0x1] %v8933
    %v8947 = vld [vmem:[#allocation5] sm:$0xff]
    %v8948 = vld [vmem:[#allocation5 + $0x8] sm:$0xff]
    %v8949 = vld [vmem:[#allocation5 + $0x10] sm:$0xff]
    %v8950 = vld [vmem:[#allocation5 + $0x18] sm:$0xff]
    %v8951 = vld [vmem:[#allocation5 + $0x20] sm:$0xff]
    %v8952 = vld [vmem:[#allocation5 + $0x28] sm:$0xff]
    %v8953 = vld [vmem:[#allocation5 + $0x30] sm:$0xff]
    %v8954 = vld [vmem:[#allocation5 + $0x38] sm:$0x1f]
    %v8955 = vld [vmem:[#allocation12] sm:$0xff]
    %v8956 = vld [vmem:[#allocation12 + $0x8] sm:$0xff]
    %v8957 = vld [vmem:[#allocation12 + $0x10] sm:$0xff]
    %v8958 = vld [vmem:[#allocation12 + $0x18] sm:$0xff]
    %v8959 = vld [vmem:[#allocation12 + $0x20] sm:$0xff]
    %v8960 = vld [vmem:[#allocation12 + $0x28] sm:$0xff]
    %v8961 = vld [vmem:[#allocation12 + $0x30] sm:$0xff]
    %v8962 = vld [vmem:[#allocation12 + $0x38] sm:$0xff]
    %v8963 = vld [vmem:[#allocation12 + $0x40] sm:$0xff]
    %v8964 = vld [vmem:[#allocation12 + $0x48] sm:$0xff]
    %v8965 = vld [vmem:[#allocation12 + $0x50] sm:$0xff]
    %v8966 = vld [vmem:[#allocation12 + $0x58] sm:$0xff]
    %v8967 = vld [vmem:[#allocation12 + $0x60] sm:$0xff]
    %v8968 = vld [vmem:[#allocation12 + $0x68] sm:$0xff]
    %v8969 = vld [vmem:[#allocation12 + $0x70] sm:$0xff]
    %v8970 = vld [vmem:[#allocation12 + $0x78] sm:$0xff]
    %v8971 = vld [vmem:[#allocation5 + $0x1] sm:$0xff]
    %v8972 = vld [vmem:[#allocation5 + $0x9] sm:$0xff]
    %v8973 = vld [vmem:[#allocation5 + $0x11] sm:$0xff]
    %v8974 = vld [vmem:[#allocation5 + $0x19] sm:$0xff]
    %v8975 = vld [vmem:[#allocation5 + $0x21] sm:$0xff]
    %v8976 = vld [vmem:[#allocation5 + $0x29] sm:$0xff]
    %v8977 = vld [vmem:[#allocation5 + $0x31] sm:$0xff]
    %v8978 = vld [vmem:[#allocation5 + $0x39] sm:$0x1f]
    %s8979 = scalar_lea.vmem [#allocation12], 128
    %v8980 = vld [vmem:[%s8979] sm:$0xff]
    %v8981 = vld [vmem:[%s8979 + $0x8] sm:$0xff]
    %v8982 = vld [vmem:[%s8979 + $0x10] sm:$0xff]
    %v8983 = vld [vmem:[%s8979 + $0x18] sm:$0xff]
    %v8984 = vld [vmem:[%s8979 + $0x20] sm:$0xff]
    %v8985 = vld [vmem:[%s8979 + $0x28] sm:$0xff]
    %v8986 = vld [vmem:[%s8979 + $0x30] sm:$0xff]
    %v8987 = vld [vmem:[%s8979 + $0x38] sm:$0xff]
    %v8988 = vld [vmem:[%s8979 + $0x40] sm:$0xff]
    %v8989 = vld [vmem:[%s8979 + $0x48] sm:$0xff]
    %v8990 = vld [vmem:[%s8979 + $0x50] sm:$0xff]
    %v8991 = vld [vmem:[%s8979 + $0x58] sm:$0xff]
    %v8992 = vld [vmem:[%s8979 + $0x60] sm:$0xff]
    %v8993 = vld [vmem:[%s8979 + $0x68] sm:$0xff]
    %v8994 = vld [vmem:[%s8979 + $0x70] sm:$0xff]
    %v8995 = vld [vmem:[%s8979 + $0x78] sm:$0xff]
    %8996 = vmatprep.subr.mxu0 0.0
    %8997 = vmatpush1.msra.mxu0 %v8980
    %8998 = vmatprep.subr.mxu0 0.0
    %8999 = vmatpush1.msra.mxu0 %v8981
    %9000 = vmatprep.subr.mxu0 0.0
    %9001 = vmatpush1.msra.mxu0 %v8982
    %9002 = vmatprep.subr.mxu0 0.0
    %9003 = vmatpush1.msra.mxu0 %v8983
    %9004 = vmatprep.subr.mxu0 0.0
    %9005 = vmatpush1.msra.mxu0 %v8984
    %9006 = vmatprep.subr.mxu0 0.0
    %9007 = vmatpush1.msra.mxu0 %v8985
    %9008 = vmatprep.subr.mxu0 0.0
    %9009 = vmatpush1.msra.mxu0 %v8986
    %9010 = vmatprep.subr.mxu0 0.0
    %9011 = vmatpush1.msra.mxu0 %v8987
    %9012 = vmatprep.subr.mxu0 0.0
    %9013 = vmatpush1.msra.mxu0 %v8988
    %9014 = vmatprep.subr.mxu0 0.0
    %9015 = vmatpush1.msra.mxu0 %v8989
    %9016 = vmatprep.subr.mxu0 0.0
    %9017 = vmatpush1.msra.mxu0 %v8990
    %9018 = vmatprep.subr.mxu0 0.0
    %9019 = vmatpush1.msra.mxu0 %v8991
    %9020 = vmatprep.subr.mxu0 0.0
    %9021 = vmatpush1.msra.mxu0 %v8992
    %9022 = vmatprep.subr.mxu0 0.0
    %9023 = vmatpush1.msra.mxu0 %v8993
    %9024 = vmatprep.subr.mxu0 0.0
    %9025 = vmatpush1.msra.mxu0 %v8994
    %9026 = vmatprep.subr.mxu0 0.0
    %9027 = vmatpush1.msra.mxu0 %v8995
    %9028 = vmatprep.subr.mxu0 0.0
    %9029 = vmatpush1.msra.mxu0 0.0
    %9030 = vmatprep.subr.mxu0 0.0
    %9031 = vmatpush1.msra.mxu0 0.0
    %9032 = vmatprep.subr.mxu0 0.0
    %9033 = vmatpush1.msra.mxu0 0.0
    %9034 = vmatprep.subr.mxu0 0.0
    %9035 = vmatpush1.msra.mxu0 0.0
    %9036 = vmatprep.subr.mxu0 0.0
    %9037 = vmatpush1.msra.mxu0 0.0
    %9038 = vmatprep.subr.mxu0 0.0
    %9039 = vmatpush1.msra.mxu0 0.0
    %9040 = vmatprep.subr.mxu0 0.0
    %9041 = vmatpush1.msra.mxu0 0.0
    %9042 = vmatprep.subr.mxu0 0.0
    %9043 = vmatpush1.msra.mxu0 0.0
    %9044 = vmatprep.subr.mxu0 0.0
    %9045 = vmatpush1.msra.mxu0 0.0
    %9046 = vmatprep.subr.mxu0 0.0
    %9047 = vmatpush1.msra.mxu0 0.0
    %9048 = vmatprep.subr.mxu0 0.0
    %9049 = vmatpush1.msra.mxu0 0.0
    %9050 = vmatprep.subr.mxu0 0.0
    %9051 = vmatpush1.msra.mxu0 0.0
    %9052 = vmatprep.subr.mxu0 0.0
    %9053 = vmatpush1.msra.mxu0 0.0
    %9054 = vmatprep.subr.mxu0 0.0
    %9055 = vmatpush1.msra.mxu0 0.0
    %9056 = vmatprep.subr.mxu0 0.0
    %9057 = vmatpush1.msra.mxu0 0.0
    %9058 = vmatprep.subr.mxu0 0.0
    %9059 = vmatpush1.msra.mxu0 0.0
    %9060 = vmatprep.mubr.f32.mxu0 0.0
    %9061 = vmatmul.mubr.f32.gmra.mrb[0].mxu0 %v8971
    %v9062 = vpop.f32.mrb[0].mxu0
    %v9063 = vadd.f32 0.0, %v9062
    %v9064 = vpop.f32.mrb[0].mxu0
    %9065 = vmatprep.mubr.f32.mxu0 0.0
    %9066 = vmatmul.mubr.f32.gmra.mrb[0].mxu0 %v8972
    %v9067 = vpop.f32.mrb[0].mxu0
    %v9068 = vadd.f32 0.0, %v9067
    %v9069 = vpop.f32.mrb[0].mxu0
    %9070 = vmatprep.mubr.f32.mxu0 0.0
    %9071 = vmatmul.mubr.f32.gmra.mrb[0].mxu0 %v8973
    %v9072 = vpop.f32.mrb[0].mxu0
    %v9073 = vadd.f32 0.0, %v9072
    %v9074 = vpop.f32.mrb[0].mxu0
    %9075 = vmatprep.mubr.f32.mxu0 0.0
    %9076 = vmatmul.mubr.f32.gmra.mrb[0].mxu0 %v8974
    %v9077 = vpop.f32.mrb[0].mxu0
    %v9078 = vadd.f32 0.0, %v9077
    %v9079 = vpop.f32.mrb[0].mxu0
    %9080 = vmatprep.mubr.f32.mxu0 0.0
    %9081 = vmatmul.mubr.f32.gmra.mrb[0].mxu0 %v8975
    %v9082 = vpop.f32.mrb[0].mxu0
    %v9083 = vadd.f32 0.0, %v9082
    %v9084 = vpop.f32.mrb[0].mxu0
    %9085 = vmatprep.mubr.f32.mxu0 0.0
    %9086 = vmatmul.mubr.f32.gmra.mrb[0].mxu0 %v8976
    %v9087 = vpop.f32.mrb[0].mxu0
    %v9088 = vadd.f32 0.0, %v9087
    %v9089 = vpop.f32.mrb[0].mxu0
    %9090 = vmatprep.mubr.f32.mxu0 0.0
    %9091 = vmatmul.mubr.f32.gmra.mrb[0].mxu0 %v8977
    %v9092 = vpop.f32.mrb[0].mxu0
    %v9093 = vadd.f32 0.0, %v9092
    %v9094 = vpop.f32.mrb[0].mxu0
    %9095 = vmatprep.mubr.f32.mxu0 0.0
    %9096 = vmatmul.mubr.f32.gmra.mrb[0].mxu0 %v8978
    %v9097 = vpop.f32.mrb[0].mxu0
    %v9098 = vadd.f32 0.0, %v9097
    %v9099 = vpop.f32.mrb[0].mxu0
    %9100 = vdwg.mxu0
    %9101 = vmatprep.subr.mxu0 0.0
    %9102 = vmatpush1.msra.mxu0 %v8955
    %9103 = vmatprep.subr.mxu0 0.0
    %9104 = vmatpush1.msra.mxu0 %v8956
    %9105 = vmatprep.subr.mxu0 0.0
    %9106 = vmatpush1.msra.mxu0 %v8957
    %9107 = vmatprep.subr.mxu0 0.0
    %9108 = vmatpush1.msra.mxu0 %v8958
    %9109 = vmatprep.subr.mxu0 0.0
    %9110 = vmatpush1.msra.mxu0 %v8959
    %9111 = vmatprep.subr.mxu0 0.0
    %9112 = vmatpush1.msra.mxu0 %v8960
    %9113 = vmatprep.subr.mxu0 0.0
    %9114 = vmatpush1.msra.mxu0 %v8961
    %9115 = vmatprep.subr.mxu0 0.0
    %9116 = vmatpush1.msra.mxu0 %v8962
    %9117 = vmatprep.subr.mxu0 0.0
    %9118 = vmatpush1.msra.mxu0 %v8963
    %9119 = vmatprep.subr.mxu0 0.0
    %9120 = vmatpush1.msra.mxu0 %v8964
    %9121 = vmatprep.subr.mxu0 0.0
    %9122 = vmatpush1.msra.mxu0 %v8965
    %9123 = vmatprep.subr.mxu0 0.0
    %9124 = vmatpush1.msra.mxu0 %v8966
    %9125 = vmatprep.subr.mxu0 0.0
    %9126 = vmatpush1.msra.mxu0 %v8967
    %9127 = vmatprep.subr.mxu0 0.0
    %9128 = vmatpush1.msra.mxu0 %v8968
    %9129 = vmatprep.subr.mxu0 0.0
    %9130 = vmatpush1.msra.mxu0 %v8969
    %9131 = vmatprep.subr.mxu0 0.0
    %9132 = vmatpush1.msra.mxu0 %v8970
    %9133 = vmatprep.subr.mxu0 0.0
    %9134 = vmatpush1.msra.mxu0 0.0
    %9135 = vmatprep.subr.mxu0 0.0
    %9136 = vmatpush1.msra.mxu0 0.0
    %9137 = vmatprep.subr.mxu0 0.0
    %9138 = vmatpush1.msra.mxu0 0.0
    %9139 = vmatprep.subr.mxu0 0.0
    %9140 = vmatpush1.msra.mxu0 0.0
    %9141 = vmatprep.subr.mxu0 0.0
    %9142 = vmatpush1.msra.mxu0 0.0
    %9143 = vmatprep.subr.mxu0 0.0
    %9144 = vmatpush1.msra.mxu0 0.0
    %9145 = vmatprep.subr.mxu0 0.0
    %9146 = vmatpush1.msra.mxu0 0.0
    %9147 = vmatprep.subr.mxu0 0.0
    %9148 = vmatpush1.msra.mxu0 0.0
    %9149 = vmatprep.subr.mxu0 0.0
    %9150 = vmatpush1.msra.mxu0 0.0
    %9151 = vmatprep.subr.mxu0 0.0
    %9152 = vmatpush1.msra.mxu0 0.0
    %9153 = vmatprep.subr.mxu0 0.0
    %9154 = vmatpush1.msra.mxu0 0.0
    %9155 = vmatprep.subr.mxu0 0.0
    %9156 = vmatpush1.msra.mxu0 0.0
    %9157 = vmatprep.subr.mxu0 0.0
    %9158 = vmatpush1.msra.mxu0 0.0
    %9159 = vmatprep.subr.mxu0 0.0
    %9160 = vmatpush1.msra.mxu0 0.0
    %9161 = vmatprep.subr.mxu0 0.0
    %9162 = vmatpush1.msra.mxu0 0.0
    %9163 = vmatprep.subr.mxu0 0.0
    %9164 = vmatpush1.msra.mxu0 0.0
    %9165 = vmatprep.mubr.f32.mxu0 0.0
    %9166 = vmatmul.mubr.f32.gmra.mrb[0].mxu0 %v8947
    %v9167 = vpop.f32.mrb[0].mxu0
    %v9168 = vadd.f32 %v9063, %v9167
    %v9169 = vpop.f32.mrb[0].mxu0
    %9170 = vmatprep.mubr.f32.mxu0 0.0
    %9171 = vmatmul.mubr.f32.gmra.mrb[0].mxu0 %v8948
    %v9172 = vpop.f32.mrb[0].mxu0
    %v9173 = vadd.f32 %v9068, %v9172
    %v9174 = vpop.f32.mrb[0].mxu0
    %9175 = vmatprep.mubr.f32.mxu0 0.0
    %9176 = vmatmul.mubr.f32.gmra.mrb[0].mxu0 %v8949
    %v9177 = vpop.f32.mrb[0].mxu0
    %v9178 = vadd.f32 %v9073, %v9177
    %v9179 = vpop.f32.mrb[0].mxu0
    %9180 = vmatprep.mubr.f32.mxu0 0.0
    %9181 = vmatmul.mubr.f32.gmra.mrb[0].mxu0 %v8950
    %v9182 = vpop.f32.mrb[0].mxu0
    %v9183 = vadd.f32 %v9078, %v9182
    %v9184 = vpop.f32.mrb[0].mxu0
    %9185 = vmatprep.mubr.f32.mxu0 0.0
    %9186 = vmatmul.mubr.f32.gmra.mrb[0].mxu0 %v8951
    %v9187 = vpop.f32.mrb[0].mxu0
    %v9188 = vadd.f32 %v9083, %v9187
    %v9189 = vpop.f32.mrb[0].mxu0
    %9190 = vmatprep.mubr.f32.mxu0 0.0
    %9191 = vmatmul.mubr.f32.gmra.mrb[0].mxu0 %v8952
    %v9192 = vpop.f32.mrb[0].mxu0
    %v9193 = vadd.f32 %v9088, %v9192
    %v9194 = vpop.f32.mrb[0].mxu0
    %9195 = vmatprep.mubr.f32.mxu0 0.0
    %9196 = vmatmul.mubr.f32.gmra.mrb[0].mxu0 %v8953
    %v9197 = vpop.f32.mrb[0].mxu0
    %v9198 = vadd.f32 %v9093, %v9197
    %v9199 = vpop.f32.mrb[0].mxu0
    %9200 = vmatprep.mubr.f32.mxu0 0.0
    %9201 = vmatmul.mubr.f32.gmra.mrb[0].mxu0 %v8954
    %v9202 = vpop.f32.mrb[0].mxu0
    %v9203 = vadd.f32 %v9098, %v9202
    %v9204 = vpop.f32.mrb[0].mxu0
    %9205 = vdwg.mxu0
    %v9206 = vld [vmem:[#allocation5 + $0x2] sm:$0xff]
    %v9207 = vld [vmem:[#allocation5 + $0xa] sm:$0xff]
    %v9208 = vld [vmem:[#allocation5 + $0x12] sm:$0xff]
    %v9209 = vld [vmem:[#allocation5 + $0x1a] sm:$0xff]
    %v9210 = vld [vmem:[#allocation5 + $0x22] sm:$0xff]
    %v9211 = vld [vmem:[#allocation5 + $0x2a] sm:$0xff]
    %v9212 = vld [vmem:[#allocation5 + $0x32] sm:$0xff]
    %v9213 = vld [vmem:[#allocation5 + $0x3a] sm:$0x1f]
    %s9214 = scalar_lea.vmem [#allocation12], 256
    %v9215 = vld [vmem:[%s9214] sm:$0xff]
    %v9216 = vld [vmem:[%s9214 + $0x8] sm:$0xff]
    %v9217 = vld [vmem:[%s9214 + $0x10] sm:$0xff]
    %v9218 = vld [vmem:[%s9214 + $0x18] sm:$0xff]
    %v9219 = vld [vmem:[%s9214 + $0x20] sm:$0xff]
    %v9220 = vld [vmem:[%s9214 + $0x28] sm:$0xff]
    %v9221 = vld [vmem:[%s9214 + $0x30] sm:$0xff]
    %v9222 = vld [vmem:[%s9214 + $0x38] sm:$0xff]
    %v9223 = vld [vmem:[%s9214 + $0x40] sm:$0xff]
    %v9224 = vld [vmem:[%s9214 + $0x48] sm:$0xff]
    %v9225 = vld [vmem:[%s9214 + $0x50] sm:$0xff]
    %v9226 = vld [vmem:[%s9214 + $0x58] sm:$0xff]
    %v9227 = vld [vmem:[%s9214 + $0x60] sm:$0xff]
    %v9228 = vld [vmem:[%s9214 + $0x68] sm:$0xff]
    %v9229 = vld [vmem:[%s9214 + $0x70] sm:$0xff]
    %v9230 = vld [vmem:[%s9214 + $0x78] sm:$0xff]
    %9231 = vmatprep.subr.mxu0 0.0
    %9232 = vmatpush1.msra.mxu0 %v9215
    %9233 = vmatprep.subr.mxu0 0.0
    %9234 = vmatpush1.msra.mxu0 %v9216
    %9235 = vmatprep.subr.mxu0 0.0
    %9236 = vmatpush1.msra.mxu0 %v9217
    %9237 = vmatprep.subr.mxu0 0.0
    %9238 = vmatpush1.msra.mxu0 %v9218
    %9239 = vmatprep.subr.mxu0 0.0
    %9240 = vmatpush1.msra.mxu0 %v9219
    %9241 = vmatprep.subr.mxu0 0.0
    %9242 = vmatpush1.msra.mxu0 %v9220
    %9243 = vmatprep.subr.mxu0 0.0
    %9244 = vmatpush1.msra.mxu0 %v9221
    %9245 = vmatprep.subr.mxu0 0.0
    %9246 = vmatpush1.msra.mxu0 %v9222
    %9247 = vmatprep.subr.mxu0 0.0
    %9248 = vmatpush1.msra.mxu0 %v9223
    %9249 = vmatprep.subr.mxu0 0.0
    %9250 = vmatpush1.msra.mxu0 %v9224
    %9251 = vmatprep.subr.mxu0 0.0
    %9252 = vmatpush1.msra.mxu0 %v9225
    %9253 = vmatprep.subr.mxu0 0.0
    %9254 = vmatpush1.msra.mxu0 %v9226
    %9255 = vmatprep.subr.mxu0 0.0
    %9256 = vmatpush1.msra.mxu0 %v9227
    %9257 = vmatprep.subr.mxu0 0.0
    %9258 = vmatpush1.msra.mxu0 %v9228
    %9259 = vmatprep.subr.mxu0 0.0
    %9260 = vmatpush1.msra.mxu0 %v9229
    %9261 = vmatprep.subr.mxu0 0.0
    %9262 = vmatpush1.msra.mxu0 %v9230
    %9263 = vmatprep.subr.mxu0 0.0
    %9264 = vmatpush1.msra.mxu0 0.0
    %9265 = vmatprep.subr.mxu0 0.0
    %9266 = vmatpush1.msra.mxu0 0.0
    %9267 = vmatprep.subr.mxu0 0.0
    %9268 = vmatpush1.msra.mxu0 0.0
    %9269 = vmatprep.subr.mxu0 0.0
    %9270 = vmatpush1.msra.mxu0 0.0
    %9271 = vmatprep.subr.mxu0 0.0
    %9272 = vmatpush1.msra.mxu0 0.0
    %9273 = vmatprep.subr.mxu0 0.0
    %9274 = vmatpush1.msra.mxu0 0.0
    %9275 = vmatprep.subr.mxu0 0.0
    %9276 = vmatpush1.msra.mxu0 0.0
    %9277 = vmatprep.subr.mxu0 0.0
    %9278 = vmatpush1.msra.mxu0 0.0
    %9279 = vmatprep.subr.mxu0 0.0
    %9280 = vmatpush1.msra.mxu0 0.0
    %9281 = vmatprep.subr.mxu0 0.0
    %9282 = vmatpush1.msra.mxu0 0.0
    %9283 = vmatprep.subr.mxu0 0.0
    %9284 = vmatpush1.msra.mxu0 0.0
    %9285 = vmatprep.subr.mxu0 0.0
    %9286 = vmatpush1.msra.mxu0 0.0
    %9287 = vmatprep.subr.mxu0 0.0
    %9288 = vmatpush1.msra.mxu0 0.0
    %9289 = vmatprep.subr.mxu0 0.0
    %9290 = vmatpush1.msra.mxu0 0.0
    %9291 = vmatprep.subr.mxu0 0.0
    %9292 = vmatpush1.msra.mxu0 0.0
    %9293 = vmatprep.subr.mxu0 0.0
    %9294 = vmatpush1.msra.mxu0 0.0
    %9295 = vmatprep.mubr.f32.mxu0 0.0
    %9296 = vmatmul.mubr.f32.gmra.mrb[0].mxu0 %v9206
    %v9297 = vpop.f32.mrb[0].mxu0
    %v9298 = vadd.f32 0.0, %v9297
    %v9299 = vpop.f32.mrb[0].mxu0
    %9300 = vmatprep.mubr.f32.mxu0 0.0
    %9301 = vmatmul.mubr.f32.gmra.mrb[0].mxu0 %v9207
    %v9302 = vpop.f32.mrb[0].mxu0
    %v9303 = vadd.f32 0.0, %v9302
    %v9304 = vpop.f32.mrb[0].mxu0
    %9305 = vmatprep.mubr.f32.mxu0 0.0
    %9306 = vmatmul.mubr.f32.gmra.mrb[0].mxu0 %v9208
    %v9307 = vpop.f32.mrb[0].mxu0
    %v9308 = vadd.f32 0.0, %v9307
    %v9309 = vpop.f32.mrb[0].mxu0
    %9310 = vmatprep.mubr.f32.mxu0 0.0
    %9311 = vmatmul.mubr.f32.gmra.mrb[0].mxu0 %v9209
    %v9312 = vpop.f32.mrb[0].mxu0
    %v9313 = vadd.f32 0.0, %v9312
    %v9314 = vpop.f32.mrb[0].mxu0
    %9315 = vmatprep.mubr.f32.mxu0 0.0
    %9316 = vmatmul.mubr.f32.gmra.mrb[0].mxu0 %v9210
    %v9317 = vpop.f32.mrb[0].mxu0
    %v9318 = vadd.f32 0.0, %v9317
    %v9319 = vpop.f32.mrb[0].mxu0
    %9320 = vmatprep.mubr.f32.mxu0 0.0
    %9321 = vmatmul.mubr.f32.gmra.mrb[0].mxu0 %v9211
    %v9322 = vpop.f32.mrb[0].mxu0
    %v9323 = vadd.f32 0.0, %v9322
    %v9324 = vpop.f32.mrb[0].mxu0
    %9325 = vmatprep.mubr.f32.mxu0 0.0
    %9326 = vmatmul.mubr.f32.gmra.mrb[0].mxu0 %v9212
    %v9327 = vpop.f32.mrb[0].mxu0
    %v9328 = vadd.f32 0.0, %v9327
    %v9329 = vpop.f32.mrb[0].mxu0
    %9330 = vmatprep.mubr.f32.mxu0 0.0
    %9331 = vmatmul.mubr.f32.gmra.mrb[0].mxu0 %v9213
    %v9332 = vpop.f32.mrb[0].mxu0
    %v9333 = vadd.f32 0.0, %v9332
    %v9334 = vpop.f32.mrb[0].mxu0
    %9335 = vdwg.mxu0
    %v9336 = vadd.f32 %v9168, %v9298
    %v9337 = vadd.f32 %v9173, %v9303
    %v9338 = vadd.f32 %v9178, %v9308
    %v9339 = vadd.f32 %v9183, %v9313
    %v9340 = vadd.f32 %v9188, %v9318
    %v9341 = vadd.f32 %v9193, %v9323
    %v9342 = vadd.f32 %v9198, %v9328
    %v9343 = vadd.f32 %v9203, %v9333
    %v9344 = vld [vmem:[#allocation5 + $0x9] sm:$0xff]
    %v9345 = vld [vmem:[#allocation5 + $0x11] sm:$0xff]
    %v9346 = vld [vmem:[#allocation5 + $0x19] sm:$0xff]
    %v9347 = vld [vmem:[#allocation5 + $0x21] sm:$0xff]
    %v9348 = vld [vmem:[#allocation5 + $0x29] sm:$0xff]
    %v9349 = vld [vmem:[#allocation5 + $0x31] sm:$0xff]
    %v9350 = vld [vmem:[#allocation5 + $0x39] sm:$0xff]
    %v9351 = vld [vmem:[#allocation5 + $0x41] sm:$0x1f]
    %s9352 = scalar_lea.vmem [#allocation12], 384
    %v9353 = vld [vmem:[%s9352] sm:$0xff]
    %v9354 = vld [vmem:[%s9352 + $0x8] sm:$0xff]
    %v9355 = vld [vmem:[%s9352 + $0x10] sm:$0xff]
    %v9356 = vld [vmem:[%s9352 + $0x18] sm:$0xff]
    %v9357 = vld [vmem:[%s9352 + $0x20] sm:$0xff]
    %v9358 = vld [vmem:[%s9352 + $0x28] sm:$0xff]
    %v9359 = vld [vmem:[%s9352 + $0x30] sm:$0xff]
    %v9360 = vld [vmem:[%s9352 + $0x38] sm:$0xff]
    %v9361 = vld [vmem:[%s9352 + $0x40] sm:$0xff]
    %v9362 = vld [vmem:[%s9352 + $0x48] sm:$0xff]
    %v9363 = vld [vmem:[%s9352 + $0x50] sm:$0xff]
    %v9364 = vld [vmem:[%s9352 + $0x58] sm:$0xff]
    %v9365 = vld [vmem:[%s9352 + $0x60] sm:$0xff]
    %v9366 = vld [vmem:[%s9352 + $0x68] sm:$0xff]
    %v9367 = vld [vmem:[%s9352 + $0x70] sm:$0xff]
    %v9368 = vld [vmem:[%s9352 + $0x78] sm:$0xff]
    %9369 = vmatprep.subr.mxu0 0.0
    %9370 = vmatpush1.msra.mxu0 %v9353
    %9371 = vmatprep.subr.mxu0 0.0
    %9372 = vmatpush1.msra.mxu0 %v9354
    %9373 = vmatprep.subr.mxu0 0.0
    %9374 = vmatpush1.msra.mxu0 %v9355
    %9375 = vmatprep.subr.mxu0 0.0
    %9376 = vmatpush1.msra.mxu0 %v9356
    %9377 = vmatprep.subr.mxu0 0.0
    %9378 = vmatpush1.msra.mxu0 %v9357
    %9379 = vmatprep.subr.mxu0 0.0
    %9380 = vmatpush1.msra.mxu0 %v9358
    %9381 = vmatprep.subr.mxu0 0.0
    %9382 = vmatpush1.msra.mxu0 %v9359
    %9383 = vmatprep.subr.mxu0 0.0
    %9384 = vmatpush1.msra.mxu0 %v9360
    %9385 = vmatprep.subr.mxu0 0.0
    %9386 = vmatpush1.msra.mxu0 %v9361
    %9387 = vmatprep.subr.mxu0 0.0
    %9388 = vmatpush1.msra.mxu0 %v9362
    %9389 = vmatprep.subr.mxu0 0.0
    %9390 = vmatpush1.msra.mxu0 %v9363
    %9391 = vmatprep.subr.mxu0 0.0
    %9392 = vmatpush1.msra.mxu0 %v9364
    %9393 = vmatprep.subr.mxu0 0.0
    %9394 = vmatpush1.msra.mxu0 %v9365
    %9395 = vmatprep.subr.mxu0 0.0
    %9396 = vmatpush1.msra.mxu0 %v9366
    %9397 = vmatprep.subr.mxu0 0.0
    %9398 = vmatpush1.msra.mxu0 %v9367
    %9399 = vmatprep.subr.mxu0 0.0
    %9400 = vmatpush1.msra.mxu0 %v9368
    %9401 = vmatprep.subr.mxu0 0.0
    %9402 = vmatpush1.msra.mxu0 0.0
    %9403 = vmatprep.subr.mxu0 0.0
    %9404 = vmatpush1.msra.mxu0 0.0
    %9405 = vmatprep.subr.mxu0 0.0
    %9406 = vmatpush1.msra.mxu0 0.0
    %9407 = vmatprep.subr.mxu0 0.0
    %9408 = vmatpush1.msra.mxu0 0.0
    %9409 = vmatprep.subr.mxu0 0.0
    %9410 = vmatpush1.msra.mxu0 0.0
    %9411 = vmatprep.subr.mxu0 0.0
    %9412 = vmatpush1.msra.mxu0 0.0
    %9413 = vmatprep.subr.mxu0 0.0
    %9414 = vmatpush1.msra.mxu0 0.0
    %9415 = vmatprep.subr.mxu0 0.0
    %9416 = vmatpush1.msra.mxu0 0.0
    %9417 = vmatprep.subr.mxu0 0.0
    %9418 = vmatpush1.msra.mxu0 0.0
    %9419 = vmatprep.subr.mxu0 0.0
    %9420 = vmatpush1.msra.mxu0 0.0
    %9421 = vmatprep.subr.mxu0 0.0
    %9422 = vmatpush1.msra.mxu0 0.0
    %9423 = vmatprep.subr.mxu0 0.0
    %9424 = vmatpush1.msra.mxu0 0.0
    %9425 = vmatprep.subr.mxu0 0.0
    %9426 = vmatpush1.msra.mxu0 0.0
    %9427 = vmatprep.subr.mxu0 0.0
    %9428 = vmatpush1.msra.mxu0 0.0
    %9429 = vmatprep.subr.mxu0 0.0
    %9430 = vmatpush1.msra.mxu0 0.0
    %9431 = vmatprep.subr.mxu0 0.0
    %9432 = vmatpush1.msra.mxu0 0.0
    %9433 = vmatprep.mubr.f32.mxu0 0.0
    %9434 = vmatmul.mubr.f32.gmra.mrb[0].mxu0 %v9344
    %v9435 = vpop.f32.mrb[0].mxu0
    %v9436 = vadd.f32 0.0, %v9435
    %v9437 = vpop.f32.mrb[0].mxu0
    %9438 = vmatprep.mubr.f32.mxu0 0.0
    %9439 = vmatmul.mubr.f32.gmra.mrb[0].mxu0 %v9345
    %v9440 = vpop.f32.mrb[0].mxu0
    %v9441 = vadd.f32 0.0, %v9440
    %v9442 = vpop.f32.mrb[0].mxu0
    %9443 = vmatprep.mubr.f32.mxu0 0.0
    %9444 = vmatmul.mubr.f32.gmra.mrb[0].mxu0 %v9346
    %v9445 = vpop.f32.mrb[0].mxu0
    %v9446 = vadd.f32 0.0, %v9445
    %v9447 = vpop.f32.mrb[0].mxu0
    %9448 = vmatprep.mubr.f32.mxu0 0.0
    %9449 = vmatmul.mubr.f32.gmra.mrb[0].mxu0 %v9347
    %v9450 = vpop.f32.mrb[0].mxu0
    %v9451 = vadd.f32 0.0, %v9450
    %v9452 = vpop.f32.mrb[0].mxu0
    %9453 = vmatprep.mubr.f32.mxu0 0.0
    %9454 = vmatmul.mubr.f32.gmra.mrb[0].mxu0 %v9348
    %v9455 = vpop.f32.mrb[0].mxu0
    %v9456 = vadd.f32 0.0, %v9455
    %v9457 = vpop.f32.mrb[0].mxu0
    %9458 = vmatprep.mubr.f32.mxu0 0.0
    %9459 = vmatmul.mubr.f32.gmra.mrb[0].mxu0 %v9349
    %v9460 = vpop.f32.mrb[0].mxu0
    %v9461 = vadd.f32 0.0, %v9460
    %v9462 = vpop.f32.mrb[0].mxu0
    %9463 = vmatprep.mubr.f32.mxu0 0.0
    %9464 = vmatmul.mubr.f32.gmra.mrb[0].mxu0 %v9350
    %v9465 = vpop.f32.mrb[0].mxu0
    %v9466 = vadd.f32 0.0, %v9465
    %v9467 = vpop.f32.mrb[0].mxu0
    %9468 = vmatprep.mubr.f32.mxu0 0.0
    %9469 = vmatmul.mubr.f32.gmra.mrb[0].mxu0 %v9351
    %v9470 = vpop.f32.mrb[0].mxu0
    %v9471 = vadd.f32 0.0, %v9470
    %v9472 = vpop.f32.mrb[0].mxu0
    %9473 = vdwg.mxu0
    %v9474 = vadd.f32 %v9336, %v9436
    %v9475 = vadd.f32 %v9337, %v9441
    %v9476 = vadd.f32 %v9338, %v9446
    %v9477 = vadd.f32 %v9339, %v9451
    %v9478 = vadd.f32 %v9340, %v9456
    %v9479 = vadd.f32 %v9341, %v9461
    %v9480 = vadd.f32 %v9342, %v9466
    %v9481 = vadd.f32 %v9343, %v9471
    %v9482 = vld [vmem:[#allocation5 + $0xa] sm:$0xff]
    %v9483 = vld [vmem:[#allocation5 + $0x12] sm:$0xff]
    %v9484 = vld [vmem:[#allocation5 + $0x1a] sm:$0xff]
    %v9485 = vld [vmem:[#allocation5 + $0x22] sm:$0xff]
    %v9486 = vld [vmem:[#allocation5 + $0x2a] sm:$0xff]
    %v9487 = vld [vmem:[#allocation5 + $0x32] sm:$0xff]
    %v9488 = vld [vmem:[#allocation5 + $0x3a] sm:$0xff]
    %v9489 = vld [vmem:[#allocation5 + $0x42] sm:$0x1f]
    %s9490 = scalar_lea.vmem [#allocation12], 512
    %v9491 = vld [vmem:[%s9490] sm:$0xff]
    %v9492 = vld [vmem:[%s9490 + $0x8] sm:$0xff]
    %v9493 = vld [vmem:[%s9490 + $0x10] sm:$0xff]
    %v9494 = vld [vmem:[%s9490 + $0x18] sm:$0xff]
    %v9495 = vld [vmem:[%s9490 + $0x20] sm:$0xff]
    %v9496 = vld [vmem:[%s9490 + $0x28] sm:$0xff]
    %v9497 = vld [vmem:[%s9490 + $0x30] sm:$0xff]
    %v9498 = vld [vmem:[%s9490 + $0x38] sm:$0xff]
    %v9499 = vld [vmem:[%s9490 + $0x40] sm:$0xff]
    %v9500 = vld [vmem:[%s9490 + $0x48] sm:$0xff]
    %v9501 = vld [vmem:[%s9490 + $0x50] sm:$0xff]
    %v9502 = vld [vmem:[%s9490 + $0x58] sm:$0xff]
    %v9503 = vld [vmem:[%s9490 + $0x60] sm:$0xff]
    %v9504 = vld [vmem:[%s9490 + $0x68] sm:$0xff]
    %v9505 = vld [vmem:[%s9490 + $0x70] sm:$0xff]
    %v9506 = vld [vmem:[%s9490 + $0x78] sm:$0xff]
    %9507 = vmatprep.subr.mxu0 0.0
    %9508 = vmatpush1.msra.mxu0 %v9491
    %9509 = vmatprep.subr.mxu0 0.0
    %9510 = vmatpush1.msra.mxu0 %v9492
    %9511 = vmatprep.subr.mxu0 0.0
    %9512 = vmatpush1.msra.mxu0 %v9493
    %9513 = vmatprep.subr.mxu0 0.0
    %9514 = vmatpush1.msra.mxu0 %v9494
    %9515 = vmatprep.subr.mxu0 0.0
    %9516 = vmatpush1.msra.mxu0 %v9495
    %9517 = vmatprep.subr.mxu0 0.0
    %9518 = vmatpush1.msra.mxu0 %v9496
    %9519 = vmatprep.subr.mxu0 0.0
    %9520 = vmatpush1.msra.mxu0 %v9497
    %9521 = vmatprep.subr.mxu0 0.0
    %9522 = vmatpush1.msra.mxu0 %v9498
    %9523 = vmatprep.subr.mxu0 0.0
    %9524 = vmatpush1.msra.mxu0 %v9499
    %9525 = vmatprep.subr.mxu0 0.0
    %9526 = vmatpush1.msra.mxu0 %v9500
    %9527 = vmatprep.subr.mxu0 0.0
    %9528 = vmatpush1.msra.mxu0 %v9501
    %9529 = vmatprep.subr.mxu0 0.0
    %9530 = vmatpush1.msra.mxu0 %v9502
    %9531 = vmatprep.subr.mxu0 0.0
    %9532 = vmatpush1.msra.mxu0 %v9503
    %9533 = vmatprep.subr.mxu0 0.0
    %9534 = vmatpush1.msra.mxu0 %v9504
    %9535 = vmatprep.subr.mxu0 0.0
    %9536 = vmatpush1.msra.mxu0 %v9505
    %9537 = vmatprep.subr.mxu0 0.0
    %9538 = vmatpush1.msra.mxu0 %v9506
    %9539 = vmatprep.subr.mxu0 0.0
    %9540 = vmatpush1.msra.mxu0 0.0
    %9541 = vmatprep.subr.mxu0 0.0
    %9542 = vmatpush1.msra.mxu0 0.0
    %9543 = vmatprep.subr.mxu0 0.0
    %9544 = vmatpush1.msra.mxu0 0.0
    %9545 = vmatprep.subr.mxu0 0.0
    %9546 = vmatpush1.msra.mxu0 0.0
    %9547 = vmatprep.subr.mxu0 0.0
    %9548 = vmatpush1.msra.mxu0 0.0
    %9549 = vmatprep.subr.mxu0 0.0
    %9550 = vmatpush1.msra.mxu0 0.0
    %9551 = vmatprep.subr.mxu0 0.0
    %9552 = vmatpush1.msra.mxu0 0.0
    %9553 = vmatprep.subr.mxu0 0.0
    %9554 = vmatpush1.msra.mxu0 0.0
    %9555 = vmatprep.subr.mxu0 0.0
    %9556 = vmatpush1.msra.mxu0 0.0
    %9557 = vmatprep.subr.mxu0 0.0
    %9558 = vmatpush1.msra.mxu0 0.0
    %9559 = vmatprep.subr.mxu0 0.0
    %9560 = vmatpush1.msra.mxu0 0.0
    %9561 = vmatprep.subr.mxu0 0.0
    %9562 = vmatpush1.msra.mxu0 0.0
    %9563 = vmatprep.subr.mxu0 0.0
    %9564 = vmatpush1.msra.mxu0 0.0
    %9565 = vmatprep.subr.mxu0 0.0
    %9566 = vmatpush1.msra.mxu0 0.0
    %9567 = vmatprep.subr.mxu0 0.0
    %9568 = vmatpush1.msra.mxu0 0.0
    %9569 = vmatprep.subr.mxu0 0.0
    %9570 = vmatpush1.msra.mxu0 0.0
    %9571 = vmatprep.mubr.f32.mxu0 0.0
    %9572 = vmatmul.mubr.f32.gmra.mrb[0].mxu0 %v9482
    %v9573 = vpop.f32.mrb[0].mxu0
    %v9574 = vadd.f32 0.0, %v9573
    %v9575 = vpop.f32.mrb[0].mxu0
    %9576 = vmatprep.mubr.f32.mxu0 0.0
    %9577 = vmatmul.mubr.f32.gmra.mrb[0].mxu0 %v9483
    %v9578 = vpop.f32.mrb[0].mxu0
    %v9579 = vadd.f32 0.0, %v9578
    %v9580 = vpop.f32.mrb[0].mxu0
    %9581 = vmatprep.mubr.f32.mxu0 0.0
    %9582 = vmatmul.mubr.f32.gmra.mrb[0].mxu0 %v9484
    %v9583 = vpop.f32.mrb[0].mxu0
    %v9584 = vadd.f32 0.0, %v9583
    %v9585 = vpop.f32.mrb[0].mxu0
    %9586 = vmatprep.mubr.f32.mxu0 0.0
    %9587 = vmatmul.mubr.f32.gmra.mrb[0].mxu0 %v9485
    %v9588 = vpop.f32.mrb[0].mxu0
    %v9589 = vadd.f32 0.0, %v9588
    %v9590 = vpop.f32.mrb[0].mxu0
    %9591 = vmatprep.mubr.f32.mxu0 0.0
    %9592 = vmatmul.mubr.f32.gmra.mrb[0].mxu0 %v9486
    %v9593 = vpop.f32.mrb[0].mxu0
    %v9594 = vadd.f32 0.0, %v9593
    %v9595 = vpop.f32.mrb[0].mxu0
    %9596 = vmatprep.mubr.f32.mxu0 0.0
    %9597 = vmatmul.mubr.f32.gmra.mrb[0].mxu0 %v9487
    %v9598 = vpop.f32.mrb[0].mxu0
    %v9599 = vadd.f32 0.0, %v9598
    %v9600 = vpop.f32.mrb[0].mxu0
    %9601 = vmatprep.mubr.f32.mxu0 0.0
    %9602 = vmatmul.mubr.f32.gmra.mrb[0].mxu0 %v9488
    %v9603 = vpop.f32.mrb[0].mxu0
    %v9604 = vadd.f32 0.0, %v9603
    %v9605 = vpop.f32.mrb[0].mxu0
    %9606 = vmatprep.mubr.f32.mxu0 0.0
    %9607 = vmatmul.mubr.f32.gmra.mrb[0].mxu0 %v9489
    %v9608 = vpop.f32.mrb[0].mxu0
    %v9609 = vadd.f32 0.0, %v9608
    %v9610 = vpop.f32.mrb[0].mxu0
    %9611 = vdwg.mxu0
    %v9612 = vadd.f32 %v9474, %v9574
    %v9613 = vadd.f32 %v9475, %v9579
    %v9614 = vadd.f32 %v9476, %v9584
    %v9615 = vadd.f32 %v9477, %v9589
    %v9616 = vadd.f32 %v9478, %v9594
    %v9617 = vadd.f32 %v9479, %v9599
    %v9618 = vadd.f32 %v9480, %v9604
    %v9619 = vadd.f32 %v9481, %v9609
    %v9620 = vld [vmem:[#allocation5 + $0xb] sm:$0xff]
    %v9621 = vld [vmem:[#allocation5 + $0x13] sm:$0xff]
    %v9622 = vld [vmem:[#allocation5 + $0x1b] sm:$0xff]
    %v9623 = vld [vmem:[#allocation5 + $0x23] sm:$0xff]
    %v9624 = vld [vmem:[#allocation5 + $0x2b] sm:$0xff]
    %v9625 = vld [vmem:[#allocation5 + $0x33] sm:$0xff]
    %v9626 = vld [vmem:[#allocation5 + $0x3b] sm:$0xff]
    %v9627 = vld [vmem:[#allocation5 + $0x43] sm:$0x1f]
    %s9628 = scalar_lea.vmem [#allocation12], 640
    %v9629 = vld [vmem:[%s9628] sm:$0xff]
    %v9630 = vld [vmem:[%s9628 + $0x8] sm:$0xff]
    %v9631 = vld [vmem:[%s9628 + $0x10] sm:$0xff]
    %v9632 = vld [vmem:[%s9628 + $0x18] sm:$0xff]
    %v9633 = vld [vmem:[%s9628 + $0x20] sm:$0xff]
    %v9634 = vld [vmem:[%s9628 + $0x28] sm:$0xff]
    %v9635 = vld [vmem:[%s9628 + $0x30] sm:$0xff]
    %v9636 = vld [vmem:[%s9628 + $0x38] sm:$0xff]
    %v9637 = vld [vmem:[%s9628 + $0x40] sm:$0xff]
    %v9638 = vld [vmem:[%s9628 + $0x48] sm:$0xff]
    %v9639 = vld [vmem:[%s9628 + $0x50] sm:$0xff]
    %v9640 = vld [vmem:[%s9628 + $0x58] sm:$0xff]
    %v9641 = vld [vmem:[%s9628 + $0x60] sm:$0xff]
    %v9642 = vld [vmem:[%s9628 + $0x68] sm:$0xff]
    %v9643 = vld [vmem:[%s9628 + $0x70] sm:$0xff]
    %v9644 = vld [vmem:[%s9628 + $0x78] sm:$0xff]
    %9645 = vmatprep.subr.mxu0 0.0
    %9646 = vmatpush1.msra.mxu0 %v9629
    %9647 = vmatprep.subr.mxu0 0.0
    %9648 = vmatpush1.msra.mxu0 %v9630
    %9649 = vmatprep.subr.mxu0 0.0
    %9650 = vmatpush1.msra.mxu0 %v9631
    %9651 = vmatprep.subr.mxu0 0.0
    %9652 = vmatpush1.msra.mxu0 %v9632
    %9653 = vmatprep.subr.mxu0 0.0
    %9654 = vmatpush1.msra.mxu0 %v9633
    %9655 = vmatprep.subr.mxu0 0.0
    %9656 = vmatpush1.msra.mxu0 %v9634
    %9657 = vmatprep.subr.mxu0 0.0
    %9658 = vmatpush1.msra.mxu0 %v9635
    %9659 = vmatprep.subr.mxu0 0.0
    %9660 = vmatpush1.msra.mxu0 %v9636
    %9661 = vmatprep.subr.mxu0 0.0
    %9662 = vmatpush1.msra.mxu0 %v9637
    %9663 = vmatprep.subr.mxu0 0.0
    %9664 = vmatpush1.msra.mxu0 %v9638
    %9665 = vmatprep.subr.mxu0 0.0
    %9666 = vmatpush1.msra.mxu0 %v9639
    %9667 = vmatprep.subr.mxu0 0.0
    %9668 = vmatpush1.msra.mxu0 %v9640
    %9669 = vmatprep.subr.mxu0 0.0
    %9670 = vmatpush1.msra.mxu0 %v9641
    %9671 = vmatprep.subr.mxu0 0.0
    %9672 = vmatpush1.msra.mxu0 %v9642
    %9673 = vmatprep.subr.mxu0 0.0
    %9674 = vmatpush1.msra.mxu0 %v9643
    %9675 = vmatprep.subr.mxu0 0.0
    %9676 = vmatpush1.msra.mxu0 %v9644
    %9677 = vmatprep.subr.mxu0 0.0
    %9678 = vmatpush1.msra.mxu0 0.0
    %9679 = vmatprep.subr.mxu0 0.0
    %9680 = vmatpush1.msra.mxu0 0.0
    %9681 = vmatprep.subr.mxu0 0.0
    %9682 = vmatpush1.msra.mxu0 0.0
    %9683 = vmatprep.subr.mxu0 0.0
    %9684 = vmatpush1.msra.mxu0 0.0
    %9685 = vmatprep.subr.mxu0 0.0
    %9686 = vmatpush1.msra.mxu0 0.0
    %9687 = vmatprep.subr.mxu0 0.0
    %9688 = vmatpush1.msra.mxu0 0.0
    %9689 = vmatprep.subr.mxu0 0.0
    %9690 = vmatpush1.msra.mxu0 0.0
    %9691 = vmatprep.subr.mxu0 0.0
    %9692 = vmatpush1.msra.mxu0 0.0
    %9693 = vmatprep.subr.mxu0 0.0
    %9694 = vmatpush1.msra.mxu0 0.0
    %9695 = vmatprep.subr.mxu0 0.0
    %9696 = vmatpush1.msra.mxu0 0.0
    %9697 = vmatprep.subr.mxu0 0.0
    %9698 = vmatpush1.msra.mxu0 0.0
    %9699 = vmatprep.subr.mxu0 0.0
    %9700 = vmatpush1.msra.mxu0 0.0
    %9701 = vmatprep.subr.mxu0 0.0
    %9702 = vmatpush1.msra.mxu0 0.0
    %9703 = vmatprep.subr.mxu0 0.0
    %9704 = vmatpush1.msra.mxu0 0.0
    %9705 = vmatprep.subr.mxu0 0.0
    %9706 = vmatpush1.msra.mxu0 0.0
    %9707 = vmatprep.subr.mxu0 0.0
    %9708 = vmatpush1.msra.mxu0 0.0
    %9709 = vmatprep.mubr.f32.mxu0 0.0
    %9710 = vmatmul.mubr.f32.gmra.mrb[0].mxu0 %v9620
    %v9711 = vpop.f32.mrb[0].mxu0
    %v9712 = vadd.f32 0.0, %v9711
    %v9713 = vpop.f32.mrb[0].mxu0
    %9714 = vmatprep.mubr.f32.mxu0 0.0
    %9715 = vmatmul.mubr.f32.gmra.mrb[0].mxu0 %v9621
    %v9716 = vpop.f32.mrb[0].mxu0
    %v9717 = vadd.f32 0.0, %v9716
    %v9718 = vpop.f32.mrb[0].mxu0
    %9719 = vmatprep.mubr.f32.mxu0 0.0
    %9720 = vmatmul.mubr.f32.gmra.mrb[0].mxu0 %v9622
    %v9721 = vpop.f32.mrb[0].mxu0
    %v9722 = vadd.f32 0.0, %v9721
    %v9723 = vpop.f32.mrb[0].mxu0
    %9724 = vmatprep.mubr.f32.mxu0 0.0
    %9725 = vmatmul.mubr.f32.gmra.mrb[0].mxu0 %v9623
    %v9726 = vpop.f32.mrb[0].mxu0
    %v9727 = vadd.f32 0.0, %v9726
    %v9728 = vpop.f32.mrb[0].mxu0
    %9729 = vmatprep.mubr.f32.mxu0 0.0
    %9730 = vmatmul.mubr.f32.gmra.mrb[0].mxu0 %v9624
    %v9731 = vpop.f32.mrb[0].mxu0
    %v9732 = vadd.f32 0.0, %v9731
    %v9733 = vpop.f32.mrb[0].mxu0
    %9734 = vmatprep.mubr.f32.mxu0 0.0
    %9735 = vmatmul.mubr.f32.gmra.mrb[0].mxu0 %v9625
    %v9736 = vpop.f32.mrb[0].mxu0
    %v9737 = vadd.f32 0.0, %v9736
    %v9738 = vpop.f32.mrb[0].mxu0
    %9739 = vmatprep.mubr.f32.mxu0 0.0
    %9740 = vmatmul.mubr.f32.gmra.mrb[0].mxu0 %v9626
    %v9741 = vpop.f32.mrb[0].mxu0
    %v9742 = vadd.f32 0.0, %v9741
    %v9743 = vpop.f32.mrb[0].mxu0
    %9744 = vmatprep.mubr.f32.mxu0 0.0
    %9745 = vmatmul.mubr.f32.gmra.mrb[0].mxu0 %v9627
    %v9746 = vpop.f32.mrb[0].mxu0
    %v9747 = vadd.f32 0.0, %v9746
    %v9748 = vpop.f32.mrb[0].mxu0
    %9749 = vdwg.mxu0
    %v9750 = vadd.f32 %v9612, %v9712
    %v9751 = vadd.f32 %v9613, %v9717
    %v9752 = vadd.f32 %v9614, %v9722
    %v9753 = vadd.f32 %v9615, %v9727
    %v9754 = vadd.f32 %v9616, %v9732
    %v9755 = vadd.f32 %v9617, %v9737
    %v9756 = vadd.f32 %v9618, %v9742
    %v9757 = vadd.f32 %v9619, %v9747
    %v9758 = vld [vmem:[#allocation5 + $0x12] sm:$0xff]
    %v9759 = vld [vmem:[#allocation5 + $0x1a] sm:$0xff]
    %v9760 = vld [vmem:[#allocation5 + $0x22] sm:$0xff]
    %v9761 = vld [vmem:[#allocation5 + $0x2a] sm:$0xff]
    %v9762 = vld [vmem:[#allocation5 + $0x32] sm:$0xff]
    %v9763 = vld [vmem:[#allocation5 + $0x3a] sm:$0xff]
    %v9764 = vld [vmem:[#allocation5 + $0x42] sm:$0xff]
    %v9765 = vld [vmem:[#allocation5 + $0x4a] sm:$0x1f]
    %s9766 = scalar_lea.vmem [#allocation12], 768
    %v9767 = vld [vmem:[%s9766] sm:$0xff]
    %v9768 = vld [vmem:[%s9766 + $0x8] sm:$0xff]
    %v9769 = vld [vmem:[%s9766 + $0x10] sm:$0xff]
    %v9770 = vld [vmem:[%s9766 + $0x18] sm:$0xff]
    %v9771 = vld [vmem:[%s9766 + $0x20] sm:$0xff]
    %v9772 = vld [vmem:[%s9766 + $0x28] sm:$0xff]
    %v9773 = vld [vmem:[%s9766 + $0x30] sm:$0xff]
    %v9774 = vld [vmem:[%s9766 + $0x38] sm:$0xff]
    %v9775 = vld [vmem:[%s9766 + $0x40] sm:$0xff]
    %v9776 = vld [vmem:[%s9766 + $0x48] sm:$0xff]
    %v9777 = vld [vmem:[%s9766 + $0x50] sm:$0xff]
    %v9778 = vld [vmem:[%s9766 + $0x58] sm:$0xff]
    %v9779 = vld [vmem:[%s9766 + $0x60] sm:$0xff]
    %v9780 = vld [vmem:[%s9766 + $0x68] sm:$0xff]
    %v9781 = vld [vmem:[%s9766 + $0x70] sm:$0xff]
    %v9782 = vld [vmem:[%s9766 + $0x78] sm:$0xff]
    %9783 = vmatprep.subr.mxu0 0.0
    %9784 = vmatpush1.msra.mxu0 %v9767
    %9785 = vmatprep.subr.mxu0 0.0
    %9786 = vmatpush1.msra.mxu0 %v9768
    %9787 = vmatprep.subr.mxu0 0.0
    %9788 = vmatpush1.msra.mxu0 %v9769
    %9789 = vmatprep.subr.mxu0 0.0
    %9790 = vmatpush1.msra.mxu0 %v9770
    %9791 = vmatprep.subr.mxu0 0.0
    %9792 = vmatpush1.msra.mxu0 %v9771
    %9793 = vmatprep.subr.mxu0 0.0
    %9794 = vmatpush1.msra.mxu0 %v9772
    %9795 = vmatprep.subr.mxu0 0.0
    %9796 = vmatpush1.msra.mxu0 %v9773
    %9797 = vmatprep.subr.mxu0 0.0
    %9798 = vmatpush1.msra.mxu0 %v9774
    %9799 = vmatprep.subr.mxu0 0.0
    %9800 = vmatpush1.msra.mxu0 %v9775
    %9801 = vmatprep.subr.mxu0 0.0
    %9802 = vmatpush1.msra.mxu0 %v9776
    %9803 = vmatprep.subr.mxu0 0.0
    %9804 = vmatpush1.msra.mxu0 %v9777
    %9805 = vmatprep.subr.mxu0 0.0
    %9806 = vmatpush1.msra.mxu0 %v9778
    %9807 = vmatprep.subr.mxu0 0.0
    %9808 = vmatpush1.msra.mxu0 %v9779
    %9809 = vmatprep.subr.mxu0 0.0
    %9810 = vmatpush1.msra.mxu0 %v9780
    %9811 = vmatprep.subr.mxu0 0.0
    %9812 = vmatpush1.msra.mxu0 %v9781
    %9813 = vmatprep.subr.mxu0 0.0
    %9814 = vmatpush1.msra.mxu0 %v9782
    %9815 = vmatprep.subr.mxu0 0.0
    %9816 = vmatpush1.msra.mxu0 0.0
    %9817 = vmatprep.subr.mxu0 0.0
    %9818 = vmatpush1.msra.mxu0 0.0
    %9819 = vmatprep.subr.mxu0 0.0
    %9820 = vmatpush1.msra.mxu0 0.0
    %9821 = vmatprep.subr.mxu0 0.0
    %9822 = vmatpush1.msra.mxu0 0.0
    %9823 = vmatprep.subr.mxu0 0.0
    %9824 = vmatpush1.msra.mxu0 0.0
    %9825 = vmatprep.subr.mxu0 0.0
    %9826 = vmatpush1.msra.mxu0 0.0
    %9827 = vmatprep.subr.mxu0 0.0
    %9828 = vmatpush1.msra.mxu0 0.0
    %9829 = vmatprep.subr.mxu0 0.0
    %9830 = vmatpush1.msra.mxu0 0.0
    %9831 = vmatprep.subr.mxu0 0.0
    %9832 = vmatpush1.msra.mxu0 0.0
    %9833 = vmatprep.subr.mxu0 0.0
    %9834 = vmatpush1.msra.mxu0 0.0
    %9835 = vmatprep.subr.mxu0 0.0
    %9836 = vmatpush1.msra.mxu0 0.0
    %9837 = vmatprep.subr.mxu0 0.0
    %9838 = vmatpush1.msra.mxu0 0.0
    %9839 = vmatprep.subr.mxu0 0.0
    %9840 = vmatpush1.msra.mxu0 0.0
    %9841 = vmatprep.subr.mxu0 0.0
    %9842 = vmatpush1.msra.mxu0 0.0
    %9843 = vmatprep.subr.mxu0 0.0
    %9844 = vmatpush1.msra.mxu0 0.0
    %9845 = vmatprep.subr.mxu0 0.0
    %9846 = vmatpush1.msra.mxu0 0.0
    %9847 = vmatprep.mubr.f32.mxu0 0.0
    %9848 = vmatmul.mubr.f32.gmra.mrb[0].mxu0 %v9758
    %v9849 = vpop.f32.mrb[0].mxu0
    %v9850 = vadd.f32 0.0, %v9849
    %v9851 = vpop.f32.mrb[0].mxu0
    %9852 = vmatprep.mubr.f32.mxu0 0.0
    %9853 = vmatmul.mubr.f32.gmra.mrb[0].mxu0 %v9759
    %v9854 = vpop.f32.mrb[0].mxu0
    %v9855 = vadd.f32 0.0, %v9854
    %v9856 = vpop.f32.mrb[0].mxu0
    %9857 = vmatprep.mubr.f32.mxu0 0.0
    %9858 = vmatmul.mubr.f32.gmra.mrb[0].mxu0 %v9760
    %v9859 = vpop.f32.mrb[0].mxu0
    %v9860 = vadd.f32 0.0, %v9859
    %v9861 = vpop.f32.mrb[0].mxu0
    %9862 = vmatprep.mubr.f32.mxu0 0.0
    %9863 = vmatmul.mubr.f32.gmra.mrb[0].mxu0 %v9761
    %v9864 = vpop.f32.mrb[0].mxu0
    %v9865 = vadd.f32 0.0, %v9864
    %v9866 = vpop.f32.mrb[0].mxu0
    %9867 = vmatprep.mubr.f32.mxu0 0.0
    %9868 = vmatmul.mubr.f32.gmra.mrb[0].mxu0 %v9762
    %v9869 = vpop.f32.mrb[0].mxu0
    %v9870 = vadd.f32 0.0, %v9869
    %v9871 = vpop.f32.mrb[0].mxu0
    %9872 = vmatprep.mubr.f32.mxu0 0.0
    %9873 = vmatmul.mubr.f32.gmra.mrb[0].mxu0 %v9763
    %v9874 = vpop.f32.mrb[0].mxu0
    %v9875 = vadd.f32 0.0, %v9874
    %v9876 = vpop.f32.mrb[0].mxu0
    %9877 = vmatprep.mubr.f32.mxu0 0.0
    %9878 = vmatmul.mubr.f32.gmra.mrb[0].mxu0 %v9764
    %v9879 = vpop.f32.mrb[0].mxu0
    %v9880 = vadd.f32 0.0, %v9879
    %v9881 = vpop.f32.mrb[0].mxu0
    %9882 = vmatprep.mubr.f32.mxu0 0.0
    %9883 = vmatmul.mubr.f32.gmra.mrb[0].mxu0 %v9765
    %v9884 = vpop.f32.mrb[0].mxu0
    %v9885 = vadd.f32 0.0, %v9884
    %v9886 = vpop.f32.mrb[0].mxu0
    %9887 = vdwg.mxu0
    %v9888 = vadd.f32 %v9750, %v9850
    %v9889 = vadd.f32 %v9751, %v9855
    %v9890 = vadd.f32 %v9752, %v9860
    %v9891 = vadd.f32 %v9753, %v9865
    %v9892 = vadd.f32 %v9754, %v9870
    %v9893 = vadd.f32 %v9755, %v9875
    %v9894 = vadd.f32 %v9756, %v9880
    %v9895 = vadd.f32 %v9757, %v9885
    %v9896 = vld [vmem:[#allocation5 + $0x13] sm:$0xff]
    %v9897 = vld [vmem:[#allocation5 + $0x1b] sm:$0xff]
    %v9898 = vld [vmem:[#allocation5 + $0x23] sm:$0xff]
    %v9899 = vld [vmem:[#allocation5 + $0x2b] sm:$0xff]
    %v9900 = vld [vmem:[#allocation5 + $0x33] sm:$0xff]
    %v9901 = vld [vmem:[#allocation5 + $0x3b] sm:$0xff]
    %v9902 = vld [vmem:[#allocation5 + $0x43] sm:$0xff]
    %v9903 = vld [vmem:[#allocation5 + $0x4b] sm:$0x1f]
    %s9904 = scalar_lea.vmem [#allocation12], 896
    %v9905 = vld [vmem:[%s9904] sm:$0xff]
    %v9906 = vld [vmem:[%s9904 + $0x8] sm:$0xff]
    %v9907 = vld [vmem:[%s9904 + $0x10] sm:$0xff]
    %v9908 = vld [vmem:[%s9904 + $0x18] sm:$0xff]
    %v9909 = vld [vmem:[%s9904 + $0x20] sm:$0xff]
    %v9910 = vld [vmem:[%s9904 + $0x28] sm:$0xff]
    %v9911 = vld [vmem:[%s9904 + $0x30] sm:$0xff]
    %v9912 = vld [vmem:[%s9904 + $0x38] sm:$0xff]
    %v9913 = vld [vmem:[%s9904 + $0x40] sm:$0xff]
    %v9914 = vld [vmem:[%s9904 + $0x48] sm:$0xff]
    %v9915 = vld [vmem:[%s9904 + $0x50] sm:$0xff]
    %v9916 = vld [vmem:[%s9904 + $0x58] sm:$0xff]
    %v9917 = vld [vmem:[%s9904 + $0x60] sm:$0xff]
    %v9918 = vld [vmem:[%s9904 + $0x68] sm:$0xff]
    %v9919 = vld [vmem:[%s9904 + $0x70] sm:$0xff]
    %v9920 = vld [vmem:[%s9904 + $0x78] sm:$0xff]
    %9921 = vmatprep.subr.mxu0 0.0
    %9922 = vmatpush1.msra.mxu0 %v9905
    %9923 = vmatprep.subr.mxu0 0.0
    %9924 = vmatpush1.msra.mxu0 %v9906
    %9925 = vmatprep.subr.mxu0 0.0
    %9926 = vmatpush1.msra.mxu0 %v9907
    %9927 = vmatprep.subr.mxu0 0.0
    %9928 = vmatpush1.msra.mxu0 %v9908
    %9929 = vmatprep.subr.mxu0 0.0
    %9930 = vmatpush1.msra.mxu0 %v9909
    %9931 = vmatprep.subr.mxu0 0.0
    %9932 = vmatpush1.msra.mxu0 %v9910
    %9933 = vmatprep.subr.mxu0 0.0
    %9934 = vmatpush1.msra.mxu0 %v9911
    %9935 = vmatprep.subr.mxu0 0.0
    %9936 = vmatpush1.msra.mxu0 %v9912
    %9937 = vmatprep.subr.mxu0 0.0
    %9938 = vmatpush1.msra.mxu0 %v9913
    %9939 = vmatprep.subr.mxu0 0.0
    %9940 = vmatpush1.msra.mxu0 %v9914
    %9941 = vmatprep.subr.mxu0 0.0
    %9942 = vmatpush1.msra.mxu0 %v9915
    %9943 = vmatprep.subr.mxu0 0.0
    %9944 = vmatpush1.msra.mxu0 %v9916
    %9945 = vmatprep.subr.mxu0 0.0
    %9946 = vmatpush1.msra.mxu0 %v9917
    %9947 = vmatprep.subr.mxu0 0.0
    %9948 = vmatpush1.msra.mxu0 %v9918
    %9949 = vmatprep.subr.mxu0 0.0
    %9950 = vmatpush1.msra.mxu0 %v9919
    %9951 = vmatprep.subr.mxu0 0.0
    %9952 = vmatpush1.msra.mxu0 %v9920
    %9953 = vmatprep.subr.mxu0 0.0
    %9954 = vmatpush1.msra.mxu0 0.0
    %9955 = vmatprep.subr.mxu0 0.0
    %9956 = vmatpush1.msra.mxu0 0.0
    %9957 = vmatprep.subr.mxu0 0.0
    %9958 = vmatpush1.msra.mxu0 0.0
    %9959 = vmatprep.subr.mxu0 0.0
    %9960 = vmatpush1.msra.mxu0 0.0
    %9961 = vmatprep.subr.mxu0 0.0
    %9962 = vmatpush1.msra.mxu0 0.0
    %9963 = vmatprep.subr.mxu0 0.0
    %9964 = vmatpush1.msra.mxu0 0.0
    %9965 = vmatprep.subr.mxu0 0.0
    %9966 = vmatpush1.msra.mxu0 0.0
    %9967 = vmatprep.subr.mxu0 0.0
    %9968 = vmatpush1.msra.mxu0 0.0
    %9969 = vmatprep.subr.mxu0 0.0
    %9970 = vmatpush1.msra.mxu0 0.0
    %9971 = vmatprep.subr.mxu0 0.0
    %9972 = vmatpush1.msra.mxu0 0.0
    %9973 = vmatprep.subr.mxu0 0.0
    %9974 = vmatpush1.msra.mxu0 0.0
    %9975 = vmatprep.subr.mxu0 0.0
    %9976 = vmatpush1.msra.mxu0 0.0
    %9977 = vmatprep.subr.mxu0 0.0
    %9978 = vmatpush1.msra.mxu0 0.0
    %9979 = vmatprep.subr.mxu0 0.0
    %9980 = vmatpush1.msra.mxu0 0.0
    %9981 = vmatprep.subr.mxu0 0.0
    %9982 = vmatpush1.msra.mxu0 0.0
    %9983 = vmatprep.subr.mxu0 0.0
    %9984 = vmatpush1.msra.mxu0 0.0
    %9985 = vmatprep.mubr.f32.mxu0 0.0
    %9986 = vmatmul.mubr.f32.gmra.mrb[0].mxu0 %v9896
    %v9987 = vpop.f32.mrb[0].mxu0
    %v9988 = vadd.f32 0.0, %v9987
    %v9989 = vpop.f32.mrb[0].mxu0
    %9990 = vmatprep.mubr.f32.mxu0 0.0
    %9991 = vmatmul.mubr.f32.gmra.mrb[0].mxu0 %v9897
    %v9992 = vpop.f32.mrb[0].mxu0
    %v9993 = vadd.f32 0.0, %v9992
    %v9994 = vpop.f32.mrb[0].mxu0
    %9995 = vmatprep.mubr.f32.mxu0 0.0
    %9996 = vmatmul.mubr.f32.gmra.mrb[0].mxu0 %v9898
    %v9997 = vpop.f32.mrb[0].mxu0
    %v9998 = vadd.f32 0.0, %v9997
    %v9999 = vpop.f32.mrb[0].mxu0
    %10000 = vmatprep.mubr.f32.mxu0 0.0
    %10001 = vmatmul.mubr.f32.gmra.mrb[0].mxu0 %v9899
    %v10002 = vpop.f32.mrb[0].mxu0
    %v10003 = vadd.f32 0.0, %v10002
    %v10004 = vpop.f32.mrb[0].mxu0
    %10005 = vmatprep.mubr.f32.mxu0 0.0
    %10006 = vmatmul.mubr.f32.gmra.mrb[0].mxu0 %v9900
    %v10007 = vpop.f32.mrb[0].mxu0
    %v10008 = vadd.f32 0.0, %v10007
    %v10009 = vpop.f32.mrb[0].mxu0
    %10010 = vmatprep.mubr.f32.mxu0 0.0
    %10011 = vmatmul.mubr.f32.gmra.mrb[0].mxu0 %v9901
    %v10012 = vpop.f32.mrb[0].mxu0
    %v10013 = vadd.f32 0.0, %v10012
    %v10014 = vpop.f32.mrb[0].mxu0
    %10015 = vmatprep.mubr.f32.mxu0 0.0
    %10016 = vmatmul.mubr.f32.gmra.mrb[0].mxu0 %v9902
    %v10017 = vpop.f32.mrb[0].mxu0
    %v10018 = vadd.f32 0.0, %v10017
    %v10019 = vpop.f32.mrb[0].mxu0
    %10020 = vmatprep.mubr.f32.mxu0 0.0
    %10021 = vmatmul.mubr.f32.gmra.mrb[0].mxu0 %v9903
    %v10022 = vpop.f32.mrb[0].mxu0
    %v10023 = vadd.f32 0.0, %v10022
    %v10024 = vpop.f32.mrb[0].mxu0
    %10025 = vdwg.mxu0
    %v10026 = vadd.f32 %v9888, %v9988
    %v10027 = vadd.f32 %v9889, %v9993
    %v10028 = vadd.f32 %v9890, %v9998
    %v10029 = vadd.f32 %v9891, %v10003
    %v10030 = vadd.f32 %v9892, %v10008
    %v10031 = vadd.f32 %v9893, %v10013
    %v10032 = vadd.f32 %v9894, %v10018
    %v10033 = vadd.f32 %v9895, %v10023
    %v10034 = vld [vmem:[#allocation5 + $0x14] sm:$0xff]
    %v10035 = vld [vmem:[#allocation5 + $0x1c] sm:$0xff]
    %v10036 = vld [vmem:[#allocation5 + $0x24] sm:$0xff]
    %v10037 = vld [vmem:[#allocation5 + $0x2c] sm:$0xff]
    %v10038 = vld [vmem:[#allocation5 + $0x34] sm:$0xff]
    %v10039 = vld [vmem:[#allocation5 + $0x3c] sm:$0xff]
    %v10040 = vld [vmem:[#allocation5 + $0x44] sm:$0xff]
    %v10041 = vld [vmem:[#allocation5 + $0x4c] sm:$0x1f]
    %s10042 = scalar_lea.vmem [#allocation12], 1024
    %v10043 = vld [vmem:[%s10042] sm:$0xff]
    %v10044 = vld [vmem:[%s10042 + $0x8] sm:$0xff]
    %v10045 = vld [vmem:[%s10042 + $0x10] sm:$0xff]
    %v10046 = vld [vmem:[%s10042 + $0x18] sm:$0xff]
    %v10047 = vld [vmem:[%s10042 + $0x20] sm:$0xff]
    %v10048 = vld [vmem:[%s10042 + $0x28] sm:$0xff]
    %v10049 = vld [vmem:[%s10042 + $0x30] sm:$0xff]
    %v10050 = vld [vmem:[%s10042 + $0x38] sm:$0xff]
    %v10051 = vld [vmem:[%s10042 + $0x40] sm:$0xff]
    %v10052 = vld [vmem:[%s10042 + $0x48] sm:$0xff]
    %v10053 = vld [vmem:[%s10042 + $0x50] sm:$0xff]
    %v10054 = vld [vmem:[%s10042 + $0x58] sm:$0xff]
    %v10055 = vld [vmem:[%s10042 + $0x60] sm:$0xff]
    %v10056 = vld [vmem:[%s10042 + $0x68] sm:$0xff]
    %v10057 = vld [vmem:[%s10042 + $0x70] sm:$0xff]
    %v10058 = vld [vmem:[%s10042 + $0x78] sm:$0xff]
    %10059 = vmatprep.subr.mxu0 0.0
    %10060 = vmatpush1.msra.mxu0 %v10043
    %10061 = vmatprep.subr.mxu0 0.0
    %10062 = vmatpush1.msra.mxu0 %v10044
    %10063 = vmatprep.subr.mxu0 0.0
    %10064 = vmatpush1.msra.mxu0 %v10045
    %10065 = vmatprep.subr.mxu0 0.0
    %10066 = vmatpush1.msra.mxu0 %v10046
    %10067 = vmatprep.subr.mxu0 0.0
    %10068 = vmatpush1.msra.mxu0 %v10047
    %10069 = vmatprep.subr.mxu0 0.0
    %10070 = vmatpush1.msra.mxu0 %v10048
    %10071 = vmatprep.subr.mxu0 0.0
    %10072 = vmatpush1.msra.mxu0 %v10049
    %10073 = vmatprep.subr.mxu0 0.0
    %10074 = vmatpush1.msra.mxu0 %v10050
    %10075 = vmatprep.subr.mxu0 0.0
    %10076 = vmatpush1.msra.mxu0 %v10051
    %10077 = vmatprep.subr.mxu0 0.0
    %10078 = vmatpush1.msra.mxu0 %v10052
    %10079 = vmatprep.subr.mxu0 0.0
    %10080 = vmatpush1.msra.mxu0 %v10053
    %10081 = vmatprep.subr.mxu0 0.0
    %10082 = vmatpush1.msra.mxu0 %v10054
    %10083 = vmatprep.subr.mxu0 0.0
    %10084 = vmatpush1.msra.mxu0 %v10055
    %10085 = vmatprep.subr.mxu0 0.0
    %10086 = vmatpush1.msra.mxu0 %v10056
    %10087 = vmatprep.subr.mxu0 0.0
    %10088 = vmatpush1.msra.mxu0 %v10057
    %10089 = vmatprep.subr.mxu0 0.0
    %10090 = vmatpush1.msra.mxu0 %v10058
    %10091 = vmatprep.subr.mxu0 0.0
    %10092 = vmatpush1.msra.mxu0 0.0
    %10093 = vmatprep.subr.mxu0 0.0
    %10094 = vmatpush1.msra.mxu0 0.0
    %10095 = vmatprep.subr.mxu0 0.0
    %10096 = vmatpush1.msra.mxu0 0.0
    %10097 = vmatprep.subr.mxu0 0.0
    %10098 = vmatpush1.msra.mxu0 0.0
    %10099 = vmatprep.subr.mxu0 0.0
    %10100 = vmatpush1.msra.mxu0 0.0
    %10101 = vmatprep.subr.mxu0 0.0
    %10102 = vmatpush1.msra.mxu0 0.0
    %10103 = vmatprep.subr.mxu0 0.0
    %10104 = vmatpush1.msra.mxu0 0.0
    %10105 = vmatprep.subr.mxu0 0.0
    %10106 = vmatpush1.msra.mxu0 0.0
    %10107 = vmatprep.subr.mxu0 0.0
    %10108 = vmatpush1.msra.mxu0 0.0
    %10109 = vmatprep.subr.mxu0 0.0
    %10110 = vmatpush1.msra.mxu0 0.0
    %10111 = vmatprep.subr.mxu0 0.0
    %10112 = vmatpush1.msra.mxu0 0.0
    %10113 = vmatprep.subr.mxu0 0.0
    %10114 = vmatpush1.msra.mxu0 0.0
    %10115 = vmatprep.subr.mxu0 0.0
    %10116 = vmatpush1.msra.mxu0 0.0
    %10117 = vmatprep.subr.mxu0 0.0
    %10118 = vmatpush1.msra.mxu0 0.0
    %10119 = vmatprep.subr.mxu0 0.0
    %10120 = vmatpush1.msra.mxu0 0.0
    %10121 = vmatprep.subr.mxu0 0.0
    %10122 = vmatpush1.msra.mxu0 0.0
    %10123 = vmatprep.mubr.f32.mxu0 0.0
    %10124 = vmatmul.mubr.f32.gmra.mrb[0].mxu0 %v10034
    %v10125 = vpop.f32.mrb[0].mxu0
    %v10126 = vadd.f32 0.0, %v10125
    %v10127 = vpop.f32.mrb[0].mxu0
    %10128 = vmatprep.mubr.f32.mxu0 0.0
    %10129 = vmatmul.mubr.f32.gmra.mrb[0].mxu0 %v10035
    %v10130 = vpop.f32.mrb[0].mxu0
    %v10131 = vadd.f32 0.0, %v10130
    %v10132 = vpop.f32.mrb[0].mxu0
    %10133 = vmatprep.mubr.f32.mxu0 0.0
    %10134 = vmatmul.mubr.f32.gmra.mrb[0].mxu0 %v10036
    %v10135 = vpop.f32.mrb[0].mxu0
    %v10136 = vadd.f32 0.0, %v10135
    %v10137 = vpop.f32.mrb[0].mxu0
    %10138 = vmatprep.mubr.f32.mxu0 0.0
    %10139 = vmatmul.mubr.f32.gmra.mrb[0].mxu0 %v10037
    %v10140 = vpop.f32.mrb[0].mxu0
    %v10141 = vadd.f32 0.0, %v10140
    %v10142 = vpop.f32.mrb[0].mxu0
    %10143 = vmatprep.mubr.f32.mxu0 0.0
    %10144 = vmatmul.mubr.f32.gmra.mrb[0].mxu0 %v10038
    %v10145 = vpop.f32.mrb[0].mxu0
    %v10146 = vadd.f32 0.0, %v10145
    %v10147 = vpop.f32.mrb[0].mxu0
    %10148 = vmatprep.mubr.f32.mxu0 0.0
    %10149 = vmatmul.mubr.f32.gmra.mrb[0].mxu0 %v10039
    %v10150 = vpop.f32.mrb[0].mxu0
    %v10151 = vadd.f32 0.0, %v10150
    %v10152 = vpop.f32.mrb[0].mxu0
    %10153 = vmatprep.mubr.f32.mxu0 0.0
    %10154 = vmatmul.mubr.f32.gmra.mrb[0].mxu0 %v10040
    %v10155 = vpop.f32.mrb[0].mxu0
    %v10156 = vadd.f32 0.0, %v10155
    %v10157 = vpop.f32.mrb[0].mxu0
    %10158 = vmatprep.mubr.f32.mxu0 0.0
    %10159 = vmatmul.mubr.f32.gmra.mrb[0].mxu0 %v10041
    %v10160 = vpop.f32.mrb[0].mxu0
    %v10161 = vadd.f32 0.0, %v10160
    %v10162 = vpop.f32.mrb[0].mxu0
    %10163 = vdwg.mxu0
    %v10164 = vadd.f32 %v10026, %v10126
    %v10165 = vadd.f32 %v10027, %v10131
    %v10166 = vadd.f32 %v10028, %v10136
    %v10167 = vadd.f32 %v10029, %v10141
    %v10168 = vadd.f32 %v10030, %v10146
    %v10169 = vadd.f32 %v10031, %v10151
    %v10170 = vadd.f32 %v10032, %v10156
    %v10171 = vadd.f32 %v10033, %v10161
    %v10172 = vld [vmem:[%s11] sm:$0x1]
    %v10174 = vlaneseq
    %v10175 = vshrl.u32 %v10174, 7
    %v10176 = vsub.s32 0, %v10175
    %v10177 = vrot.slane %v10172, %v10176
    %v10179 = vadd.f32 %v10164, %v10177
    %v10180 = vadd.f32 %v10165, %v10177
    %v10181 = vadd.f32 %v10166, %v10177
    %v10182 = vadd.f32 %v10167, %v10177
    %v10183 = vadd.f32 %v10168, %v10177
    %v10184 = vadd.f32 %v10169, %v10177
    %v10185 = vadd.f32 %v10170, %v10177
    %v10186 = vadd.f32 %v10171, %v10177
    %vm10187 = vcmp.ge.f32.partialorder %v10179, 0.0
    %vm10188 = vcmp.ge.f32.partialorder %v10180, 0.0
    %vm10189 = vcmp.ge.f32.partialorder %v10181, 0.0
    %vm10190 = vcmp.ge.f32.partialorder %v10182, 0.0
    %vm10191 = vcmp.ge.f32.partialorder %v10183, 0.0
    %vm10192 = vcmp.ge.f32.partialorder %v10184, 0.0
    %vm10193 = vcmp.ge.f32.partialorder %v10185, 0.0
    %vm10194 = vcmp.ge.f32.partialorder %v10186, 0.0
    %v10195 = vmul.f32 %v10179, 0.01
    %v10196 = vmul.f32 %v10180, 0.01
    %v10197 = vmul.f32 %v10181, 0.01
    %v10198 = vmul.f32 %v10182, 0.01
    %v10199 = vmul.f32 %v10183, 0.01
    %v10200 = vmul.f32 %v10184, 0.01
    %v10201 = vmul.f32 %v10185, 0.01
    %v10202 = vmul.f32 %v10186, 0.01
    %v10203 = vsel %vm10187, %v10179, %v10195
    %v10204 = vsel %vm10188, %v10180, %v10196
    %v10205 = vsel %vm10189, %v10181, %v10197
    %v10206 = vsel %vm10190, %v10182, %v10198
    %v10207 = vsel %vm10191, %v10183, %v10199
    %v10208 = vsel %vm10192, %v10184, %v10200
    %v10209 = vsel %vm10193, %v10185, %v10201
    %v10210 = vsel %vm10194, %v10186, %v10202
    %v10211 = vld [vmem:[%s12] sm:$0x1]
    %vm10212 = vcmask 498688
    %v10214 = vsel %vm10212, %v10211, 0
    %v10217 = vsel %vm8812, %v10210, 0
    %10219 = vmatprep.subr.mxu0 0.0
    %10220 = vmatpush1.msra.mxu0 %v10203
    %10221 = vmatprep.subr.mxu0 0.0
    %10222 = vmatpush1.msra.mxu0 %v10204
    %10223 = vmatprep.subr.mxu0 0.0
    %10224 = vmatpush1.msra.mxu0 %v10205
    %10225 = vmatprep.subr.mxu0 0.0
    %10226 = vmatpush1.msra.mxu0 %v10206
    %10227 = vmatprep.subr.mxu0 0.0
    %10228 = vmatpush1.msra.mxu0 %v10207
    %10229 = vmatprep.subr.mxu0 0.0
    %10230 = vmatpush1.msra.mxu0 %v10208
    %10231 = vmatprep.subr.mxu0 0.0
    %10232 = vmatpush1.msra.mxu0 %v10209
    %10233 = vmatprep.subr.mxu0 0.0
    %10234 = vmatpush1.msra.mxu0 %v10217
    %10235 = vmatprep.subr.mxu0 0.0
    %10236 = vmatpush1.msra.mxu0 0.0
    %10237 = vmatprep.subr.mxu0 0.0
    %10238 = vmatpush1.msra.mxu0 0.0
    %10239 = vmatprep.subr.mxu0 0.0
    %10240 = vmatpush1.msra.mxu0 0.0
    %10241 = vmatprep.subr.mxu0 0.0
    %10242 = vmatpush1.msra.mxu0 0.0
    %10243 = vmatprep.subr.mxu0 0.0
    %10244 = vmatpush1.msra.mxu0 0.0
    %10245 = vmatprep.subr.mxu0 0.0
    %10246 = vmatpush1.msra.mxu0 0.0
    %10247 = vmatprep.subr.mxu0 0.0
    %10248 = vmatpush1.msra.mxu0 0.0
    %10249 = vmatprep.subr.mxu0 0.0
    %10250 = vmatpush1.msra.mxu0 0.0
    %10251 = vmatprep.subr.mxu0 0.0
    %10252 = vmatpush1.msra.mxu0 0.0
    %10253 = vmatprep.subr.mxu0 0.0
    %10254 = vmatpush1.msra.mxu0 0.0
    %10255 = vmatprep.subr.mxu0 0.0
    %10256 = vmatpush1.msra.mxu0 0.0
    %10257 = vmatprep.subr.mxu0 0.0
    %10258 = vmatpush1.msra.mxu0 0.0
    %10259 = vmatprep.subr.mxu0 0.0
    %10260 = vmatpush1.msra.mxu0 0.0
    %10261 = vmatprep.subr.mxu0 0.0
    %10262 = vmatpush1.msra.mxu0 0.0
    %10263 = vmatprep.subr.mxu0 0.0
    %10264 = vmatpush1.msra.mxu0 0.0
    %10265 = vmatprep.subr.mxu0 0.0
    %10266 = vmatpush1.msra.mxu0 0.0
    %10267 = vmatprep.subr.mxu0 0.0
    %10268 = vmatpush1.msra.mxu0 0.0
    %10269 = vmatprep.subr.mxu0 0.0
    %10270 = vmatpush1.msra.mxu0 0.0
    %10271 = vmatprep.subr.mxu0 0.0
    %10272 = vmatpush1.msra.mxu0 0.0
    %10273 = vmatprep.subr.mxu0 0.0
    %10274 = vmatpush1.msra.mxu0 0.0
    %10275 = vmatprep.subr.mxu0 0.0
    %10276 = vmatpush1.msra.mxu0 0.0
    %10277 = vmatprep.subr.mxu0 0.0
    %10278 = vmatpush1.msra.mxu0 0.0
    %10279 = vmatprep.subr.mxu0 0.0
    %10280 = vmatpush1.msra.mxu0 0.0
    %10281 = vmatprep.subr.mxu0 0.0
    %10282 = vmatpush1.msra.mxu0 0.0
    %10283 = vmatprep.mubr.f32.mxu0 0.0
    %10284 = vmatmul.mubr.f32.gmra.mrb[0].mxu0 %v10214
    %v10285 = vpop.f32.mrb[0].mxu0
    %v10286 = vadd.f32 0.0, %v10285
    %v10287 = vpop.f32.mrb[0].mxu0
    %10288 = vdwg.mxu0
    %v10289 = vld [vmem:[#allocation14] sm:$0xff]
    %v10290 = vld [vmem:[#allocation14 + $0x8] sm:$0xff]
    %v10291 = vld [vmem:[#allocation14 + $0x10] sm:$0xff]
    %v10292 = vld [vmem:[#allocation14 + $0x18] sm:$0xff]
    %v10293 = vld [vmem:[#allocation14 + $0x20] sm:$0xff]
    %v10294 = vld [vmem:[#allocation14 + $0x28] sm:$0xff]
    %v10295 = vld [vmem:[#allocation14 + $0x30] sm:$0xff]
    %v10296 = vld [vmem:[#allocation14 + $0x38] sm:$0xff]
    %v10297 = vld [vmem:[#allocation14 + $0x40] sm:$0xff]
    %v10298 = vld [vmem:[#allocation14 + $0x48] sm:$0xff]
    %v10299 = vld [vmem:[#allocation14 + $0x50] sm:$0xff]
    %v10300 = vld [vmem:[#allocation14 + $0x58] sm:$0xff]
    %v10301 = vld [vmem:[#allocation14 + $0x60] sm:$0xff]
    %v10302 = vld [vmem:[#allocation14 + $0x68] sm:$0xff]
    %v10303 = vld [vmem:[#allocation14 + $0x70] sm:$0xff]
    %v10304 = vld [vmem:[#allocation14 + $0x78] sm:$0xff]
    %v10305 = vld [vmem:[%s14] sm:$0x1]
    %10306 = vmatprep.subr.mxu0 0.0
    %10307 = vmatpush1.msra.mxu0 %v10289
    %10308 = vmatprep.subr.mxu0 0.0
    %10309 = vmatpush1.msra.mxu0 %v10290
    %10310 = vmatprep.subr.mxu0 0.0
    %10311 = vmatpush1.msra.mxu0 %v10291
    %10312 = vmatprep.subr.mxu0 0.0
    %10313 = vmatpush1.msra.mxu0 %v10292
    %10314 = vmatprep.subr.mxu0 0.0
    %10315 = vmatpush1.msra.mxu0 %v10293
    %10316 = vmatprep.subr.mxu0 0.0
    %10317 = vmatpush1.msra.mxu0 %v10294
    %10318 = vmatprep.subr.mxu0 0.0
    %10319 = vmatpush1.msra.mxu0 %v10295
    %10320 = vmatprep.subr.mxu0 0.0
    %10321 = vmatpush1.msra.mxu0 %v10296
    %10322 = vmatprep.subr.mxu0 0.0
    %10323 = vmatpush1.msra.mxu0 %v10297
    %10324 = vmatprep.subr.mxu0 0.0
    %10325 = vmatpush1.msra.mxu0 %v10298
    %10326 = vmatprep.subr.mxu0 0.0
    %10327 = vmatpush1.msra.mxu0 %v10299
    %10328 = vmatprep.subr.mxu0 0.0
    %10329 = vmatpush1.msra.mxu0 %v10300
    %10330 = vmatprep.subr.mxu0 0.0
    %10331 = vmatpush1.msra.mxu0 %v10301
    %10332 = vmatprep.subr.mxu0 0.0
    %10333 = vmatpush1.msra.mxu0 %v10302
    %10334 = vmatprep.subr.mxu0 0.0
    %10335 = vmatpush1.msra.mxu0 %v10303
    %10336 = vmatprep.subr.mxu0 0.0
    %10337 = vmatpush1.msra.mxu0 %v10304
    %10338 = vmatprep.subr.mxu0 0.0
    %10339 = vmatpush1.msra.mxu0 0.0
    %10340 = vmatprep.subr.mxu0 0.0
    %10341 = vmatpush1.msra.mxu0 0.0
    %10342 = vmatprep.subr.mxu0 0.0
    %10343 = vmatpush1.msra.mxu0 0.0
    %10344 = vmatprep.subr.mxu0 0.0
    %10345 = vmatpush1.msra.mxu0 0.0
    %10346 = vmatprep.subr.mxu0 0.0
    %10347 = vmatpush1.msra.mxu0 0.0
    %10348 = vmatprep.subr.mxu0 0.0
    %10349 = vmatpush1.msra.mxu0 0.0
    %10350 = vmatprep.subr.mxu0 0.0
    %10351 = vmatpush1.msra.mxu0 0.0
    %10352 = vmatprep.subr.mxu0 0.0
    %10353 = vmatpush1.msra.mxu0 0.0
    %10354 = vmatprep.subr.mxu0 0.0
    %10355 = vmatpush1.msra.mxu0 0.0
    %10356 = vmatprep.subr.mxu0 0.0
    %10357 = vmatpush1.msra.mxu0 0.0
    %10358 = vmatprep.subr.mxu0 0.0
    %10359 = vmatpush1.msra.mxu0 0.0
    %10360 = vmatprep.subr.mxu0 0.0
    %10361 = vmatpush1.msra.mxu0 0.0
    %10362 = vmatprep.subr.mxu0 0.0
    %10363 = vmatpush1.msra.mxu0 0.0
    %10364 = vmatprep.subr.mxu0 0.0
    %10365 = vmatpush1.msra.mxu0 0.0
    %10366 = vmatprep.subr.mxu0 0.0
    %10367 = vmatpush1.msra.mxu0 0.0
    %10368 = vmatprep.subr.mxu0 0.0
    %10369 = vmatpush1.msra.mxu0 0.0
    %10370 = vmatprep.mubr.f32.mxu0 0.0
    %10371 = vmatmul.mubr.f32.gmra.mrb[0].mxu0 %v10286
    %v10372 = vpop.f32.mrb[0].mxu0
    %v10373 = vadd.f32 %v10305, %v10372
    %v10374 = vpop.f32.mrb[0].mxu0
    %10375 = vdwg.mxu0
    %10376 = vst [vmem:[#allocation15] sm:$0x1] %v10373
    // Predicated region
    $region82: #{tpu_custom_call.1} parent=1 // pred_check
      _
    $region83: #{tpu_custom_call.1} parent=1 // pred_check_branch
      %10378 = sbr.rel (0) target = $region85
    $region84: #{tpu_custom_call.1} parent=1 // pred_region
      %s10380 = ssub.s32 16, 16
      %10381 = vsyncadd [#allocation8], %s10380
      %s10383 = sshll.u32 [#allocation15], 4
      %s10384 = int_to_ptr.vmem [resolvable:$true] %s10383
      %10386 = dma.vmem_to_hbm [thread:$0]  %s10384, 16, %s15, [#allocation8]
    $region85: #{tpu_custom_call.1} parent=1 // pred_fallthru
      _
    // Predicated region
    $region86: #{tpu_custom_call.1} parent=1 // pred_check
      _
    $region87: #{tpu_custom_call.1} parent=1 // pred_check_branch
      %10388 = sbr.rel (0) target = $region89
    $region88: #{tpu_custom_call.1} parent=1 // pred_region
      %10389 = dma.done [#allocation8], 16
    $region89: #{tpu_custom_call.1} parent=1 // pred_fallthru
      _
    %10390 = vsyncpa [#allocation7], 1
    %10391 = vsyncpa [#allocation10], 1
    %10392 = vsyncpa [#allocation13], 1
    %10393 = vsyncpa [#allocation8], 1

</llo_original>
